<compile_context>
chip_gen: v7x
topology: tpu7x:2x2x1
jax: 0.10.0
libtpu: 0.0.40
codegen_flags: <defaults>
</compile_context>

<pallas_src>
import jax
import jax.numpy as jnp
import numpy as np
from jax.experimental import pallas as pl
from jax.experimental.pallas import tpu as pltpu  # noqa: F401  (TPU backend)

# ---------------------------------------------------------------- config ----
B, TX, TY = 2, 8, 8          # batch, src length, tgt length
E = 32                       # emb_size
H = 32                       # encoder / decoder hidden size
A = 32                       # attention (energy) size
V_SRC, V_TGT = 64, 64        # vocab sizes
PAD_IDX = 0

BP = 8                       # batch padded to the f32 sublane count
VP = 128                     # lane-dense output slab width: [logits | att | 0]
assert B <= BP and V_TGT + TX <= VP


# ------------------------------------------------------- fused NMT kernel ---
def nmt_fused_kernel(
        xemb_ref, yemb_ref, mask_enc_ref, mask_att_ref,
        enc_wih_ref, enc_whh_ref, enc_bih_ref, enc_bhh_ref,
        init_w_ref, init_b_ref,
        att_wk_ref, w_hid_ref, dec_bhh_ref, s_sel_ref,
        w_yin_ref, b_yin_ref, w_ctx_ref, pre_wh_ref, out_w_ref,
        out_ref):
    f32 = jnp.float32
    bf16 = jnp.bfloat16

    # ---- hoisted bias/mask *broadcasts* only (weights stay as ref reads at
    # their use sites: VMEM vld is ~free and keeps them out of regalloc) ------
    enc_bhh_b = jnp.broadcast_to(enc_bhh_ref[...], (BP, 3 * H))
    dec_bhh_b = jnp.broadcast_to(dec_bhh_ref[...], (BP, 3 * H))
    mask_att = mask_att_ref[...]                     # [BP, VP], 1s only at the
                                                     # attention lanes [64,72)

    # ---- batched (non-recurrent) input->hidden projections, hoisted out of
    # the serial loops; biases folded in once -------------------------------
    x_gi_all = (jnp.dot(xemb_ref[...], enc_wih_ref[...],
                        preferred_element_type=f32)
                + jnp.broadcast_to(enc_bih_ref[...], (TX * BP, 3 * H)))
    y_all = (jnp.dot(yemb_ref[...], w_yin_ref[...],
                     preferred_element_type=f32)
             + jnp.broadcast_to(b_yin_ref[...], (TY * BP, 4 * H)))

    # ---- encoder: unidirectional GRU over TX steps (fully unrolled) ---------
    h = jnp.zeros((BP, H), f32)
    enc_states = []
    for t in range(TX):
        gi = x_gi_all[t * BP:(t + 1) * BP]           # [BP, 3H]
        gh = jnp.dot(h.astype(bf16), enc_whh_ref[...],
                     preferred_element_type=f32) + enc_bhh_b
        rz = jax.nn.sigmoid(gi[:, :2 * H] + gh[:, :2 * H])   # one EUP push
        r, z = rz[:, :H], rz[:, H:]
        n = jnp.tanh(gi[:, 2 * H:] + r * gh[:, 2 * H:])
        h_new = (1.0 - z) * n + z * h
        m = mask_enc_ref[t]                          # [BP, H] 1=token 0=pad
        h = h + m * (h_new - h)                      # carry h through padding
        enc_states.append(m * h_new)                 # packed-seq: zero pads

    # ---- decoder init bridge: hidden0 = tanh(enc_final @ W + b) -------------
    hidden = jnp.tanh(jnp.dot(h.astype(bf16), init_w_ref[...],
                              preferred_element_type=f32) + init_b_ref[...])

    # ---- Bahdanau proj_keys, lane-packed once as [BP, TX*A] -----------------
    keys = jnp.concatenate(
        [jnp.dot(e.astype(bf16), att_wk_ref[...], preferred_element_type=f32)
         for e in enc_states], axis=-1)              # [BP, TX*A] = [8, 256]

    # ---- decoder: attention + GRU + pre-output + generate (unrolled) --------
    for t in range(TY):
        # merged hidden-LHS matmul: [q tiled across TX | GRU gh], 352 lanes
        hq = jnp.dot(hidden.astype(bf16), w_hid_ref[...],
                     preferred_element_type=f32)     # [BP, TX*A + 3H]
        q_tiled = hq[:, :TX * A]
        gh = hq[:, TX * A:] + dec_bhh_b

        # Bahdanau attention: full-lane EUP tanh, scores produced by one
        # selection-matrix matmul directly in output lanes [V_TGT, V_TGT+TX)
        energy = jnp.tanh(keys + q_tiled)            # [BP, 256]
        scores = jnp.dot(energy.astype(bf16), s_sel_ref[...],
                         preferred_element_type=f32)  # [BP, VP]
        # masked-numerator softmax; scores are tanh-bounded by ||att_v||_1 so
        # the row-max subtraction is skipped (restore it if att_v is rescaled).
        es = jnp.exp(scores) * mask_att
        den = jnp.sum(es, axis=-1, keepdims=True)
        # padded batch rows have an all-zero mask -> den==0; clamp keeps them
        # at 0 (instead of NaN).  Those rows are sliced off in the wrapper.
        den = jnp.maximum(den, 1e-30)
        att = es * pl.reciprocal(den)                # exact reciprocal

        # context = sum_t att[:, t] * enc_t — pure VPU accumulation
        ctx = att[:, V_TGT:V_TGT + 1] * enc_states[0]
        for tp in range(1, TX):
            ctx = ctx + att[:, V_TGT + tp:V_TGT + tp + 1] * enc_states[tp]

        # merged ctx-LHS matmul: [GRU input gates | pre-output ctx part]
        cm = jnp.dot(ctx.astype(bf16), w_ctx_ref[...],
                     preferred_element_type=f32)     # [BP, 3H + H]
        y_t = y_all[t * BP:(t + 1) * BP]             # [BP, 3H + H] (+biases)
        gi = y_t[:, :3 * H] + cm[:, :3 * H]

        # GRU cell step (PyTorch gate order [r|z|n]); r,z in one sigmoid push
        rz = jax.nn.sigmoid(gi[:, :2 * H] + gh[:, :2 * H])
        r, z = rz[:, :H], rz[:, H:]
        n = jnp.tanh(gi[:, 2 * H:] + r * gh[:, 2 * H:])
        hidden = (1.0 - z) * n + z * hidden

        # pre-output + generate (out_w zero-padded to 128 lanes in wrapper)
        pre = jnp.tanh(y_t[:, 3 * H:] + cm[:, 3 * H:]
                       + jnp.dot(hidden.astype(bf16), pre_wh_ref[...],
                                 preferred_element_type=f32))
        logits = jnp.dot(pre.astype(bf16), out_w_ref[...],
                         preferred_element_type=f32)  # [BP, VP], 0 past V_TGT

        # single full-width store: lanes [0,64)=logits, [64,72)=att, rest 0
        out_ref[t] = logits + att


# ------------------------------------------------------------- forward glue -
def pallas_forward(params, x, seq_mask_x, y):
    f32, bf16 = jnp.float32, jnp.bfloat16
    # src_embed / tgt_embed: embedding gather in plain JAX; dropout = identity.
    src_e = jnp.take(params["src_emb"], x, axis=0)            # [B, TX, E]
    tgt_e = jnp.take(params["tgt_emb"], y, axis=0)            # [B, TY, E]
    mask_f = seq_mask_x.astype(f32)                           # [B, TX]

    # pad batch to BP sublanes (padded rows: zero embeddings, zero mask)
    pb = BP - B
    src_tb = jnp.transpose(jnp.pad(src_e, ((0, pb), (0, 0), (0, 0))), (1, 0, 2))
    tgt_tb = jnp.transpose(jnp.pad(tgt_e, ((0, pb), (0, 0), (0, 0))), (1, 0, 2))
    xemb = src_tb.reshape(TX * BP, E).astype(bf16)            # [TX*BP, E]
    yemb = tgt_tb.reshape(TY * BP, E).astype(bf16)            # [TY*BP, E]

    mask_p = jnp.pad(mask_f, ((0, pb), (0, 0)))               # [BP, TX]
    # encoder mask pre-broadcast to [TX, BP, H] (plain VPU blend in-kernel)
    mask_enc = jnp.broadcast_to(jnp.transpose(mask_p)[:, :, None],
                                (TX, BP, H)).astype(f32)
    # attention softmax mask, already placed at the output-slab att lanes
    mask_att = jnp.pad(mask_p, ((0, 0), (V_TGT, VP - V_TGT - TX)))

    # --- weight packing / fusion (bf16 MXU inputs; f32 accumulate in-kernel) -
    # hidden-LHS merge: [tile(att_wq, TX) | dec_whh]  -> [H, TX*A + 3H]
    w_hid = jnp.concatenate([jnp.tile(params["att_wq"], (1, TX)),
                             params["dec_w_hh"]], axis=1).astype(bf16)
    # ctx-LHS merge: [dec_wih_c | pre_wc] -> [H, 4H]
    w_ctx = jnp.concatenate([params["dec_w_ih"][E:], params["pre_w"][E + H:]],
                            axis=1).astype(bf16)
    # y-embedding merge: [dec_wih_y | pre_wy] -> [E, 4H], biases alongside
    w_yin = jnp.concatenate([params["dec_w_ih"][:E], params["pre_w"][:E]],
                            axis=1).astype(bf16)
    b_yin = jnp.concatenate([params["dec_b_ih"], params["pre_b"]], axis=1)
    # attention "selection" matrix: folds the att_v dot product, the per-step
    # lane segmentation and the output-lane placement into one matmul RHS.
    s_sel_narrow = jnp.kron(jnp.eye(TX, dtype=f32),
                            jnp.transpose(params["att_v"]))   # [TX*A, TX]
    s_sel = jnp.pad(s_sel_narrow,
                    ((0, 0), (V_TGT, VP - V_TGT - TX))).astype(bf16)
    out_w_pad = jnp.pad(params["out_w"],
                        ((0, 0), (0, VP - V_TGT))).astype(bf16)   # [H, VP]

    # single fused, grid-less pallas_call: everything whole-array in VMEM
    slab = pl.pallas_call(
        nmt_fused_kernel,
        out_shape=jax.ShapeDtypeStruct((TY, BP, VP), jnp.float32),
    )(xemb, yemb, mask_enc, mask_att,
      params["enc_w_ih"].astype(bf16), params["enc_w_hh"].astype(bf16),
      params["enc_b_ih"], params["enc_b_hh"],
      params["init_w"].astype(bf16), params["init_b"],
      params["att_wk"].astype(bf16), w_hid, params["dec_b_hh"], s_sel,
      w_yin, b_yin, w_ctx,
      params["pre_w"][E:E + H].astype(bf16), out_w_pad)

    logits = jnp.transpose(slab[:, :B, :V_TGT], (1, 0, 2))            # [B,TY,V]
    att = jnp.transpose(slab[:, :B, V_TGT:V_TGT + TX], (1, 0, 2))     # [B,TY,TX]
    return logits, att


# ------------------------------------------------------- pure-JAX reference -
def _gru_gates_ref(gi, gh, h, hdim):
    r = jax.nn.sigmoid(gi[:, :hdim] + gh[:, :hdim])
    z = jax.nn.sigmoid(gi[:, hdim:2 * hdim] + gh[:, hdim:2 * hdim])
    n = jnp.tanh(gi[:, 2 * hdim:] + r * gh[:, 2 * hdim:])
    return (1.0 - z) * n + z * h


def reference_forward(params, x, seq_mask_x, y):
    src_e = params["src_emb"][x]
    tgt_e = params["tgt_emb"][y]
    mask = seq_mask_x.astype(jnp.float32)

    h = jnp.zeros((B, H), jnp.float32)
    outs = []
    for t in range(TX):
        gi = src_e[:, t] @ params["enc_w_ih"] + params["enc_b_ih"]
        gh = h @ params["enc_w_hh"] + params["enc_b_hh"]
        h_new = _gru_gates_ref(gi, gh, h, H)
        m = mask[:, t:t + 1]
        h = jnp.where(m > 0, h_new, h)
        outs.append(jnp.where(m > 0, h_new, 0.0))
    enc_out = jnp.stack(outs, axis=1)
    hidden = jnp.tanh(h @ params["init_w"] + params["init_b"])
    proj_keys = (enc_out.reshape(B * TX, H) @ params["att_wk"]).reshape(B, TX, A)

    logits_all, att_all = [], []
    for t in range(TY):
        ye = tgt_e[:, t]
        q = hidden @ params["att_wq"]
        energy = jnp.tanh(proj_keys + q[:, None, :])
        scores = jnp.sum(energy * params["att_v"][None, :, :], axis=-1)
        scores = jnp.where(mask > 0, scores, -1e9)
        scores = scores - scores.max(-1, keepdims=True)
        es = jnp.exp(scores)
        att = es / es.sum(-1, keepdims=True)
        ctx = jnp.sum(att[:, :, None] * enc_out, axis=1)
        rnn_in = jnp.concatenate([ye, ctx], axis=-1)
        gi = rnn_in @ params["dec_w_ih"] + params["dec_b_ih"]
        gh = hidden @ params["dec_w_hh"] + params["dec_b_hh"]
        hidden = _gru_gates_ref(gi, gh, hidden, H)
        pre = jnp.tanh(jnp.concatenate([ye, hidden, ctx], -1) @ params["pre_w"]
                       + params["pre_b"])
        logits_all.append(pre @ params["out_w"])
        att_all.append(att)
    return jnp.stack(logits_all, 1), jnp.stack(att_all, 1)


# -------------------------------------------------------------- parameters --
def init_params(key):
    ks = jax.random.split(key, 20)

    def rn(k, shape, scale=0.1):
        return (scale * jax.random.normal(k, shape)).astype(jnp.float32)

    src_emb = rn(ks[0], (V_SRC, E)).at[PAD_IDX].set(0.0)   # padding_idx row = 0
    tgt_emb = rn(ks[1], (V_TGT, E)).at[PAD_IDX].set(0.0)
    return dict(
        src_emb=src_emb, tgt_emb=tgt_emb,
        # encoder GRU
        enc_w_ih=rn(ks[2], (E, 3 * H)), enc_w_hh=rn(ks[3], (H, 3 * H)),
        enc_b_ih=rn(ks[4], (1, 3 * H)), enc_b_hh=rn(ks[5], (1, 3 * H)),
        # decoder init bridge
        init_w=rn(ks[6], (H, H)), init_b=rn(ks[7], (1, H)),
        # Bahdanau attention
        att_wq=rn(ks[8], (H, A)), att_wk=rn(ks[9], (H, A)), att_v=rn(ks[10], (1, A)),
        # decoder GRU cell (input = [y_embed; context])
        dec_w_ih=rn(ks[11], (E + H, 3 * H)), dec_w_hh=rn(ks[12], (H, 3 * H)),
        dec_b_ih=rn(ks[13], (1, 3 * H)), dec_b_hh=rn(ks[14], (1, 3 * H)),
        # pre-output layer (input = [y_embed; hidden; context])
        pre_w=rn(ks[15], (E + 2 * H, H)), pre_b=rn(ks[16], (1, H)),
        # output_matrix (tied_embeddings=False), stored pre-transposed as [H, V]
        out_w=rn(ks[17], (H, V_TGT)),
    )


# TODO(synk): loss() / cross_entropy is not part of forward() and is left out.

if __name__ == "__main__":
    key = jax.random.PRNGKey(0)
    pkey, xkey, ykey = jax.random.split(key, 3)
    params = init_params(pkey)

    seq_len_x = jnp.array([TX, 5], dtype=jnp.int32)
    pos = jnp.arange(TX)[None, :]
    seq_mask_x = pos < seq_len_x[:, None]                       # [B, TX] bool
    x = jax.random.randint(xkey, (B, TX), 1, V_SRC)
    x = jnp.where(seq_mask_x, x, PAD_IDX).astype(jnp.int32)
    y = jax.random.randint(ykey, (B, TY), 1, V_TGT).astype(jnp.int32)

    logits, att = jax.jit(pallas_forward)(params, x, seq_mask_x, y)
    jax.block_until_ready((logits, att))

    ref_logits, ref_att = reference_forward(params, x, seq_mask_x, y)
    # Tolerance is relaxed vs. exact f32 only because the kernel feeds the MXU
    # bf16 operands (native MXU input format on v5e/v6e/v7x) with f32
    # accumulation; the softmax reciprocal is exact.  Structural bugs would
    # produce O(0.1) errors and still fail.
    np.testing.assert_allclose(np.asarray(logits), np.asarray(ref_logits),
                               rtol=2e-2, atol=2e-2)
    np.testing.assert_allclose(np.asarray(att), np.asarray(ref_att),
                               rtol=2e-2, atol=2e-2)
    assert logits.shape == (B, TY, V_TGT) and att.shape == (B, TY, TX)
    print("KERNEL_OK")
</pallas_src>

<mosaic_0001>
module attributes {stable_mosaic.version = 11 : i64} {
  func.func @nmt_fused_kernel(%arg0: memref<64x32xbf16, #tpu.memory_space<vmem>>, %arg1: memref<64x32xbf16, #tpu.memory_space<vmem>>, %arg2: memref<8x8x32xf32, #tpu.memory_space<vmem>>, %arg3: memref<8x128xf32, #tpu.memory_space<vmem>>, %arg4: memref<32x96xbf16, #tpu.memory_space<vmem>>, %arg5: memref<32x96xbf16, #tpu.memory_space<vmem>>, %arg6: memref<1x96xf32, #tpu.memory_space<vmem>>, %arg7: memref<1x96xf32, #tpu.memory_space<vmem>>, %arg8: memref<32x32xbf16, #tpu.memory_space<vmem>>, %arg9: memref<1x32xf32, #tpu.memory_space<vmem>>, %arg10: memref<32x32xbf16, #tpu.memory_space<vmem>>, %arg11: memref<32x352xbf16, #tpu.memory_space<vmem>>, %arg12: memref<1x96xf32, #tpu.memory_space<vmem>>, %arg13: memref<256x128xbf16, #tpu.memory_space<vmem>>, %arg14: memref<32x128xbf16, #tpu.memory_space<vmem>>, %arg15: memref<1x128xf32, #tpu.memory_space<vmem>>, %arg16: memref<32x128xbf16, #tpu.memory_space<vmem>>, %arg17: memref<32x32xbf16, #tpu.memory_space<vmem>>, %arg18: memref<32x128xbf16, #tpu.memory_space<vmem>>, %arg19: memref<8x8x128xf32, #tpu.memory_space<vmem>>) attributes {dimension_semantics = [], scalar_prefetch = 0 : i64, scratch_operands = 0 : i64, tpu.core_type = #tpu.core_type<tc>} {
    %c0 = arith.constant 0 : index
    %c0_0 = arith.constant 0 : index
    %0 = vector.load %arg7[%c0, %c0_0] : memref<1x96xf32, #tpu.memory_space<vmem>>, vector<1x96xf32>
    %1 = vector.shape_cast %0 : vector<1x96xf32> to vector<1x96xf32>
    %2 = vector.broadcast %1 : vector<1x96xf32> to vector<8x96xf32>
    %c0_1 = arith.constant 0 : index
    %c0_2 = arith.constant 0 : index
    %3 = vector.load %arg12[%c0_1, %c0_2] : memref<1x96xf32, #tpu.memory_space<vmem>>, vector<1x96xf32>
    %4 = vector.shape_cast %3 : vector<1x96xf32> to vector<1x96xf32>
    %5 = vector.broadcast %4 : vector<1x96xf32> to vector<8x96xf32>
    %c0_3 = arith.constant 0 : index
    %c0_4 = arith.constant 0 : index
    %6 = vector.load %arg3[%c0_3, %c0_4] : memref<8x128xf32, #tpu.memory_space<vmem>>, vector<8x128xf32>
    %c0_5 = arith.constant 0 : index
    %c0_6 = arith.constant 0 : index
    %7 = vector.load %arg0[%c0_5, %c0_6] : memref<64x32xbf16, #tpu.memory_space<vmem>>, vector<64x32xbf16>
    %c0_7 = arith.constant 0 : index
    %c0_8 = arith.constant 0 : index
    %8 = vector.load %arg4[%c0_7, %c0_8] : memref<32x96xbf16, #tpu.memory_space<vmem>>, vector<32x96xbf16>
    %cst = arith.constant dense<0.000000e+00> : vector<64x96xf32>
    %9 = tpu.matmul %7, %8, %cst {dimension_numbers = #tpu.dot_dimension_numbers<[1], [0], [0], [1], [0, 0, 1, 1], [], []>} : vector<64x32xbf16>, vector<32x96xbf16>, vector<64x96xf32> -> vector<64x96xf32>
    %c0_9 = arith.constant 0 : index
    %c0_10 = arith.constant 0 : index
    %10 = vector.load %arg6[%c0_9, %c0_10] : memref<1x96xf32, #tpu.memory_space<vmem>>, vector<1x96xf32>
    %11 = vector.shape_cast %10 : vector<1x96xf32> to vector<1x96xf32>
    %12 = vector.broadcast %11 : vector<1x96xf32> to vector<64x96xf32>
    %13 = arith.addf %9, %12 : vector<64x96xf32>
    %c0_11 = arith.constant 0 : index
    %c0_12 = arith.constant 0 : index
    %14 = vector.load %arg1[%c0_11, %c0_12] : memref<64x32xbf16, #tpu.memory_space<vmem>>, vector<64x32xbf16>
    %c0_13 = arith.constant 0 : index
    %c0_14 = arith.constant 0 : index
    %15 = vector.load %arg14[%c0_13, %c0_14] : memref<32x128xbf16, #tpu.memory_space<vmem>>, vector<32x128xbf16>
    %cst_15 = arith.constant dense<0.000000e+00> : vector<64x128xf32>
    %16 = tpu.matmul %14, %15, %cst_15 {dimension_numbers = #tpu.dot_dimension_numbers<[1], [0], [0], [1], [0, 0, 1, 1], [], []>} : vector<64x32xbf16>, vector<32x128xbf16>, vector<64x128xf32> -> vector<64x128xf32>
    %c0_16 = arith.constant 0 : index
    %c0_17 = arith.constant 0 : index
    %17 = vector.load %arg15[%c0_16, %c0_17] : memref<1x128xf32, #tpu.memory_space<vmem>>, vector<1x128xf32>
    %18 = vector.shape_cast %17 : vector<1x128xf32> to vector<1x128xf32>
    %19 = vector.broadcast %18 : vector<1x128xf32> to vector<64x128xf32>
    %20 = arith.addf %16, %19 : vector<64x128xf32>
    %cst_18 = arith.constant 0.000000e+00 : f32
    %21 = vector.broadcast %cst_18 : f32 to vector<8x32xf32>
    %22 = vector.extract_strided_slice %13 {offsets = [0, 0], sizes = [8, 96], strides = [1, 1]} : vector<64x96xf32> to vector<8x96xf32>
    %23 = arith.truncf %21 : vector<8x32xf32> to vector<8x32xbf16>
    %c0_19 = arith.constant 0 : index
    %c0_20 = arith.constant 0 : index
    %24 = vector.load %arg5[%c0_19, %c0_20] : memref<32x96xbf16, #tpu.memory_space<vmem>>, vector<32x96xbf16>
    %cst_21 = arith.constant dense<0.000000e+00> : vector<8x96xf32>
    %25 = tpu.matmul %23, %24, %cst_21 {dimension_numbers = #tpu.dot_dimension_numbers<[1], [0], [0], [1], [0, 0, 1, 1], [], []>} : vector<8x32xbf16>, vector<32x96xbf16>, vector<8x96xf32> -> vector<8x96xf32>
    %26 = arith.addf %25, %2 : vector<8x96xf32>
    %27 = vector.extract_strided_slice %22 {offsets = [0, 0], sizes = [8, 64], strides = [1, 1]} : vector<8x96xf32> to vector<8x64xf32>
    %28 = vector.extract_strided_slice %26 {offsets = [0, 0], sizes = [8, 64], strides = [1, 1]} : vector<8x96xf32> to vector<8x64xf32>
    %29 = arith.addf %27, %28 : vector<8x64xf32>
    %30 = arith.negf %29 : vector<8x64xf32>
    %31 = math.exp %30 : vector<8x64xf32>
    %cst_22 = arith.constant 1.000000e+00 : f32
    %32 = vector.broadcast %cst_22 : f32 to vector<8x64xf32>
    %33 = arith.addf %32, %31 : vector<8x64xf32>
    %34 = arith.divf %32, %33 : vector<8x64xf32>
    %35 = vector.extract_strided_slice %34 {offsets = [0, 0], sizes = [8, 32], strides = [1, 1]} : vector<8x64xf32> to vector<8x32xf32>
    %36 = vector.extract_strided_slice %34 {offsets = [0, 32], sizes = [8, 32], strides = [1, 1]} : vector<8x64xf32> to vector<8x32xf32>
    %37 = vector.extract_strided_slice %22 {offsets = [0, 64], sizes = [8, 32], strides = [1, 1]} : vector<8x96xf32> to vector<8x32xf32>
    %38 = vector.extract_strided_slice %26 {offsets = [0, 64], sizes = [8, 32], strides = [1, 1]} : vector<8x96xf32> to vector<8x32xf32>
    %39 = arith.mulf %35, %38 : vector<8x32xf32>
    %40 = arith.addf %37, %39 : vector<8x32xf32>
    %41 = math.tanh %40 : vector<8x32xf32>
    %cst_23 = arith.constant 1.000000e+00 : f32
    %42 = vector.broadcast %cst_23 : f32 to vector<8x32xf32>
    %43 = arith.subf %42, %36 : vector<8x32xf32>
    %44 = arith.mulf %43, %41 : vector<8x32xf32>
    %45 = arith.mulf %36, %21 : vector<8x32xf32>
    %46 = arith.addf %44, %45 : vector<8x32xf32>
    %c0_24 = arith.constant 0 : index
    %c0_25 = arith.constant 0 : index
    %c0_26 = arith.constant 0 : index
    %47 = vector.load %arg2[%c0_24, %c0_25, %c0_26] : memref<8x8x32xf32, #tpu.memory_space<vmem>>, vector<1x8x32xf32>
    %48 = vector.shape_cast %47 : vector<1x8x32xf32> to vector<8x32xf32>
    %49 = arith.subf %46, %21 : vector<8x32xf32>
    %50 = arith.mulf %48, %49 : vector<8x32xf32>
    %51 = arith.addf %21, %50 : vector<8x32xf32>
    %52 = arith.mulf %48, %46 : vector<8x32xf32>
    %53 = vector.extract_strided_slice %13 {offsets = [8, 0], sizes = [8, 96], strides = [1, 1]} : vector<64x96xf32> to vector<8x96xf32>
    %54 = arith.truncf %51 : vector<8x32xf32> to vector<8x32xbf16>
    %c0_27 = arith.constant 0 : index
    %c0_28 = arith.constant 0 : index
    %55 = vector.load %arg5[%c0_27, %c0_28] : memref<32x96xbf16, #tpu.memory_space<vmem>>, vector<32x96xbf16>
    %cst_29 = arith.constant dense<0.000000e+00> : vector<8x96xf32>
    %56 = tpu.matmul %54, %55, %cst_29 {dimension_numbers = #tpu.dot_dimension_numbers<[1], [0], [0], [1], [0, 0, 1, 1], [], []>} : vector<8x32xbf16>, vector<32x96xbf16>, vector<8x96xf32> -> vector<8x96xf32>
    %57 = arith.addf %56, %2 : vector<8x96xf32>
    %58 = vector.extract_strided_slice %53 {offsets = [0, 0], sizes = [8, 64], strides = [1, 1]} : vector<8x96xf32> to vector<8x64xf32>
    %59 = vector.extract_strided_slice %57 {offsets = [0, 0], sizes = [8, 64], strides = [1, 1]} : vector<8x96xf32> to vector<8x64xf32>
    %60 = arith.addf %58, %59 : vector<8x64xf32>
    %61 = arith.negf %60 : vector<8x64xf32>
    %62 = math.exp %61 : vector<8x64xf32>
    %cst_30 = arith.constant 1.000000e+00 : f32
    %63 = vector.broadcast %cst_30 : f32 to vector<8x64xf32>
    %64 = arith.addf %63, %62 : vector<8x64xf32>
    %65 = arith.divf %63, %64 : vector<8x64xf32>
    %66 = vector.extract_strided_slice %65 {offsets = [0, 0], sizes = [8, 32], strides = [1, 1]} : vector<8x64xf32> to vector<8x32xf32>
    %67 = vector.extract_strided_slice %65 {offsets = [0, 32], sizes = [8, 32], strides = [1, 1]} : vector<8x64xf32> to vector<8x32xf32>
    %68 = vector.extract_strided_slice %53 {offsets = [0, 64], sizes = [8, 32], strides = [1, 1]} : vector<8x96xf32> to vector<8x32xf32>
    %69 = vector.extract_strided_slice %57 {offsets = [0, 64], sizes = [8, 32], strides = [1, 1]} : vector<8x96xf32> to vector<8x32xf32>
    %70 = arith.mulf %66, %69 : vector<8x32xf32>
    %71 = arith.addf %68, %70 : vector<8x32xf32>
    %72 = math.tanh %71 : vector<8x32xf32>
    %cst_31 = arith.constant 1.000000e+00 : f32
    %73 = vector.broadcast %cst_31 : f32 to vector<8x32xf32>
    %74 = arith.subf %73, %67 : vector<8x32xf32>
    %75 = arith.mulf %74, %72 : vector<8x32xf32>
    %76 = arith.mulf %67, %51 : vector<8x32xf32>
    %77 = arith.addf %75, %76 : vector<8x32xf32>
    %c1 = arith.constant 1 : index
    %c0_32 = arith.constant 0 : index
    %c0_33 = arith.constant 0 : index
    %78 = vector.load %arg2[%c1, %c0_32, %c0_33] : memref<8x8x32xf32, #tpu.memory_space<vmem>>, vector<1x8x32xf32>
    %79 = vector.shape_cast %78 : vector<1x8x32xf32> to vector<8x32xf32>
    %80 = arith.subf %77, %51 : vector<8x32xf32>
    %81 = arith.mulf %79, %80 : vector<8x32xf32>
    %82 = arith.addf %51, %81 : vector<8x32xf32>
    %83 = arith.mulf %79, %77 : vector<8x32xf32>
    %84 = vector.extract_strided_slice %13 {offsets = [16, 0], sizes = [8, 96], strides = [1, 1]} : vector<64x96xf32> to vector<8x96xf32>
    %85 = arith.truncf %82 : vector<8x32xf32> to vector<8x32xbf16>
    %c0_34 = arith.constant 0 : index
    %c0_35 = arith.constant 0 : index
    %86 = vector.load %arg5[%c0_34, %c0_35] : memref<32x96xbf16, #tpu.memory_space<vmem>>, vector<32x96xbf16>
    %cst_36 = arith.constant dense<0.000000e+00> : vector<8x96xf32>
    %87 = tpu.matmul %85, %86, %cst_36 {dimension_numbers = #tpu.dot_dimension_numbers<[1], [0], [0], [1], [0, 0, 1, 1], [], []>} : vector<8x32xbf16>, vector<32x96xbf16>, vector<8x96xf32> -> vector<8x96xf32>
    %88 = arith.addf %87, %2 : vector<8x96xf32>
    %89 = vector.extract_strided_slice %84 {offsets = [0, 0], sizes = [8, 64], strides = [1, 1]} : vector<8x96xf32> to vector<8x64xf32>
    %90 = vector.extract_strided_slice %88 {offsets = [0, 0], sizes = [8, 64], strides = [1, 1]} : vector<8x96xf32> to vector<8x64xf32>
    %91 = arith.addf %89, %90 : vector<8x64xf32>
    %92 = arith.negf %91 : vector<8x64xf32>
    %93 = math.exp %92 : vector<8x64xf32>
    %cst_37 = arith.constant 1.000000e+00 : f32
    %94 = vector.broadcast %cst_37 : f32 to vector<8x64xf32>
    %95 = arith.addf %94, %93 : vector<8x64xf32>
    %96 = arith.divf %94, %95 : vector<8x64xf32>
    %97 = vector.extract_strided_slice %96 {offsets = [0, 0], sizes = [8, 32], strides = [1, 1]} : vector<8x64xf32> to vector<8x32xf32>
    %98 = vector.extract_strided_slice %96 {offsets = [0, 32], sizes = [8, 32], strides = [1, 1]} : vector<8x64xf32> to vector<8x32xf32>
    %99 = vector.extract_strided_slice %84 {offsets = [0, 64], sizes = [8, 32], strides = [1, 1]} : vector<8x96xf32> to vector<8x32xf32>
    %100 = vector.extract_strided_slice %88 {offsets = [0, 64], sizes = [8, 32], strides = [1, 1]} : vector<8x96xf32> to vector<8x32xf32>
    %101 = arith.mulf %97, %100 : vector<8x32xf32>
    %102 = arith.addf %99, %101 : vector<8x32xf32>
    %103 = math.tanh %102 : vector<8x32xf32>
    %cst_38 = arith.constant 1.000000e+00 : f32
    %104 = vector.broadcast %cst_38 : f32 to vector<8x32xf32>
    %105 = arith.subf %104, %98 : vector<8x32xf32>
    %106 = arith.mulf %105, %103 : vector<8x32xf32>
    %107 = arith.mulf %98, %82 : vector<8x32xf32>
    %108 = arith.addf %106, %107 : vector<8x32xf32>
    %c2 = arith.constant 2 : index
    %c0_39 = arith.constant 0 : index
    %c0_40 = arith.constant 0 : index
    %109 = vector.load %arg2[%c2, %c0_39, %c0_40] : memref<8x8x32xf32, #tpu.memory_space<vmem>>, vector<1x8x32xf32>
    %110 = vector.shape_cast %109 : vector<1x8x32xf32> to vector<8x32xf32>
    %111 = arith.subf %108, %82 : vector<8x32xf32>
    %112 = arith.mulf %110, %111 : vector<8x32xf32>
    %113 = arith.addf %82, %112 : vector<8x32xf32>
    %114 = arith.mulf %110, %108 : vector<8x32xf32>
    %115 = vector.extract_strided_slice %13 {offsets = [24, 0], sizes = [8, 96], strides = [1, 1]} : vector<64x96xf32> to vector<8x96xf32>
    %116 = arith.truncf %113 : vector<8x32xf32> to vector<8x32xbf16>
    %c0_41 = arith.constant 0 : index
    %c0_42 = arith.constant 0 : index
    %117 = vector.load %arg5[%c0_41, %c0_42] : memref<32x96xbf16, #tpu.memory_space<vmem>>, vector<32x96xbf16>
    %cst_43 = arith.constant dense<0.000000e+00> : vector<8x96xf32>
    %118 = tpu.matmul %116, %117, %cst_43 {dimension_numbers = #tpu.dot_dimension_numbers<[1], [0], [0], [1], [0, 0, 1, 1], [], []>} : vector<8x32xbf16>, vector<32x96xbf16>, vector<8x96xf32> -> vector<8x96xf32>
    %119 = arith.addf %118, %2 : vector<8x96xf32>
    %120 = vector.extract_strided_slice %115 {offsets = [0, 0], sizes = [8, 64], strides = [1, 1]} : vector<8x96xf32> to vector<8x64xf32>
    %121 = vector.extract_strided_slice %119 {offsets = [0, 0], sizes = [8, 64], strides = [1, 1]} : vector<8x96xf32> to vector<8x64xf32>
    %122 = arith.addf %120, %121 : vector<8x64xf32>
    %123 = arith.negf %122 : vector<8x64xf32>
    %124 = math.exp %123 : vector<8x64xf32>
    %cst_44 = arith.constant 1.000000e+00 : f32
    %125 = vector.broadcast %cst_44 : f32 to vector<8x64xf32>
    %126 = arith.addf %125, %124 : vector<8x64xf32>
    %127 = arith.divf %125, %126 : vector<8x64xf32>
    %128 = vector.extract_strided_slice %127 {offsets = [0, 0], sizes = [8, 32], strides = [1, 1]} : vector<8x64xf32> to vector<8x32xf32>
    %129 = vector.extract_strided_slice %127 {offsets = [0, 32], sizes = [8, 32], strides = [1, 1]} : vector<8x64xf32> to vector<8x32xf32>
    %130 = vector.extract_strided_slice %115 {offsets = [0, 64], sizes = [8, 32], strides = [1, 1]} : vector<8x96xf32> to vector<8x32xf32>
    %131 = vector.extract_strided_slice %119 {offsets = [0, 64], sizes = [8, 32], strides = [1, 1]} : vector<8x96xf32> to vector<8x32xf32>
    %132 = arith.mulf %128, %131 : vector<8x32xf32>
    %133 = arith.addf %130, %132 : vector<8x32xf32>
    %134 = math.tanh %133 : vector<8x32xf32>
    %cst_45 = arith.constant 1.000000e+00 : f32
    %135 = vector.broadcast %cst_45 : f32 to vector<8x32xf32>
    %136 = arith.subf %135, %129 : vector<8x32xf32>
    %137 = arith.mulf %136, %134 : vector<8x32xf32>
    %138 = arith.mulf %129, %113 : vector<8x32xf32>
    %139 = arith.addf %137, %138 : vector<8x32xf32>
    %c3 = arith.constant 3 : index
    %c0_46 = arith.constant 0 : index
    %c0_47 = arith.constant 0 : index
    %140 = vector.load %arg2[%c3, %c0_46, %c0_47] : memref<8x8x32xf32, #tpu.memory_space<vmem>>, vector<1x8x32xf32>
    %141 = vector.shape_cast %140 : vector<1x8x32xf32> to vector<8x32xf32>
    %142 = arith.subf %139, %113 : vector<8x32xf32>
    %143 = arith.mulf %141, %142 : vector<8x32xf32>
    %144 = arith.addf %113, %143 : vector<8x32xf32>
    %145 = arith.mulf %141, %139 : vector<8x32xf32>
    %146 = vector.extract_strided_slice %13 {offsets = [32, 0], sizes = [8, 96], strides = [1, 1]} : vector<64x96xf32> to vector<8x96xf32>
    %147 = arith.truncf %144 : vector<8x32xf32> to vector<8x32xbf16>
    %c0_48 = arith.constant 0 : index
    %c0_49 = arith.constant 0 : index
    %148 = vector.load %arg5[%c0_48, %c0_49] : memref<32x96xbf16, #tpu.memory_space<vmem>>, vector<32x96xbf16>
    %cst_50 = arith.constant dense<0.000000e+00> : vector<8x96xf32>
    %149 = tpu.matmul %147, %148, %cst_50 {dimension_numbers = #tpu.dot_dimension_numbers<[1], [0], [0], [1], [0, 0, 1, 1], [], []>} : vector<8x32xbf16>, vector<32x96xbf16>, vector<8x96xf32> -> vector<8x96xf32>
    %150 = arith.addf %149, %2 : vector<8x96xf32>
    %151 = vector.extract_strided_slice %146 {offsets = [0, 0], sizes = [8, 64], strides = [1, 1]} : vector<8x96xf32> to vector<8x64xf32>
    %152 = vector.extract_strided_slice %150 {offsets = [0, 0], sizes = [8, 64], strides = [1, 1]} : vector<8x96xf32> to vector<8x64xf32>
    %153 = arith.addf %151, %152 : vector<8x64xf32>
    %154 = arith.negf %153 : vector<8x64xf32>
    %155 = math.exp %154 : vector<8x64xf32>
    %cst_51 = arith.constant 1.000000e+00 : f32
    %156 = vector.broadcast %cst_51 : f32 to vector<8x64xf32>
    %157 = arith.addf %156, %155 : vector<8x64xf32>
    %158 = arith.divf %156, %157 : vector<8x64xf32>
    %159 = vector.extract_strided_slice %158 {offsets = [0, 0], sizes = [8, 32], strides = [1, 1]} : vector<8x64xf32> to vector<8x32xf32>
    %160 = vector.extract_strided_slice %158 {offsets = [0, 32], sizes = [8, 32], strides = [1, 1]} : vector<8x64xf32> to vector<8x32xf32>
    %161 = vector.extract_strided_slice %146 {offsets = [0, 64], sizes = [8, 32], strides = [1, 1]} : vector<8x96xf32> to vector<8x32xf32>
    %162 = vector.extract_strided_slice %150 {offsets = [0, 64], sizes = [8, 32], strides = [1, 1]} : vector<8x96xf32> to vector<8x32xf32>
    %163 = arith.mulf %159, %162 : vector<8x32xf32>
    %164 = arith.addf %161, %163 : vector<8x32xf32>
    %165 = math.tanh %164 : vector<8x32xf32>
    %cst_52 = arith.constant 1.000000e+00 : f32
    %166 = vector.broadcast %cst_52 : f32 to vector<8x32xf32>
    %167 = arith.subf %166, %160 : vector<8x32xf32>
    %168 = arith.mulf %167, %165 : vector<8x32xf32>
    %169 = arith.mulf %160, %144 : vector<8x32xf32>
    %170 = arith.addf %168, %169 : vector<8x32xf32>
    %c4 = arith.constant 4 : index
    %c0_53 = arith.constant 0 : index
    %c0_54 = arith.constant 0 : index
    %171 = vector.load %arg2[%c4, %c0_53, %c0_54] : memref<8x8x32xf32, #tpu.memory_space<vmem>>, vector<1x8x32xf32>
    %172 = vector.shape_cast %171 : vector<1x8x32xf32> to vector<8x32xf32>
    %173 = arith.subf %170, %144 : vector<8x32xf32>
    %174 = arith.mulf %172, %173 : vector<8x32xf32>
    %175 = arith.addf %144, %174 : vector<8x32xf32>
    %176 = arith.mulf %172, %170 : vector<8x32xf32>
    %177 = vector.extract_strided_slice %13 {offsets = [40, 0], sizes = [8, 96], strides = [1, 1]} : vector<64x96xf32> to vector<8x96xf32>
    %178 = arith.truncf %175 : vector<8x32xf32> to vector<8x32xbf16>
    %c0_55 = arith.constant 0 : index
    %c0_56 = arith.constant 0 : index
    %179 = vector.load %arg5[%c0_55, %c0_56] : memref<32x96xbf16, #tpu.memory_space<vmem>>, vector<32x96xbf16>
    %cst_57 = arith.constant dense<0.000000e+00> : vector<8x96xf32>
    %180 = tpu.matmul %178, %179, %cst_57 {dimension_numbers = #tpu.dot_dimension_numbers<[1], [0], [0], [1], [0, 0, 1, 1], [], []>} : vector<8x32xbf16>, vector<32x96xbf16>, vector<8x96xf32> -> vector<8x96xf32>
    %181 = arith.addf %180, %2 : vector<8x96xf32>
    %182 = vector.extract_strided_slice %177 {offsets = [0, 0], sizes = [8, 64], strides = [1, 1]} : vector<8x96xf32> to vector<8x64xf32>
    %183 = vector.extract_strided_slice %181 {offsets = [0, 0], sizes = [8, 64], strides = [1, 1]} : vector<8x96xf32> to vector<8x64xf32>
    %184 = arith.addf %182, %183 : vector<8x64xf32>
    %185 = arith.negf %184 : vector<8x64xf32>
    %186 = math.exp %185 : vector<8x64xf32>
    %cst_58 = arith.constant 1.000000e+00 : f32
    %187 = vector.broadcast %cst_58 : f32 to vector<8x64xf32>
    %188 = arith.addf %187, %186 : vector<8x64xf32>
    %189 = arith.divf %187, %188 : vector<8x64xf32>
    %190 = vector.extract_strided_slice %189 {offsets = [0, 0], sizes = [8, 32], strides = [1, 1]} : vector<8x64xf32> to vector<8x32xf32>
    %191 = vector.extract_strided_slice %189 {offsets = [0, 32], sizes = [8, 32], strides = [1, 1]} : vector<8x64xf32> to vector<8x32xf32>
    %192 = vector.extract_strided_slice %177 {offsets = [0, 64], sizes = [8, 32], strides = [1, 1]} : vector<8x96xf32> to vector<8x32xf32>
    %193 = vector.extract_strided_slice %181 {offsets = [0, 64], sizes = [8, 32], strides = [1, 1]} : vector<8x96xf32> to vector<8x32xf32>
    %194 = arith.mulf %190, %193 : vector<8x32xf32>
    %195 = arith.addf %192, %194 : vector<8x32xf32>
    %196 = math.tanh %195 : vector<8x32xf32>
    %cst_59 = arith.constant 1.000000e+00 : f32
    %197 = vector.broadcast %cst_59 : f32 to vector<8x32xf32>
    %198 = arith.subf %197, %191 : vector<8x32xf32>
    %199 = arith.mulf %198, %196 : vector<8x32xf32>
    %200 = arith.mulf %191, %175 : vector<8x32xf32>
    %201 = arith.addf %199, %200 : vector<8x32xf32>
    %c5 = arith.constant 5 : index
    %c0_60 = arith.constant 0 : index
    %c0_61 = arith.constant 0 : index
    %202 = vector.load %arg2[%c5, %c0_60, %c0_61] : memref<8x8x32xf32, #tpu.memory_space<vmem>>, vector<1x8x32xf32>
    %203 = vector.shape_cast %202 : vector<1x8x32xf32> to vector<8x32xf32>
    %204 = arith.subf %201, %175 : vector<8x32xf32>
    %205 = arith.mulf %203, %204 : vector<8x32xf32>
    %206 = arith.addf %175, %205 : vector<8x32xf32>
    %207 = arith.mulf %203, %201 : vector<8x32xf32>
    %208 = vector.extract_strided_slice %13 {offsets = [48, 0], sizes = [8, 96], strides = [1, 1]} : vector<64x96xf32> to vector<8x96xf32>
    %209 = arith.truncf %206 : vector<8x32xf32> to vector<8x32xbf16>
    %c0_62 = arith.constant 0 : index
    %c0_63 = arith.constant 0 : index
    %210 = vector.load %arg5[%c0_62, %c0_63] : memref<32x96xbf16, #tpu.memory_space<vmem>>, vector<32x96xbf16>
    %cst_64 = arith.constant dense<0.000000e+00> : vector<8x96xf32>
    %211 = tpu.matmul %209, %210, %cst_64 {dimension_numbers = #tpu.dot_dimension_numbers<[1], [0], [0], [1], [0, 0, 1, 1], [], []>} : vector<8x32xbf16>, vector<32x96xbf16>, vector<8x96xf32> -> vector<8x96xf32>
    %212 = arith.addf %211, %2 : vector<8x96xf32>
    %213 = vector.extract_strided_slice %208 {offsets = [0, 0], sizes = [8, 64], strides = [1, 1]} : vector<8x96xf32> to vector<8x64xf32>
    %214 = vector.extract_strided_slice %212 {offsets = [0, 0], sizes = [8, 64], strides = [1, 1]} : vector<8x96xf32> to vector<8x64xf32>
    %215 = arith.addf %213, %214 : vector<8x64xf32>
    %216 = arith.negf %215 : vector<8x64xf32>
    %217 = math.exp %216 : vector<8x64xf32>
    %cst_65 = arith.constant 1.000000e+00 : f32
    %218 = vector.broadcast %cst_65 : f32 to vector<8x64xf32>
    %219 = arith.addf %218, %217 : vector<8x64xf32>
    %220 = arith.divf %218, %219 : vector<8x64xf32>
    %221 = vector.extract_strided_slice %220 {offsets = [0, 0], sizes = [8, 32], strides = [1, 1]} : vector<8x64xf32> to vector<8x32xf32>
    %222 = vector.extract_strided_slice %220 {offsets = [0, 32], sizes = [8, 32], strides = [1, 1]} : vector<8x64xf32> to vector<8x32xf32>
    %223 = vector.extract_strided_slice %208 {offsets = [0, 64], sizes = [8, 32], strides = [1, 1]} : vector<8x96xf32> to vector<8x32xf32>
    %224 = vector.extract_strided_slice %212 {offsets = [0, 64], sizes = [8, 32], strides = [1, 1]} : vector<8x96xf32> to vector<8x32xf32>
    %225 = arith.mulf %221, %224 : vector<8x32xf32>
    %226 = arith.addf %223, %225 : vector<8x32xf32>
    %227 = math.tanh %226 : vector<8x32xf32>
    %cst_66 = arith.constant 1.000000e+00 : f32
    %228 = vector.broadcast %cst_66 : f32 to vector<8x32xf32>
    %229 = arith.subf %228, %222 : vector<8x32xf32>
    %230 = arith.mulf %229, %227 : vector<8x32xf32>
    %231 = arith.mulf %222, %206 : vector<8x32xf32>
    %232 = arith.addf %230, %231 : vector<8x32xf32>
    %c6 = arith.constant 6 : index
    %c0_67 = arith.constant 0 : index
    %c0_68 = arith.constant 0 : index
    %233 = vector.load %arg2[%c6, %c0_67, %c0_68] : memref<8x8x32xf32, #tpu.memory_space<vmem>>, vector<1x8x32xf32>
    %234 = vector.shape_cast %233 : vector<1x8x32xf32> to vector<8x32xf32>
    %235 = arith.subf %232, %206 : vector<8x32xf32>
    %236 = arith.mulf %234, %235 : vector<8x32xf32>
    %237 = arith.addf %206, %236 : vector<8x32xf32>
    %238 = arith.mulf %234, %232 : vector<8x32xf32>
    %239 = vector.extract_strided_slice %13 {offsets = [56, 0], sizes = [8, 96], strides = [1, 1]} : vector<64x96xf32> to vector<8x96xf32>
    %240 = arith.truncf %237 : vector<8x32xf32> to vector<8x32xbf16>
    %c0_69 = arith.constant 0 : index
    %c0_70 = arith.constant 0 : index
    %241 = vector.load %arg5[%c0_69, %c0_70] : memref<32x96xbf16, #tpu.memory_space<vmem>>, vector<32x96xbf16>
    %cst_71 = arith.constant dense<0.000000e+00> : vector<8x96xf32>
    %242 = tpu.matmul %240, %241, %cst_71 {dimension_numbers = #tpu.dot_dimension_numbers<[1], [0], [0], [1], [0, 0, 1, 1], [], []>} : vector<8x32xbf16>, vector<32x96xbf16>, vector<8x96xf32> -> vector<8x96xf32>
    %243 = arith.addf %242, %2 : vector<8x96xf32>
    %244 = vector.extract_strided_slice %239 {offsets = [0, 0], sizes = [8, 64], strides = [1, 1]} : vector<8x96xf32> to vector<8x64xf32>
    %245 = vector.extract_strided_slice %243 {offsets = [0, 0], sizes = [8, 64], strides = [1, 1]} : vector<8x96xf32> to vector<8x64xf32>
    %246 = arith.addf %244, %245 : vector<8x64xf32>
    %247 = arith.negf %246 : vector<8x64xf32>
    %248 = math.exp %247 : vector<8x64xf32>
    %cst_72 = arith.constant 1.000000e+00 : f32
    %249 = vector.broadcast %cst_72 : f32 to vector<8x64xf32>
    %250 = arith.addf %249, %248 : vector<8x64xf32>
    %251 = arith.divf %249, %250 : vector<8x64xf32>
    %252 = vector.extract_strided_slice %251 {offsets = [0, 0], sizes = [8, 32], strides = [1, 1]} : vector<8x64xf32> to vector<8x32xf32>
    %253 = vector.extract_strided_slice %251 {offsets = [0, 32], sizes = [8, 32], strides = [1, 1]} : vector<8x64xf32> to vector<8x32xf32>
    %254 = vector.extract_strided_slice %239 {offsets = [0, 64], sizes = [8, 32], strides = [1, 1]} : vector<8x96xf32> to vector<8x32xf32>
    %255 = vector.extract_strided_slice %243 {offsets = [0, 64], sizes = [8, 32], strides = [1, 1]} : vector<8x96xf32> to vector<8x32xf32>
    %256 = arith.mulf %252, %255 : vector<8x32xf32>
    %257 = arith.addf %254, %256 : vector<8x32xf32>
    %258 = math.tanh %257 : vector<8x32xf32>
    %cst_73 = arith.constant 1.000000e+00 : f32
    %259 = vector.broadcast %cst_73 : f32 to vector<8x32xf32>
    %260 = arith.subf %259, %253 : vector<8x32xf32>
    %261 = arith.mulf %260, %258 : vector<8x32xf32>
    %262 = arith.mulf %253, %237 : vector<8x32xf32>
    %263 = arith.addf %261, %262 : vector<8x32xf32>
    %c7 = arith.constant 7 : index
    %c0_74 = arith.constant 0 : index
    %c0_75 = arith.constant 0 : index
    %264 = vector.load %arg2[%c7, %c0_74, %c0_75] : memref<8x8x32xf32, #tpu.memory_space<vmem>>, vector<1x8x32xf32>
    %265 = vector.shape_cast %264 : vector<1x8x32xf32> to vector<8x32xf32>
    %266 = arith.subf %263, %237 : vector<8x32xf32>
    %267 = arith.mulf %265, %266 : vector<8x32xf32>
    %268 = arith.addf %237, %267 : vector<8x32xf32>
    %269 = arith.mulf %265, %263 : vector<8x32xf32>
    %270 = arith.truncf %268 : vector<8x32xf32> to vector<8x32xbf16>
    %c0_76 = arith.constant 0 : index
    %c0_77 = arith.constant 0 : index
    %271 = vector.load %arg8[%c0_76, %c0_77] : memref<32x32xbf16, #tpu.memory_space<vmem>>, vector<32x32xbf16>
    %cst_78 = arith.constant dense<0.000000e+00> : vector<8x32xf32>
    %272 = tpu.matmul %270, %271, %cst_78 {dimension_numbers = #tpu.dot_dimension_numbers<[1], [0], [0], [1], [0, 0, 1, 1], [], []>} : vector<8x32xbf16>, vector<32x32xbf16>, vector<8x32xf32> -> vector<8x32xf32>
    %c0_79 = arith.constant 0 : index
    %c0_80 = arith.constant 0 : index
    %273 = vector.load %arg9[%c0_79, %c0_80] : memref<1x32xf32, #tpu.memory_space<vmem>>, vector<1x32xf32>
    %274 = vector.broadcast %273 : vector<1x32xf32> to vector<8x32xf32>
    %275 = arith.addf %272, %274 : vector<8x32xf32>
    %276 = math.tanh %275 : vector<8x32xf32>
    %277 = arith.truncf %52 : vector<8x32xf32> to vector<8x32xbf16>
    %c0_81 = arith.constant 0 : index
    %c0_82 = arith.constant 0 : index
    %278 = vector.load %arg10[%c0_81, %c0_82] : memref<32x32xbf16, #tpu.memory_space<vmem>>, vector<32x32xbf16>
    %cst_83 = arith.constant dense<0.000000e+00> : vector<8x32xf32>
    %279 = tpu.matmul %277, %278, %cst_83 {dimension_numbers = #tpu.dot_dimension_numbers<[1], [0], [0], [1], [0, 0, 1, 1], [], []>} : vector<8x32xbf16>, vector<32x32xbf16>, vector<8x32xf32> -> vector<8x32xf32>
    %280 = arith.truncf %83 : vector<8x32xf32> to vector<8x32xbf16>
    %c0_84 = arith.constant 0 : index
    %c0_85 = arith.constant 0 : index
    %281 = vector.load %arg10[%c0_84, %c0_85] : memref<32x32xbf16, #tpu.memory_space<vmem>>, vector<32x32xbf16>
    %cst_86 = arith.constant dense<0.000000e+00> : vector<8x32xf32>
    %282 = tpu.matmul %280, %281, %cst_86 {dimension_numbers = #tpu.dot_dimension_numbers<[1], [0], [0], [1], [0, 0, 1, 1], [], []>} : vector<8x32xbf16>, vector<32x32xbf16>, vector<8x32xf32> -> vector<8x32xf32>
    %283 = arith.truncf %114 : vector<8x32xf32> to vector<8x32xbf16>
    %c0_87 = arith.constant 0 : index
    %c0_88 = arith.constant 0 : index
    %284 = vector.load %arg10[%c0_87, %c0_88] : memref<32x32xbf16, #tpu.memory_space<vmem>>, vector<32x32xbf16>
    %cst_89 = arith.constant dense<0.000000e+00> : vector<8x32xf32>
    %285 = tpu.matmul %283, %284, %cst_89 {dimension_numbers = #tpu.dot_dimension_numbers<[1], [0], [0], [1], [0, 0, 1, 1], [], []>} : vector<8x32xbf16>, vector<32x32xbf16>, vector<8x32xf32> -> vector<8x32xf32>
    %286 = arith.truncf %145 : vector<8x32xf32> to vector<8x32xbf16>
    %c0_90 = arith.constant 0 : index
    %c0_91 = arith.constant 0 : index
    %287 = vector.load %arg10[%c0_90, %c0_91] : memref<32x32xbf16, #tpu.memory_space<vmem>>, vector<32x32xbf16>
    %cst_92 = arith.constant dense<0.000000e+00> : vector<8x32xf32>
    %288 = tpu.matmul %286, %287, %cst_92 {dimension_numbers = #tpu.dot_dimension_numbers<[1], [0], [0], [1], [0, 0, 1, 1], [], []>} : vector<8x32xbf16>, vector<32x32xbf16>, vector<8x32xf32> -> vector<8x32xf32>
    %289 = arith.truncf %176 : vector<8x32xf32> to vector<8x32xbf16>
    %c0_93 = arith.constant 0 : index
    %c0_94 = arith.constant 0 : index
    %290 = vector.load %arg10[%c0_93, %c0_94] : memref<32x32xbf16, #tpu.memory_space<vmem>>, vector<32x32xbf16>
    %cst_95 = arith.constant dense<0.000000e+00> : vector<8x32xf32>
    %291 = tpu.matmul %289, %290, %cst_95 {dimension_numbers = #tpu.dot_dimension_numbers<[1], [0], [0], [1], [0, 0, 1, 1], [], []>} : vector<8x32xbf16>, vector<32x32xbf16>, vector<8x32xf32> -> vector<8x32xf32>
    %292 = arith.truncf %207 : vector<8x32xf32> to vector<8x32xbf16>
    %c0_96 = arith.constant 0 : index
    %c0_97 = arith.constant 0 : index
    %293 = vector.load %arg10[%c0_96, %c0_97] : memref<32x32xbf16, #tpu.memory_space<vmem>>, vector<32x32xbf16>
    %cst_98 = arith.constant dense<0.000000e+00> : vector<8x32xf32>
    %294 = tpu.matmul %292, %293, %cst_98 {dimension_numbers = #tpu.dot_dimension_numbers<[1], [0], [0], [1], [0, 0, 1, 1], [], []>} : vector<8x32xbf16>, vector<32x32xbf16>, vector<8x32xf32> -> vector<8x32xf32>
    %295 = arith.truncf %238 : vector<8x32xf32> to vector<8x32xbf16>
    %c0_99 = arith.constant 0 : index
    %c0_100 = arith.constant 0 : index
    %296 = vector.load %arg10[%c0_99, %c0_100] : memref<32x32xbf16, #tpu.memory_space<vmem>>, vector<32x32xbf16>
    %cst_101 = arith.constant dense<0.000000e+00> : vector<8x32xf32>
    %297 = tpu.matmul %295, %296, %cst_101 {dimension_numbers = #tpu.dot_dimension_numbers<[1], [0], [0], [1], [0, 0, 1, 1], [], []>} : vector<8x32xbf16>, vector<32x32xbf16>, vector<8x32xf32> -> vector<8x32xf32>
    %298 = arith.truncf %269 : vector<8x32xf32> to vector<8x32xbf16>
    %c0_102 = arith.constant 0 : index
    %c0_103 = arith.constant 0 : index
    %299 = vector.load %arg10[%c0_102, %c0_103] : memref<32x32xbf16, #tpu.memory_space<vmem>>, vector<32x32xbf16>
    %cst_104 = arith.constant dense<0.000000e+00> : vector<8x32xf32>
    %300 = tpu.matmul %298, %299, %cst_104 {dimension_numbers = #tpu.dot_dimension_numbers<[1], [0], [0], [1], [0, 0, 1, 1], [], []>} : vector<8x32xbf16>, vector<32x32xbf16>, vector<8x32xf32> -> vector<8x32xf32>
    %301 = tpu.concatenate %279, %282, %285, %288, %291, %294, %297, %300 in 1 : vector<8x32xf32>, vector<8x32xf32>, vector<8x32xf32>, vector<8x32xf32>, vector<8x32xf32>, vector<8x32xf32>, vector<8x32xf32>, vector<8x32xf32> -> vector<8x256xf32>
    %302 = arith.truncf %276 : vector<8x32xf32> to vector<8x32xbf16>
    %c0_105 = arith.constant 0 : index
    %c0_106 = arith.constant 0 : index
    %303 = vector.load %arg11[%c0_105, %c0_106] : memref<32x352xbf16, #tpu.memory_space<vmem>>, vector<32x352xbf16>
    %cst_107 = arith.constant dense<0.000000e+00> : vector<8x352xf32>
    %304 = tpu.matmul %302, %303, %cst_107 {dimension_numbers = #tpu.dot_dimension_numbers<[1], [0], [0], [1], [0, 0, 1, 1], [], []>} : vector<8x32xbf16>, vector<32x352xbf16>, vector<8x352xf32> -> vector<8x352xf32>
    %305 = vector.extract_strided_slice %304 {offsets = [0, 0], sizes = [8, 256], strides = [1, 1]} : vector<8x352xf32> to vector<8x256xf32>
    %306 = vector.extract_strided_slice %304 {offsets = [0, 256], sizes = [8, 96], strides = [1, 1]} : vector<8x352xf32> to vector<8x96xf32>
    %307 = arith.addf %306, %5 : vector<8x96xf32>
    %308 = arith.addf %301, %305 : vector<8x256xf32>
    %309 = math.tanh %308 : vector<8x256xf32>
    %310 = arith.truncf %309 : vector<8x256xf32> to vector<8x256xbf16>
    %c0_108 = arith.constant 0 : index
    %c0_109 = arith.constant 0 : index
    %311 = vector.load %arg13[%c0_108, %c0_109] : memref<256x128xbf16, #tpu.memory_space<vmem>>, vector<256x128xbf16>
    %cst_110 = arith.constant dense<0.000000e+00> : vector<8x128xf32>
    %312 = tpu.matmul %310, %311, %cst_110 {dimension_numbers = #tpu.dot_dimension_numbers<[1], [0], [0], [1], [0, 0, 1, 1], [], []>} : vector<8x256xbf16>, vector<256x128xbf16>, vector<8x128xf32> -> vector<8x128xf32>
    %313 = math.exp %312 : vector<8x128xf32>
    %314 = arith.mulf %313, %6 : vector<8x128xf32>
    %cst_111 = arith.constant dense<0.000000e+00> : vector<8xf32>
    %315 = vector.multi_reduction <add>, %314, %cst_111 [1] : vector<8x128xf32> to vector<8xf32>
    %316 = vector.shape_cast %315 : vector<8xf32> to vector<8x1xf32>
    %cst_112 = arith.constant 1.000000e-30 : f32
    %317 = vector.broadcast %cst_112 : f32 to vector<8x1xf32>
    %318 = arith.maximumf %316, %317 : vector<8x1xf32>
    %319 = tpu.reciprocal %318 : vector<8x1xf32> -> vector<8x1xf32>
    %320 = vector.broadcast %319 : vector<8x1xf32> to vector<8x128xf32>
    %321 = arith.mulf %314, %320 : vector<8x128xf32>
    %322 = vector.extract_strided_slice %321 {offsets = [0, 64], sizes = [8, 1], strides = [1, 1]} : vector<8x128xf32> to vector<8x1xf32>
    %323 = vector.broadcast %322 : vector<8x1xf32> to vector<8x32xf32>
    %324 = arith.mulf %323, %52 : vector<8x32xf32>
    %325 = vector.extract_strided_slice %321 {offsets = [0, 65], sizes = [8, 1], strides = [1, 1]} : vector<8x128xf32> to vector<8x1xf32>
    %326 = vector.broadcast %325 : vector<8x1xf32> to vector<8x32xf32>
    %327 = arith.mulf %326, %83 : vector<8x32xf32>
    %328 = arith.addf %324, %327 : vector<8x32xf32>
    %329 = vector.extract_strided_slice %321 {offsets = [0, 66], sizes = [8, 1], strides = [1, 1]} : vector<8x128xf32> to vector<8x1xf32>
    %330 = vector.broadcast %329 : vector<8x1xf32> to vector<8x32xf32>
    %331 = arith.mulf %330, %114 : vector<8x32xf32>
    %332 = arith.addf %328, %331 : vector<8x32xf32>
    %333 = vector.extract_strided_slice %321 {offsets = [0, 67], sizes = [8, 1], strides = [1, 1]} : vector<8x128xf32> to vector<8x1xf32>
    %334 = vector.broadcast %333 : vector<8x1xf32> to vector<8x32xf32>
    %335 = arith.mulf %334, %145 : vector<8x32xf32>
    %336 = arith.addf %332, %335 : vector<8x32xf32>
    %337 = vector.extract_strided_slice %321 {offsets = [0, 68], sizes = [8, 1], strides = [1, 1]} : vector<8x128xf32> to vector<8x1xf32>
    %338 = vector.broadcast %337 : vector<8x1xf32> to vector<8x32xf32>
    %339 = arith.mulf %338, %176 : vector<8x32xf32>
    %340 = arith.addf %336, %339 : vector<8x32xf32>
    %341 = vector.extract_strided_slice %321 {offsets = [0, 69], sizes = [8, 1], strides = [1, 1]} : vector<8x128xf32> to vector<8x1xf32>
    %342 = vector.broadcast %341 : vector<8x1xf32> to vector<8x32xf32>
    %343 = arith.mulf %342, %207 : vector<8x32xf32>
    %344 = arith.addf %340, %343 : vector<8x32xf32>
    %345 = vector.extract_strided_slice %321 {offsets = [0, 70], sizes = [8, 1], strides = [1, 1]} : vector<8x128xf32> to vector<8x1xf32>
    %346 = vector.broadcast %345 : vector<8x1xf32> to vector<8x32xf32>
    %347 = arith.mulf %346, %238 : vector<8x32xf32>
    %348 = arith.addf %344, %347 : vector<8x32xf32>
    %349 = vector.extract_strided_slice %321 {offsets = [0, 71], sizes = [8, 1], strides = [1, 1]} : vector<8x128xf32> to vector<8x1xf32>
    %350 = vector.broadcast %349 : vector<8x1xf32> to vector<8x32xf32>
    %351 = arith.mulf %350, %269 : vector<8x32xf32>
    %352 = arith.addf %348, %351 : vector<8x32xf32>
    %353 = arith.truncf %352 : vector<8x32xf32> to vector<8x32xbf16>
    %c0_113 = arith.constant 0 : index
    %c0_114 = arith.constant 0 : index
    %354 = vector.load %arg16[%c0_113, %c0_114] : memref<32x128xbf16, #tpu.memory_space<vmem>>, vector<32x128xbf16>
    %cst_115 = arith.constant dense<0.000000e+00> : vector<8x128xf32>
    %355 = tpu.matmul %353, %354, %cst_115 {dimension_numbers = #tpu.dot_dimension_numbers<[1], [0], [0], [1], [0, 0, 1, 1], [], []>} : vector<8x32xbf16>, vector<32x128xbf16>, vector<8x128xf32> -> vector<8x128xf32>
    %356 = vector.extract_strided_slice %20 {offsets = [0, 0], sizes = [8, 128], strides = [1, 1]} : vector<64x128xf32> to vector<8x128xf32>
    %357 = vector.extract_strided_slice %356 {offsets = [0, 0], sizes = [8, 96], strides = [1, 1]} : vector<8x128xf32> to vector<8x96xf32>
    %358 = vector.extract_strided_slice %355 {offsets = [0, 0], sizes = [8, 96], strides = [1, 1]} : vector<8x128xf32> to vector<8x96xf32>
    %359 = arith.addf %357, %358 : vector<8x96xf32>
    %360 = vector.extract_strided_slice %359 {offsets = [0, 0], sizes = [8, 64], strides = [1, 1]} : vector<8x96xf32> to vector<8x64xf32>
    %361 = vector.extract_strided_slice %307 {offsets = [0, 0], sizes = [8, 64], strides = [1, 1]} : vector<8x96xf32> to vector<8x64xf32>
    %362 = arith.addf %360, %361 : vector<8x64xf32>
    %363 = arith.negf %362 : vector<8x64xf32>
    %364 = math.exp %363 : vector<8x64xf32>
    %cst_116 = arith.constant 1.000000e+00 : f32
    %365 = vector.broadcast %cst_116 : f32 to vector<8x64xf32>
    %366 = arith.addf %365, %364 : vector<8x64xf32>
    %367 = arith.divf %365, %366 : vector<8x64xf32>
    %368 = vector.extract_strided_slice %367 {offsets = [0, 0], sizes = [8, 32], strides = [1, 1]} : vector<8x64xf32> to vector<8x32xf32>
    %369 = vector.extract_strided_slice %367 {offsets = [0, 32], sizes = [8, 32], strides = [1, 1]} : vector<8x64xf32> to vector<8x32xf32>
    %370 = vector.extract_strided_slice %359 {offsets = [0, 64], sizes = [8, 32], strides = [1, 1]} : vector<8x96xf32> to vector<8x32xf32>
    %371 = vector.extract_strided_slice %307 {offsets = [0, 64], sizes = [8, 32], strides = [1, 1]} : vector<8x96xf32> to vector<8x32xf32>
    %372 = arith.mulf %368, %371 : vector<8x32xf32>
    %373 = arith.addf %370, %372 : vector<8x32xf32>
    %374 = math.tanh %373 : vector<8x32xf32>
    %cst_117 = arith.constant 1.000000e+00 : f32
    %375 = vector.broadcast %cst_117 : f32 to vector<8x32xf32>
    %376 = arith.subf %375, %369 : vector<8x32xf32>
    %377 = arith.mulf %376, %374 : vector<8x32xf32>
    %378 = arith.mulf %369, %276 : vector<8x32xf32>
    %379 = arith.addf %377, %378 : vector<8x32xf32>
    %380 = vector.extract_strided_slice %356 {offsets = [0, 96], sizes = [8, 32], strides = [1, 1]} : vector<8x128xf32> to vector<8x32xf32>
    %381 = vector.extract_strided_slice %355 {offsets = [0, 96], sizes = [8, 32], strides = [1, 1]} : vector<8x128xf32> to vector<8x32xf32>
    %382 = arith.addf %380, %381 : vector<8x32xf32>
    %383 = arith.truncf %379 : vector<8x32xf32> to vector<8x32xbf16>
    %c0_118 = arith.constant 0 : index
    %c0_119 = arith.constant 0 : index
    %384 = vector.load %arg17[%c0_118, %c0_119] : memref<32x32xbf16, #tpu.memory_space<vmem>>, vector<32x32xbf16>
    %cst_120 = arith.constant dense<0.000000e+00> : vector<8x32xf32>
    %385 = tpu.matmul %383, %384, %cst_120 {dimension_numbers = #tpu.dot_dimension_numbers<[1], [0], [0], [1], [0, 0, 1, 1], [], []>} : vector<8x32xbf16>, vector<32x32xbf16>, vector<8x32xf32> -> vector<8x32xf32>
    %386 = arith.addf %382, %385 : vector<8x32xf32>
    %387 = math.tanh %386 : vector<8x32xf32>
    %388 = arith.truncf %387 : vector<8x32xf32> to vector<8x32xbf16>
    %c0_121 = arith.constant 0 : index
    %c0_122 = arith.constant 0 : index
    %389 = vector.load %arg18[%c0_121, %c0_122] : memref<32x128xbf16, #tpu.memory_space<vmem>>, vector<32x128xbf16>
    %cst_123 = arith.constant dense<0.000000e+00> : vector<8x128xf32>
    %390 = tpu.matmul %388, %389, %cst_123 {dimension_numbers = #tpu.dot_dimension_numbers<[1], [0], [0], [1], [0, 0, 1, 1], [], []>} : vector<8x32xbf16>, vector<32x128xbf16>, vector<8x128xf32> -> vector<8x128xf32>
    %391 = arith.addf %390, %321 : vector<8x128xf32>
    %c0_124 = arith.constant 0 : index
    %c0_125 = arith.constant 0 : index
    %c0_126 = arith.constant 0 : index
    %392 = vector.load %arg19[%c0_124, %c0_125, %c0_126] : memref<8x8x128xf32, #tpu.memory_space<vmem>>, vector<1x8x128xf32>
    %393 = vector.shape_cast %392 : vector<1x8x128xf32> to vector<8x128xf32>
    %394 = vector.shape_cast %391 : vector<8x128xf32> to vector<1x8x128xf32>
    tpu.vector_store %arg19[%c0_124, %c0_125, %c0_126], %394 {strides = array<i32>} : memref<8x8x128xf32, #tpu.memory_space<vmem>>, vector<1x8x128xf32>,
    %395 = arith.truncf %379 : vector<8x32xf32> to vector<8x32xbf16>
    %c0_127 = arith.constant 0 : index
    %c0_128 = arith.constant 0 : index
    %396 = vector.load %arg11[%c0_127, %c0_128] : memref<32x352xbf16, #tpu.memory_space<vmem>>, vector<32x352xbf16>
    %cst_129 = arith.constant dense<0.000000e+00> : vector<8x352xf32>
    %397 = tpu.matmul %395, %396, %cst_129 {dimension_numbers = #tpu.dot_dimension_numbers<[1], [0], [0], [1], [0, 0, 1, 1], [], []>} : vector<8x32xbf16>, vector<32x352xbf16>, vector<8x352xf32> -> vector<8x352xf32>
    %398 = vector.extract_strided_slice %397 {offsets = [0, 0], sizes = [8, 256], strides = [1, 1]} : vector<8x352xf32> to vector<8x256xf32>
    %399 = vector.extract_strided_slice %397 {offsets = [0, 256], sizes = [8, 96], strides = [1, 1]} : vector<8x352xf32> to vector<8x96xf32>
    %400 = arith.addf %399, %5 : vector<8x96xf32>
    %401 = arith.addf %301, %398 : vector<8x256xf32>
    %402 = math.tanh %401 : vector<8x256xf32>
    %403 = arith.truncf %402 : vector<8x256xf32> to vector<8x256xbf16>
    %c0_130 = arith.constant 0 : index
    %c0_131 = arith.constant 0 : index
    %404 = vector.load %arg13[%c0_130, %c0_131] : memref<256x128xbf16, #tpu.memory_space<vmem>>, vector<256x128xbf16>
    %cst_132 = arith.constant dense<0.000000e+00> : vector<8x128xf32>
    %405 = tpu.matmul %403, %404, %cst_132 {dimension_numbers = #tpu.dot_dimension_numbers<[1], [0], [0], [1], [0, 0, 1, 1], [], []>} : vector<8x256xbf16>, vector<256x128xbf16>, vector<8x128xf32> -> vector<8x128xf32>
    %406 = math.exp %405 : vector<8x128xf32>
    %407 = arith.mulf %406, %6 : vector<8x128xf32>
    %cst_133 = arith.constant dense<0.000000e+00> : vector<8xf32>
    %408 = vector.multi_reduction <add>, %407, %cst_133 [1] : vector<8x128xf32> to vector<8xf32>
    %409 = vector.shape_cast %408 : vector<8xf32> to vector<8x1xf32>
    %cst_134 = arith.constant 1.000000e-30 : f32
    %410 = vector.broadcast %cst_134 : f32 to vector<8x1xf32>
    %411 = arith.maximumf %409, %410 : vector<8x1xf32>
    %412 = tpu.reciprocal %411 : vector<8x1xf32> -> vector<8x1xf32>
    %413 = vector.broadcast %412 : vector<8x1xf32> to vector<8x128xf32>
    %414 = arith.mulf %407, %413 : vector<8x128xf32>
    %415 = vector.extract_strided_slice %414 {offsets = [0, 64], sizes = [8, 1], strides = [1, 1]} : vector<8x128xf32> to vector<8x1xf32>
    %416 = vector.broadcast %415 : vector<8x1xf32> to vector<8x32xf32>
    %417 = arith.mulf %416, %52 : vector<8x32xf32>
    %418 = vector.extract_strided_slice %414 {offsets = [0, 65], sizes = [8, 1], strides = [1, 1]} : vector<8x128xf32> to vector<8x1xf32>
    %419 = vector.broadcast %418 : vector<8x1xf32> to vector<8x32xf32>
    %420 = arith.mulf %419, %83 : vector<8x32xf32>
    %421 = arith.addf %417, %420 : vector<8x32xf32>
    %422 = vector.extract_strided_slice %414 {offsets = [0, 66], sizes = [8, 1], strides = [1, 1]} : vector<8x128xf32> to vector<8x1xf32>
    %423 = vector.broadcast %422 : vector<8x1xf32> to vector<8x32xf32>
    %424 = arith.mulf %423, %114 : vector<8x32xf32>
    %425 = arith.addf %421, %424 : vector<8x32xf32>
    %426 = vector.extract_strided_slice %414 {offsets = [0, 67], sizes = [8, 1], strides = [1, 1]} : vector<8x128xf32> to vector<8x1xf32>
    %427 = vector.broadcast %426 : vector<8x1xf32> to vector<8x32xf32>
    %428 = arith.mulf %427, %145 : vector<8x32xf32>
    %429 = arith.addf %425, %428 : vector<8x32xf32>
    %430 = vector.extract_strided_slice %414 {offsets = [0, 68], sizes = [8, 1], strides = [1, 1]} : vector<8x128xf32> to vector<8x1xf32>
    %431 = vector.broadcast %430 : vector<8x1xf32> to vector<8x32xf32>
    %432 = arith.mulf %431, %176 : vector<8x32xf32>
    %433 = arith.addf %429, %432 : vector<8x32xf32>
    %434 = vector.extract_strided_slice %414 {offsets = [0, 69], sizes = [8, 1], strides = [1, 1]} : vector<8x128xf32> to vector<8x1xf32>
    %435 = vector.broadcast %434 : vector<8x1xf32> to vector<8x32xf32>
    %436 = arith.mulf %435, %207 : vector<8x32xf32>
    %437 = arith.addf %433, %436 : vector<8x32xf32>
    %438 = vector.extract_strided_slice %414 {offsets = [0, 70], sizes = [8, 1], strides = [1, 1]} : vector<8x128xf32> to vector<8x1xf32>
    %439 = vector.broadcast %438 : vector<8x1xf32> to vector<8x32xf32>
    %440 = arith.mulf %439, %238 : vector<8x32xf32>
    %441 = arith.addf %437, %440 : vector<8x32xf32>
    %442 = vector.extract_strided_slice %414 {offsets = [0, 71], sizes = [8, 1], strides = [1, 1]} : vector<8x128xf32> to vector<8x1xf32>
    %443 = vector.broadcast %442 : vector<8x1xf32> to vector<8x32xf32>
    %444 = arith.mulf %443, %269 : vector<8x32xf32>
    %445 = arith.addf %441, %444 : vector<8x32xf32>
    %446 = arith.truncf %445 : vector<8x32xf32> to vector<8x32xbf16>
    %c0_135 = arith.constant 0 : index
    %c0_136 = arith.constant 0 : index
    %447 = vector.load %arg16[%c0_135, %c0_136] : memref<32x128xbf16, #tpu.memory_space<vmem>>, vector<32x128xbf16>
    %cst_137 = arith.constant dense<0.000000e+00> : vector<8x128xf32>
    %448 = tpu.matmul %446, %447, %cst_137 {dimension_numbers = #tpu.dot_dimension_numbers<[1], [0], [0], [1], [0, 0, 1, 1], [], []>} : vector<8x32xbf16>, vector<32x128xbf16>, vector<8x128xf32> -> vector<8x128xf32>
    %449 = vector.extract_strided_slice %20 {offsets = [8, 0], sizes = [8, 128], strides = [1, 1]} : vector<64x128xf32> to vector<8x128xf32>
    %450 = vector.extract_strided_slice %449 {offsets = [0, 0], sizes = [8, 96], strides = [1, 1]} : vector<8x128xf32> to vector<8x96xf32>
    %451 = vector.extract_strided_slice %448 {offsets = [0, 0], sizes = [8, 96], strides = [1, 1]} : vector<8x128xf32> to vector<8x96xf32>
    %452 = arith.addf %450, %451 : vector<8x96xf32>
    %453 = vector.extract_strided_slice %452 {offsets = [0, 0], sizes = [8, 64], strides = [1, 1]} : vector<8x96xf32> to vector<8x64xf32>
    %454 = vector.extract_strided_slice %400 {offsets = [0, 0], sizes = [8, 64], strides = [1, 1]} : vector<8x96xf32> to vector<8x64xf32>
    %455 = arith.addf %453, %454 : vector<8x64xf32>
    %456 = arith.negf %455 : vector<8x64xf32>
    %457 = math.exp %456 : vector<8x64xf32>
    %cst_138 = arith.constant 1.000000e+00 : f32
    %458 = vector.broadcast %cst_138 : f32 to vector<8x64xf32>
    %459 = arith.addf %458, %457 : vector<8x64xf32>
    %460 = arith.divf %458, %459 : vector<8x64xf32>
    %461 = vector.extract_strided_slice %460 {offsets = [0, 0], sizes = [8, 32], strides = [1, 1]} : vector<8x64xf32> to vector<8x32xf32>
    %462 = vector.extract_strided_slice %460 {offsets = [0, 32], sizes = [8, 32], strides = [1, 1]} : vector<8x64xf32> to vector<8x32xf32>
    %463 = vector.extract_strided_slice %452 {offsets = [0, 64], sizes = [8, 32], strides = [1, 1]} : vector<8x96xf32> to vector<8x32xf32>
    %464 = vector.extract_strided_slice %400 {offsets = [0, 64], sizes = [8, 32], strides = [1, 1]} : vector<8x96xf32> to vector<8x32xf32>
    %465 = arith.mulf %461, %464 : vector<8x32xf32>
    %466 = arith.addf %463, %465 : vector<8x32xf32>
    %467 = math.tanh %466 : vector<8x32xf32>
    %cst_139 = arith.constant 1.000000e+00 : f32
    %468 = vector.broadcast %cst_139 : f32 to vector<8x32xf32>
    %469 = arith.subf %468, %462 : vector<8x32xf32>
    %470 = arith.mulf %469, %467 : vector<8x32xf32>
    %471 = arith.mulf %462, %379 : vector<8x32xf32>
    %472 = arith.addf %470, %471 : vector<8x32xf32>
    %473 = vector.extract_strided_slice %449 {offsets = [0, 96], sizes = [8, 32], strides = [1, 1]} : vector<8x128xf32> to vector<8x32xf32>
    %474 = vector.extract_strided_slice %448 {offsets = [0, 96], sizes = [8, 32], strides = [1, 1]} : vector<8x128xf32> to vector<8x32xf32>
    %475 = arith.addf %473, %474 : vector<8x32xf32>
    %476 = arith.truncf %472 : vector<8x32xf32> to vector<8x32xbf16>
    %c0_140 = arith.constant 0 : index
    %c0_141 = arith.constant 0 : index
    %477 = vector.load %arg17[%c0_140, %c0_141] : memref<32x32xbf16, #tpu.memory_space<vmem>>, vector<32x32xbf16>
    %cst_142 = arith.constant dense<0.000000e+00> : vector<8x32xf32>
    %478 = tpu.matmul %476, %477, %cst_142 {dimension_numbers = #tpu.dot_dimension_numbers<[1], [0], [0], [1], [0, 0, 1, 1], [], []>} : vector<8x32xbf16>, vector<32x32xbf16>, vector<8x32xf32> -> vector<8x32xf32>
    %479 = arith.addf %475, %478 : vector<8x32xf32>
    %480 = math.tanh %479 : vector<8x32xf32>
    %481 = arith.truncf %480 : vector<8x32xf32> to vector<8x32xbf16>
    %c0_143 = arith.constant 0 : index
    %c0_144 = arith.constant 0 : index
    %482 = vector.load %arg18[%c0_143, %c0_144] : memref<32x128xbf16, #tpu.memory_space<vmem>>, vector<32x128xbf16>
    %cst_145 = arith.constant dense<0.000000e+00> : vector<8x128xf32>
    %483 = tpu.matmul %481, %482, %cst_145 {dimension_numbers = #tpu.dot_dimension_numbers<[1], [0], [0], [1], [0, 0, 1, 1], [], []>} : vector<8x32xbf16>, vector<32x128xbf16>, vector<8x128xf32> -> vector<8x128xf32>
    %484 = arith.addf %483, %414 : vector<8x128xf32>
    %c1_146 = arith.constant 1 : index
    %c0_147 = arith.constant 0 : index
    %c0_148 = arith.constant 0 : index
    %485 = vector.load %arg19[%c1_146, %c0_147, %c0_148] : memref<8x8x128xf32, #tpu.memory_space<vmem>>, vector<1x8x128xf32>
    %486 = vector.shape_cast %485 : vector<1x8x128xf32> to vector<8x128xf32>
    %487 = vector.shape_cast %484 : vector<8x128xf32> to vector<1x8x128xf32>
    tpu.vector_store %arg19[%c1_146, %c0_147, %c0_148], %487 {strides = array<i32>} : memref<8x8x128xf32, #tpu.memory_space<vmem>>, vector<1x8x128xf32>,
    %488 = arith.truncf %472 : vector<8x32xf32> to vector<8x32xbf16>
    %c0_149 = arith.constant 0 : index
    %c0_150 = arith.constant 0 : index
    %489 = vector.load %arg11[%c0_149, %c0_150] : memref<32x352xbf16, #tpu.memory_space<vmem>>, vector<32x352xbf16>
    %cst_151 = arith.constant dense<0.000000e+00> : vector<8x352xf32>
    %490 = tpu.matmul %488, %489, %cst_151 {dimension_numbers = #tpu.dot_dimension_numbers<[1], [0], [0], [1], [0, 0, 1, 1], [], []>} : vector<8x32xbf16>, vector<32x352xbf16>, vector<8x352xf32> -> vector<8x352xf32>
    %491 = vector.extract_strided_slice %490 {offsets = [0, 0], sizes = [8, 256], strides = [1, 1]} : vector<8x352xf32> to vector<8x256xf32>
    %492 = vector.extract_strided_slice %490 {offsets = [0, 256], sizes = [8, 96], strides = [1, 1]} : vector<8x352xf32> to vector<8x96xf32>
    %493 = arith.addf %492, %5 : vector<8x96xf32>
    %494 = arith.addf %301, %491 : vector<8x256xf32>
    %495 = math.tanh %494 : vector<8x256xf32>
    %496 = arith.truncf %495 : vector<8x256xf32> to vector<8x256xbf16>
    %c0_152 = arith.constant 0 : index
    %c0_153 = arith.constant 0 : index
    %497 = vector.load %arg13[%c0_152, %c0_153] : memref<256x128xbf16, #tpu.memory_space<vmem>>, vector<256x128xbf16>
    %cst_154 = arith.constant dense<0.000000e+00> : vector<8x128xf32>
    %498 = tpu.matmul %496, %497, %cst_154 {dimension_numbers = #tpu.dot_dimension_numbers<[1], [0], [0], [1], [0, 0, 1, 1], [], []>} : vector<8x256xbf16>, vector<256x128xbf16>, vector<8x128xf32> -> vector<8x128xf32>
    %499 = math.exp %498 : vector<8x128xf32>
    %500 = arith.mulf %499, %6 : vector<8x128xf32>
    %cst_155 = arith.constant dense<0.000000e+00> : vector<8xf32>
    %501 = vector.multi_reduction <add>, %500, %cst_155 [1] : vector<8x128xf32> to vector<8xf32>
    %502 = vector.shape_cast %501 : vector<8xf32> to vector<8x1xf32>
    %cst_156 = arith.constant 1.000000e-30 : f32
    %503 = vector.broadcast %cst_156 : f32 to vector<8x1xf32>
    %504 = arith.maximumf %502, %503 : vector<8x1xf32>
    %505 = tpu.reciprocal %504 : vector<8x1xf32> -> vector<8x1xf32>
    %506 = vector.broadcast %505 : vector<8x1xf32> to vector<8x128xf32>
    %507 = arith.mulf %500, %506 : vector<8x128xf32>
    %508 = vector.extract_strided_slice %507 {offsets = [0, 64], sizes = [8, 1], strides = [1, 1]} : vector<8x128xf32> to vector<8x1xf32>
    %509 = vector.broadcast %508 : vector<8x1xf32> to vector<8x32xf32>
    %510 = arith.mulf %509, %52 : vector<8x32xf32>
    %511 = vector.extract_strided_slice %507 {offsets = [0, 65], sizes = [8, 1], strides = [1, 1]} : vector<8x128xf32> to vector<8x1xf32>
    %512 = vector.broadcast %511 : vector<8x1xf32> to vector<8x32xf32>
    %513 = arith.mulf %512, %83 : vector<8x32xf32>
    %514 = arith.addf %510, %513 : vector<8x32xf32>
    %515 = vector.extract_strided_slice %507 {offsets = [0, 66], sizes = [8, 1], strides = [1, 1]} : vector<8x128xf32> to vector<8x1xf32>
    %516 = vector.broadcast %515 : vector<8x1xf32> to vector<8x32xf32>
    %517 = arith.mulf %516, %114 : vector<8x32xf32>
    %518 = arith.addf %514, %517 : vector<8x32xf32>
    %519 = vector.extract_strided_slice %507 {offsets = [0, 67], sizes = [8, 1], strides = [1, 1]} : vector<8x128xf32> to vector<8x1xf32>
    %520 = vector.broadcast %519 : vector<8x1xf32> to vector<8x32xf32>
    %521 = arith.mulf %520, %145 : vector<8x32xf32>
    %522 = arith.addf %518, %521 : vector<8x32xf32>
    %523 = vector.extract_strided_slice %507 {offsets = [0, 68], sizes = [8, 1], strides = [1, 1]} : vector<8x128xf32> to vector<8x1xf32>
    %524 = vector.broadcast %523 : vector<8x1xf32> to vector<8x32xf32>
    %525 = arith.mulf %524, %176 : vector<8x32xf32>
    %526 = arith.addf %522, %525 : vector<8x32xf32>
    %527 = vector.extract_strided_slice %507 {offsets = [0, 69], sizes = [8, 1], strides = [1, 1]} : vector<8x128xf32> to vector<8x1xf32>
    %528 = vector.broadcast %527 : vector<8x1xf32> to vector<8x32xf32>
    %529 = arith.mulf %528, %207 : vector<8x32xf32>
    %530 = arith.addf %526, %529 : vector<8x32xf32>
    %531 = vector.extract_strided_slice %507 {offsets = [0, 70], sizes = [8, 1], strides = [1, 1]} : vector<8x128xf32> to vector<8x1xf32>
    %532 = vector.broadcast %531 : vector<8x1xf32> to vector<8x32xf32>
    %533 = arith.mulf %532, %238 : vector<8x32xf32>
    %534 = arith.addf %530, %533 : vector<8x32xf32>
    %535 = vector.extract_strided_slice %507 {offsets = [0, 71], sizes = [8, 1], strides = [1, 1]} : vector<8x128xf32> to vector<8x1xf32>
    %536 = vector.broadcast %535 : vector<8x1xf32> to vector<8x32xf32>
    %537 = arith.mulf %536, %269 : vector<8x32xf32>
    %538 = arith.addf %534, %537 : vector<8x32xf32>
    %539 = arith.truncf %538 : vector<8x32xf32> to vector<8x32xbf16>
    %c0_157 = arith.constant 0 : index
    %c0_158 = arith.constant 0 : index
    %540 = vector.load %arg16[%c0_157, %c0_158] : memref<32x128xbf16, #tpu.memory_space<vmem>>, vector<32x128xbf16>
    %cst_159 = arith.constant dense<0.000000e+00> : vector<8x128xf32>
    %541 = tpu.matmul %539, %540, %cst_159 {dimension_numbers = #tpu.dot_dimension_numbers<[1], [0], [0], [1], [0, 0, 1, 1], [], []>} : vector<8x32xbf16>, vector<32x128xbf16>, vector<8x128xf32> -> vector<8x128xf32>
    %542 = vector.extract_strided_slice %20 {offsets = [16, 0], sizes = [8, 128], strides = [1, 1]} : vector<64x128xf32> to vector<8x128xf32>
    %543 = vector.extract_strided_slice %542 {offsets = [0, 0], sizes = [8, 96], strides = [1, 1]} : vector<8x128xf32> to vector<8x96xf32>
    %544 = vector.extract_strided_slice %541 {offsets = [0, 0], sizes = [8, 96], strides = [1, 1]} : vector<8x128xf32> to vector<8x96xf32>
    %545 = arith.addf %543, %544 : vector<8x96xf32>
    %546 = vector.extract_strided_slice %545 {offsets = [0, 0], sizes = [8, 64], strides = [1, 1]} : vector<8x96xf32> to vector<8x64xf32>
    %547 = vector.extract_strided_slice %493 {offsets = [0, 0], sizes = [8, 64], strides = [1, 1]} : vector<8x96xf32> to vector<8x64xf32>
    %548 = arith.addf %546, %547 : vector<8x64xf32>
    %549 = arith.negf %548 : vector<8x64xf32>
    %550 = math.exp %549 : vector<8x64xf32>
    %cst_160 = arith.constant 1.000000e+00 : f32
    %551 = vector.broadcast %cst_160 : f32 to vector<8x64xf32>
    %552 = arith.addf %551, %550 : vector<8x64xf32>
    %553 = arith.divf %551, %552 : vector<8x64xf32>
    %554 = vector.extract_strided_slice %553 {offsets = [0, 0], sizes = [8, 32], strides = [1, 1]} : vector<8x64xf32> to vector<8x32xf32>
    %555 = vector.extract_strided_slice %553 {offsets = [0, 32], sizes = [8, 32], strides = [1, 1]} : vector<8x64xf32> to vector<8x32xf32>
    %556 = vector.extract_strided_slice %545 {offsets = [0, 64], sizes = [8, 32], strides = [1, 1]} : vector<8x96xf32> to vector<8x32xf32>
    %557 = vector.extract_strided_slice %493 {offsets = [0, 64], sizes = [8, 32], strides = [1, 1]} : vector<8x96xf32> to vector<8x32xf32>
    %558 = arith.mulf %554, %557 : vector<8x32xf32>
    %559 = arith.addf %556, %558 : vector<8x32xf32>
    %560 = math.tanh %559 : vector<8x32xf32>
    %cst_161 = arith.constant 1.000000e+00 : f32
    %561 = vector.broadcast %cst_161 : f32 to vector<8x32xf32>
    %562 = arith.subf %561, %555 : vector<8x32xf32>
    %563 = arith.mulf %562, %560 : vector<8x32xf32>
    %564 = arith.mulf %555, %472 : vector<8x32xf32>
    %565 = arith.addf %563, %564 : vector<8x32xf32>
    %566 = vector.extract_strided_slice %542 {offsets = [0, 96], sizes = [8, 32], strides = [1, 1]} : vector<8x128xf32> to vector<8x32xf32>
    %567 = vector.extract_strided_slice %541 {offsets = [0, 96], sizes = [8, 32], strides = [1, 1]} : vector<8x128xf32> to vector<8x32xf32>
    %568 = arith.addf %566, %567 : vector<8x32xf32>
    %569 = arith.truncf %565 : vector<8x32xf32> to vector<8x32xbf16>
    %c0_162 = arith.constant 0 : index
    %c0_163 = arith.constant 0 : index
    %570 = vector.load %arg17[%c0_162, %c0_163] : memref<32x32xbf16, #tpu.memory_space<vmem>>, vector<32x32xbf16>
    %cst_164 = arith.constant dense<0.000000e+00> : vector<8x32xf32>
    %571 = tpu.matmul %569, %570, %cst_164 {dimension_numbers = #tpu.dot_dimension_numbers<[1], [0], [0], [1], [0, 0, 1, 1], [], []>} : vector<8x32xbf16>, vector<32x32xbf16>, vector<8x32xf32> -> vector<8x32xf32>
    %572 = arith.addf %568, %571 : vector<8x32xf32>
    %573 = math.tanh %572 : vector<8x32xf32>
    %574 = arith.truncf %573 : vector<8x32xf32> to vector<8x32xbf16>
    %c0_165 = arith.constant 0 : index
    %c0_166 = arith.constant 0 : index
    %575 = vector.load %arg18[%c0_165, %c0_166] : memref<32x128xbf16, #tpu.memory_space<vmem>>, vector<32x128xbf16>
    %cst_167 = arith.constant dense<0.000000e+00> : vector<8x128xf32>
    %576 = tpu.matmul %574, %575, %cst_167 {dimension_numbers = #tpu.dot_dimension_numbers<[1], [0], [0], [1], [0, 0, 1, 1], [], []>} : vector<8x32xbf16>, vector<32x128xbf16>, vector<8x128xf32> -> vector<8x128xf32>
    %577 = arith.addf %576, %507 : vector<8x128xf32>
    %c2_168 = arith.constant 2 : index
    %c0_169 = arith.constant 0 : index
    %c0_170 = arith.constant 0 : index
    %578 = vector.load %arg19[%c2_168, %c0_169, %c0_170] : memref<8x8x128xf32, #tpu.memory_space<vmem>>, vector<1x8x128xf32>
    %579 = vector.shape_cast %578 : vector<1x8x128xf32> to vector<8x128xf32>
    %580 = vector.shape_cast %577 : vector<8x128xf32> to vector<1x8x128xf32>
    tpu.vector_store %arg19[%c2_168, %c0_169, %c0_170], %580 {strides = array<i32>} : memref<8x8x128xf32, #tpu.memory_space<vmem>>, vector<1x8x128xf32>,
    %581 = arith.truncf %565 : vector<8x32xf32> to vector<8x32xbf16>
    %c0_171 = arith.constant 0 : index
    %c0_172 = arith.constant 0 : index
    %582 = vector.load %arg11[%c0_171, %c0_172] : memref<32x352xbf16, #tpu.memory_space<vmem>>, vector<32x352xbf16>
    %cst_173 = arith.constant dense<0.000000e+00> : vector<8x352xf32>
    %583 = tpu.matmul %581, %582, %cst_173 {dimension_numbers = #tpu.dot_dimension_numbers<[1], [0], [0], [1], [0, 0, 1, 1], [], []>} : vector<8x32xbf16>, vector<32x352xbf16>, vector<8x352xf32> -> vector<8x352xf32>
    %584 = vector.extract_strided_slice %583 {offsets = [0, 0], sizes = [8, 256], strides = [1, 1]} : vector<8x352xf32> to vector<8x256xf32>
    %585 = vector.extract_strided_slice %583 {offsets = [0, 256], sizes = [8, 96], strides = [1, 1]} : vector<8x352xf32> to vector<8x96xf32>
    %586 = arith.addf %585, %5 : vector<8x96xf32>
    %587 = arith.addf %301, %584 : vector<8x256xf32>
    %588 = math.tanh %587 : vector<8x256xf32>
    %589 = arith.truncf %588 : vector<8x256xf32> to vector<8x256xbf16>
    %c0_174 = arith.constant 0 : index
    %c0_175 = arith.constant 0 : index
    %590 = vector.load %arg13[%c0_174, %c0_175] : memref<256x128xbf16, #tpu.memory_space<vmem>>, vector<256x128xbf16>
    %cst_176 = arith.constant dense<0.000000e+00> : vector<8x128xf32>
    %591 = tpu.matmul %589, %590, %cst_176 {dimension_numbers = #tpu.dot_dimension_numbers<[1], [0], [0], [1], [0, 0, 1, 1], [], []>} : vector<8x256xbf16>, vector<256x128xbf16>, vector<8x128xf32> -> vector<8x128xf32>
    %592 = math.exp %591 : vector<8x128xf32>
    %593 = arith.mulf %592, %6 : vector<8x128xf32>
    %cst_177 = arith.constant dense<0.000000e+00> : vector<8xf32>
    %594 = vector.multi_reduction <add>, %593, %cst_177 [1] : vector<8x128xf32> to vector<8xf32>
    %595 = vector.shape_cast %594 : vector<8xf32> to vector<8x1xf32>
    %cst_178 = arith.constant 1.000000e-30 : f32
    %596 = vector.broadcast %cst_178 : f32 to vector<8x1xf32>
    %597 = arith.maximumf %595, %596 : vector<8x1xf32>
    %598 = tpu.reciprocal %597 : vector<8x1xf32> -> vector<8x1xf32>
    %599 = vector.broadcast %598 : vector<8x1xf32> to vector<8x128xf32>
    %600 = arith.mulf %593, %599 : vector<8x128xf32>
    %601 = vector.extract_strided_slice %600 {offsets = [0, 64], sizes = [8, 1], strides = [1, 1]} : vector<8x128xf32> to vector<8x1xf32>
    %602 = vector.broadcast %601 : vector<8x1xf32> to vector<8x32xf32>
    %603 = arith.mulf %602, %52 : vector<8x32xf32>
    %604 = vector.extract_strided_slice %600 {offsets = [0, 65], sizes = [8, 1], strides = [1, 1]} : vector<8x128xf32> to vector<8x1xf32>
    %605 = vector.broadcast %604 : vector<8x1xf32> to vector<8x32xf32>
    %606 = arith.mulf %605, %83 : vector<8x32xf32>
    %607 = arith.addf %603, %606 : vector<8x32xf32>
    %608 = vector.extract_strided_slice %600 {offsets = [0, 66], sizes = [8, 1], strides = [1, 1]} : vector<8x128xf32> to vector<8x1xf32>
    %609 = vector.broadcast %608 : vector<8x1xf32> to vector<8x32xf32>
    %610 = arith.mulf %609, %114 : vector<8x32xf32>
    %611 = arith.addf %607, %610 : vector<8x32xf32>
    %612 = vector.extract_strided_slice %600 {offsets = [0, 67], sizes = [8, 1], strides = [1, 1]} : vector<8x128xf32> to vector<8x1xf32>
    %613 = vector.broadcast %612 : vector<8x1xf32> to vector<8x32xf32>
    %614 = arith.mulf %613, %145 : vector<8x32xf32>
    %615 = arith.addf %611, %614 : vector<8x32xf32>
    %616 = vector.extract_strided_slice %600 {offsets = [0, 68], sizes = [8, 1], strides = [1, 1]} : vector<8x128xf32> to vector<8x1xf32>
    %617 = vector.broadcast %616 : vector<8x1xf32> to vector<8x32xf32>
    %618 = arith.mulf %617, %176 : vector<8x32xf32>
    %619 = arith.addf %615, %618 : vector<8x32xf32>
    %620 = vector.extract_strided_slice %600 {offsets = [0, 69], sizes = [8, 1], strides = [1, 1]} : vector<8x128xf32> to vector<8x1xf32>
    %621 = vector.broadcast %620 : vector<8x1xf32> to vector<8x32xf32>
    %622 = arith.mulf %621, %207 : vector<8x32xf32>
    %623 = arith.addf %619, %622 : vector<8x32xf32>
    %624 = vector.extract_strided_slice %600 {offsets = [0, 70], sizes = [8, 1], strides = [1, 1]} : vector<8x128xf32> to vector<8x1xf32>
    %625 = vector.broadcast %624 : vector<8x1xf32> to vector<8x32xf32>
    %626 = arith.mulf %625, %238 : vector<8x32xf32>
    %627 = arith.addf %623, %626 : vector<8x32xf32>
    %628 = vector.extract_strided_slice %600 {offsets = [0, 71], sizes = [8, 1], strides = [1, 1]} : vector<8x128xf32> to vector<8x1xf32>
    %629 = vector.broadcast %628 : vector<8x1xf32> to vector<8x32xf32>
    %630 = arith.mulf %629, %269 : vector<8x32xf32>
    %631 = arith.addf %627, %630 : vector<8x32xf32>
    %632 = arith.truncf %631 : vector<8x32xf32> to vector<8x32xbf16>
    %c0_179 = arith.constant 0 : index
    %c0_180 = arith.constant 0 : index
    %633 = vector.load %arg16[%c0_179, %c0_180] : memref<32x128xbf16, #tpu.memory_space<vmem>>, vector<32x128xbf16>
    %cst_181 = arith.constant dense<0.000000e+00> : vector<8x128xf32>
    %634 = tpu.matmul %632, %633, %cst_181 {dimension_numbers = #tpu.dot_dimension_numbers<[1], [0], [0], [1], [0, 0, 1, 1], [], []>} : vector<8x32xbf16>, vector<32x128xbf16>, vector<8x128xf32> -> vector<8x128xf32>
    %635 = vector.extract_strided_slice %20 {offsets = [24, 0], sizes = [8, 128], strides = [1, 1]} : vector<64x128xf32> to vector<8x128xf32>
    %636 = vector.extract_strided_slice %635 {offsets = [0, 0], sizes = [8, 96], strides = [1, 1]} : vector<8x128xf32> to vector<8x96xf32>
    %637 = vector.extract_strided_slice %634 {offsets = [0, 0], sizes = [8, 96], strides = [1, 1]} : vector<8x128xf32> to vector<8x96xf32>
    %638 = arith.addf %636, %637 : vector<8x96xf32>
    %639 = vector.extract_strided_slice %638 {offsets = [0, 0], sizes = [8, 64], strides = [1, 1]} : vector<8x96xf32> to vector<8x64xf32>
    %640 = vector.extract_strided_slice %586 {offsets = [0, 0], sizes = [8, 64], strides = [1, 1]} : vector<8x96xf32> to vector<8x64xf32>
    %641 = arith.addf %639, %640 : vector<8x64xf32>
    %642 = arith.negf %641 : vector<8x64xf32>
    %643 = math.exp %642 : vector<8x64xf32>
    %cst_182 = arith.constant 1.000000e+00 : f32
    %644 = vector.broadcast %cst_182 : f32 to vector<8x64xf32>
    %645 = arith.addf %644, %643 : vector<8x64xf32>
    %646 = arith.divf %644, %645 : vector<8x64xf32>
    %647 = vector.extract_strided_slice %646 {offsets = [0, 0], sizes = [8, 32], strides = [1, 1]} : vector<8x64xf32> to vector<8x32xf32>
    %648 = vector.extract_strided_slice %646 {offsets = [0, 32], sizes = [8, 32], strides = [1, 1]} : vector<8x64xf32> to vector<8x32xf32>
    %649 = vector.extract_strided_slice %638 {offsets = [0, 64], sizes = [8, 32], strides = [1, 1]} : vector<8x96xf32> to vector<8x32xf32>
    %650 = vector.extract_strided_slice %586 {offsets = [0, 64], sizes = [8, 32], strides = [1, 1]} : vector<8x96xf32> to vector<8x32xf32>
    %651 = arith.mulf %647, %650 : vector<8x32xf32>
    %652 = arith.addf %649, %651 : vector<8x32xf32>
    %653 = math.tanh %652 : vector<8x32xf32>
    %cst_183 = arith.constant 1.000000e+00 : f32
    %654 = vector.broadcast %cst_183 : f32 to vector<8x32xf32>
    %655 = arith.subf %654, %648 : vector<8x32xf32>
    %656 = arith.mulf %655, %653 : vector<8x32xf32>
    %657 = arith.mulf %648, %565 : vector<8x32xf32>
    %658 = arith.addf %656, %657 : vector<8x32xf32>
    %659 = vector.extract_strided_slice %635 {offsets = [0, 96], sizes = [8, 32], strides = [1, 1]} : vector<8x128xf32> to vector<8x32xf32>
    %660 = vector.extract_strided_slice %634 {offsets = [0, 96], sizes = [8, 32], strides = [1, 1]} : vector<8x128xf32> to vector<8x32xf32>
    %661 = arith.addf %659, %660 : vector<8x32xf32>
    %662 = arith.truncf %658 : vector<8x32xf32> to vector<8x32xbf16>
    %c0_184 = arith.constant 0 : index
    %c0_185 = arith.constant 0 : index
    %663 = vector.load %arg17[%c0_184, %c0_185] : memref<32x32xbf16, #tpu.memory_space<vmem>>, vector<32x32xbf16>
    %cst_186 = arith.constant dense<0.000000e+00> : vector<8x32xf32>
    %664 = tpu.matmul %662, %663, %cst_186 {dimension_numbers = #tpu.dot_dimension_numbers<[1], [0], [0], [1], [0, 0, 1, 1], [], []>} : vector<8x32xbf16>, vector<32x32xbf16>, vector<8x32xf32> -> vector<8x32xf32>
    %665 = arith.addf %661, %664 : vector<8x32xf32>
    %666 = math.tanh %665 : vector<8x32xf32>
    %667 = arith.truncf %666 : vector<8x32xf32> to vector<8x32xbf16>
    %c0_187 = arith.constant 0 : index
    %c0_188 = arith.constant 0 : index
    %668 = vector.load %arg18[%c0_187, %c0_188] : memref<32x128xbf16, #tpu.memory_space<vmem>>, vector<32x128xbf16>
    %cst_189 = arith.constant dense<0.000000e+00> : vector<8x128xf32>
    %669 = tpu.matmul %667, %668, %cst_189 {dimension_numbers = #tpu.dot_dimension_numbers<[1], [0], [0], [1], [0, 0, 1, 1], [], []>} : vector<8x32xbf16>, vector<32x128xbf16>, vector<8x128xf32> -> vector<8x128xf32>
    %670 = arith.addf %669, %600 : vector<8x128xf32>
    %c3_190 = arith.constant 3 : index
    %c0_191 = arith.constant 0 : index
    %c0_192 = arith.constant 0 : index
    %671 = vector.load %arg19[%c3_190, %c0_191, %c0_192] : memref<8x8x128xf32, #tpu.memory_space<vmem>>, vector<1x8x128xf32>
    %672 = vector.shape_cast %671 : vector<1x8x128xf32> to vector<8x128xf32>
    %673 = vector.shape_cast %670 : vector<8x128xf32> to vector<1x8x128xf32>
    tpu.vector_store %arg19[%c3_190, %c0_191, %c0_192], %673 {strides = array<i32>} : memref<8x8x128xf32, #tpu.memory_space<vmem>>, vector<1x8x128xf32>,
    %674 = arith.truncf %658 : vector<8x32xf32> to vector<8x32xbf16>
    %c0_193 = arith.constant 0 : index
    %c0_194 = arith.constant 0 : index
    %675 = vector.load %arg11[%c0_193, %c0_194] : memref<32x352xbf16, #tpu.memory_space<vmem>>, vector<32x352xbf16>
    %cst_195 = arith.constant dense<0.000000e+00> : vector<8x352xf32>
    %676 = tpu.matmul %674, %675, %cst_195 {dimension_numbers = #tpu.dot_dimension_numbers<[1], [0], [0], [1], [0, 0, 1, 1], [], []>} : vector<8x32xbf16>, vector<32x352xbf16>, vector<8x352xf32> -> vector<8x352xf32>
    %677 = vector.extract_strided_slice %676 {offsets = [0, 0], sizes = [8, 256], strides = [1, 1]} : vector<8x352xf32> to vector<8x256xf32>
    %678 = vector.extract_strided_slice %676 {offsets = [0, 256], sizes = [8, 96], strides = [1, 1]} : vector<8x352xf32> to vector<8x96xf32>
    %679 = arith.addf %678, %5 : vector<8x96xf32>
    %680 = arith.addf %301, %677 : vector<8x256xf32>
    %681 = math.tanh %680 : vector<8x256xf32>
    %682 = arith.truncf %681 : vector<8x256xf32> to vector<8x256xbf16>
    %c0_196 = arith.constant 0 : index
    %c0_197 = arith.constant 0 : index
    %683 = vector.load %arg13[%c0_196, %c0_197] : memref<256x128xbf16, #tpu.memory_space<vmem>>, vector<256x128xbf16>
    %cst_198 = arith.constant dense<0.000000e+00> : vector<8x128xf32>
    %684 = tpu.matmul %682, %683, %cst_198 {dimension_numbers = #tpu.dot_dimension_numbers<[1], [0], [0], [1], [0, 0, 1, 1], [], []>} : vector<8x256xbf16>, vector<256x128xbf16>, vector<8x128xf32> -> vector<8x128xf32>
    %685 = math.exp %684 : vector<8x128xf32>
    %686 = arith.mulf %685, %6 : vector<8x128xf32>
    %cst_199 = arith.constant dense<0.000000e+00> : vector<8xf32>
    %687 = vector.multi_reduction <add>, %686, %cst_199 [1] : vector<8x128xf32> to vector<8xf32>
    %688 = vector.shape_cast %687 : vector<8xf32> to vector<8x1xf32>
    %cst_200 = arith.constant 1.000000e-30 : f32
    %689 = vector.broadcast %cst_200 : f32 to vector<8x1xf32>
    %690 = arith.maximumf %688, %689 : vector<8x1xf32>
    %691 = tpu.reciprocal %690 : vector<8x1xf32> -> vector<8x1xf32>
    %692 = vector.broadcast %691 : vector<8x1xf32> to vector<8x128xf32>
    %693 = arith.mulf %686, %692 : vector<8x128xf32>
    %694 = vector.extract_strided_slice %693 {offsets = [0, 64], sizes = [8, 1], strides = [1, 1]} : vector<8x128xf32> to vector<8x1xf32>
    %695 = vector.broadcast %694 : vector<8x1xf32> to vector<8x32xf32>
    %696 = arith.mulf %695, %52 : vector<8x32xf32>
    %697 = vector.extract_strided_slice %693 {offsets = [0, 65], sizes = [8, 1], strides = [1, 1]} : vector<8x128xf32> to vector<8x1xf32>
    %698 = vector.broadcast %697 : vector<8x1xf32> to vector<8x32xf32>
    %699 = arith.mulf %698, %83 : vector<8x32xf32>
    %700 = arith.addf %696, %699 : vector<8x32xf32>
    %701 = vector.extract_strided_slice %693 {offsets = [0, 66], sizes = [8, 1], strides = [1, 1]} : vector<8x128xf32> to vector<8x1xf32>
    %702 = vector.broadcast %701 : vector<8x1xf32> to vector<8x32xf32>
    %703 = arith.mulf %702, %114 : vector<8x32xf32>
    %704 = arith.addf %700, %703 : vector<8x32xf32>
    %705 = vector.extract_strided_slice %693 {offsets = [0, 67], sizes = [8, 1], strides = [1, 1]} : vector<8x128xf32> to vector<8x1xf32>
    %706 = vector.broadcast %705 : vector<8x1xf32> to vector<8x32xf32>
    %707 = arith.mulf %706, %145 : vector<8x32xf32>
    %708 = arith.addf %704, %707 : vector<8x32xf32>
    %709 = vector.extract_strided_slice %693 {offsets = [0, 68], sizes = [8, 1], strides = [1, 1]} : vector<8x128xf32> to vector<8x1xf32>
    %710 = vector.broadcast %709 : vector<8x1xf32> to vector<8x32xf32>
    %711 = arith.mulf %710, %176 : vector<8x32xf32>
    %712 = arith.addf %708, %711 : vector<8x32xf32>
    %713 = vector.extract_strided_slice %693 {offsets = [0, 69], sizes = [8, 1], strides = [1, 1]} : vector<8x128xf32> to vector<8x1xf32>
    %714 = vector.broadcast %713 : vector<8x1xf32> to vector<8x32xf32>
    %715 = arith.mulf %714, %207 : vector<8x32xf32>
    %716 = arith.addf %712, %715 : vector<8x32xf32>
    %717 = vector.extract_strided_slice %693 {offsets = [0, 70], sizes = [8, 1], strides = [1, 1]} : vector<8x128xf32> to vector<8x1xf32>
    %718 = vector.broadcast %717 : vector<8x1xf32> to vector<8x32xf32>
    %719 = arith.mulf %718, %238 : vector<8x32xf32>
    %720 = arith.addf %716, %719 : vector<8x32xf32>
    %721 = vector.extract_strided_slice %693 {offsets = [0, 71], sizes = [8, 1], strides = [1, 1]} : vector<8x128xf32> to vector<8x1xf32>
    %722 = vector.broadcast %721 : vector<8x1xf32> to vector<8x32xf32>
    %723 = arith.mulf %722, %269 : vector<8x32xf32>
    %724 = arith.addf %720, %723 : vector<8x32xf32>
    %725 = arith.truncf %724 : vector<8x32xf32> to vector<8x32xbf16>
    %c0_201 = arith.constant 0 : index
    %c0_202 = arith.constant 0 : index
    %726 = vector.load %arg16[%c0_201, %c0_202] : memref<32x128xbf16, #tpu.memory_space<vmem>>, vector<32x128xbf16>
    %cst_203 = arith.constant dense<0.000000e+00> : vector<8x128xf32>
    %727 = tpu.matmul %725, %726, %cst_203 {dimension_numbers = #tpu.dot_dimension_numbers<[1], [0], [0], [1], [0, 0, 1, 1], [], []>} : vector<8x32xbf16>, vector<32x128xbf16>, vector<8x128xf32> -> vector<8x128xf32>
    %728 = vector.extract_strided_slice %20 {offsets = [32, 0], sizes = [8, 128], strides = [1, 1]} : vector<64x128xf32> to vector<8x128xf32>
    %729 = vector.extract_strided_slice %728 {offsets = [0, 0], sizes = [8, 96], strides = [1, 1]} : vector<8x128xf32> to vector<8x96xf32>
    %730 = vector.extract_strided_slice %727 {offsets = [0, 0], sizes = [8, 96], strides = [1, 1]} : vector<8x128xf32> to vector<8x96xf32>
    %731 = arith.addf %729, %730 : vector<8x96xf32>
    %732 = vector.extract_strided_slice %731 {offsets = [0, 0], sizes = [8, 64], strides = [1, 1]} : vector<8x96xf32> to vector<8x64xf32>
    %733 = vector.extract_strided_slice %679 {offsets = [0, 0], sizes = [8, 64], strides = [1, 1]} : vector<8x96xf32> to vector<8x64xf32>
    %734 = arith.addf %732, %733 : vector<8x64xf32>
    %735 = arith.negf %734 : vector<8x64xf32>
    %736 = math.exp %735 : vector<8x64xf32>
    %cst_204 = arith.constant 1.000000e+00 : f32
    %737 = vector.broadcast %cst_204 : f32 to vector<8x64xf32>
    %738 = arith.addf %737, %736 : vector<8x64xf32>
    %739 = arith.divf %737, %738 : vector<8x64xf32>
    %740 = vector.extract_strided_slice %739 {offsets = [0, 0], sizes = [8, 32], strides = [1, 1]} : vector<8x64xf32> to vector<8x32xf32>
    %741 = vector.extract_strided_slice %739 {offsets = [0, 32], sizes = [8, 32], strides = [1, 1]} : vector<8x64xf32> to vector<8x32xf32>
    %742 = vector.extract_strided_slice %731 {offsets = [0, 64], sizes = [8, 32], strides = [1, 1]} : vector<8x96xf32> to vector<8x32xf32>
    %743 = vector.extract_strided_slice %679 {offsets = [0, 64], sizes = [8, 32], strides = [1, 1]} : vector<8x96xf32> to vector<8x32xf32>
    %744 = arith.mulf %740, %743 : vector<8x32xf32>
    %745 = arith.addf %742, %744 : vector<8x32xf32>
    %746 = math.tanh %745 : vector<8x32xf32>
    %cst_205 = arith.constant 1.000000e+00 : f32
    %747 = vector.broadcast %cst_205 : f32 to vector<8x32xf32>
    %748 = arith.subf %747, %741 : vector<8x32xf32>
    %749 = arith.mulf %748, %746 : vector<8x32xf32>
    %750 = arith.mulf %741, %658 : vector<8x32xf32>
    %751 = arith.addf %749, %750 : vector<8x32xf32>
    %752 = vector.extract_strided_slice %728 {offsets = [0, 96], sizes = [8, 32], strides = [1, 1]} : vector<8x128xf32> to vector<8x32xf32>
    %753 = vector.extract_strided_slice %727 {offsets = [0, 96], sizes = [8, 32], strides = [1, 1]} : vector<8x128xf32> to vector<8x32xf32>
    %754 = arith.addf %752, %753 : vector<8x32xf32>
    %755 = arith.truncf %751 : vector<8x32xf32> to vector<8x32xbf16>
    %c0_206 = arith.constant 0 : index
    %c0_207 = arith.constant 0 : index
    %756 = vector.load %arg17[%c0_206, %c0_207] : memref<32x32xbf16, #tpu.memory_space<vmem>>, vector<32x32xbf16>
    %cst_208 = arith.constant dense<0.000000e+00> : vector<8x32xf32>
    %757 = tpu.matmul %755, %756, %cst_208 {dimension_numbers = #tpu.dot_dimension_numbers<[1], [0], [0], [1], [0, 0, 1, 1], [], []>} : vector<8x32xbf16>, vector<32x32xbf16>, vector<8x32xf32> -> vector<8x32xf32>
    %758 = arith.addf %754, %757 : vector<8x32xf32>
    %759 = math.tanh %758 : vector<8x32xf32>
    %760 = arith.truncf %759 : vector<8x32xf32> to vector<8x32xbf16>
    %c0_209 = arith.constant 0 : index
    %c0_210 = arith.constant 0 : index
    %761 = vector.load %arg18[%c0_209, %c0_210] : memref<32x128xbf16, #tpu.memory_space<vmem>>, vector<32x128xbf16>
    %cst_211 = arith.constant dense<0.000000e+00> : vector<8x128xf32>
    %762 = tpu.matmul %760, %761, %cst_211 {dimension_numbers = #tpu.dot_dimension_numbers<[1], [0], [0], [1], [0, 0, 1, 1], [], []>} : vector<8x32xbf16>, vector<32x128xbf16>, vector<8x128xf32> -> vector<8x128xf32>
    %763 = arith.addf %762, %693 : vector<8x128xf32>
    %c4_212 = arith.constant 4 : index
    %c0_213 = arith.constant 0 : index
    %c0_214 = arith.constant 0 : index
    %764 = vector.load %arg19[%c4_212, %c0_213, %c0_214] : memref<8x8x128xf32, #tpu.memory_space<vmem>>, vector<1x8x128xf32>
    %765 = vector.shape_cast %764 : vector<1x8x128xf32> to vector<8x128xf32>
    %766 = vector.shape_cast %763 : vector<8x128xf32> to vector<1x8x128xf32>
    tpu.vector_store %arg19[%c4_212, %c0_213, %c0_214], %766 {strides = array<i32>} : memref<8x8x128xf32, #tpu.memory_space<vmem>>, vector<1x8x128xf32>,
    %767 = arith.truncf %751 : vector<8x32xf32> to vector<8x32xbf16>
    %c0_215 = arith.constant 0 : index
    %c0_216 = arith.constant 0 : index
    %768 = vector.load %arg11[%c0_215, %c0_216] : memref<32x352xbf16, #tpu.memory_space<vmem>>, vector<32x352xbf16>
    %cst_217 = arith.constant dense<0.000000e+00> : vector<8x352xf32>
    %769 = tpu.matmul %767, %768, %cst_217 {dimension_numbers = #tpu.dot_dimension_numbers<[1], [0], [0], [1], [0, 0, 1, 1], [], []>} : vector<8x32xbf16>, vector<32x352xbf16>, vector<8x352xf32> -> vector<8x352xf32>
    %770 = vector.extract_strided_slice %769 {offsets = [0, 0], sizes = [8, 256], strides = [1, 1]} : vector<8x352xf32> to vector<8x256xf32>
    %771 = vector.extract_strided_slice %769 {offsets = [0, 256], sizes = [8, 96], strides = [1, 1]} : vector<8x352xf32> to vector<8x96xf32>
    %772 = arith.addf %771, %5 : vector<8x96xf32>
    %773 = arith.addf %301, %770 : vector<8x256xf32>
    %774 = math.tanh %773 : vector<8x256xf32>
    %775 = arith.truncf %774 : vector<8x256xf32> to vector<8x256xbf16>
    %c0_218 = arith.constant 0 : index
    %c0_219 = arith.constant 0 : index
    %776 = vector.load %arg13[%c0_218, %c0_219] : memref<256x128xbf16, #tpu.memory_space<vmem>>, vector<256x128xbf16>
    %cst_220 = arith.constant dense<0.000000e+00> : vector<8x128xf32>
    %777 = tpu.matmul %775, %776, %cst_220 {dimension_numbers = #tpu.dot_dimension_numbers<[1], [0], [0], [1], [0, 0, 1, 1], [], []>} : vector<8x256xbf16>, vector<256x128xbf16>, vector<8x128xf32> -> vector<8x128xf32>
    %778 = math.exp %777 : vector<8x128xf32>
    %779 = arith.mulf %778, %6 : vector<8x128xf32>
    %cst_221 = arith.constant dense<0.000000e+00> : vector<8xf32>
    %780 = vector.multi_reduction <add>, %779, %cst_221 [1] : vector<8x128xf32> to vector<8xf32>
    %781 = vector.shape_cast %780 : vector<8xf32> to vector<8x1xf32>
    %cst_222 = arith.constant 1.000000e-30 : f32
    %782 = vector.broadcast %cst_222 : f32 to vector<8x1xf32>
    %783 = arith.maximumf %781, %782 : vector<8x1xf32>
    %784 = tpu.reciprocal %783 : vector<8x1xf32> -> vector<8x1xf32>
    %785 = vector.broadcast %784 : vector<8x1xf32> to vector<8x128xf32>
    %786 = arith.mulf %779, %785 : vector<8x128xf32>
    %787 = vector.extract_strided_slice %786 {offsets = [0, 64], sizes = [8, 1], strides = [1, 1]} : vector<8x128xf32> to vector<8x1xf32>
    %788 = vector.broadcast %787 : vector<8x1xf32> to vector<8x32xf32>
    %789 = arith.mulf %788, %52 : vector<8x32xf32>
    %790 = vector.extract_strided_slice %786 {offsets = [0, 65], sizes = [8, 1], strides = [1, 1]} : vector<8x128xf32> to vector<8x1xf32>
    %791 = vector.broadcast %790 : vector<8x1xf32> to vector<8x32xf32>
    %792 = arith.mulf %791, %83 : vector<8x32xf32>
    %793 = arith.addf %789, %792 : vector<8x32xf32>
    %794 = vector.extract_strided_slice %786 {offsets = [0, 66], sizes = [8, 1], strides = [1, 1]} : vector<8x128xf32> to vector<8x1xf32>
    %795 = vector.broadcast %794 : vector<8x1xf32> to vector<8x32xf32>
    %796 = arith.mulf %795, %114 : vector<8x32xf32>
    %797 = arith.addf %793, %796 : vector<8x32xf32>
    %798 = vector.extract_strided_slice %786 {offsets = [0, 67], sizes = [8, 1], strides = [1, 1]} : vector<8x128xf32> to vector<8x1xf32>
    %799 = vector.broadcast %798 : vector<8x1xf32> to vector<8x32xf32>
    %800 = arith.mulf %799, %145 : vector<8x32xf32>
    %801 = arith.addf %797, %800 : vector<8x32xf32>
    %802 = vector.extract_strided_slice %786 {offsets = [0, 68], sizes = [8, 1], strides = [1, 1]} : vector<8x128xf32> to vector<8x1xf32>
    %803 = vector.broadcast %802 : vector<8x1xf32> to vector<8x32xf32>
    %804 = arith.mulf %803, %176 : vector<8x32xf32>
    %805 = arith.addf %801, %804 : vector<8x32xf32>
    %806 = vector.extract_strided_slice %786 {offsets = [0, 69], sizes = [8, 1], strides = [1, 1]} : vector<8x128xf32> to vector<8x1xf32>
    %807 = vector.broadcast %806 : vector<8x1xf32> to vector<8x32xf32>
    %808 = arith.mulf %807, %207 : vector<8x32xf32>
    %809 = arith.addf %805, %808 : vector<8x32xf32>
    %810 = vector.extract_strided_slice %786 {offsets = [0, 70], sizes = [8, 1], strides = [1, 1]} : vector<8x128xf32> to vector<8x1xf32>
    %811 = vector.broadcast %810 : vector<8x1xf32> to vector<8x32xf32>
    %812 = arith.mulf %811, %238 : vector<8x32xf32>
    %813 = arith.addf %809, %812 : vector<8x32xf32>
    %814 = vector.extract_strided_slice %786 {offsets = [0, 71], sizes = [8, 1], strides = [1, 1]} : vector<8x128xf32> to vector<8x1xf32>
    %815 = vector.broadcast %814 : vector<8x1xf32> to vector<8x32xf32>
    %816 = arith.mulf %815, %269 : vector<8x32xf32>
    %817 = arith.addf %813, %816 : vector<8x32xf32>
    %818 = arith.truncf %817 : vector<8x32xf32> to vector<8x32xbf16>
    %c0_223 = arith.constant 0 : index
    %c0_224 = arith.constant 0 : index
    %819 = vector.load %arg16[%c0_223, %c0_224] : memref<32x128xbf16, #tpu.memory_space<vmem>>, vector<32x128xbf16>
    %cst_225 = arith.constant dense<0.000000e+00> : vector<8x128xf32>
    %820 = tpu.matmul %818, %819, %cst_225 {dimension_numbers = #tpu.dot_dimension_numbers<[1], [0], [0], [1], [0, 0, 1, 1], [], []>} : vector<8x32xbf16>, vector<32x128xbf16>, vector<8x128xf32> -> vector<8x128xf32>
    %821 = vector.extract_strided_slice %20 {offsets = [40, 0], sizes = [8, 128], strides = [1, 1]} : vector<64x128xf32> to vector<8x128xf32>
    %822 = vector.extract_strided_slice %821 {offsets = [0, 0], sizes = [8, 96], strides = [1, 1]} : vector<8x128xf32> to vector<8x96xf32>
    %823 = vector.extract_strided_slice %820 {offsets = [0, 0], sizes = [8, 96], strides = [1, 1]} : vector<8x128xf32> to vector<8x96xf32>
    %824 = arith.addf %822, %823 : vector<8x96xf32>
    %825 = vector.extract_strided_slice %824 {offsets = [0, 0], sizes = [8, 64], strides = [1, 1]} : vector<8x96xf32> to vector<8x64xf32>
    %826 = vector.extract_strided_slice %772 {offsets = [0, 0], sizes = [8, 64], strides = [1, 1]} : vector<8x96xf32> to vector<8x64xf32>
    %827 = arith.addf %825, %826 : vector<8x64xf32>
    %828 = arith.negf %827 : vector<8x64xf32>
    %829 = math.exp %828 : vector<8x64xf32>
    %cst_226 = arith.constant 1.000000e+00 : f32
    %830 = vector.broadcast %cst_226 : f32 to vector<8x64xf32>
    %831 = arith.addf %830, %829 : vector<8x64xf32>
    %832 = arith.divf %830, %831 : vector<8x64xf32>
    %833 = vector.extract_strided_slice %832 {offsets = [0, 0], sizes = [8, 32], strides = [1, 1]} : vector<8x64xf32> to vector<8x32xf32>
    %834 = vector.extract_strided_slice %832 {offsets = [0, 32], sizes = [8, 32], strides = [1, 1]} : vector<8x64xf32> to vector<8x32xf32>
    %835 = vector.extract_strided_slice %824 {offsets = [0, 64], sizes = [8, 32], strides = [1, 1]} : vector<8x96xf32> to vector<8x32xf32>
    %836 = vector.extract_strided_slice %772 {offsets = [0, 64], sizes = [8, 32], strides = [1, 1]} : vector<8x96xf32> to vector<8x32xf32>
    %837 = arith.mulf %833, %836 : vector<8x32xf32>
    %838 = arith.addf %835, %837 : vector<8x32xf32>
    %839 = math.tanh %838 : vector<8x32xf32>
    %cst_227 = arith.constant 1.000000e+00 : f32
    %840 = vector.broadcast %cst_227 : f32 to vector<8x32xf32>
    %841 = arith.subf %840, %834 : vector<8x32xf32>
    %842 = arith.mulf %841, %839 : vector<8x32xf32>
    %843 = arith.mulf %834, %751 : vector<8x32xf32>
    %844 = arith.addf %842, %843 : vector<8x32xf32>
    %845 = vector.extract_strided_slice %821 {offsets = [0, 96], sizes = [8, 32], strides = [1, 1]} : vector<8x128xf32> to vector<8x32xf32>
    %846 = vector.extract_strided_slice %820 {offsets = [0, 96], sizes = [8, 32], strides = [1, 1]} : vector<8x128xf32> to vector<8x32xf32>
    %847 = arith.addf %845, %846 : vector<8x32xf32>
    %848 = arith.truncf %844 : vector<8x32xf32> to vector<8x32xbf16>
    %c0_228 = arith.constant 0 : index
    %c0_229 = arith.constant 0 : index
    %849 = vector.load %arg17[%c0_228, %c0_229] : memref<32x32xbf16, #tpu.memory_space<vmem>>, vector<32x32xbf16>
    %cst_230 = arith.constant dense<0.000000e+00> : vector<8x32xf32>
    %850 = tpu.matmul %848, %849, %cst_230 {dimension_numbers = #tpu.dot_dimension_numbers<[1], [0], [0], [1], [0, 0, 1, 1], [], []>} : vector<8x32xbf16>, vector<32x32xbf16>, vector<8x32xf32> -> vector<8x32xf32>
    %851 = arith.addf %847, %850 : vector<8x32xf32>
    %852 = math.tanh %851 : vector<8x32xf32>
    %853 = arith.truncf %852 : vector<8x32xf32> to vector<8x32xbf16>
    %c0_231 = arith.constant 0 : index
    %c0_232 = arith.constant 0 : index
    %854 = vector.load %arg18[%c0_231, %c0_232] : memref<32x128xbf16, #tpu.memory_space<vmem>>, vector<32x128xbf16>
    %cst_233 = arith.constant dense<0.000000e+00> : vector<8x128xf32>
    %855 = tpu.matmul %853, %854, %cst_233 {dimension_numbers = #tpu.dot_dimension_numbers<[1], [0], [0], [1], [0, 0, 1, 1], [], []>} : vector<8x32xbf16>, vector<32x128xbf16>, vector<8x128xf32> -> vector<8x128xf32>
    %856 = arith.addf %855, %786 : vector<8x128xf32>
    %c5_234 = arith.constant 5 : index
    %c0_235 = arith.constant 0 : index
    %c0_236 = arith.constant 0 : index
    %857 = vector.load %arg19[%c5_234, %c0_235, %c0_236] : memref<8x8x128xf32, #tpu.memory_space<vmem>>, vector<1x8x128xf32>
    %858 = vector.shape_cast %857 : vector<1x8x128xf32> to vector<8x128xf32>
    %859 = vector.shape_cast %856 : vector<8x128xf32> to vector<1x8x128xf32>
    tpu.vector_store %arg19[%c5_234, %c0_235, %c0_236], %859 {strides = array<i32>} : memref<8x8x128xf32, #tpu.memory_space<vmem>>, vector<1x8x128xf32>,
    %860 = arith.truncf %844 : vector<8x32xf32> to vector<8x32xbf16>
    %c0_237 = arith.constant 0 : index
    %c0_238 = arith.constant 0 : index
    %861 = vector.load %arg11[%c0_237, %c0_238] : memref<32x352xbf16, #tpu.memory_space<vmem>>, vector<32x352xbf16>
    %cst_239 = arith.constant dense<0.000000e+00> : vector<8x352xf32>
    %862 = tpu.matmul %860, %861, %cst_239 {dimension_numbers = #tpu.dot_dimension_numbers<[1], [0], [0], [1], [0, 0, 1, 1], [], []>} : vector<8x32xbf16>, vector<32x352xbf16>, vector<8x352xf32> -> vector<8x352xf32>
    %863 = vector.extract_strided_slice %862 {offsets = [0, 0], sizes = [8, 256], strides = [1, 1]} : vector<8x352xf32> to vector<8x256xf32>
    %864 = vector.extract_strided_slice %862 {offsets = [0, 256], sizes = [8, 96], strides = [1, 1]} : vector<8x352xf32> to vector<8x96xf32>
    %865 = arith.addf %864, %5 : vector<8x96xf32>
    %866 = arith.addf %301, %863 : vector<8x256xf32>
    %867 = math.tanh %866 : vector<8x256xf32>
    %868 = arith.truncf %867 : vector<8x256xf32> to vector<8x256xbf16>
    %c0_240 = arith.constant 0 : index
    %c0_241 = arith.constant 0 : index
    %869 = vector.load %arg13[%c0_240, %c0_241] : memref<256x128xbf16, #tpu.memory_space<vmem>>, vector<256x128xbf16>
    %cst_242 = arith.constant dense<0.000000e+00> : vector<8x128xf32>
    %870 = tpu.matmul %868, %869, %cst_242 {dimension_numbers = #tpu.dot_dimension_numbers<[1], [0], [0], [1], [0, 0, 1, 1], [], []>} : vector<8x256xbf16>, vector<256x128xbf16>, vector<8x128xf32> -> vector<8x128xf32>
    %871 = math.exp %870 : vector<8x128xf32>
    %872 = arith.mulf %871, %6 : vector<8x128xf32>
    %cst_243 = arith.constant dense<0.000000e+00> : vector<8xf32>
    %873 = vector.multi_reduction <add>, %872, %cst_243 [1] : vector<8x128xf32> to vector<8xf32>
    %874 = vector.shape_cast %873 : vector<8xf32> to vector<8x1xf32>
    %cst_244 = arith.constant 1.000000e-30 : f32
    %875 = vector.broadcast %cst_244 : f32 to vector<8x1xf32>
    %876 = arith.maximumf %874, %875 : vector<8x1xf32>
    %877 = tpu.reciprocal %876 : vector<8x1xf32> -> vector<8x1xf32>
    %878 = vector.broadcast %877 : vector<8x1xf32> to vector<8x128xf32>
    %879 = arith.mulf %872, %878 : vector<8x128xf32>
    %880 = vector.extract_strided_slice %879 {offsets = [0, 64], sizes = [8, 1], strides = [1, 1]} : vector<8x128xf32> to vector<8x1xf32>
    %881 = vector.broadcast %880 : vector<8x1xf32> to vector<8x32xf32>
    %882 = arith.mulf %881, %52 : vector<8x32xf32>
    %883 = vector.extract_strided_slice %879 {offsets = [0, 65], sizes = [8, 1], strides = [1, 1]} : vector<8x128xf32> to vector<8x1xf32>
    %884 = vector.broadcast %883 : vector<8x1xf32> to vector<8x32xf32>
    %885 = arith.mulf %884, %83 : vector<8x32xf32>
    %886 = arith.addf %882, %885 : vector<8x32xf32>
    %887 = vector.extract_strided_slice %879 {offsets = [0, 66], sizes = [8, 1], strides = [1, 1]} : vector<8x128xf32> to vector<8x1xf32>
    %888 = vector.broadcast %887 : vector<8x1xf32> to vector<8x32xf32>
    %889 = arith.mulf %888, %114 : vector<8x32xf32>
    %890 = arith.addf %886, %889 : vector<8x32xf32>
    %891 = vector.extract_strided_slice %879 {offsets = [0, 67], sizes = [8, 1], strides = [1, 1]} : vector<8x128xf32> to vector<8x1xf32>
    %892 = vector.broadcast %891 : vector<8x1xf32> to vector<8x32xf32>
    %893 = arith.mulf %892, %145 : vector<8x32xf32>
    %894 = arith.addf %890, %893 : vector<8x32xf32>
    %895 = vector.extract_strided_slice %879 {offsets = [0, 68], sizes = [8, 1], strides = [1, 1]} : vector<8x128xf32> to vector<8x1xf32>
    %896 = vector.broadcast %895 : vector<8x1xf32> to vector<8x32xf32>
    %897 = arith.mulf %896, %176 : vector<8x32xf32>
    %898 = arith.addf %894, %897 : vector<8x32xf32>
    %899 = vector.extract_strided_slice %879 {offsets = [0, 69], sizes = [8, 1], strides = [1, 1]} : vector<8x128xf32> to vector<8x1xf32>
    %900 = vector.broadcast %899 : vector<8x1xf32> to vector<8x32xf32>
    %901 = arith.mulf %900, %207 : vector<8x32xf32>
    %902 = arith.addf %898, %901 : vector<8x32xf32>
    %903 = vector.extract_strided_slice %879 {offsets = [0, 70], sizes = [8, 1], strides = [1, 1]} : vector<8x128xf32> to vector<8x1xf32>
    %904 = vector.broadcast %903 : vector<8x1xf32> to vector<8x32xf32>
    %905 = arith.mulf %904, %238 : vector<8x32xf32>
    %906 = arith.addf %902, %905 : vector<8x32xf32>
    %907 = vector.extract_strided_slice %879 {offsets = [0, 71], sizes = [8, 1], strides = [1, 1]} : vector<8x128xf32> to vector<8x1xf32>
    %908 = vector.broadcast %907 : vector<8x1xf32> to vector<8x32xf32>
    %909 = arith.mulf %908, %269 : vector<8x32xf32>
    %910 = arith.addf %906, %909 : vector<8x32xf32>
    %911 = arith.truncf %910 : vector<8x32xf32> to vector<8x32xbf16>
    %c0_245 = arith.constant 0 : index
    %c0_246 = arith.constant 0 : index
    %912 = vector.load %arg16[%c0_245, %c0_246] : memref<32x128xbf16, #tpu.memory_space<vmem>>, vector<32x128xbf16>
    %cst_247 = arith.constant dense<0.000000e+00> : vector<8x128xf32>
    %913 = tpu.matmul %911, %912, %cst_247 {dimension_numbers = #tpu.dot_dimension_numbers<[1], [0], [0], [1], [0, 0, 1, 1], [], []>} : vector<8x32xbf16>, vector<32x128xbf16>, vector<8x128xf32> -> vector<8x128xf32>
    %914 = vector.extract_strided_slice %20 {offsets = [48, 0], sizes = [8, 128], strides = [1, 1]} : vector<64x128xf32> to vector<8x128xf32>
    %915 = vector.extract_strided_slice %914 {offsets = [0, 0], sizes = [8, 96], strides = [1, 1]} : vector<8x128xf32> to vector<8x96xf32>
    %916 = vector.extract_strided_slice %913 {offsets = [0, 0], sizes = [8, 96], strides = [1, 1]} : vector<8x128xf32> to vector<8x96xf32>
    %917 = arith.addf %915, %916 : vector<8x96xf32>
    %918 = vector.extract_strided_slice %917 {offsets = [0, 0], sizes = [8, 64], strides = [1, 1]} : vector<8x96xf32> to vector<8x64xf32>
    %919 = vector.extract_strided_slice %865 {offsets = [0, 0], sizes = [8, 64], strides = [1, 1]} : vector<8x96xf32> to vector<8x64xf32>
    %920 = arith.addf %918, %919 : vector<8x64xf32>
    %921 = arith.negf %920 : vector<8x64xf32>
    %922 = math.exp %921 : vector<8x64xf32>
    %cst_248 = arith.constant 1.000000e+00 : f32
    %923 = vector.broadcast %cst_248 : f32 to vector<8x64xf32>
    %924 = arith.addf %923, %922 : vector<8x64xf32>
    %925 = arith.divf %923, %924 : vector<8x64xf32>
    %926 = vector.extract_strided_slice %925 {offsets = [0, 0], sizes = [8, 32], strides = [1, 1]} : vector<8x64xf32> to vector<8x32xf32>
    %927 = vector.extract_strided_slice %925 {offsets = [0, 32], sizes = [8, 32], strides = [1, 1]} : vector<8x64xf32> to vector<8x32xf32>
    %928 = vector.extract_strided_slice %917 {offsets = [0, 64], sizes = [8, 32], strides = [1, 1]} : vector<8x96xf32> to vector<8x32xf32>
    %929 = vector.extract_strided_slice %865 {offsets = [0, 64], sizes = [8, 32], strides = [1, 1]} : vector<8x96xf32> to vector<8x32xf32>
    %930 = arith.mulf %926, %929 : vector<8x32xf32>
    %931 = arith.addf %928, %930 : vector<8x32xf32>
    %932 = math.tanh %931 : vector<8x32xf32>
    %cst_249 = arith.constant 1.000000e+00 : f32
    %933 = vector.broadcast %cst_249 : f32 to vector<8x32xf32>
    %934 = arith.subf %933, %927 : vector<8x32xf32>
    %935 = arith.mulf %934, %932 : vector<8x32xf32>
    %936 = arith.mulf %927, %844 : vector<8x32xf32>
    %937 = arith.addf %935, %936 : vector<8x32xf32>
    %938 = vector.extract_strided_slice %914 {offsets = [0, 96], sizes = [8, 32], strides = [1, 1]} : vector<8x128xf32> to vector<8x32xf32>
    %939 = vector.extract_strided_slice %913 {offsets = [0, 96], sizes = [8, 32], strides = [1, 1]} : vector<8x128xf32> to vector<8x32xf32>
    %940 = arith.addf %938, %939 : vector<8x32xf32>
    %941 = arith.truncf %937 : vector<8x32xf32> to vector<8x32xbf16>
    %c0_250 = arith.constant 0 : index
    %c0_251 = arith.constant 0 : index
    %942 = vector.load %arg17[%c0_250, %c0_251] : memref<32x32xbf16, #tpu.memory_space<vmem>>, vector<32x32xbf16>
    %cst_252 = arith.constant dense<0.000000e+00> : vector<8x32xf32>
    %943 = tpu.matmul %941, %942, %cst_252 {dimension_numbers = #tpu.dot_dimension_numbers<[1], [0], [0], [1], [0, 0, 1, 1], [], []>} : vector<8x32xbf16>, vector<32x32xbf16>, vector<8x32xf32> -> vector<8x32xf32>
    %944 = arith.addf %940, %943 : vector<8x32xf32>
    %945 = math.tanh %944 : vector<8x32xf32>
    %946 = arith.truncf %945 : vector<8x32xf32> to vector<8x32xbf16>
    %c0_253 = arith.constant 0 : index
    %c0_254 = arith.constant 0 : index
    %947 = vector.load %arg18[%c0_253, %c0_254] : memref<32x128xbf16, #tpu.memory_space<vmem>>, vector<32x128xbf16>
    %cst_255 = arith.constant dense<0.000000e+00> : vector<8x128xf32>
    %948 = tpu.matmul %946, %947, %cst_255 {dimension_numbers = #tpu.dot_dimension_numbers<[1], [0], [0], [1], [0, 0, 1, 1], [], []>} : vector<8x32xbf16>, vector<32x128xbf16>, vector<8x128xf32> -> vector<8x128xf32>
    %949 = arith.addf %948, %879 : vector<8x128xf32>
    %c6_256 = arith.constant 6 : index
    %c0_257 = arith.constant 0 : index
    %c0_258 = arith.constant 0 : index
    %950 = vector.load %arg19[%c6_256, %c0_257, %c0_258] : memref<8x8x128xf32, #tpu.memory_space<vmem>>, vector<1x8x128xf32>
    %951 = vector.shape_cast %950 : vector<1x8x128xf32> to vector<8x128xf32>
    %952 = vector.shape_cast %949 : vector<8x128xf32> to vector<1x8x128xf32>
    tpu.vector_store %arg19[%c6_256, %c0_257, %c0_258], %952 {strides = array<i32>} : memref<8x8x128xf32, #tpu.memory_space<vmem>>, vector<1x8x128xf32>,
    %953 = arith.truncf %937 : vector<8x32xf32> to vector<8x32xbf16>
    %c0_259 = arith.constant 0 : index
    %c0_260 = arith.constant 0 : index
    %954 = vector.load %arg11[%c0_259, %c0_260] : memref<32x352xbf16, #tpu.memory_space<vmem>>, vector<32x352xbf16>
    %cst_261 = arith.constant dense<0.000000e+00> : vector<8x352xf32>
    %955 = tpu.matmul %953, %954, %cst_261 {dimension_numbers = #tpu.dot_dimension_numbers<[1], [0], [0], [1], [0, 0, 1, 1], [], []>} : vector<8x32xbf16>, vector<32x352xbf16>, vector<8x352xf32> -> vector<8x352xf32>
    %956 = vector.extract_strided_slice %955 {offsets = [0, 0], sizes = [8, 256], strides = [1, 1]} : vector<8x352xf32> to vector<8x256xf32>
    %957 = vector.extract_strided_slice %955 {offsets = [0, 256], sizes = [8, 96], strides = [1, 1]} : vector<8x352xf32> to vector<8x96xf32>
    %958 = arith.addf %957, %5 : vector<8x96xf32>
    %959 = arith.addf %301, %956 : vector<8x256xf32>
    %960 = math.tanh %959 : vector<8x256xf32>
    %961 = arith.truncf %960 : vector<8x256xf32> to vector<8x256xbf16>
    %c0_262 = arith.constant 0 : index
    %c0_263 = arith.constant 0 : index
    %962 = vector.load %arg13[%c0_262, %c0_263] : memref<256x128xbf16, #tpu.memory_space<vmem>>, vector<256x128xbf16>
    %cst_264 = arith.constant dense<0.000000e+00> : vector<8x128xf32>
    %963 = tpu.matmul %961, %962, %cst_264 {dimension_numbers = #tpu.dot_dimension_numbers<[1], [0], [0], [1], [0, 0, 1, 1], [], []>} : vector<8x256xbf16>, vector<256x128xbf16>, vector<8x128xf32> -> vector<8x128xf32>
    %964 = math.exp %963 : vector<8x128xf32>
    %965 = arith.mulf %964, %6 : vector<8x128xf32>
    %cst_265 = arith.constant dense<0.000000e+00> : vector<8xf32>
    %966 = vector.multi_reduction <add>, %965, %cst_265 [1] : vector<8x128xf32> to vector<8xf32>
    %967 = vector.shape_cast %966 : vector<8xf32> to vector<8x1xf32>
    %cst_266 = arith.constant 1.000000e-30 : f32
    %968 = vector.broadcast %cst_266 : f32 to vector<8x1xf32>
    %969 = arith.maximumf %967, %968 : vector<8x1xf32>
    %970 = tpu.reciprocal %969 : vector<8x1xf32> -> vector<8x1xf32>
    %971 = vector.broadcast %970 : vector<8x1xf32> to vector<8x128xf32>
    %972 = arith.mulf %965, %971 : vector<8x128xf32>
    %973 = vector.extract_strided_slice %972 {offsets = [0, 64], sizes = [8, 1], strides = [1, 1]} : vector<8x128xf32> to vector<8x1xf32>
    %974 = vector.broadcast %973 : vector<8x1xf32> to vector<8x32xf32>
    %975 = arith.mulf %974, %52 : vector<8x32xf32>
    %976 = vector.extract_strided_slice %972 {offsets = [0, 65], sizes = [8, 1], strides = [1, 1]} : vector<8x128xf32> to vector<8x1xf32>
    %977 = vector.broadcast %976 : vector<8x1xf32> to vector<8x32xf32>
    %978 = arith.mulf %977, %83 : vector<8x32xf32>
    %979 = arith.addf %975, %978 : vector<8x32xf32>
    %980 = vector.extract_strided_slice %972 {offsets = [0, 66], sizes = [8, 1], strides = [1, 1]} : vector<8x128xf32> to vector<8x1xf32>
    %981 = vector.broadcast %980 : vector<8x1xf32> to vector<8x32xf32>
    %982 = arith.mulf %981, %114 : vector<8x32xf32>
    %983 = arith.addf %979, %982 : vector<8x32xf32>
    %984 = vector.extract_strided_slice %972 {offsets = [0, 67], sizes = [8, 1], strides = [1, 1]} : vector<8x128xf32> to vector<8x1xf32>
    %985 = vector.broadcast %984 : vector<8x1xf32> to vector<8x32xf32>
    %986 = arith.mulf %985, %145 : vector<8x32xf32>
    %987 = arith.addf %983, %986 : vector<8x32xf32>
    %988 = vector.extract_strided_slice %972 {offsets = [0, 68], sizes = [8, 1], strides = [1, 1]} : vector<8x128xf32> to vector<8x1xf32>
    %989 = vector.broadcast %988 : vector<8x1xf32> to vector<8x32xf32>
    %990 = arith.mulf %989, %176 : vector<8x32xf32>
    %991 = arith.addf %987, %990 : vector<8x32xf32>
    %992 = vector.extract_strided_slice %972 {offsets = [0, 69], sizes = [8, 1], strides = [1, 1]} : vector<8x128xf32> to vector<8x1xf32>
    %993 = vector.broadcast %992 : vector<8x1xf32> to vector<8x32xf32>
    %994 = arith.mulf %993, %207 : vector<8x32xf32>
    %995 = arith.addf %991, %994 : vector<8x32xf32>
    %996 = vector.extract_strided_slice %972 {offsets = [0, 70], sizes = [8, 1], strides = [1, 1]} : vector<8x128xf32> to vector<8x1xf32>
    %997 = vector.broadcast %996 : vector<8x1xf32> to vector<8x32xf32>
    %998 = arith.mulf %997, %238 : vector<8x32xf32>
    %999 = arith.addf %995, %998 : vector<8x32xf32>
    %1000 = vector.extract_strided_slice %972 {offsets = [0, 71], sizes = [8, 1], strides = [1, 1]} : vector<8x128xf32> to vector<8x1xf32>
    %1001 = vector.broadcast %1000 : vector<8x1xf32> to vector<8x32xf32>
    %1002 = arith.mulf %1001, %269 : vector<8x32xf32>
    %1003 = arith.addf %999, %1002 : vector<8x32xf32>
    %1004 = arith.truncf %1003 : vector<8x32xf32> to vector<8x32xbf16>
    %c0_267 = arith.constant 0 : index
    %c0_268 = arith.constant 0 : index
    %1005 = vector.load %arg16[%c0_267, %c0_268] : memref<32x128xbf16, #tpu.memory_space<vmem>>, vector<32x128xbf16>
    %cst_269 = arith.constant dense<0.000000e+00> : vector<8x128xf32>
    %1006 = tpu.matmul %1004, %1005, %cst_269 {dimension_numbers = #tpu.dot_dimension_numbers<[1], [0], [0], [1], [0, 0, 1, 1], [], []>} : vector<8x32xbf16>, vector<32x128xbf16>, vector<8x128xf32> -> vector<8x128xf32>
    %1007 = vector.extract_strided_slice %20 {offsets = [56, 0], sizes = [8, 128], strides = [1, 1]} : vector<64x128xf32> to vector<8x128xf32>
    %1008 = vector.extract_strided_slice %1007 {offsets = [0, 0], sizes = [8, 96], strides = [1, 1]} : vector<8x128xf32> to vector<8x96xf32>
    %1009 = vector.extract_strided_slice %1006 {offsets = [0, 0], sizes = [8, 96], strides = [1, 1]} : vector<8x128xf32> to vector<8x96xf32>
    %1010 = arith.addf %1008, %1009 : vector<8x96xf32>
    %1011 = vector.extract_strided_slice %1010 {offsets = [0, 0], sizes = [8, 64], strides = [1, 1]} : vector<8x96xf32> to vector<8x64xf32>
    %1012 = vector.extract_strided_slice %958 {offsets = [0, 0], sizes = [8, 64], strides = [1, 1]} : vector<8x96xf32> to vector<8x64xf32>
    %1013 = arith.addf %1011, %1012 : vector<8x64xf32>
    %1014 = arith.negf %1013 : vector<8x64xf32>
    %1015 = math.exp %1014 : vector<8x64xf32>
    %cst_270 = arith.constant 1.000000e+00 : f32
    %1016 = vector.broadcast %cst_270 : f32 to vector<8x64xf32>
    %1017 = arith.addf %1016, %1015 : vector<8x64xf32>
    %1018 = arith.divf %1016, %1017 : vector<8x64xf32>
    %1019 = vector.extract_strided_slice %1018 {offsets = [0, 0], sizes = [8, 32], strides = [1, 1]} : vector<8x64xf32> to vector<8x32xf32>
    %1020 = vector.extract_strided_slice %1018 {offsets = [0, 32], sizes = [8, 32], strides = [1, 1]} : vector<8x64xf32> to vector<8x32xf32>
    %1021 = vector.extract_strided_slice %1010 {offsets = [0, 64], sizes = [8, 32], strides = [1, 1]} : vector<8x96xf32> to vector<8x32xf32>
    %1022 = vector.extract_strided_slice %958 {offsets = [0, 64], sizes = [8, 32], strides = [1, 1]} : vector<8x96xf32> to vector<8x32xf32>
    %1023 = arith.mulf %1019, %1022 : vector<8x32xf32>
    %1024 = arith.addf %1021, %1023 : vector<8x32xf32>
    %1025 = math.tanh %1024 : vector<8x32xf32>
    %cst_271 = arith.constant 1.000000e+00 : f32
    %1026 = vector.broadcast %cst_271 : f32 to vector<8x32xf32>
    %1027 = arith.subf %1026, %1020 : vector<8x32xf32>
    %1028 = arith.mulf %1027, %1025 : vector<8x32xf32>
    %1029 = arith.mulf %1020, %937 : vector<8x32xf32>
    %1030 = arith.addf %1028, %1029 : vector<8x32xf32>
    %1031 = vector.extract_strided_slice %1007 {offsets = [0, 96], sizes = [8, 32], strides = [1, 1]} : vector<8x128xf32> to vector<8x32xf32>
    %1032 = vector.extract_strided_slice %1006 {offsets = [0, 96], sizes = [8, 32], strides = [1, 1]} : vector<8x128xf32> to vector<8x32xf32>
    %1033 = arith.addf %1031, %1032 : vector<8x32xf32>
    %1034 = arith.truncf %1030 : vector<8x32xf32> to vector<8x32xbf16>
    %c0_272 = arith.constant 0 : index
    %c0_273 = arith.constant 0 : index
    %1035 = vector.load %arg17[%c0_272, %c0_273] : memref<32x32xbf16, #tpu.memory_space<vmem>>, vector<32x32xbf16>
    %cst_274 = arith.constant dense<0.000000e+00> : vector<8x32xf32>
    %1036 = tpu.matmul %1034, %1035, %cst_274 {dimension_numbers = #tpu.dot_dimension_numbers<[1], [0], [0], [1], [0, 0, 1, 1], [], []>} : vector<8x32xbf16>, vector<32x32xbf16>, vector<8x32xf32> -> vector<8x32xf32>
    %1037 = arith.addf %1033, %1036 : vector<8x32xf32>
    %1038 = math.tanh %1037 : vector<8x32xf32>
    %1039 = arith.truncf %1038 : vector<8x32xf32> to vector<8x32xbf16>
    %c0_275 = arith.constant 0 : index
    %c0_276 = arith.constant 0 : index
    %1040 = vector.load %arg18[%c0_275, %c0_276] : memref<32x128xbf16, #tpu.memory_space<vmem>>, vector<32x128xbf16>
    %cst_277 = arith.constant dense<0.000000e+00> : vector<8x128xf32>
    %1041 = tpu.matmul %1039, %1040, %cst_277 {dimension_numbers = #tpu.dot_dimension_numbers<[1], [0], [0], [1], [0, 0, 1, 1], [], []>} : vector<8x32xbf16>, vector<32x128xbf16>, vector<8x128xf32> -> vector<8x128xf32>
    %1042 = arith.addf %1041, %972 : vector<8x128xf32>
    %c7_278 = arith.constant 7 : index
    %c0_279 = arith.constant 0 : index
    %c0_280 = arith.constant 0 : index
    %1043 = vector.load %arg19[%c7_278, %c0_279, %c0_280] : memref<8x8x128xf32, #tpu.memory_space<vmem>>, vector<1x8x128xf32>
    %1044 = vector.shape_cast %1043 : vector<1x8x128xf32> to vector<8x128xf32>
    %1045 = vector.shape_cast %1042 : vector<8x128xf32> to vector<1x8x128xf32>
    tpu.vector_store %arg19[%c7_278, %c0_279, %c0_280], %1045 {strides = array<i32>} : memref<8x8x128xf32, #tpu.memory_space<vmem>>, vector<1x8x128xf32>,
    return
  }
}

</mosaic_0001>

<llo_original>
// kernel: tile.0
$region0: #{tile.0}
  %s0 = inlined_call_operand.vmem [shape: bf16[32,8,32], index: 0, kind: input, shape index: {}]
  %s1 = inlined_call_operand.vmem [shape: bf16[32,256], index: 1, kind: output, shape index: {}]
  $region1: #{tile.0} parent=0
    #allocation0 [shape = 'u8[32768]{0}', space=vmem, size = 0x8000, scoped, tag = 'scoped mem for output reshape']
    #allocation1 [shape = 'u8[131072]{0}', space=vmem, size = 0x20000, scoped, tag = 'scoped mem for input reshape']
    %s3 = smul.u32 4, 2
    %s4 = sshllo.u32 0, %s3
    %s5 = smul.addr 4, 31
    %s6 = scalar_lea.vmem %s0, %s5
    %s7 = sshrl.u32 %s4, 1
    %s8 = sor.u32 %s4, %s7
    %s9 = sand.u32 %s8, 85
    %s10 = sshrl.u32 %s9, 1
    %s11 = sor.u32 %s9, %s10
    %s12 = sand.u32 51, %s11
    %s13 = sshrl.u32 %s12, 2
    %s14 = sor.u32 %s12, %s13
    %s15 = sand.u32 15, %s14
    %v16 = vld [vmem:[%s6] sm:%s15]
    %v17 = vunpack.c.l.bf16 %v16
    %v18 = vunpack.c.h.bf16 %v16
    %s19 = scalar_lea.vmem [#allocation1], 248
    %20 = vst [vmem:[%s19] sm:%s4] %v17
    %s21 = smul.addr 4, 30
    %s22 = scalar_lea.vmem %s0, %s21
    %s23 = sshrl.u32 %s4, 1
    %s24 = sor.u32 %s4, %s23
    %s25 = sand.u32 %s24, 85
    %s26 = sshrl.u32 %s25, 1
    %s27 = sor.u32 %s25, %s26
    %s28 = sand.u32 51, %s27
    %s29 = sshrl.u32 %s28, 2
    %s30 = sor.u32 %s28, %s29
    %s31 = sand.u32 15, %s30
    %v32 = vld [vmem:[%s22] sm:%s31]
    %v33 = vunpack.c.l.bf16 %v32
    %v34 = vunpack.c.h.bf16 %v32
    %s35 = scalar_lea.vmem [#allocation1], 240
    %36 = vst [vmem:[%s35] sm:%s4] %v33
    %s37 = smul.addr 4, 29
    %s38 = scalar_lea.vmem %s0, %s37
    %s39 = sshrl.u32 %s4, 1
    %s40 = sor.u32 %s4, %s39
    %s41 = sand.u32 %s40, 85
    %s42 = sshrl.u32 %s41, 1
    %s43 = sor.u32 %s41, %s42
    %s44 = sand.u32 51, %s43
    %s45 = sshrl.u32 %s44, 2
    %s46 = sor.u32 %s44, %s45
    %s47 = sand.u32 15, %s46
    %v48 = vld [vmem:[%s38] sm:%s47]
    %v49 = vunpack.c.l.bf16 %v48
    %v50 = vunpack.c.h.bf16 %v48
    %s51 = scalar_lea.vmem [#allocation1], 232
    %52 = vst [vmem:[%s51] sm:%s4] %v49
    %s53 = smul.addr 4, 28
    %s54 = scalar_lea.vmem %s0, %s53
    %s55 = sshrl.u32 %s4, 1
    %s56 = sor.u32 %s4, %s55
    %s57 = sand.u32 %s56, 85
    %s58 = sshrl.u32 %s57, 1
    %s59 = sor.u32 %s57, %s58
    %s60 = sand.u32 51, %s59
    %s61 = sshrl.u32 %s60, 2
    %s62 = sor.u32 %s60, %s61
    %s63 = sand.u32 15, %s62
    %v64 = vld [vmem:[%s54] sm:%s63]
    %v65 = vunpack.c.l.bf16 %v64
    %v66 = vunpack.c.h.bf16 %v64
    %s67 = scalar_lea.vmem [#allocation1], 224
    %68 = vst [vmem:[%s67] sm:%s4] %v65
    %s69 = smul.addr 4, 27
    %s70 = scalar_lea.vmem %s0, %s69
    %s71 = sshrl.u32 %s4, 1
    %s72 = sor.u32 %s4, %s71
    %s73 = sand.u32 %s72, 85
    %s74 = sshrl.u32 %s73, 1
    %s75 = sor.u32 %s73, %s74
    %s76 = sand.u32 51, %s75
    %s77 = sshrl.u32 %s76, 2
    %s78 = sor.u32 %s76, %s77
    %s79 = sand.u32 15, %s78
    %v80 = vld [vmem:[%s70] sm:%s79]
    %v81 = vunpack.c.l.bf16 %v80
    %v82 = vunpack.c.h.bf16 %v80
    %s83 = scalar_lea.vmem [#allocation1], 216
    %84 = vst [vmem:[%s83] sm:%s4] %v81
    %s85 = smul.addr 4, 26
    %s86 = scalar_lea.vmem %s0, %s85
    %s87 = sshrl.u32 %s4, 1
    %s88 = sor.u32 %s4, %s87
    %s89 = sand.u32 %s88, 85
    %s90 = sshrl.u32 %s89, 1
    %s91 = sor.u32 %s89, %s90
    %s92 = sand.u32 51, %s91
    %s93 = sshrl.u32 %s92, 2
    %s94 = sor.u32 %s92, %s93
    %s95 = sand.u32 15, %s94
    %v96 = vld [vmem:[%s86] sm:%s95]
    %v97 = vunpack.c.l.bf16 %v96
    %v98 = vunpack.c.h.bf16 %v96
    %s99 = scalar_lea.vmem [#allocation1], 208
    %100 = vst [vmem:[%s99] sm:%s4] %v97
    %s101 = smul.addr 4, 25
    %s102 = scalar_lea.vmem %s0, %s101
    %s103 = sshrl.u32 %s4, 1
    %s104 = sor.u32 %s4, %s103
    %s105 = sand.u32 %s104, 85
    %s106 = sshrl.u32 %s105, 1
    %s107 = sor.u32 %s105, %s106
    %s108 = sand.u32 51, %s107
    %s109 = sshrl.u32 %s108, 2
    %s110 = sor.u32 %s108, %s109
    %s111 = sand.u32 15, %s110
    %v112 = vld [vmem:[%s102] sm:%s111]
    %v113 = vunpack.c.l.bf16 %v112
    %v114 = vunpack.c.h.bf16 %v112
    %s115 = scalar_lea.vmem [#allocation1], 200
    %116 = vst [vmem:[%s115] sm:%s4] %v113
    %s117 = smul.addr 4, 24
    %s118 = scalar_lea.vmem %s0, %s117
    %s119 = sshrl.u32 %s4, 1
    %s120 = sor.u32 %s4, %s119
    %s121 = sand.u32 %s120, 85
    %s122 = sshrl.u32 %s121, 1
    %s123 = sor.u32 %s121, %s122
    %s124 = sand.u32 51, %s123
    %s125 = sshrl.u32 %s124, 2
    %s126 = sor.u32 %s124, %s125
    %s127 = sand.u32 15, %s126
    %v128 = vld [vmem:[%s118] sm:%s127]
    %v129 = vunpack.c.l.bf16 %v128
    %v130 = vunpack.c.h.bf16 %v128
    %s131 = scalar_lea.vmem [#allocation1], 192
    %132 = vst [vmem:[%s131] sm:%s4] %v129
    %s133 = smul.addr 4, 23
    %s134 = scalar_lea.vmem %s0, %s133
    %s135 = sshrl.u32 %s4, 1
    %s136 = sor.u32 %s4, %s135
    %s137 = sand.u32 %s136, 85
    %s138 = sshrl.u32 %s137, 1
    %s139 = sor.u32 %s137, %s138
    %s140 = sand.u32 51, %s139
    %s141 = sshrl.u32 %s140, 2
    %s142 = sor.u32 %s140, %s141
    %s143 = sand.u32 15, %s142
    %v144 = vld [vmem:[%s134] sm:%s143]
    %v145 = vunpack.c.l.bf16 %v144
    %v146 = vunpack.c.h.bf16 %v144
    %s147 = scalar_lea.vmem [#allocation1], 184
    %148 = vst [vmem:[%s147] sm:%s4] %v145
    %s149 = smul.addr 4, 22
    %s150 = scalar_lea.vmem %s0, %s149
    %s151 = sshrl.u32 %s4, 1
    %s152 = sor.u32 %s4, %s151
    %s153 = sand.u32 %s152, 85
    %s154 = sshrl.u32 %s153, 1
    %s155 = sor.u32 %s153, %s154
    %s156 = sand.u32 51, %s155
    %s157 = sshrl.u32 %s156, 2
    %s158 = sor.u32 %s156, %s157
    %s159 = sand.u32 15, %s158
    %v160 = vld [vmem:[%s150] sm:%s159]
    %v161 = vunpack.c.l.bf16 %v160
    %v162 = vunpack.c.h.bf16 %v160
    %s163 = scalar_lea.vmem [#allocation1], 176
    %164 = vst [vmem:[%s163] sm:%s4] %v161
    %s165 = smul.addr 4, 21
    %s166 = scalar_lea.vmem %s0, %s165
    %s167 = sshrl.u32 %s4, 1
    %s168 = sor.u32 %s4, %s167
    %s169 = sand.u32 %s168, 85
    %s170 = sshrl.u32 %s169, 1
    %s171 = sor.u32 %s169, %s170
    %s172 = sand.u32 51, %s171
    %s173 = sshrl.u32 %s172, 2
    %s174 = sor.u32 %s172, %s173
    %s175 = sand.u32 15, %s174
    %v176 = vld [vmem:[%s166] sm:%s175]
    %v177 = vunpack.c.l.bf16 %v176
    %v178 = vunpack.c.h.bf16 %v176
    %s179 = scalar_lea.vmem [#allocation1], 168
    %180 = vst [vmem:[%s179] sm:%s4] %v177
    %s181 = smul.addr 4, 20
    %s182 = scalar_lea.vmem %s0, %s181
    %s183 = sshrl.u32 %s4, 1
    %s184 = sor.u32 %s4, %s183
    %s185 = sand.u32 %s184, 85
    %s186 = sshrl.u32 %s185, 1
    %s187 = sor.u32 %s185, %s186
    %s188 = sand.u32 51, %s187
    %s189 = sshrl.u32 %s188, 2
    %s190 = sor.u32 %s188, %s189
    %s191 = sand.u32 15, %s190
    %v192 = vld [vmem:[%s182] sm:%s191]
    %v193 = vunpack.c.l.bf16 %v192
    %v194 = vunpack.c.h.bf16 %v192
    %s195 = scalar_lea.vmem [#allocation1], 160
    %196 = vst [vmem:[%s195] sm:%s4] %v193
    %s197 = smul.addr 4, 19
    %s198 = scalar_lea.vmem %s0, %s197
    %s199 = sshrl.u32 %s4, 1
    %s200 = sor.u32 %s4, %s199
    %s201 = sand.u32 %s200, 85
    %s202 = sshrl.u32 %s201, 1
    %s203 = sor.u32 %s201, %s202
    %s204 = sand.u32 51, %s203
    %s205 = sshrl.u32 %s204, 2
    %s206 = sor.u32 %s204, %s205
    %s207 = sand.u32 15, %s206
    %v208 = vld [vmem:[%s198] sm:%s207]
    %v209 = vunpack.c.l.bf16 %v208
    %v210 = vunpack.c.h.bf16 %v208
    %s211 = scalar_lea.vmem [#allocation1], 152
    %212 = vst [vmem:[%s211] sm:%s4] %v209
    %s213 = smul.addr 4, 18
    %s214 = scalar_lea.vmem %s0, %s213
    %s215 = sshrl.u32 %s4, 1
    %s216 = sor.u32 %s4, %s215
    %s217 = sand.u32 %s216, 85
    %s218 = sshrl.u32 %s217, 1
    %s219 = sor.u32 %s217, %s218
    %s220 = sand.u32 51, %s219
    %s221 = sshrl.u32 %s220, 2
    %s222 = sor.u32 %s220, %s221
    %s223 = sand.u32 15, %s222
    %v224 = vld [vmem:[%s214] sm:%s223]
    %v225 = vunpack.c.l.bf16 %v224
    %v226 = vunpack.c.h.bf16 %v224
    %s227 = scalar_lea.vmem [#allocation1], 144
    %228 = vst [vmem:[%s227] sm:%s4] %v225
    %s229 = smul.addr 4, 17
    %s230 = scalar_lea.vmem %s0, %s229
    %s231 = sshrl.u32 %s4, 1
    %s232 = sor.u32 %s4, %s231
    %s233 = sand.u32 %s232, 85
    %s234 = sshrl.u32 %s233, 1
    %s235 = sor.u32 %s233, %s234
    %s236 = sand.u32 51, %s235
    %s237 = sshrl.u32 %s236, 2
    %s238 = sor.u32 %s236, %s237
    %s239 = sand.u32 15, %s238
    %v240 = vld [vmem:[%s230] sm:%s239]
    %v241 = vunpack.c.l.bf16 %v240
    %v242 = vunpack.c.h.bf16 %v240
    %s243 = scalar_lea.vmem [#allocation1], 136
    %244 = vst [vmem:[%s243] sm:%s4] %v241
    %s245 = smul.addr 4, 16
    %s246 = scalar_lea.vmem %s0, %s245
    %s247 = sshrl.u32 %s4, 1
    %s248 = sor.u32 %s4, %s247
    %s249 = sand.u32 %s248, 85
    %s250 = sshrl.u32 %s249, 1
    %s251 = sor.u32 %s249, %s250
    %s252 = sand.u32 51, %s251
    %s253 = sshrl.u32 %s252, 2
    %s254 = sor.u32 %s252, %s253
    %s255 = sand.u32 15, %s254
    %v256 = vld [vmem:[%s246] sm:%s255]
    %v257 = vunpack.c.l.bf16 %v256
    %v258 = vunpack.c.h.bf16 %v256
    %s259 = scalar_lea.vmem [#allocation1], 128
    %260 = vst [vmem:[%s259] sm:%s4] %v257
    %s261 = smul.addr 4, 15
    %s262 = scalar_lea.vmem %s0, %s261
    %s263 = sshrl.u32 %s4, 1
    %s264 = sor.u32 %s4, %s263
    %s265 = sand.u32 %s264, 85
    %s266 = sshrl.u32 %s265, 1
    %s267 = sor.u32 %s265, %s266
    %s268 = sand.u32 51, %s267
    %s269 = sshrl.u32 %s268, 2
    %s270 = sor.u32 %s268, %s269
    %s271 = sand.u32 15, %s270
    %v272 = vld [vmem:[%s262] sm:%s271]
    %v273 = vunpack.c.l.bf16 %v272
    %v274 = vunpack.c.h.bf16 %v272
    %s275 = scalar_lea.vmem [#allocation1], 120
    %276 = vst [vmem:[%s275] sm:%s4] %v273
    %s277 = smul.addr 4, 14
    %s278 = scalar_lea.vmem %s0, %s277
    %s279 = sshrl.u32 %s4, 1
    %s280 = sor.u32 %s4, %s279
    %s281 = sand.u32 %s280, 85
    %s282 = sshrl.u32 %s281, 1
    %s283 = sor.u32 %s281, %s282
    %s284 = sand.u32 51, %s283
    %s285 = sshrl.u32 %s284, 2
    %s286 = sor.u32 %s284, %s285
    %s287 = sand.u32 15, %s286
    %v288 = vld [vmem:[%s278] sm:%s287]
    %v289 = vunpack.c.l.bf16 %v288
    %v290 = vunpack.c.h.bf16 %v288
    %s291 = scalar_lea.vmem [#allocation1], 112
    %292 = vst [vmem:[%s291] sm:%s4] %v289
    %s293 = smul.addr 4, 13
    %s294 = scalar_lea.vmem %s0, %s293
    %s295 = sshrl.u32 %s4, 1
    %s296 = sor.u32 %s4, %s295
    %s297 = sand.u32 %s296, 85
    %s298 = sshrl.u32 %s297, 1
    %s299 = sor.u32 %s297, %s298
    %s300 = sand.u32 51, %s299
    %s301 = sshrl.u32 %s300, 2
    %s302 = sor.u32 %s300, %s301
    %s303 = sand.u32 15, %s302
    %v304 = vld [vmem:[%s294] sm:%s303]
    %v305 = vunpack.c.l.bf16 %v304
    %v306 = vunpack.c.h.bf16 %v304
    %s307 = scalar_lea.vmem [#allocation1], 104
    %308 = vst [vmem:[%s307] sm:%s4] %v305
    %s309 = smul.addr 4, 12
    %s310 = scalar_lea.vmem %s0, %s309
    %s311 = sshrl.u32 %s4, 1
    %s312 = sor.u32 %s4, %s311
    %s313 = sand.u32 %s312, 85
    %s314 = sshrl.u32 %s313, 1
    %s315 = sor.u32 %s313, %s314
    %s316 = sand.u32 51, %s315
    %s317 = sshrl.u32 %s316, 2
    %s318 = sor.u32 %s316, %s317
    %s319 = sand.u32 15, %s318
    %v320 = vld [vmem:[%s310] sm:%s319]
    %v321 = vunpack.c.l.bf16 %v320
    %v322 = vunpack.c.h.bf16 %v320
    %s323 = scalar_lea.vmem [#allocation1], 96
    %324 = vst [vmem:[%s323] sm:%s4] %v321
    %s325 = smul.addr 4, 11
    %s326 = scalar_lea.vmem %s0, %s325
    %s327 = sshrl.u32 %s4, 1
    %s328 = sor.u32 %s4, %s327
    %s329 = sand.u32 %s328, 85
    %s330 = sshrl.u32 %s329, 1
    %s331 = sor.u32 %s329, %s330
    %s332 = sand.u32 51, %s331
    %s333 = sshrl.u32 %s332, 2
    %s334 = sor.u32 %s332, %s333
    %s335 = sand.u32 15, %s334
    %v336 = vld [vmem:[%s326] sm:%s335]
    %v337 = vunpack.c.l.bf16 %v336
    %v338 = vunpack.c.h.bf16 %v336
    %s339 = scalar_lea.vmem [#allocation1], 88
    %340 = vst [vmem:[%s339] sm:%s4] %v337
    %s341 = smul.addr 4, 10
    %s342 = scalar_lea.vmem %s0, %s341
    %s343 = sshrl.u32 %s4, 1
    %s344 = sor.u32 %s4, %s343
    %s345 = sand.u32 %s344, 85
    %s346 = sshrl.u32 %s345, 1
    %s347 = sor.u32 %s345, %s346
    %s348 = sand.u32 51, %s347
    %s349 = sshrl.u32 %s348, 2
    %s350 = sor.u32 %s348, %s349
    %s351 = sand.u32 15, %s350
    %v352 = vld [vmem:[%s342] sm:%s351]
    %v353 = vunpack.c.l.bf16 %v352
    %v354 = vunpack.c.h.bf16 %v352
    %s355 = scalar_lea.vmem [#allocation1], 80
    %356 = vst [vmem:[%s355] sm:%s4] %v353
    %s357 = smul.addr 4, 9
    %s358 = scalar_lea.vmem %s0, %s357
    %s359 = sshrl.u32 %s4, 1
    %s360 = sor.u32 %s4, %s359
    %s361 = sand.u32 %s360, 85
    %s362 = sshrl.u32 %s361, 1
    %s363 = sor.u32 %s361, %s362
    %s364 = sand.u32 51, %s363
    %s365 = sshrl.u32 %s364, 2
    %s366 = sor.u32 %s364, %s365
    %s367 = sand.u32 15, %s366
    %v368 = vld [vmem:[%s358] sm:%s367]
    %v369 = vunpack.c.l.bf16 %v368
    %v370 = vunpack.c.h.bf16 %v368
    %s371 = scalar_lea.vmem [#allocation1], 72
    %372 = vst [vmem:[%s371] sm:%s4] %v369
    %s373 = smul.addr 4, 8
    %s374 = scalar_lea.vmem %s0, %s373
    %s375 = sshrl.u32 %s4, 1
    %s376 = sor.u32 %s4, %s375
    %s377 = sand.u32 %s376, 85
    %s378 = sshrl.u32 %s377, 1
    %s379 = sor.u32 %s377, %s378
    %s380 = sand.u32 51, %s379
    %s381 = sshrl.u32 %s380, 2
    %s382 = sor.u32 %s380, %s381
    %s383 = sand.u32 15, %s382
    %v384 = vld [vmem:[%s374] sm:%s383]
    %v385 = vunpack.c.l.bf16 %v384
    %v386 = vunpack.c.h.bf16 %v384
    %s387 = scalar_lea.vmem [#allocation1], 64
    %388 = vst [vmem:[%s387] sm:%s4] %v385
    %s389 = smul.addr 4, 7
    %s390 = scalar_lea.vmem %s0, %s389
    %s391 = sshrl.u32 %s4, 1
    %s392 = sor.u32 %s4, %s391
    %s393 = sand.u32 %s392, 85
    %s394 = sshrl.u32 %s393, 1
    %s395 = sor.u32 %s393, %s394
    %s396 = sand.u32 51, %s395
    %s397 = sshrl.u32 %s396, 2
    %s398 = sor.u32 %s396, %s397
    %s399 = sand.u32 15, %s398
    %v400 = vld [vmem:[%s390] sm:%s399]
    %v401 = vunpack.c.l.bf16 %v400
    %v402 = vunpack.c.h.bf16 %v400
    %s403 = scalar_lea.vmem [#allocation1], 56
    %404 = vst [vmem:[%s403] sm:%s4] %v401
    %s405 = smul.addr 4, 6
    %s406 = scalar_lea.vmem %s0, %s405
    %s407 = sshrl.u32 %s4, 1
    %s408 = sor.u32 %s4, %s407
    %s409 = sand.u32 %s408, 85
    %s410 = sshrl.u32 %s409, 1
    %s411 = sor.u32 %s409, %s410
    %s412 = sand.u32 51, %s411
    %s413 = sshrl.u32 %s412, 2
    %s414 = sor.u32 %s412, %s413
    %s415 = sand.u32 15, %s414
    %v416 = vld [vmem:[%s406] sm:%s415]
    %v417 = vunpack.c.l.bf16 %v416
    %v418 = vunpack.c.h.bf16 %v416
    %s419 = scalar_lea.vmem [#allocation1], 48
    %420 = vst [vmem:[%s419] sm:%s4] %v417
    %s421 = smul.addr 4, 5
    %s422 = scalar_lea.vmem %s0, %s421
    %s423 = sshrl.u32 %s4, 1
    %s424 = sor.u32 %s4, %s423
    %s425 = sand.u32 %s424, 85
    %s426 = sshrl.u32 %s425, 1
    %s427 = sor.u32 %s425, %s426
    %s428 = sand.u32 51, %s427
    %s429 = sshrl.u32 %s428, 2
    %s430 = sor.u32 %s428, %s429
    %s431 = sand.u32 15, %s430
    %v432 = vld [vmem:[%s422] sm:%s431]
    %v433 = vunpack.c.l.bf16 %v432
    %v434 = vunpack.c.h.bf16 %v432
    %s435 = scalar_lea.vmem [#allocation1], 40
    %436 = vst [vmem:[%s435] sm:%s4] %v433
    %s437 = smul.addr 4, 4
    %s438 = scalar_lea.vmem %s0, %s437
    %s439 = sshrl.u32 %s4, 1
    %s440 = sor.u32 %s4, %s439
    %s441 = sand.u32 %s440, 85
    %s442 = sshrl.u32 %s441, 1
    %s443 = sor.u32 %s441, %s442
    %s444 = sand.u32 51, %s443
    %s445 = sshrl.u32 %s444, 2
    %s446 = sor.u32 %s444, %s445
    %s447 = sand.u32 15, %s446
    %v448 = vld [vmem:[%s438] sm:%s447]
    %v449 = vunpack.c.l.bf16 %v448
    %v450 = vunpack.c.h.bf16 %v448
    %s451 = scalar_lea.vmem [#allocation1], 32
    %452 = vst [vmem:[%s451] sm:%s4] %v449
    %s453 = smul.addr 4, 3
    %s454 = scalar_lea.vmem %s0, %s453
    %s455 = sshrl.u32 %s4, 1
    %s456 = sor.u32 %s4, %s455
    %s457 = sand.u32 %s456, 85
    %s458 = sshrl.u32 %s457, 1
    %s459 = sor.u32 %s457, %s458
    %s460 = sand.u32 51, %s459
    %s461 = sshrl.u32 %s460, 2
    %s462 = sor.u32 %s460, %s461
    %s463 = sand.u32 15, %s462
    %v464 = vld [vmem:[%s454] sm:%s463]
    %v465 = vunpack.c.l.bf16 %v464
    %v466 = vunpack.c.h.bf16 %v464
    %s467 = scalar_lea.vmem [#allocation1], 24
    %468 = vst [vmem:[%s467] sm:%s4] %v465
    %s469 = smul.addr 4, 2
    %s470 = scalar_lea.vmem %s0, %s469
    %s471 = sshrl.u32 %s4, 1
    %s472 = sor.u32 %s4, %s471
    %s473 = sand.u32 %s472, 85
    %s474 = sshrl.u32 %s473, 1
    %s475 = sor.u32 %s473, %s474
    %s476 = sand.u32 51, %s475
    %s477 = sshrl.u32 %s476, 2
    %s478 = sor.u32 %s476, %s477
    %s479 = sand.u32 15, %s478
    %v480 = vld [vmem:[%s470] sm:%s479]
    %v481 = vunpack.c.l.bf16 %v480
    %v482 = vunpack.c.h.bf16 %v480
    %s483 = scalar_lea.vmem [#allocation1], 16
    %484 = vst [vmem:[%s483] sm:%s4] %v481
    %s485 = scalar_lea.vmem %s0, 4
    %s486 = sshrl.u32 %s4, 1
    %s487 = sor.u32 %s4, %s486
    %s488 = sand.u32 %s487, 85
    %s489 = sshrl.u32 %s488, 1
    %s490 = sor.u32 %s488, %s489
    %s491 = sand.u32 51, %s490
    %s492 = sshrl.u32 %s491, 2
    %s493 = sor.u32 %s491, %s492
    %s494 = sand.u32 15, %s493
    %v495 = vld [vmem:[%s485] sm:%s494]
    %v496 = vunpack.c.l.bf16 %v495
    %v497 = vunpack.c.h.bf16 %v495
    %s498 = scalar_lea.vmem [#allocation1], 8
    %499 = vst [vmem:[%s498] sm:%s4] %v496
    %s500 = sshrl.u32 %s4, 1
    %s501 = sor.u32 %s4, %s500
    %s502 = sand.u32 %s501, 85
    %s503 = sshrl.u32 %s502, 1
    %s504 = sor.u32 %s502, %s503
    %s505 = sand.u32 51, %s504
    %s506 = sshrl.u32 %s505, 2
    %s507 = sor.u32 %s505, %s506
    %s508 = sand.u32 15, %s507
    %v509 = vld [vmem:[%s0] sm:%s508]
    %v510 = vunpack.c.l.bf16 %v509
    %v511 = vunpack.c.h.bf16 %v509
    %512 = vst [vmem:[#allocation1] sm:%s4] %v510
    %v513 = vld [vmem:[#allocation1] ss:$4 sm:$0xff]
    %vm514 = vcmask 261120
    %515 = vst.msk [vmem:[#allocation0] ss:$8 sm:$0x3] %vm514, %v513
    %s516 = scalar_lea.vmem [#allocation0], 4294967281
    %517 = vst.msk [vmem:[%s516] ss:$8 sm:$0xc] %vm514, %v513
    %s518 = scalar_lea.vmem [#allocation0], 4294967266
    %519 = vst.msk [vmem:[%s518] ss:$8 sm:$0x30] %vm514, %v513
    %s520 = scalar_lea.vmem [#allocation0], 4294967251
    %521 = vst.msk [vmem:[%s520] ss:$8 sm:$0xc0] %vm514, %v513
    %s522 = scalar_lea.vmem [#allocation1], 32
    %v523 = vld [vmem:[%s522] ss:$4 sm:$0xff]
    %vm524 = vcmask 261120
    %s525 = scalar_lea.vmem [#allocation0], 4
    %526 = vst.msk [vmem:[%s525] ss:$8 sm:$0x3] %vm524, %v523
    %s527 = scalar_lea.vmem [#allocation0], 4294967285
    %528 = vst.msk [vmem:[%s527] ss:$8 sm:$0xc] %vm524, %v523
    %s529 = scalar_lea.vmem [#allocation0], 4294967270
    %530 = vst.msk [vmem:[%s529] ss:$8 sm:$0x30] %vm524, %v523
    %s531 = scalar_lea.vmem [#allocation0], 4294967255
    %532 = vst.msk [vmem:[%s531] ss:$8 sm:$0xc0] %vm524, %v523
    %s533 = scalar_lea.vmem [#allocation1], 64
    %v534 = vld [vmem:[%s533] ss:$4 sm:$0xff]
    %vm535 = vcmask 261120
    %s536 = scalar_lea.vmem [#allocation0], 16
    %537 = vst.msk [vmem:[%s536] ss:$8 sm:$0x3] %vm535, %v534
    %s538 = scalar_lea.vmem [#allocation0], 1
    %539 = vst.msk [vmem:[%s538] ss:$8 sm:$0xc] %vm535, %v534
    %s540 = scalar_lea.vmem [#allocation0], 4294967282
    %541 = vst.msk [vmem:[%s540] ss:$8 sm:$0x30] %vm535, %v534
    %s542 = scalar_lea.vmem [#allocation0], 4294967267
    %543 = vst.msk [vmem:[%s542] ss:$8 sm:$0xc0] %vm535, %v534
    %s544 = scalar_lea.vmem [#allocation1], 96
    %v545 = vld [vmem:[%s544] ss:$4 sm:$0xff]
    %vm546 = vcmask 261120
    %s547 = scalar_lea.vmem [#allocation0], 20
    %548 = vst.msk [vmem:[%s547] ss:$8 sm:$0x3] %vm546, %v545
    %s549 = scalar_lea.vmem [#allocation0], 5
    %550 = vst.msk [vmem:[%s549] ss:$8 sm:$0xc] %vm546, %v545
    %s551 = scalar_lea.vmem [#allocation0], 4294967286
    %552 = vst.msk [vmem:[%s551] ss:$8 sm:$0x30] %vm546, %v545
    %s553 = scalar_lea.vmem [#allocation0], 4294967271
    %554 = vst.msk [vmem:[%s553] ss:$8 sm:$0xc0] %vm546, %v545
    %s555 = scalar_lea.vmem [#allocation1], 128
    %v556 = vld [vmem:[%s555] ss:$4 sm:$0xff]
    %vm557 = vcmask 261120
    %s558 = scalar_lea.vmem [#allocation0], 32
    %559 = vst.msk [vmem:[%s558] ss:$8 sm:$0x3] %vm557, %v556
    %s560 = scalar_lea.vmem [#allocation0], 17
    %561 = vst.msk [vmem:[%s560] ss:$8 sm:$0xc] %vm557, %v556
    %s562 = scalar_lea.vmem [#allocation0], 2
    %563 = vst.msk [vmem:[%s562] ss:$8 sm:$0x30] %vm557, %v556
    %s564 = scalar_lea.vmem [#allocation0], 4294967283
    %565 = vst.msk [vmem:[%s564] ss:$8 sm:$0xc0] %vm557, %v556
    %s566 = scalar_lea.vmem [#allocation1], 160
    %v567 = vld [vmem:[%s566] ss:$4 sm:$0xff]
    %vm568 = vcmask 261120
    %s569 = scalar_lea.vmem [#allocation0], 36
    %570 = vst.msk [vmem:[%s569] ss:$8 sm:$0x3] %vm568, %v567
    %s571 = scalar_lea.vmem [#allocation0], 21
    %572 = vst.msk [vmem:[%s571] ss:$8 sm:$0xc] %vm568, %v567
    %s573 = scalar_lea.vmem [#allocation0], 6
    %574 = vst.msk [vmem:[%s573] ss:$8 sm:$0x30] %vm568, %v567
    %s575 = scalar_lea.vmem [#allocation0], 4294967287
    %576 = vst.msk [vmem:[%s575] ss:$8 sm:$0xc0] %vm568, %v567
    %s577 = scalar_lea.vmem [#allocation1], 192
    %v578 = vld [vmem:[%s577] ss:$4 sm:$0xff]
    %vm579 = vcmask 261120
    %s580 = scalar_lea.vmem [#allocation0], 48
    %581 = vst.msk [vmem:[%s580] ss:$8 sm:$0x3] %vm579, %v578
    %s582 = scalar_lea.vmem [#allocation0], 33
    %583 = vst.msk [vmem:[%s582] ss:$8 sm:$0xc] %vm579, %v578
    %s584 = scalar_lea.vmem [#allocation0], 18
    %585 = vst.msk [vmem:[%s584] ss:$8 sm:$0x30] %vm579, %v578
    %s586 = scalar_lea.vmem [#allocation0], 3
    %587 = vst.msk [vmem:[%s586] ss:$8 sm:$0xc0] %vm579, %v578
    %s588 = scalar_lea.vmem [#allocation1], 224
    %v589 = vld [vmem:[%s588] ss:$4 sm:$0xff]
    %vm590 = vcmask 261120
    %s591 = scalar_lea.vmem [#allocation0], 52
    %592 = vst.msk [vmem:[%s591] ss:$8 sm:$0x3] %vm590, %v589
    %s593 = scalar_lea.vmem [#allocation0], 37
    %594 = vst.msk [vmem:[%s593] ss:$8 sm:$0xc] %vm590, %v589
    %s595 = scalar_lea.vmem [#allocation0], 22
    %596 = vst.msk [vmem:[%s595] ss:$8 sm:$0x30] %vm590, %v589
    %s597 = scalar_lea.vmem [#allocation0], 7
    %598 = vst.msk [vmem:[%s597] ss:$8 sm:$0xc0] %vm590, %v589
    %s599 = scalar_lea.vmem [#allocation1], 3
    %v600 = vld [vmem:[%s599] ss:$8 sm:$0xf]
    %s601 = scalar_lea.vmem [#allocation1], 3
    %v602 = vld [vmem:[%s601] ss:$8 sm:$0xf0]
    %vm603 = vcmask 1047556
    %v604 = vsel %vm603, %v602, %v600
    %605 = vrot.lane.b32.xlu0 %v604, 96
    %v606 = vpop.permute.xlu0 %605
    %vm607 = vcmask 1048320
    %608 = vst.msk [vmem:[#allocation0] sm:$0xff] %vm607, %v606
    %s609 = scalar_lea.vmem [#allocation1], 131
    %v610 = vld [vmem:[%s609] ss:$8 sm:$0xf]
    %s611 = scalar_lea.vmem [#allocation1], 131
    %v612 = vld [vmem:[%s611] ss:$8 sm:$0xf0]
    %vm613 = vcmask 1047556
    %v614 = vsel %vm613, %v612, %v610
    %615 = vrot.lane.b32.xlu0 %v614, 96
    %v616 = vpop.permute.xlu0 %615
    %vm617 = vcmask 1048320
    %s618 = scalar_lea.vmem [#allocation0], 32
    %619 = vst.msk [vmem:[%s618] sm:$0xff] %vm617, %v616
    %s620 = scalar_lea.vmem [#allocation1], 7
    %v621 = vld [vmem:[%s620] ss:$8 sm:$0xf]
    %s622 = scalar_lea.vmem [#allocation1], 7
    %v623 = vld [vmem:[%s622] ss:$8 sm:$0xf0]
    %vm624 = vcmask 1047556
    %v625 = vsel %vm624, %v623, %v621
    %626 = vrot.lane.b32.xlu0 %v625, 96
    %v627 = vpop.permute.xlu0 %626
    %vm628 = vcmask 1048320
    %s629 = scalar_lea.vmem [#allocation0], 8
    %630 = vst.msk [vmem:[%s629] sm:$0xff] %vm628, %v627
    %s631 = scalar_lea.vmem [#allocation1], 135
    %v632 = vld [vmem:[%s631] ss:$8 sm:$0xf]
    %s633 = scalar_lea.vmem [#allocation1], 135
    %v634 = vld [vmem:[%s633] ss:$8 sm:$0xf0]
    %vm635 = vcmask 1047556
    %v636 = vsel %vm635, %v634, %v632
    %637 = vrot.lane.b32.xlu0 %v636, 96
    %v638 = vpop.permute.xlu0 %637
    %vm639 = vcmask 1048320
    %s640 = scalar_lea.vmem [#allocation0], 40
    %641 = vst.msk [vmem:[%s640] sm:$0xff] %vm639, %v638
    %s642 = scalar_lea.vmem [#allocation1], 67
    %v643 = vld [vmem:[%s642] ss:$8 sm:$0xf]
    %s644 = scalar_lea.vmem [#allocation1], 67
    %v645 = vld [vmem:[%s644] ss:$8 sm:$0xf0]
    %vm646 = vcmask 1047556
    %v647 = vsel %vm646, %v645, %v643
    %648 = vrot.lane.b32.xlu0 %v647, 96
    %v649 = vpop.permute.xlu0 %648
    %vm650 = vcmask 1048320
    %s651 = scalar_lea.vmem [#allocation0], 16
    %652 = vst.msk [vmem:[%s651] sm:$0xff] %vm650, %v649
    %s653 = scalar_lea.vmem [#allocation1], 195
    %v654 = vld [vmem:[%s653] ss:$8 sm:$0xf]
    %s655 = scalar_lea.vmem [#allocation1], 195
    %v656 = vld [vmem:[%s655] ss:$8 sm:$0xf0]
    %vm657 = vcmask 1047556
    %v658 = vsel %vm657, %v656, %v654
    %659 = vrot.lane.b32.xlu0 %v658, 96
    %v660 = vpop.permute.xlu0 %659
    %vm661 = vcmask 1048320
    %s662 = scalar_lea.vmem [#allocation0], 48
    %663 = vst.msk [vmem:[%s662] sm:$0xff] %vm661, %v660
    %s664 = scalar_lea.vmem [#allocation1], 71
    %v665 = vld [vmem:[%s664] ss:$8 sm:$0xf]
    %s666 = scalar_lea.vmem [#allocation1], 71
    %v667 = vld [vmem:[%s666] ss:$8 sm:$0xf0]
    %vm668 = vcmask 1047556
    %v669 = vsel %vm668, %v667, %v665
    %670 = vrot.lane.b32.xlu0 %v669, 96
    %v671 = vpop.permute.xlu0 %670
    %vm672 = vcmask 1048320
    %s673 = scalar_lea.vmem [#allocation0], 24
    %674 = vst.msk [vmem:[%s673] sm:$0xff] %vm672, %v671
    %s675 = scalar_lea.vmem [#allocation1], 199
    %v676 = vld [vmem:[%s675] ss:$8 sm:$0xf]
    %s677 = scalar_lea.vmem [#allocation1], 199
    %v678 = vld [vmem:[%s677] ss:$8 sm:$0xf0]
    %vm679 = vcmask 1047556
    %v680 = vsel %vm679, %v678, %v676
    %681 = vrot.lane.b32.xlu0 %v680, 96
    %v682 = vpop.permute.xlu0 %681
    %vm683 = vcmask 1048320
    %s684 = scalar_lea.vmem [#allocation0], 56
    %685 = vst.msk [vmem:[%s684] sm:$0xff] %vm683, %v682
    %s686 = scalar_lea.vmem [#allocation1], 2
    %v687 = vld [vmem:[%s686] ss:$8 sm:$0xf]
    %s688 = scalar_lea.vmem [#allocation1], 2
    %v689 = vld [vmem:[%s688] ss:$8 sm:$0xf0]
    %vm690 = vcmask 1047556
    %v691 = vsel %vm690, %v689, %v687
    %692 = vrot.lane.b32.xlu0 %v691, 64
    %v693 = vpop.permute.xlu0 %692
    %vm694 = vcmask 785920
    %695 = vst.msk [vmem:[#allocation0] sm:$0xff] %vm694, %v693
    %s696 = scalar_lea.vmem [#allocation1], 130
    %v697 = vld [vmem:[%s696] ss:$8 sm:$0xf]
    %s698 = scalar_lea.vmem [#allocation1], 130
    %v699 = vld [vmem:[%s698] ss:$8 sm:$0xf0]
    %vm700 = vcmask 1047556
    %v701 = vsel %vm700, %v699, %v697
    %702 = vrot.lane.b32.xlu0 %v701, 64
    %v703 = vpop.permute.xlu0 %702
    %vm704 = vcmask 785920
    %s705 = scalar_lea.vmem [#allocation0], 32
    %706 = vst.msk [vmem:[%s705] sm:$0xff] %vm704, %v703
    %s707 = scalar_lea.vmem [#allocation1], 6
    %v708 = vld [vmem:[%s707] ss:$8 sm:$0xf]
    %s709 = scalar_lea.vmem [#allocation1], 6
    %v710 = vld [vmem:[%s709] ss:$8 sm:$0xf0]
    %vm711 = vcmask 1047556
    %v712 = vsel %vm711, %v710, %v708
    %713 = vrot.lane.b32.xlu0 %v712, 64
    %v714 = vpop.permute.xlu0 %713
    %vm715 = vcmask 785920
    %s716 = scalar_lea.vmem [#allocation0], 8
    %717 = vst.msk [vmem:[%s716] sm:$0xff] %vm715, %v714
    %s718 = scalar_lea.vmem [#allocation1], 134
    %v719 = vld [vmem:[%s718] ss:$8 sm:$0xf]
    %s720 = scalar_lea.vmem [#allocation1], 134
    %v721 = vld [vmem:[%s720] ss:$8 sm:$0xf0]
    %vm722 = vcmask 1047556
    %v723 = vsel %vm722, %v721, %v719
    %724 = vrot.lane.b32.xlu0 %v723, 64
    %v725 = vpop.permute.xlu0 %724
    %vm726 = vcmask 785920
    %s727 = scalar_lea.vmem [#allocation0], 40
    %728 = vst.msk [vmem:[%s727] sm:$0xff] %vm726, %v725
    %s729 = scalar_lea.vmem [#allocation1], 66
    %v730 = vld [vmem:[%s729] ss:$8 sm:$0xf]
    %s731 = scalar_lea.vmem [#allocation1], 66
    %v732 = vld [vmem:[%s731] ss:$8 sm:$0xf0]
    %vm733 = vcmask 1047556
    %v734 = vsel %vm733, %v732, %v730
    %735 = vrot.lane.b32.xlu0 %v734, 64
    %v736 = vpop.permute.xlu0 %735
    %vm737 = vcmask 785920
    %s738 = scalar_lea.vmem [#allocation0], 16
    %739 = vst.msk [vmem:[%s738] sm:$0xff] %vm737, %v736
    %s740 = scalar_lea.vmem [#allocation1], 194
    %v741 = vld [vmem:[%s740] ss:$8 sm:$0xf]
    %s742 = scalar_lea.vmem [#allocation1], 194
    %v743 = vld [vmem:[%s742] ss:$8 sm:$0xf0]
    %vm744 = vcmask 1047556
    %v745 = vsel %vm744, %v743, %v741
    %746 = vrot.lane.b32.xlu0 %v745, 64
    %v747 = vpop.permute.xlu0 %746
    %vm748 = vcmask 785920
    %s749 = scalar_lea.vmem [#allocation0], 48
    %750 = vst.msk [vmem:[%s749] sm:$0xff] %vm748, %v747
    %s751 = scalar_lea.vmem [#allocation1], 70
    %v752 = vld [vmem:[%s751] ss:$8 sm:$0xf]
    %s753 = scalar_lea.vmem [#allocation1], 70
    %v754 = vld [vmem:[%s753] ss:$8 sm:$0xf0]
    %vm755 = vcmask 1047556
    %v756 = vsel %vm755, %v754, %v752
    %757 = vrot.lane.b32.xlu0 %v756, 64
    %v758 = vpop.permute.xlu0 %757
    %vm759 = vcmask 785920
    %s760 = scalar_lea.vmem [#allocation0], 24
    %761 = vst.msk [vmem:[%s760] sm:$0xff] %vm759, %v758
    %s762 = scalar_lea.vmem [#allocation1], 198
    %v763 = vld [vmem:[%s762] ss:$8 sm:$0xf]
    %s764 = scalar_lea.vmem [#allocation1], 198
    %v765 = vld [vmem:[%s764] ss:$8 sm:$0xf0]
    %vm766 = vcmask 1047556
    %v767 = vsel %vm766, %v765, %v763
    %768 = vrot.lane.b32.xlu0 %v767, 64
    %v769 = vpop.permute.xlu0 %768
    %vm770 = vcmask 785920
    %s771 = scalar_lea.vmem [#allocation0], 56
    %772 = vst.msk [vmem:[%s771] sm:$0xff] %vm770, %v769
    %s773 = scalar_lea.vmem [#allocation1], 1
    %v774 = vld [vmem:[%s773] ss:$8 sm:$0xf]
    %s775 = scalar_lea.vmem [#allocation1], 1
    %v776 = vld [vmem:[%s775] ss:$8 sm:$0xf0]
    %vm777 = vcmask 1047556
    %v778 = vsel %vm777, %v776, %v774
    %779 = vrot.lane.b32.xlu0 %v778, 32
    %v780 = vpop.permute.xlu0 %779
    %vm781 = vcmask 523520
    %782 = vst.msk [vmem:[#allocation0] sm:$0xff] %vm781, %v780
    %s783 = scalar_lea.vmem [#allocation1], 129
    %v784 = vld [vmem:[%s783] ss:$8 sm:$0xf]
    %s785 = scalar_lea.vmem [#allocation1], 129
    %v786 = vld [vmem:[%s785] ss:$8 sm:$0xf0]
    %vm787 = vcmask 1047556
    %v788 = vsel %vm787, %v786, %v784
    %789 = vrot.lane.b32.xlu0 %v788, 32
    %v790 = vpop.permute.xlu0 %789
    %vm791 = vcmask 523520
    %s792 = scalar_lea.vmem [#allocation0], 32
    %793 = vst.msk [vmem:[%s792] sm:$0xff] %vm791, %v790
    %s794 = scalar_lea.vmem [#allocation1], 5
    %v795 = vld [vmem:[%s794] ss:$8 sm:$0xf]
    %s796 = scalar_lea.vmem [#allocation1], 5
    %v797 = vld [vmem:[%s796] ss:$8 sm:$0xf0]
    %vm798 = vcmask 1047556
    %v799 = vsel %vm798, %v797, %v795
    %800 = vrot.lane.b32.xlu0 %v799, 32
    %v801 = vpop.permute.xlu0 %800
    %vm802 = vcmask 523520
    %s803 = scalar_lea.vmem [#allocation0], 8
    %804 = vst.msk [vmem:[%s803] sm:$0xff] %vm802, %v801
    %s805 = scalar_lea.vmem [#allocation1], 133
    %v806 = vld [vmem:[%s805] ss:$8 sm:$0xf]
    %s807 = scalar_lea.vmem [#allocation1], 133
    %v808 = vld [vmem:[%s807] ss:$8 sm:$0xf0]
    %vm809 = vcmask 1047556
    %v810 = vsel %vm809, %v808, %v806
    %811 = vrot.lane.b32.xlu0 %v810, 32
    %v812 = vpop.permute.xlu0 %811
    %vm813 = vcmask 523520
    %s814 = scalar_lea.vmem [#allocation0], 40
    %815 = vst.msk [vmem:[%s814] sm:$0xff] %vm813, %v812
    %s816 = scalar_lea.vmem [#allocation1], 65
    %v817 = vld [vmem:[%s816] ss:$8 sm:$0xf]
    %s818 = scalar_lea.vmem [#allocation1], 65
    %v819 = vld [vmem:[%s818] ss:$8 sm:$0xf0]
    %vm820 = vcmask 1047556
    %v821 = vsel %vm820, %v819, %v817
    %822 = vrot.lane.b32.xlu0 %v821, 32
    %v823 = vpop.permute.xlu0 %822
    %vm824 = vcmask 523520
    %s825 = scalar_lea.vmem [#allocation0], 16
    %826 = vst.msk [vmem:[%s825] sm:$0xff] %vm824, %v823
    %s827 = scalar_lea.vmem [#allocation1], 193
    %v828 = vld [vmem:[%s827] ss:$8 sm:$0xf]
    %s829 = scalar_lea.vmem [#allocation1], 193
    %v830 = vld [vmem:[%s829] ss:$8 sm:$0xf0]
    %vm831 = vcmask 1047556
    %v832 = vsel %vm831, %v830, %v828
    %833 = vrot.lane.b32.xlu0 %v832, 32
    %v834 = vpop.permute.xlu0 %833
    %vm835 = vcmask 523520
    %s836 = scalar_lea.vmem [#allocation0], 48
    %837 = vst.msk [vmem:[%s836] sm:$0xff] %vm835, %v834
    %s838 = scalar_lea.vmem [#allocation1], 69
    %v839 = vld [vmem:[%s838] ss:$8 sm:$0xf]
    %s840 = scalar_lea.vmem [#allocation1], 69
    %v841 = vld [vmem:[%s840] ss:$8 sm:$0xf0]
    %vm842 = vcmask 1047556
    %v843 = vsel %vm842, %v841, %v839
    %844 = vrot.lane.b32.xlu0 %v843, 32
    %v845 = vpop.permute.xlu0 %844
    %vm846 = vcmask 523520
    %s847 = scalar_lea.vmem [#allocation0], 24
    %848 = vst.msk [vmem:[%s847] sm:$0xff] %vm846, %v845
    %s849 = scalar_lea.vmem [#allocation1], 197
    %v850 = vld [vmem:[%s849] ss:$8 sm:$0xf]
    %s851 = scalar_lea.vmem [#allocation1], 197
    %v852 = vld [vmem:[%s851] ss:$8 sm:$0xf0]
    %vm853 = vcmask 1047556
    %v854 = vsel %vm853, %v852, %v850
    %855 = vrot.lane.b32.xlu0 %v854, 32
    %v856 = vpop.permute.xlu0 %855
    %vm857 = vcmask 523520
    %s858 = scalar_lea.vmem [#allocation0], 56
    %859 = vst.msk [vmem:[%s858] sm:$0xff] %vm857, %v856
    %s861 = smul.u32 4, 2
    %s862 = sshllo.u32 0, %s861
    %s863 = sshrl.u32 %s861, 1
    %v864 = vld [vmem:[#allocation0] sm:%s862]
    %v865 = vpack.c.bf16 0.0, %v864
    %s866 = sshllo.u32 0, %s863
    %867 = vst [vmem:[%s1] sm:%s866] %v865
    %s868 = scalar_lea.vmem [#allocation0], 8
    %v869 = vld [vmem:[%s868] sm:%s862]
    %v870 = vpack.c.bf16 0.0, %v869
    %s871 = sshllo.u32 0, %s863
    %s872 = scalar_lea.vmem %s1, 4
    %873 = vst [vmem:[%s872] sm:%s871] %v870
    %s874 = scalar_lea.vmem [#allocation0], 16
    %v875 = vld [vmem:[%s874] sm:%s862]
    %v876 = vpack.c.bf16 0.0, %v875
    %s877 = sshllo.u32 0, %s863
    %s878 = smul.addr 4, 2
    %s879 = scalar_lea.vmem %s1, %s878
    %880 = vst [vmem:[%s879] sm:%s877] %v876
    %s881 = scalar_lea.vmem [#allocation0], 24
    %v882 = vld [vmem:[%s881] sm:%s862]
    %v883 = vpack.c.bf16 0.0, %v882
    %s884 = sshllo.u32 0, %s863
    %s885 = smul.addr 4, 3
    %s886 = scalar_lea.vmem %s1, %s885
    %887 = vst [vmem:[%s886] sm:%s884] %v883
    %s888 = scalar_lea.vmem [#allocation0], 32
    %v889 = vld [vmem:[%s888] sm:%s862]
    %v890 = vpack.c.bf16 0.0, %v889
    %s891 = sshllo.u32 0, %s863
    %s892 = smul.addr 4, 4
    %s893 = scalar_lea.vmem %s1, %s892
    %894 = vst [vmem:[%s893] sm:%s891] %v890
    %s895 = scalar_lea.vmem [#allocation0], 40
    %v896 = vld [vmem:[%s895] sm:%s862]
    %v897 = vpack.c.bf16 0.0, %v896
    %s898 = sshllo.u32 0, %s863
    %s899 = smul.addr 4, 5
    %s900 = scalar_lea.vmem %s1, %s899
    %901 = vst [vmem:[%s900] sm:%s898] %v897
    %s902 = scalar_lea.vmem [#allocation0], 48
    %v903 = vld [vmem:[%s902] sm:%s862]
    %v904 = vpack.c.bf16 0.0, %v903
    %s905 = sshllo.u32 0, %s863
    %s906 = smul.addr 4, 6
    %s907 = scalar_lea.vmem %s1, %s906
    %908 = vst [vmem:[%s907] sm:%s905] %v904
    %s909 = scalar_lea.vmem [#allocation0], 56
    %v910 = vld [vmem:[%s909] sm:%s862]
    %v911 = vpack.c.bf16 0.0, %v910
    %s912 = sshllo.u32 0, %s863
    %s913 = smul.addr 4, 7
    %s914 = scalar_lea.vmem %s1, %s913
    %915 = vst [vmem:[%s914] sm:%s912] %v911

// kernel: pallas_forward.1
$region0: #{pallas_forward.1}
  #allocation0 [shape = 'u32[]', space=smem, size = 0x4, offset = 0x4, fixed_abs, tag = 'smem constant byte address 0x4 - core index']
  #allocation1 [shape = 'u32[144,128]{1,0:T(1,128)}', space=vmem, size = 0x12000, scoped, tag = 'internal scratch']
  %s0 = inlined_call_operand.vmem [shape: bf16[64,32], index: 0, kind: input, shape index: {}]
  %s1 = inlined_call_operand.vmem [shape: bf16[64,32], index: 1, kind: input, shape index: {}]
  %s2 = inlined_call_operand.vmem [shape: f32[8,8,32], index: 2, kind: input, shape index: {}]
  %s3 = inlined_call_operand.vmem [shape: f32[8,128], index: 3, kind: input, shape index: {}]
  %s4 = inlined_call_operand.vmem [shape: bf16[32,96], index: 4, kind: input, shape index: {}]
  %s5 = inlined_call_operand.vmem [shape: bf16[32,96], index: 5, kind: input, shape index: {}]
  %s6 = inlined_call_operand.vmem [shape: f32[1,96], index: 6, kind: input, shape index: {}]
  %s7 = inlined_call_operand.vmem [shape: f32[1,96], index: 7, kind: input, shape index: {}]
  %s8 = inlined_call_operand.vmem [shape: bf16[32,32], index: 8, kind: input, shape index: {}]
  %s9 = inlined_call_operand.vmem [shape: f32[1,32], index: 9, kind: input, shape index: {}]
  %s10 = inlined_call_operand.vmem [shape: bf16[32,32], index: 10, kind: input, shape index: {}]
  %s11 = inlined_call_operand.vmem [shape: bf16[32,352], index: 11, kind: input, shape index: {}]
  %s12 = inlined_call_operand.vmem [shape: f32[1,96], index: 12, kind: input, shape index: {}]
  %s13 = inlined_call_operand.vmem [shape: bf16[256,128], index: 13, kind: input, shape index: {}]
  %s14 = inlined_call_operand.vmem [shape: bf16[32,128], index: 14, kind: input, shape index: {}]
  %s15 = inlined_call_operand.vmem [shape: f32[1,128], index: 15, kind: input, shape index: {}]
  %s16 = inlined_call_operand.vmem [shape: bf16[32,128], index: 16, kind: input, shape index: {}]
  %s17 = inlined_call_operand.vmem [shape: bf16[32,32], index: 17, kind: input, shape index: {}]
  %s18 = inlined_call_operand.vmem [shape: bf16[32,128], index: 18, kind: input, shape index: {}]
  %s19 = inlined_call_operand.vmem [shape: f32[8,8,128], index: 19, kind: output, shape index: {}]
  %s20 = sld [smem:[#allocation0]]
  $region86: #{pallas_forward.1} parent=0
    _
  %s22 = ssub.s32 1, %s20
  %s23 = scalar_select 0, %s22, %s20
  // Predicated region
  $region2: #{pallas_forward.1} parent=0 // pred_check
    _
  $region3: #{pallas_forward.1} parent=0 // pred_check_branch
    %25 = sbr.rel (0) target = $region5
  $region4: #{pallas_forward.1} parent=0 // pred_region
    _
  $region5: #{pallas_forward.1} parent=0 // pred_fallthru
    _
  // Predicated region
  $region6: #{pallas_forward.1} parent=0 // pred_check
    _
  $region7: #{pallas_forward.1} parent=0 // pred_check_branch
    %27 = sbr.rel (0) target = $region9
  $region8: #{pallas_forward.1} parent=0 // pred_region
    _
  $region9: #{pallas_forward.1} parent=0 // pred_fallthru
    _
  // Predicated region
  $region10: #{pallas_forward.1} parent=0 // pred_check
    _
  $region11: #{pallas_forward.1} parent=0 // pred_check_branch
    %29 = sbr.rel (0) target = $region13
  $region12: #{pallas_forward.1} parent=0 // pred_region
    _
  $region13: #{pallas_forward.1} parent=0 // pred_fallthru
    _
  // Predicated region
  $region14: #{pallas_forward.1} parent=0 // pred_check
    _
  $region15: #{pallas_forward.1} parent=0 // pred_check_branch
    %31 = sbr.rel (0) target = $region17
  $region16: #{pallas_forward.1} parent=0 // pred_region
    _
  $region17: #{pallas_forward.1} parent=0 // pred_fallthru
    _
  // Predicated region
  $region18: #{pallas_forward.1} parent=0 // pred_check
    _
  $region19: #{pallas_forward.1} parent=0 // pred_check_branch
    %33 = sbr.rel (0) target = $region21
  $region20: #{pallas_forward.1} parent=0 // pred_region
    _
  $region21: #{pallas_forward.1} parent=0 // pred_fallthru
    _
  // Predicated region
  $region22: #{pallas_forward.1} parent=0 // pred_check
    _
  $region23: #{pallas_forward.1} parent=0 // pred_check_branch
    %35 = sbr.rel (0) target = $region25
  $region24: #{pallas_forward.1} parent=0 // pred_region
    _
  $region25: #{pallas_forward.1} parent=0 // pred_fallthru
    _
  // Predicated region
  $region26: #{pallas_forward.1} parent=0 // pred_check
    _
  $region27: #{pallas_forward.1} parent=0 // pred_check_branch
    %37 = sbr.rel (0) target = $region29
  $region28: #{pallas_forward.1} parent=0 // pred_region
    _
  $region29: #{pallas_forward.1} parent=0 // pred_fallthru
    _
  // Predicated region
  $region30: #{pallas_forward.1} parent=0 // pred_check
    _
  $region31: #{pallas_forward.1} parent=0 // pred_check_branch
    %39 = sbr.rel (0) target = $region33
  $region32: #{pallas_forward.1} parent=0 // pred_region
    _
  $region33: #{pallas_forward.1} parent=0 // pred_fallthru
    _
  // Predicated region
  $region34: #{pallas_forward.1} parent=0 // pred_check
    _
  $region35: #{pallas_forward.1} parent=0 // pred_check_branch
    %41 = sbr.rel (0) target = $region37
  $region36: #{pallas_forward.1} parent=0 // pred_region
    _
  $region37: #{pallas_forward.1} parent=0 // pred_fallthru
    _
  // Predicated region
  $region38: #{pallas_forward.1} parent=0 // pred_check
    _
  $region39: #{pallas_forward.1} parent=0 // pred_check_branch
    %43 = sbr.rel (0) target = $region41
  $region40: #{pallas_forward.1} parent=0 // pred_region
    _
  $region41: #{pallas_forward.1} parent=0 // pred_fallthru
    _
  // Predicated region
  $region42: #{pallas_forward.1} parent=0 // pred_check
    _
  $region43: #{pallas_forward.1} parent=0 // pred_check_branch
    %45 = sbr.rel (0) target = $region45
  $region44: #{pallas_forward.1} parent=0 // pred_region
    _
  $region45: #{pallas_forward.1} parent=0 // pred_fallthru
    _
  // Predicated region
  $region46: #{pallas_forward.1} parent=0 // pred_check
    _
  $region47: #{pallas_forward.1} parent=0 // pred_check_branch
    %47 = sbr.rel (0) target = $region49
  $region48: #{pallas_forward.1} parent=0 // pred_region
    _
  $region49: #{pallas_forward.1} parent=0 // pred_fallthru
    _
  // Predicated region
  $region50: #{pallas_forward.1} parent=0 // pred_check
    _
  $region51: #{pallas_forward.1} parent=0 // pred_check_branch
    %49 = sbr.rel (0) target = $region53
  $region52: #{pallas_forward.1} parent=0 // pred_region
    _
  $region53: #{pallas_forward.1} parent=0 // pred_fallthru
    _
  // Predicated region
  $region54: #{pallas_forward.1} parent=0 // pred_check
    _
  $region55: #{pallas_forward.1} parent=0 // pred_check_branch
    %51 = sbr.rel (0) target = $region57
  $region56: #{pallas_forward.1} parent=0 // pred_region
    _
  $region57: #{pallas_forward.1} parent=0 // pred_fallthru
    _
  // Predicated region
  $region58: #{pallas_forward.1} parent=0 // pred_check
    _
  $region59: #{pallas_forward.1} parent=0 // pred_check_branch
    %53 = sbr.rel (0) target = $region61
  $region60: #{pallas_forward.1} parent=0 // pred_region
    _
  $region61: #{pallas_forward.1} parent=0 // pred_fallthru
    _
  // Predicated region
  $region62: #{pallas_forward.1} parent=0 // pred_check
    _
  $region63: #{pallas_forward.1} parent=0 // pred_check_branch
    %55 = sbr.rel (0) target = $region65
  $region64: #{pallas_forward.1} parent=0 // pred_region
    _
  $region65: #{pallas_forward.1} parent=0 // pred_fallthru
    _
  // Predicated region
  $region66: #{pallas_forward.1} parent=0 // pred_check
    _
  $region67: #{pallas_forward.1} parent=0 // pred_check_branch
    %57 = sbr.rel (0) target = $region69
  $region68: #{pallas_forward.1} parent=0 // pred_region
    _
  $region69: #{pallas_forward.1} parent=0 // pred_fallthru
    _
  // Predicated region
  $region70: #{pallas_forward.1} parent=0 // pred_check
    _
  $region71: #{pallas_forward.1} parent=0 // pred_check_branch
    %59 = sbr.rel (0) target = $region73
  $region72: #{pallas_forward.1} parent=0 // pred_region
    _
  $region73: #{pallas_forward.1} parent=0 // pred_fallthru
    _
  // Predicated region
  $region74: #{pallas_forward.1} parent=0 // pred_check
    _
  $region75: #{pallas_forward.1} parent=0 // pred_check_branch
    %61 = sbr.rel (0) target = $region77
  $region76: #{pallas_forward.1} parent=0 // pred_region
    _
  $region77: #{pallas_forward.1} parent=0 // pred_fallthru
    _
  %v63 = vld [vmem:[%s7] sm:$0x1]
  %v65 = vlaneseq
  %v66 = vshrl.u32 %v65, 7
  %v67 = vsub.s32 0, %v66
  %v68 = vrot.slane %v63, %v67
  %v70 = vld [vmem:[%s12] sm:$0x1]
  %v72 = vlaneseq
  %v73 = vshrl.u32 %v72, 7
  %v74 = vsub.s32 0, %v73
  %v75 = vrot.slane %v70, %v74
  %v77 = vld [vmem:[%s3] sm:$0xff]
  %v78 = vld [vmem:[%s0] sm:$0xf]
  %v79 = vld [vmem:[%s0 + $0x4] sm:$0xf]
  %v80 = vld [vmem:[%s0 + $0x8] sm:$0xf]
  %v81 = vld [vmem:[%s0 + $0xc] sm:$0xf]
  %v82 = vld [vmem:[%s0 + $0x10] sm:$0xf]
  %v83 = vld [vmem:[%s0 + $0x14] sm:$0xf]
  %v84 = vld [vmem:[%s0 + $0x18] sm:$0xf]
  %v85 = vld [vmem:[%s0 + $0x1c] sm:$0xf]
  %v86 = vld [vmem:[%s4] sm:$0xf]
  %v87 = vld [vmem:[%s4 + $0x4] sm:$0xf]
  %v88 = vld [vmem:[%s4 + $0x8] sm:$0xf]
  %v89 = vld [vmem:[%s4 + $0xc] sm:$0xf]
  %v90 = vld [vmem:[%s6] sm:$0x1]
  %v92 = vlaneseq
  %v93 = vshrl.u32 %v92, 7
  %v94 = vsub.s32 0, %v93
  %v95 = vrot.slane %v90, %v94
  %v105 = vunpack.c.l.b16 %v78
  %v106 = vunpack.c.l.b16 %v79
  %v107 = vunpack.c.l.b16 %v80
  %v108 = vunpack.c.l.b16 %v81
  %v109 = vunpack.c.l.b16 %v82
  %v110 = vunpack.c.l.b16 %v83
  %v111 = vunpack.c.l.b16 %v84
  %v112 = vunpack.c.l.b16 %v85
  %v113 = vpack.c.b16 %v106, %v105
  %v114 = vpack.c.b16 %v108, %v107
  %v115 = vpack.c.b16 %v110, %v109
  %v116 = vpack.c.b16 %v112, %v111
  %v121 = vunpack.c.l.b16 %v86
  %v122 = vunpack.c.l.b16 %v87
  %v123 = vunpack.c.l.b16 %v88
  %v124 = vunpack.c.l.b16 %v89
  %v125 = vpack.c.b16 %v122, %v121
  %v126 = vpack.c.b16 %v124, %v123
  %vm129 = vcmask 261120
  %v131 = vsel %vm129, %v113, 0
  %v134 = vsel %vm129, %v114, 0
  %v137 = vsel %vm129, %v115, 0
  %v140 = vsel %vm129, %v116, 0
  %142 = vmatprep.subr.bf16.mxu0 0
  %143 = vmatpush1.bf16.msra.mxu0 %v125
  %144 = vmatprep.subr.bf16.mxu0 0
  %145 = vmatpush1.bf16.msra.mxu0 %v126
  %146 = vmatprep.subr.bf16.mxu0 0
  %147 = vmatpush1.bf16.msra.mxu0 0
  %148 = vmatprep.subr.bf16.mxu0 0
  %149 = vmatpush1.bf16.msra.mxu0 0
  %150 = vmatprep.subr.bf16.mxu0 0
  %151 = vmatpush1.bf16.msra.mxu0 0
  %152 = vmatprep.subr.bf16.mxu0 0
  %153 = vmatpush1.bf16.msra.mxu0 0
  %154 = vmatprep.subr.bf16.mxu0 0
  %155 = vmatpush1.bf16.msra.mxu0 0
  %156 = vmatprep.subr.bf16.mxu0 0
  %157 = vmatpush1.bf16.msra.mxu0 0
  %158 = vmatprep.subr.bf16.mxu0 0
  %159 = vmatpush1.bf16.msra.mxu0 0
  %160 = vmatprep.subr.bf16.mxu0 0
  %161 = vmatpush1.bf16.msra.mxu0 0
  %162 = vmatprep.subr.bf16.mxu0 0
  %163 = vmatpush1.bf16.msra.mxu0 0
  %164 = vmatprep.subr.bf16.mxu0 0
  %165 = vmatpush1.bf16.msra.mxu0 0
  %166 = vmatprep.subr.bf16.mxu0 0
  %167 = vmatpush1.bf16.msra.mxu0 0
  %168 = vmatprep.subr.bf16.mxu0 0
  %169 = vmatpush1.bf16.msra.mxu0 0
  %170 = vmatprep.subr.bf16.mxu0 0
  %171 = vmatpush1.bf16.msra.mxu0 0
  %172 = vmatprep.subr.bf16.mxu0 0
  %173 = vmatpush1.bf16.msra.mxu0 0
  %174 = vmatprep.mubr.bf16.mxu0 0
  %175 = vmatmul.mubr.bf16.gmra.mrb[0].mxu0 %v131
  %v176 = vpop.f32.mrb[0].mxu0
  %v177 = vadd.f32 %v95, %v176
  %v178 = vpop.f32.mrb[0].mxu0
  %v179 = vpop.f32.mrb[0].mxu0
  %v180 = vadd.f32 %v95, %v179
  %v181 = vpop.f32.mrb[0].mxu0
  %182 = vmatprep.mubr.bf16.mxu0 0
  %183 = vmatmul.mubr.bf16.gmra.mrb[0].mxu0 %v134
  %v184 = vpop.f32.mrb[0].mxu0
  %v185 = vadd.f32 %v95, %v184
  %v186 = vpop.f32.mrb[0].mxu0
  %v187 = vpop.f32.mrb[0].mxu0
  %v188 = vadd.f32 %v95, %v187
  %v189 = vpop.f32.mrb[0].mxu0
  %190 = vmatprep.mubr.bf16.mxu0 0
  %191 = vmatmul.mubr.bf16.gmra.mrb[0].mxu0 %v137
  %v192 = vpop.f32.mrb[0].mxu0
  %v193 = vadd.f32 %v95, %v192
  %v194 = vpop.f32.mrb[0].mxu0
  %v195 = vpop.f32.mrb[0].mxu0
  %v196 = vadd.f32 %v95, %v195
  %v197 = vpop.f32.mrb[0].mxu0
  %198 = vmatprep.mubr.bf16.mxu0 0
  %199 = vmatmul.mubr.bf16.gmra.mrb[0].mxu0 %v140
  %v200 = vpop.f32.mrb[0].mxu0
  %v201 = vadd.f32 %v95, %v200
  %v202 = vpop.f32.mrb[0].mxu0
  %v203 = vpop.f32.mrb[0].mxu0
  %v204 = vadd.f32 %v95, %v203
  %v205 = vpop.f32.mrb[0].mxu0
  %206 = vdwg.mxu0
  %v207 = vld [vmem:[%s1] sm:$0xf]
  %v208 = vld [vmem:[%s1 + $0x4] sm:$0xf]
  %v209 = vld [vmem:[%s1 + $0x8] sm:$0xf]
  %v210 = vld [vmem:[%s1 + $0xc] sm:$0xf]
  %v211 = vld [vmem:[%s1 + $0x10] sm:$0xf]
  %v212 = vld [vmem:[%s1 + $0x14] sm:$0xf]
  %v213 = vld [vmem:[%s1 + $0x18] sm:$0xf]
  %v214 = vld [vmem:[%s1 + $0x1c] sm:$0xf]
  %v215 = vld [vmem:[%s14] sm:$0xf]
  %v216 = vld [vmem:[%s14 + $0x4] sm:$0xf]
  %v217 = vld [vmem:[%s14 + $0x8] sm:$0xf]
  %v218 = vld [vmem:[%s14 + $0xc] sm:$0xf]
  %v219 = vld [vmem:[%s15] sm:$0x1]
  %v221 = vlaneseq
  %v222 = vshrl.u32 %v221, 7
  %v223 = vsub.s32 0, %v222
  %v224 = vrot.slane %v219, %v223
  %v234 = vunpack.c.l.b16 %v207
  %v235 = vunpack.c.l.b16 %v208
  %v236 = vunpack.c.l.b16 %v209
  %v237 = vunpack.c.l.b16 %v210
  %v238 = vunpack.c.l.b16 %v211
  %v239 = vunpack.c.l.b16 %v212
  %v240 = vunpack.c.l.b16 %v213
  %v241 = vunpack.c.l.b16 %v214
  %v242 = vpack.c.b16 %v235, %v234
  %v243 = vpack.c.b16 %v237, %v236
  %v244 = vpack.c.b16 %v239, %v238
  %v245 = vpack.c.b16 %v241, %v240
  %v250 = vunpack.c.l.b16 %v215
  %v251 = vunpack.c.l.b16 %v216
  %v252 = vunpack.c.l.b16 %v217
  %v253 = vunpack.c.l.b16 %v218
  %v254 = vpack.c.b16 %v251, %v250
  %v255 = vpack.c.b16 %v253, %v252
  %v259 = vsel %vm129, %v242, 0
  %v262 = vsel %vm129, %v243, 0
  %v265 = vsel %vm129, %v244, 0
  %v268 = vsel %vm129, %v245, 0
  %270 = vmatprep.subr.bf16.mxu0 0
  %271 = vmatpush1.bf16.msra.mxu0 %v254
  %272 = vmatprep.subr.bf16.mxu0 0
  %273 = vmatpush1.bf16.msra.mxu0 %v255
  %274 = vmatprep.subr.bf16.mxu0 0
  %275 = vmatpush1.bf16.msra.mxu0 0
  %276 = vmatprep.subr.bf16.mxu0 0
  %277 = vmatpush1.bf16.msra.mxu0 0
  %278 = vmatprep.subr.bf16.mxu0 0
  %279 = vmatpush1.bf16.msra.mxu0 0
  %280 = vmatprep.subr.bf16.mxu0 0
  %281 = vmatpush1.bf16.msra.mxu0 0
  %282 = vmatprep.subr.bf16.mxu0 0
  %283 = vmatpush1.bf16.msra.mxu0 0
  %284 = vmatprep.subr.bf16.mxu0 0
  %285 = vmatpush1.bf16.msra.mxu0 0
  %286 = vmatprep.subr.bf16.mxu0 0
  %287 = vmatpush1.bf16.msra.mxu0 0
  %288 = vmatprep.subr.bf16.mxu0 0
  %289 = vmatpush1.bf16.msra.mxu0 0
  %290 = vmatprep.subr.bf16.mxu0 0
  %291 = vmatpush1.bf16.msra.mxu0 0
  %292 = vmatprep.subr.bf16.mxu0 0
  %293 = vmatpush1.bf16.msra.mxu0 0
  %294 = vmatprep.subr.bf16.mxu0 0
  %295 = vmatpush1.bf16.msra.mxu0 0
  %296 = vmatprep.subr.bf16.mxu0 0
  %297 = vmatpush1.bf16.msra.mxu0 0
  %298 = vmatprep.subr.bf16.mxu0 0
  %299 = vmatpush1.bf16.msra.mxu0 0
  %300 = vmatprep.subr.bf16.mxu0 0
  %301 = vmatpush1.bf16.msra.mxu0 0
  %302 = vmatprep.mubr.bf16.mxu0 0
  %303 = vmatmul.mubr.bf16.gmra.mrb[0].mxu0 %v259
  %v304 = vpop.f32.mrb[0].mxu0
  %v305 = vadd.f32 %v224, %v304
  %v306 = vpop.f32.mrb[0].mxu0
  %v307 = vpop.f32.mrb[0].mxu0
  %v308 = vadd.f32 %v224, %v307
  %v309 = vpop.f32.mrb[0].mxu0
  %310 = vmatprep.mubr.bf16.mxu0 0
  %311 = vmatmul.mubr.bf16.gmra.mrb[0].mxu0 %v262
  %v312 = vpop.f32.mrb[0].mxu0
  %v313 = vadd.f32 %v224, %v312
  %v314 = vpop.f32.mrb[0].mxu0
  %v315 = vpop.f32.mrb[0].mxu0
  %v316 = vadd.f32 %v224, %v315
  %v317 = vpop.f32.mrb[0].mxu0
  %318 = vmatprep.mubr.bf16.mxu0 0
  %319 = vmatmul.mubr.bf16.gmra.mrb[0].mxu0 %v265
  %v320 = vpop.f32.mrb[0].mxu0
  %v321 = vadd.f32 %v224, %v320
  %v322 = vpop.f32.mrb[0].mxu0
  %v323 = vpop.f32.mrb[0].mxu0
  %v324 = vadd.f32 %v224, %v323
  %v325 = vpop.f32.mrb[0].mxu0
  %326 = vmatprep.mubr.bf16.mxu0 0
  %327 = vmatmul.mubr.bf16.gmra.mrb[0].mxu0 %v268
  %v328 = vpop.f32.mrb[0].mxu0
  %v329 = vadd.f32 %v224, %v328
  %v330 = vpop.f32.mrb[0].mxu0
  %v331 = vpop.f32.mrb[0].mxu0
  %v332 = vadd.f32 %v224, %v331
  %v333 = vpop.f32.mrb[0].mxu0
  %334 = vdwg.mxu0
  %v335 = vld [vmem:[%s5] sm:$0xf]
  %v336 = vld [vmem:[%s5 + $0x4] sm:$0xf]
  %v337 = vld [vmem:[%s5 + $0x8] sm:$0xf]
  %v338 = vld [vmem:[%s5 + $0xc] sm:$0xf]
  %v343 = vunpack.c.l.b16 %v335
  %v344 = vunpack.c.l.b16 %v336
  %v345 = vunpack.c.l.b16 %v337
  %v346 = vunpack.c.l.b16 %v338
  %v347 = vpack.c.b16 %v344, %v343
  %v348 = vpack.c.b16 %v346, %v345
  %v352 = vsel %vm129, 0, 0
  %354 = vmatprep.subr.bf16.mxu0 0
  %355 = vmatpush1.bf16.msra.mxu0 %v347
  %356 = vmatprep.subr.bf16.mxu0 0
  %357 = vmatpush1.bf16.msra.mxu0 %v348
  %358 = vmatprep.subr.bf16.mxu0 0
  %359 = vmatpush1.bf16.msra.mxu0 0
  %360 = vmatprep.subr.bf16.mxu0 0
  %361 = vmatpush1.bf16.msra.mxu0 0
  %362 = vmatprep.subr.bf16.mxu0 0
  %363 = vmatpush1.bf16.msra.mxu0 0
  %364 = vmatprep.subr.bf16.mxu0 0
  %365 = vmatpush1.bf16.msra.mxu0 0
  %366 = vmatprep.subr.bf16.mxu0 0
  %367 = vmatpush1.bf16.msra.mxu0 0
  %368 = vmatprep.subr.bf16.mxu0 0
  %369 = vmatpush1.bf16.msra.mxu0 0
  %370 = vmatprep.subr.bf16.mxu0 0
  %371 = vmatpush1.bf16.msra.mxu0 0
  %372 = vmatprep.subr.bf16.mxu0 0
  %373 = vmatpush1.bf16.msra.mxu0 0
  %374 = vmatprep.subr.bf16.mxu0 0
  %375 = vmatpush1.bf16.msra.mxu0 0
  %376 = vmatprep.subr.bf16.mxu0 0
  %377 = vmatpush1.bf16.msra.mxu0 0
  %378 = vmatprep.subr.bf16.mxu0 0
  %379 = vmatpush1.bf16.msra.mxu0 0
  %380 = vmatprep.subr.bf16.mxu0 0
  %381 = vmatpush1.bf16.msra.mxu0 0
  %382 = vmatprep.subr.bf16.mxu0 0
  %383 = vmatpush1.bf16.msra.mxu0 0
  %384 = vmatprep.subr.bf16.mxu0 0
  %385 = vmatpush1.bf16.msra.mxu0 0
  %386 = vmatprep.mubr.bf16.mxu0 0
  %387 = vmatmul.mubr.bf16.gmra.mrb[0].mxu0 %v352
  %v388 = vpop.f32.mrb[0].mxu0
  %v389 = vadd.f32 %v68, %v388
  %v390 = vpop.f32.mrb[0].mxu0
  %v391 = vpop.f32.mrb[0].mxu0
  %v392 = vpop.f32.mrb[0].mxu0
  %393 = vdwg.mxu0
  %v394 = vadd.f32 %v177, %v389
  %v395 = vxor.u32 %v394, 2147483648
  %v396 = vmul.f32 %v395, 1.442695
  %v397 = vpow.pop %v396
  %v398 = vadd.f32 %v397, 1.0
  %v399 = vrcp.pop %v398
  %v400 = vmul.f32 1.0, %v399
  %402 = vrot.lane.b32.xlu0 %v389, 64
  %v403 = vpop.permute.xlu0 %402
  %v405 = vmul.f32 %v400, %v403
  %407 = vrot.lane.b32.xlu0 %v405, 64
  %v408 = vpop.permute.xlu0 %407
  %v410 = vadd.f32 %v177, %v408
  %v411 = vtanh.pop %v410
  %v412 = vsub.f32 1.0, %v400
  %414 = vrot.lane.b32.xlu0 %v411, 96
  %v415 = vpop.permute.xlu0 %414
  %v417 = vmul.f32 %v412, %v415
  %v418 = vmul.f32 %v400, 0.0
  %v419 = vadd.f32 %v417, %v418
  %v420 = vld [vmem:[%s2] sm:$0xff]
  %422 = vrot.lane.b32.xlu0 %v419, 96
  %v423 = vpop.permute.xlu0 %422
  %v425 = vmul.f32 %v420, %v423
  %v426 = vadd.f32 %v425, 0.0
  %v427 = vpack.c.bf16 %v426, %v426
  %v429 = vsel %vm129, %v427, 0
  %431 = vmatprep.subr.bf16.mxu0 0
  %432 = vmatpush1.bf16.msra.mxu0 %v347
  %433 = vmatprep.subr.bf16.mxu0 0
  %434 = vmatpush1.bf16.msra.mxu0 %v348
  %435 = vmatprep.subr.bf16.mxu0 0
  %436 = vmatpush1.bf16.msra.mxu0 0
  %437 = vmatprep.subr.bf16.mxu0 0
  %438 = vmatpush1.bf16.msra.mxu0 0
  %439 = vmatprep.subr.bf16.mxu0 0
  %440 = vmatpush1.bf16.msra.mxu0 0
  %441 = vmatprep.subr.bf16.mxu0 0
  %442 = vmatpush1.bf16.msra.mxu0 0
  %443 = vmatprep.subr.bf16.mxu0 0
  %444 = vmatpush1.bf16.msra.mxu0 0
  %445 = vmatprep.subr.bf16.mxu0 0
  %446 = vmatpush1.bf16.msra.mxu0 0
  %447 = vmatprep.subr.bf16.mxu0 0
  %448 = vmatpush1.bf16.msra.mxu0 0
  %449 = vmatprep.subr.bf16.mxu0 0
  %450 = vmatpush1.bf16.msra.mxu0 0
  %451 = vmatprep.subr.bf16.mxu0 0
  %452 = vmatpush1.bf16.msra.mxu0 0
  %453 = vmatprep.subr.bf16.mxu0 0
  %454 = vmatpush1.bf16.msra.mxu0 0
  %455 = vmatprep.subr.bf16.mxu0 0
  %456 = vmatpush1.bf16.msra.mxu0 0
  %457 = vmatprep.subr.bf16.mxu0 0
  %458 = vmatpush1.bf16.msra.mxu0 0
  %459 = vmatprep.subr.bf16.mxu0 0
  %460 = vmatpush1.bf16.msra.mxu0 0
  %461 = vmatprep.subr.bf16.mxu0 0
  %462 = vmatpush1.bf16.msra.mxu0 0
  %463 = vmatprep.mubr.bf16.mxu0 0
  %464 = vmatmul.mubr.bf16.gmra.mrb[0].mxu0 %v429
  %v465 = vpop.f32.mrb[0].mxu0
  %v466 = vadd.f32 %v68, %v465
  %v467 = vpop.f32.mrb[0].mxu0
  %v468 = vpop.f32.mrb[0].mxu0
  %v469 = vpop.f32.mrb[0].mxu0
  %470 = vdwg.mxu0
  %v471 = vadd.f32 %v180, %v466
  %v472 = vxor.u32 %v471, 2147483648
  %v473 = vmul.f32 %v472, 1.442695
  %v474 = vpow.pop %v473
  %v475 = vadd.f32 %v474, 1.0
  %v476 = vrcp.pop %v475
  %v477 = vmul.f32 1.0, %v476
  %479 = vrot.lane.b32.xlu0 %v466, 64
  %v480 = vpop.permute.xlu0 %479
  %v482 = vmul.f32 %v477, %v480
  %484 = vrot.lane.b32.xlu0 %v482, 64
  %v485 = vpop.permute.xlu0 %484
  %v487 = vadd.f32 %v180, %v485
  %v488 = vtanh.pop %v487
  %v489 = vsub.f32 1.0, %v477
  %491 = vrot.lane.b32.xlu0 %v488, 96
  %v492 = vpop.permute.xlu0 %491
  %v494 = vmul.f32 %v489, %v492
  %496 = vrot.lane.b32.xlu0 %v426, 32
  %v497 = vpop.permute.xlu0 %496
  %v499 = vmul.f32 %v477, %v497
  %v500 = vadd.f32 %v494, %v499
  %s501 = scalar_lea.vmem %s2, 8
  %v502 = vld [vmem:[%s501] sm:$0xff]
  %v503 = vsub.f32 %v500, %v497
  %505 = vrot.lane.b32.xlu0 %v503, 96
  %v506 = vpop.permute.xlu0 %505
  %v508 = vmul.f32 %v502, %v506
  %v509 = vadd.f32 %v426, %v508
  %511 = vrot.lane.b32.xlu0 %v500, 96
  %v512 = vpop.permute.xlu0 %511
  %v514 = vmul.f32 %v502, %v512
  %v515 = vpack.c.bf16 %v509, %v509
  %v517 = vsel %vm129, %v515, 0
  %519 = vmatprep.subr.bf16.mxu0 0
  %520 = vmatpush1.bf16.msra.mxu0 %v347
  %521 = vmatprep.subr.bf16.mxu0 0
  %522 = vmatpush1.bf16.msra.mxu0 %v348
  %523 = vmatprep.subr.bf16.mxu0 0
  %524 = vmatpush1.bf16.msra.mxu0 0
  %525 = vmatprep.subr.bf16.mxu0 0
  %526 = vmatpush1.bf16.msra.mxu0 0
  %527 = vmatprep.subr.bf16.mxu0 0
  %528 = vmatpush1.bf16.msra.mxu0 0
  %529 = vmatprep.subr.bf16.mxu0 0
  %530 = vmatpush1.bf16.msra.mxu0 0
  %531 = vmatprep.subr.bf16.mxu0 0
  %532 = vmatpush1.bf16.msra.mxu0 0
  %533 = vmatprep.subr.bf16.mxu0 0
  %534 = vmatpush1.bf16.msra.mxu0 0
  %535 = vmatprep.subr.bf16.mxu0 0
  %536 = vmatpush1.bf16.msra.mxu0 0
  %537 = vmatprep.subr.bf16.mxu0 0
  %538 = vmatpush1.bf16.msra.mxu0 0
  %539 = vmatprep.subr.bf16.mxu0 0
  %540 = vmatpush1.bf16.msra.mxu0 0
  %541 = vmatprep.subr.bf16.mxu0 0
  %542 = vmatpush1.bf16.msra.mxu0 0
  %543 = vmatprep.subr.bf16.mxu0 0
  %544 = vmatpush1.bf16.msra.mxu0 0
  %545 = vmatprep.subr.bf16.mxu0 0
  %546 = vmatpush1.bf16.msra.mxu0 0
  %547 = vmatprep.subr.bf16.mxu0 0
  %548 = vmatpush1.bf16.msra.mxu0 0
  %549 = vmatprep.subr.bf16.mxu0 0
  %550 = vmatpush1.bf16.msra.mxu0 0
  %551 = vmatprep.mubr.bf16.mxu0 0
  %552 = vmatmul.mubr.bf16.gmra.mrb[0].mxu0 %v517
  %v553 = vpop.f32.mrb[0].mxu0
  %v554 = vadd.f32 %v68, %v553
  %v555 = vpop.f32.mrb[0].mxu0
  %v556 = vpop.f32.mrb[0].mxu0
  %v557 = vpop.f32.mrb[0].mxu0
  %558 = vdwg.mxu0
  %v559 = vadd.f32 %v185, %v554
  %v560 = vxor.u32 %v559, 2147483648
  %v561 = vmul.f32 %v560, 1.442695
  %v562 = vpow.pop %v561
  %v563 = vadd.f32 %v562, 1.0
  %v564 = vrcp.pop %v563
  %v565 = vmul.f32 1.0, %v564
  %567 = vrot.lane.b32.xlu0 %v554, 64
  %v568 = vpop.permute.xlu0 %567
  %v570 = vmul.f32 %v565, %v568
  %572 = vrot.lane.b32.xlu0 %v570, 64
  %v573 = vpop.permute.xlu0 %572
  %v575 = vadd.f32 %v185, %v573
  %v576 = vtanh.pop %v575
  %v577 = vsub.f32 1.0, %v565
  %579 = vrot.lane.b32.xlu0 %v576, 96
  %v580 = vpop.permute.xlu0 %579
  %v582 = vmul.f32 %v577, %v580
  %584 = vrot.lane.b32.xlu0 %v509, 32
  %v585 = vpop.permute.xlu0 %584
  %v587 = vmul.f32 %v565, %v585
  %v588 = vadd.f32 %v582, %v587
  %s589 = scalar_lea.vmem %s2, 16
  %v590 = vld [vmem:[%s589] sm:$0xff]
  %v591 = vsub.f32 %v588, %v585
  %593 = vrot.lane.b32.xlu0 %v591, 96
  %v594 = vpop.permute.xlu0 %593
  %v596 = vmul.f32 %v590, %v594
  %v597 = vadd.f32 %v509, %v596
  %599 = vrot.lane.b32.xlu0 %v588, 96
  %v600 = vpop.permute.xlu0 %599
  %v602 = vmul.f32 %v590, %v600
  %v603 = vpack.c.bf16 %v597, %v597
  %v605 = vsel %vm129, %v603, 0
  %607 = vmatprep.subr.bf16.mxu0 0
  %608 = vmatpush1.bf16.msra.mxu0 %v347
  %609 = vmatprep.subr.bf16.mxu0 0
  %610 = vmatpush1.bf16.msra.mxu0 %v348
  %611 = vmatprep.subr.bf16.mxu0 0
  %612 = vmatpush1.bf16.msra.mxu0 0
  %613 = vmatprep.subr.bf16.mxu0 0
  %614 = vmatpush1.bf16.msra.mxu0 0
  %615 = vmatprep.subr.bf16.mxu0 0
  %616 = vmatpush1.bf16.msra.mxu0 0
  %617 = vmatprep.subr.bf16.mxu0 0
  %618 = vmatpush1.bf16.msra.mxu0 0
  %619 = vmatprep.subr.bf16.mxu0 0
  %620 = vmatpush1.bf16.msra.mxu0 0
  %621 = vmatprep.subr.bf16.mxu0 0
  %622 = vmatpush1.bf16.msra.mxu0 0
  %623 = vmatprep.subr.bf16.mxu0 0
  %624 = vmatpush1.bf16.msra.mxu0 0
  %625 = vmatprep.subr.bf16.mxu0 0
  %626 = vmatpush1.bf16.msra.mxu0 0
  %627 = vmatprep.subr.bf16.mxu0 0
  %628 = vmatpush1.bf16.msra.mxu0 0
  %629 = vmatprep.subr.bf16.mxu0 0
  %630 = vmatpush1.bf16.msra.mxu0 0
  %631 = vmatprep.subr.bf16.mxu0 0
  %632 = vmatpush1.bf16.msra.mxu0 0
  %633 = vmatprep.subr.bf16.mxu0 0
  %634 = vmatpush1.bf16.msra.mxu0 0
  %635 = vmatprep.subr.bf16.mxu0 0
  %636 = vmatpush1.bf16.msra.mxu0 0
  %637 = vmatprep.subr.bf16.mxu0 0
  %638 = vmatpush1.bf16.msra.mxu0 0
  %639 = vmatprep.mubr.bf16.mxu0 0
  %640 = vmatmul.mubr.bf16.gmra.mrb[0].mxu0 %v605
  %v641 = vpop.f32.mrb[0].mxu0
  %v642 = vadd.f32 %v68, %v641
  %v643 = vpop.f32.mrb[0].mxu0
  %v644 = vpop.f32.mrb[0].mxu0
  %v645 = vpop.f32.mrb[0].mxu0
  %646 = vdwg.mxu0
  %v647 = vadd.f32 %v188, %v642
  %v648 = vxor.u32 %v647, 2147483648
  %v649 = vmul.f32 %v648, 1.442695
  %v650 = vpow.pop %v649
  %v651 = vadd.f32 %v650, 1.0
  %v652 = vrcp.pop %v651
  %v653 = vmul.f32 1.0, %v652
  %655 = vrot.lane.b32.xlu0 %v642, 64
  %v656 = vpop.permute.xlu0 %655
  %v658 = vmul.f32 %v653, %v656
  %660 = vrot.lane.b32.xlu0 %v658, 64
  %v661 = vpop.permute.xlu0 %660
  %v663 = vadd.f32 %v188, %v661
  %v664 = vtanh.pop %v663
  %v665 = vsub.f32 1.0, %v653
  %667 = vrot.lane.b32.xlu0 %v664, 96
  %v668 = vpop.permute.xlu0 %667
  %v670 = vmul.f32 %v665, %v668
  %672 = vrot.lane.b32.xlu0 %v597, 32
  %v673 = vpop.permute.xlu0 %672
  %v675 = vmul.f32 %v653, %v673
  %v676 = vadd.f32 %v670, %v675
  %s677 = scalar_lea.vmem %s2, 24
  %v678 = vld [vmem:[%s677] sm:$0xff]
  %v679 = vsub.f32 %v676, %v673
  %681 = vrot.lane.b32.xlu0 %v679, 96
  %v682 = vpop.permute.xlu0 %681
  %v684 = vmul.f32 %v678, %v682
  %v685 = vadd.f32 %v597, %v684
  %687 = vrot.lane.b32.xlu0 %v676, 96
  %v688 = vpop.permute.xlu0 %687
  %v690 = vmul.f32 %v678, %v688
  %v691 = vpack.c.bf16 %v685, %v685
  %v693 = vsel %vm129, %v691, 0
  %695 = vmatprep.subr.bf16.mxu0 0
  %696 = vmatpush1.bf16.msra.mxu0 %v347
  %697 = vmatprep.subr.bf16.mxu0 0
  %698 = vmatpush1.bf16.msra.mxu0 %v348
  %699 = vmatprep.subr.bf16.mxu0 0
  %700 = vmatpush1.bf16.msra.mxu0 0
  %701 = vmatprep.subr.bf16.mxu0 0
  %702 = vmatpush1.bf16.msra.mxu0 0
  %703 = vmatprep.subr.bf16.mxu0 0
  %704 = vmatpush1.bf16.msra.mxu0 0
  %705 = vmatprep.subr.bf16.mxu0 0
  %706 = vmatpush1.bf16.msra.mxu0 0
  %707 = vmatprep.subr.bf16.mxu0 0
  %708 = vmatpush1.bf16.msra.mxu0 0
  %709 = vmatprep.subr.bf16.mxu0 0
  %710 = vmatpush1.bf16.msra.mxu0 0
  %711 = vmatprep.subr.bf16.mxu0 0
  %712 = vmatpush1.bf16.msra.mxu0 0
  %713 = vmatprep.subr.bf16.mxu0 0
  %714 = vmatpush1.bf16.msra.mxu0 0
  %715 = vmatprep.subr.bf16.mxu0 0
  %716 = vmatpush1.bf16.msra.mxu0 0
  %717 = vmatprep.subr.bf16.mxu0 0
  %718 = vmatpush1.bf16.msra.mxu0 0
  %719 = vmatprep.subr.bf16.mxu0 0
  %720 = vmatpush1.bf16.msra.mxu0 0
  %721 = vmatprep.subr.bf16.mxu0 0
  %722 = vmatpush1.bf16.msra.mxu0 0
  %723 = vmatprep.subr.bf16.mxu0 0
  %724 = vmatpush1.bf16.msra.mxu0 0
  %725 = vmatprep.subr.bf16.mxu0 0
  %726 = vmatpush1.bf16.msra.mxu0 0
  %727 = vmatprep.mubr.bf16.mxu0 0
  %728 = vmatmul.mubr.bf16.gmra.mrb[0].mxu0 %v693
  %v729 = vpop.f32.mrb[0].mxu0
  %v730 = vadd.f32 %v68, %v729
  %v731 = vpop.f32.mrb[0].mxu0
  %v732 = vpop.f32.mrb[0].mxu0
  %v733 = vpop.f32.mrb[0].mxu0
  %734 = vdwg.mxu0
  %v735 = vadd.f32 %v193, %v730
  %v736 = vxor.u32 %v735, 2147483648
  %v737 = vmul.f32 %v736, 1.442695
  %v738 = vpow.pop %v737
  %v739 = vadd.f32 %v738, 1.0
  %v740 = vrcp.pop %v739
  %v741 = vmul.f32 1.0, %v740
  %743 = vrot.lane.b32.xlu0 %v730, 64
  %v744 = vpop.permute.xlu0 %743
  %v746 = vmul.f32 %v741, %v744
  %748 = vrot.lane.b32.xlu0 %v746, 64
  %v749 = vpop.permute.xlu0 %748
  %v751 = vadd.f32 %v193, %v749
  %v752 = vtanh.pop %v751
  %v753 = vsub.f32 1.0, %v741
  %755 = vrot.lane.b32.xlu0 %v752, 96
  %v756 = vpop.permute.xlu0 %755
  %v758 = vmul.f32 %v753, %v756
  %760 = vrot.lane.b32.xlu0 %v685, 32
  %v761 = vpop.permute.xlu0 %760
  %v763 = vmul.f32 %v741, %v761
  %v764 = vadd.f32 %v758, %v763
  %s765 = scalar_lea.vmem %s2, 32
  %v766 = vld [vmem:[%s765] sm:$0xff]
  %v767 = vsub.f32 %v764, %v761
  %769 = vrot.lane.b32.xlu0 %v767, 96
  %v770 = vpop.permute.xlu0 %769
  %v772 = vmul.f32 %v766, %v770
  %v773 = vadd.f32 %v685, %v772
  %775 = vrot.lane.b32.xlu0 %v764, 96
  %v776 = vpop.permute.xlu0 %775
  %v778 = vmul.f32 %v766, %v776
  %v779 = vpack.c.bf16 %v773, %v773
  %v781 = vsel %vm129, %v779, 0
  %783 = vmatprep.subr.bf16.mxu0 0
  %784 = vmatpush1.bf16.msra.mxu0 %v347
  %785 = vmatprep.subr.bf16.mxu0 0
  %786 = vmatpush1.bf16.msra.mxu0 %v348
  %787 = vmatprep.subr.bf16.mxu0 0
  %788 = vmatpush1.bf16.msra.mxu0 0
  %789 = vmatprep.subr.bf16.mxu0 0
  %790 = vmatpush1.bf16.msra.mxu0 0
  %791 = vmatprep.subr.bf16.mxu0 0
  %792 = vmatpush1.bf16.msra.mxu0 0
  %793 = vmatprep.subr.bf16.mxu0 0
  %794 = vmatpush1.bf16.msra.mxu0 0
  %795 = vmatprep.subr.bf16.mxu0 0
  %796 = vmatpush1.bf16.msra.mxu0 0
  %797 = vmatprep.subr.bf16.mxu0 0
  %798 = vmatpush1.bf16.msra.mxu0 0
  %799 = vmatprep.subr.bf16.mxu0 0
  %800 = vmatpush1.bf16.msra.mxu0 0
  %801 = vmatprep.subr.bf16.mxu0 0
  %802 = vmatpush1.bf16.msra.mxu0 0
  %803 = vmatprep.subr.bf16.mxu0 0
  %804 = vmatpush1.bf16.msra.mxu0 0
  %805 = vmatprep.subr.bf16.mxu0 0
  %806 = vmatpush1.bf16.msra.mxu0 0
  %807 = vmatprep.subr.bf16.mxu0 0
  %808 = vmatpush1.bf16.msra.mxu0 0
  %809 = vmatprep.subr.bf16.mxu0 0
  %810 = vmatpush1.bf16.msra.mxu0 0
  %811 = vmatprep.subr.bf16.mxu0 0
  %812 = vmatpush1.bf16.msra.mxu0 0
  %813 = vmatprep.subr.bf16.mxu0 0
  %814 = vmatpush1.bf16.msra.mxu0 0
  %815 = vmatprep.mubr.bf16.mxu0 0
  %816 = vmatmul.mubr.bf16.gmra.mrb[0].mxu0 %v781
  %v817 = vpop.f32.mrb[0].mxu0
  %v818 = vadd.f32 %v68, %v817
  %v819 = vpop.f32.mrb[0].mxu0
  %v820 = vpop.f32.mrb[0].mxu0
  %v821 = vpop.f32.mrb[0].mxu0
  %822 = vdwg.mxu0
  %v823 = vadd.f32 %v196, %v818
  %v824 = vxor.u32 %v823, 2147483648
  %v825 = vmul.f32 %v824, 1.442695
  %v826 = vpow.pop %v825
  %v827 = vadd.f32 %v826, 1.0
  %v828 = vrcp.pop %v827
  %v829 = vmul.f32 1.0, %v828
  %831 = vrot.lane.b32.xlu0 %v818, 64
  %v832 = vpop.permute.xlu0 %831
  %v834 = vmul.f32 %v829, %v832
  %836 = vrot.lane.b32.xlu0 %v834, 64
  %v837 = vpop.permute.xlu0 %836
  %v839 = vadd.f32 %v196, %v837
  %v840 = vtanh.pop %v839
  %v841 = vsub.f32 1.0, %v829
  %843 = vrot.lane.b32.xlu0 %v840, 96
  %v844 = vpop.permute.xlu0 %843
  %v846 = vmul.f32 %v841, %v844
  %848 = vrot.lane.b32.xlu0 %v773, 32
  %v849 = vpop.permute.xlu0 %848
  %v851 = vmul.f32 %v829, %v849
  %v852 = vadd.f32 %v846, %v851
  %s853 = scalar_lea.vmem %s2, 40
  %v854 = vld [vmem:[%s853] sm:$0xff]
  %v855 = vsub.f32 %v852, %v849
  %857 = vrot.lane.b32.xlu0 %v855, 96
  %v858 = vpop.permute.xlu0 %857
  %v860 = vmul.f32 %v854, %v858
  %v861 = vadd.f32 %v773, %v860
  %863 = vrot.lane.b32.xlu0 %v852, 96
  %v864 = vpop.permute.xlu0 %863
  %v866 = vmul.f32 %v854, %v864
  %v867 = vpack.c.bf16 %v861, %v861
  %v869 = vsel %vm129, %v867, 0
  %871 = vmatprep.subr.bf16.mxu0 0
  %872 = vmatpush1.bf16.msra.mxu0 %v347
  %873 = vmatprep.subr.bf16.mxu0 0
  %874 = vmatpush1.bf16.msra.mxu0 %v348
  %875 = vmatprep.subr.bf16.mxu0 0
  %876 = vmatpush1.bf16.msra.mxu0 0
  %877 = vmatprep.subr.bf16.mxu0 0
  %878 = vmatpush1.bf16.msra.mxu0 0
  %879 = vmatprep.subr.bf16.mxu0 0
  %880 = vmatpush1.bf16.msra.mxu0 0
  %881 = vmatprep.subr.bf16.mxu0 0
  %882 = vmatpush1.bf16.msra.mxu0 0
  %883 = vmatprep.subr.bf16.mxu0 0
  %884 = vmatpush1.bf16.msra.mxu0 0
  %885 = vmatprep.subr.bf16.mxu0 0
  %886 = vmatpush1.bf16.msra.mxu0 0
  %887 = vmatprep.subr.bf16.mxu0 0
  %888 = vmatpush1.bf16.msra.mxu0 0
  %889 = vmatprep.subr.bf16.mxu0 0
  %890 = vmatpush1.bf16.msra.mxu0 0
  %891 = vmatprep.subr.bf16.mxu0 0
  %892 = vmatpush1.bf16.msra.mxu0 0
  %893 = vmatprep.subr.bf16.mxu0 0
  %894 = vmatpush1.bf16.msra.mxu0 0
  %895 = vmatprep.subr.bf16.mxu0 0
  %896 = vmatpush1.bf16.msra.mxu0 0
  %897 = vmatprep.subr.bf16.mxu0 0
  %898 = vmatpush1.bf16.msra.mxu0 0
  %899 = vmatprep.subr.bf16.mxu0 0
  %900 = vmatpush1.bf16.msra.mxu0 0
  %901 = vmatprep.subr.bf16.mxu0 0
  %902 = vmatpush1.bf16.msra.mxu0 0
  %903 = vmatprep.mubr.bf16.mxu0 0
  %904 = vmatmul.mubr.bf16.gmra.mrb[0].mxu0 %v869
  %v905 = vpop.f32.mrb[0].mxu0
  %v906 = vadd.f32 %v68, %v905
  %v907 = vpop.f32.mrb[0].mxu0
  %v908 = vpop.f32.mrb[0].mxu0
  %v909 = vpop.f32.mrb[0].mxu0
  %910 = vdwg.mxu0
  %v911 = vadd.f32 %v201, %v906
  %v912 = vxor.u32 %v911, 2147483648
  %v913 = vmul.f32 %v912, 1.442695
  %v914 = vpow.pop %v913
  %v915 = vadd.f32 %v914, 1.0
  %v916 = vrcp.pop %v915
  %v917 = vmul.f32 1.0, %v916
  %919 = vrot.lane.b32.xlu0 %v906, 64
  %v920 = vpop.permute.xlu0 %919
  %v922 = vmul.f32 %v917, %v920
  %924 = vrot.lane.b32.xlu0 %v922, 64
  %v925 = vpop.permute.xlu0 %924
  %v927 = vadd.f32 %v201, %v925
  %v928 = vtanh.pop %v927
  %v929 = vsub.f32 1.0, %v917
  %931 = vrot.lane.b32.xlu0 %v928, 96
  %v932 = vpop.permute.xlu0 %931
  %v934 = vmul.f32 %v929, %v932
  %936 = vrot.lane.b32.xlu0 %v861, 32
  %v937 = vpop.permute.xlu0 %936
  %v939 = vmul.f32 %v917, %v937
  %v940 = vadd.f32 %v934, %v939
  %s941 = scalar_lea.vmem %s2, 48
  %v942 = vld [vmem:[%s941] sm:$0xff]
  %v943 = vsub.f32 %v940, %v937
  %945 = vrot.lane.b32.xlu0 %v943, 96
  %v946 = vpop.permute.xlu0 %945
  %v948 = vmul.f32 %v942, %v946
  %v949 = vadd.f32 %v861, %v948
  %951 = vrot.lane.b32.xlu0 %v940, 96
  %v952 = vpop.permute.xlu0 %951
  %v954 = vmul.f32 %v942, %v952
  %v955 = vpack.c.bf16 %v949, %v949
  %v957 = vsel %vm129, %v955, 0
  %959 = vmatprep.subr.bf16.mxu0 0
  %960 = vmatpush1.bf16.msra.mxu0 %v347
  %961 = vmatprep.subr.bf16.mxu0 0
  %962 = vmatpush1.bf16.msra.mxu0 %v348
  %963 = vmatprep.subr.bf16.mxu0 0
  %964 = vmatpush1.bf16.msra.mxu0 0
  %965 = vmatprep.subr.bf16.mxu0 0
  %966 = vmatpush1.bf16.msra.mxu0 0
  %967 = vmatprep.subr.bf16.mxu0 0
  %968 = vmatpush1.bf16.msra.mxu0 0
  %969 = vmatprep.subr.bf16.mxu0 0
  %970 = vmatpush1.bf16.msra.mxu0 0
  %971 = vmatprep.subr.bf16.mxu0 0
  %972 = vmatpush1.bf16.msra.mxu0 0
  %973 = vmatprep.subr.bf16.mxu0 0
  %974 = vmatpush1.bf16.msra.mxu0 0
  %975 = vmatprep.subr.bf16.mxu0 0
  %976 = vmatpush1.bf16.msra.mxu0 0
  %977 = vmatprep.subr.bf16.mxu0 0
  %978 = vmatpush1.bf16.msra.mxu0 0
  %979 = vmatprep.subr.bf16.mxu0 0
  %980 = vmatpush1.bf16.msra.mxu0 0
  %981 = vmatprep.subr.bf16.mxu0 0
  %982 = vmatpush1.bf16.msra.mxu0 0
  %983 = vmatprep.subr.bf16.mxu0 0
  %984 = vmatpush1.bf16.msra.mxu0 0
  %985 = vmatprep.subr.bf16.mxu0 0
  %986 = vmatpush1.bf16.msra.mxu0 0
  %987 = vmatprep.subr.bf16.mxu0 0
  %988 = vmatpush1.bf16.msra.mxu0 0
  %989 = vmatprep.subr.bf16.mxu0 0
  %990 = vmatpush1.bf16.msra.mxu0 0
  %991 = vmatprep.mubr.bf16.mxu0 0
  %992 = vmatmul.mubr.bf16.gmra.mrb[0].mxu0 %v957
  %v993 = vpop.f32.mrb[0].mxu0
  %v994 = vadd.f32 %v68, %v993
  %v995 = vpop.f32.mrb[0].mxu0
  %v996 = vpop.f32.mrb[0].mxu0
  %v997 = vpop.f32.mrb[0].mxu0
  %998 = vdwg.mxu0
  %v999 = vadd.f32 %v204, %v994
  %v1000 = vxor.u32 %v999, 2147483648
  %v1001 = vmul.f32 %v1000, 1.442695
  %v1002 = vpow.pop %v1001
  %v1003 = vadd.f32 %v1002, 1.0
  %v1004 = vrcp.pop %v1003
  %v1005 = vmul.f32 1.0, %v1004
  %1007 = vrot.lane.b32.xlu0 %v994, 64
  %v1008 = vpop.permute.xlu0 %1007
  %v1010 = vmul.f32 %v1005, %v1008
  %1012 = vrot.lane.b32.xlu0 %v1010, 64
  %v1013 = vpop.permute.xlu0 %1012
  %v1015 = vadd.f32 %v204, %v1013
  %v1016 = vtanh.pop %v1015
  %v1017 = vsub.f32 1.0, %v1005
  %1019 = vrot.lane.b32.xlu0 %v1016, 96
  %v1020 = vpop.permute.xlu0 %1019
  %v1022 = vmul.f32 %v1017, %v1020
  %1024 = vrot.lane.b32.xlu0 %v949, 32
  %v1025 = vpop.permute.xlu0 %1024
  %v1027 = vmul.f32 %v1005, %v1025
  %v1028 = vadd.f32 %v1022, %v1027
  %s1029 = scalar_lea.vmem %s2, 56
  %v1030 = vld [vmem:[%s1029] sm:$0xff]
  %v1031 = vsub.f32 %v1028, %v1025
  %1033 = vrot.lane.b32.xlu0 %v1031, 96
  %v1034 = vpop.permute.xlu0 %1033
  %v1036 = vmul.f32 %v1030, %v1034
  %v1037 = vadd.f32 %v949, %v1036
  %1039 = vrot.lane.b32.xlu0 %v1028, 96
  %v1040 = vpop.permute.xlu0 %1039
  %v1042 = vmul.f32 %v1030, %v1040
  %v1043 = vpack.c.bf16 %v1037, %v1037
  %v1044 = vld [vmem:[%s8] sm:$0xf]
  %v1045 = vld [vmem:[%s8 + $0x4] sm:$0xf]
  %v1046 = vld [vmem:[%s8 + $0x8] sm:$0xf]
  %v1047 = vld [vmem:[%s8 + $0xc] sm:$0xf]
  %v1048 = vld [vmem:[%s9] sm:$0x1]
  %v1050 = vlaneseq
  %v1051 = vshrl.u32 %v1050, 7
  %v1052 = vsub.s32 0, %v1051
  %v1053 = vrot.slane %v1048, %v1052
  %v1059 = vunpack.c.l.b16 %v1044
  %v1060 = vunpack.c.l.b16 %v1045
  %v1061 = vunpack.c.l.b16 %v1046
  %v1062 = vunpack.c.l.b16 %v1047
  %v1063 = vpack.c.b16 %v1060, %v1059
  %v1064 = vpack.c.b16 %v1062, %v1061
  %v1068 = vsel %vm129, %v1043, 0
  %1070 = vmatprep.subr.bf16.mxu0 0
  %1071 = vmatpush1.bf16.msra.mxu0 %v1063
  %1072 = vmatprep.subr.bf16.mxu0 0
  %1073 = vmatpush1.bf16.msra.mxu0 %v1064
  %1074 = vmatprep.subr.bf16.mxu0 0
  %1075 = vmatpush1.bf16.msra.mxu0 0
  %1076 = vmatprep.subr.bf16.mxu0 0
  %1077 = vmatpush1.bf16.msra.mxu0 0
  %1078 = vmatprep.subr.bf16.mxu0 0
  %1079 = vmatpush1.bf16.msra.mxu0 0
  %1080 = vmatprep.subr.bf16.mxu0 0
  %1081 = vmatpush1.bf16.msra.mxu0 0
  %1082 = vmatprep.subr.bf16.mxu0 0
  %1083 = vmatpush1.bf16.msra.mxu0 0
  %1084 = vmatprep.subr.bf16.mxu0 0
  %1085 = vmatpush1.bf16.msra.mxu0 0
  %1086 = vmatprep.subr.bf16.mxu0 0
  %1087 = vmatpush1.bf16.msra.mxu0 0
  %1088 = vmatprep.subr.bf16.mxu0 0
  %1089 = vmatpush1.bf16.msra.mxu0 0
  %1090 = vmatprep.subr.bf16.mxu0 0
  %1091 = vmatpush1.bf16.msra.mxu0 0
  %1092 = vmatprep.subr.bf16.mxu0 0
  %1093 = vmatpush1.bf16.msra.mxu0 0
  %1094 = vmatprep.subr.bf16.mxu0 0
  %1095 = vmatpush1.bf16.msra.mxu0 0
  %1096 = vmatprep.subr.bf16.mxu0 0
  %1097 = vmatpush1.bf16.msra.mxu0 0
  %1098 = vmatprep.subr.bf16.mxu0 0
  %1099 = vmatpush1.bf16.msra.mxu0 0
  %1100 = vmatprep.subr.bf16.mxu0 0
  %1101 = vmatpush1.bf16.msra.mxu0 0
  %1102 = vmatprep.mubr.bf16.mxu0 0
  %1103 = vmatmul.mubr.bf16.gmra.mrb[0].mxu0 %v1068
  %v1104 = vpop.f32.mrb[0].mxu0
  %v1105 = vadd.f32 %v1053, %v1104
  %v1106 = vpop.f32.mrb[0].mxu0
  %v1107 = vpop.f32.mrb[0].mxu0
  %v1108 = vpop.f32.mrb[0].mxu0
  %1109 = vdwg.mxu0
  %v1110 = vtanh.pop %v1105
  %v1111 = vpack.c.bf16 %v425, %v425
  %v1112 = vld [vmem:[%s10] sm:$0xf]
  %v1113 = vld [vmem:[%s10 + $0x4] sm:$0xf]
  %v1114 = vld [vmem:[%s10 + $0x8] sm:$0xf]
  %v1115 = vld [vmem:[%s10 + $0xc] sm:$0xf]
  %v1120 = vunpack.c.l.b16 %v1112
  %v1121 = vunpack.c.l.b16 %v1113
  %v1122 = vunpack.c.l.b16 %v1114
  %v1123 = vunpack.c.l.b16 %v1115
  %v1124 = vpack.c.b16 %v1121, %v1120
  %v1125 = vpack.c.b16 %v1123, %v1122
  %v1129 = vsel %vm129, %v1111, 0
  %1131 = vmatprep.subr.bf16.mxu0 0
  %1132 = vmatpush1.bf16.msra.mxu0 %v1124
  %1133 = vmatprep.subr.bf16.mxu0 0
  %1134 = vmatpush1.bf16.msra.mxu0 %v1125
  %1135 = vmatprep.subr.bf16.mxu0 0
  %1136 = vmatpush1.bf16.msra.mxu0 0
  %1137 = vmatprep.subr.bf16.mxu0 0
  %1138 = vmatpush1.bf16.msra.mxu0 0
  %1139 = vmatprep.subr.bf16.mxu0 0
  %1140 = vmatpush1.bf16.msra.mxu0 0
  %1141 = vmatprep.subr.bf16.mxu0 0
  %1142 = vmatpush1.bf16.msra.mxu0 0
  %1143 = vmatprep.subr.bf16.mxu0 0
  %1144 = vmatpush1.bf16.msra.mxu0 0
  %1145 = vmatprep.subr.bf16.mxu0 0
  %1146 = vmatpush1.bf16.msra.mxu0 0
  %1147 = vmatprep.subr.bf16.mxu0 0
  %1148 = vmatpush1.bf16.msra.mxu0 0
  %1149 = vmatprep.subr.bf16.mxu0 0
  %1150 = vmatpush1.bf16.msra.mxu0 0
  %1151 = vmatprep.subr.bf16.mxu0 0
  %1152 = vmatpush1.bf16.msra.mxu0 0
  %1153 = vmatprep.subr.bf16.mxu0 0
  %1154 = vmatpush1.bf16.msra.mxu0 0
  %1155 = vmatprep.subr.bf16.mxu0 0
  %1156 = vmatpush1.bf16.msra.mxu0 0
  %1157 = vmatprep.subr.bf16.mxu0 0
  %1158 = vmatpush1.bf16.msra.mxu0 0
  %1159 = vmatprep.subr.bf16.mxu0 0
  %1160 = vmatpush1.bf16.msra.mxu0 0
  %1161 = vmatprep.subr.bf16.mxu0 0
  %1162 = vmatpush1.bf16.msra.mxu0 0
  %1163 = vmatprep.mubr.bf16.mxu0 0
  %1164 = vmatmul.mubr.bf16.gmra.mrb[0].mxu0 %v1129
  %v1165 = vpop.f32.mrb[0].mxu0
  %v1166 = vadd.f32 0.0, %v1165
  %v1167 = vpop.f32.mrb[0].mxu0
  %v1168 = vpop.f32.mrb[0].mxu0
  %v1169 = vpop.f32.mrb[0].mxu0
  %1170 = vdwg.mxu0
  %v1171 = vpack.c.bf16 %v514, %v514
  %v1173 = vsel %vm129, %v1171, 0
  %1175 = vmatprep.subr.bf16.mxu0 0
  %1176 = vmatpush1.bf16.msra.mxu0 %v1124
  %1177 = vmatprep.subr.bf16.mxu0 0
  %1178 = vmatpush1.bf16.msra.mxu0 %v1125
  %1179 = vmatprep.subr.bf16.mxu0 0
  %1180 = vmatpush1.bf16.msra.mxu0 0
  %1181 = vmatprep.subr.bf16.mxu0 0
  %1182 = vmatpush1.bf16.msra.mxu0 0
  %1183 = vmatprep.subr.bf16.mxu0 0
  %1184 = vmatpush1.bf16.msra.mxu0 0
  %1185 = vmatprep.subr.bf16.mxu0 0
  %1186 = vmatpush1.bf16.msra.mxu0 0
  %1187 = vmatprep.subr.bf16.mxu0 0
  %1188 = vmatpush1.bf16.msra.mxu0 0
  %1189 = vmatprep.subr.bf16.mxu0 0
  %1190 = vmatpush1.bf16.msra.mxu0 0
  %1191 = vmatprep.subr.bf16.mxu0 0
  %1192 = vmatpush1.bf16.msra.mxu0 0
  %1193 = vmatprep.subr.bf16.mxu0 0
  %1194 = vmatpush1.bf16.msra.mxu0 0
  %1195 = vmatprep.subr.bf16.mxu0 0
  %1196 = vmatpush1.bf16.msra.mxu0 0
  %1197 = vmatprep.subr.bf16.mxu0 0
  %1198 = vmatpush1.bf16.msra.mxu0 0
  %1199 = vmatprep.subr.bf16.mxu0 0
  %1200 = vmatpush1.bf16.msra.mxu0 0
  %1201 = vmatprep.subr.bf16.mxu0 0
  %1202 = vmatpush1.bf16.msra.mxu0 0
  %1203 = vmatprep.subr.bf16.mxu0 0
  %1204 = vmatpush1.bf16.msra.mxu0 0
  %1205 = vmatprep.subr.bf16.mxu0 0
  %1206 = vmatpush1.bf16.msra.mxu0 0
  %1207 = vmatprep.mubr.bf16.mxu0 0
  %1208 = vmatmul.mubr.bf16.gmra.mrb[0].mxu0 %v1173
  %v1209 = vpop.f32.mrb[0].mxu0
  %v1210 = vadd.f32 0.0, %v1209
  %v1211 = vpop.f32.mrb[0].mxu0
  %v1212 = vpop.f32.mrb[0].mxu0
  %v1213 = vpop.f32.mrb[0].mxu0
  %1214 = vdwg.mxu0
  %v1215 = vpack.c.bf16 %v602, %v602
  %v1217 = vsel %vm129, %v1215, 0
  %1219 = vmatprep.subr.bf16.mxu0 0
  %1220 = vmatpush1.bf16.msra.mxu0 %v1124
  %1221 = vmatprep.subr.bf16.mxu0 0
  %1222 = vmatpush1.bf16.msra.mxu0 %v1125
  %1223 = vmatprep.subr.bf16.mxu0 0
  %1224 = vmatpush1.bf16.msra.mxu0 0
  %1225 = vmatprep.subr.bf16.mxu0 0
  %1226 = vmatpush1.bf16.msra.mxu0 0
  %1227 = vmatprep.subr.bf16.mxu0 0
  %1228 = vmatpush1.bf16.msra.mxu0 0
  %1229 = vmatprep.subr.bf16.mxu0 0
  %1230 = vmatpush1.bf16.msra.mxu0 0
  %1231 = vmatprep.subr.bf16.mxu0 0
  %1232 = vmatpush1.bf16.msra.mxu0 0
  %1233 = vmatprep.subr.bf16.mxu0 0
  %1234 = vmatpush1.bf16.msra.mxu0 0
  %1235 = vmatprep.subr.bf16.mxu0 0
  %1236 = vmatpush1.bf16.msra.mxu0 0
  %1237 = vmatprep.subr.bf16.mxu0 0
  %1238 = vmatpush1.bf16.msra.mxu0 0
  %1239 = vmatprep.subr.bf16.mxu0 0
  %1240 = vmatpush1.bf16.msra.mxu0 0
  %1241 = vmatprep.subr.bf16.mxu0 0
  %1242 = vmatpush1.bf16.msra.mxu0 0
  %1243 = vmatprep.subr.bf16.mxu0 0
  %1244 = vmatpush1.bf16.msra.mxu0 0
  %1245 = vmatprep.subr.bf16.mxu0 0
  %1246 = vmatpush1.bf16.msra.mxu0 0
  %1247 = vmatprep.subr.bf16.mxu0 0
  %1248 = vmatpush1.bf16.msra.mxu0 0
  %1249 = vmatprep.subr.bf16.mxu0 0
  %1250 = vmatpush1.bf16.msra.mxu0 0
  %1251 = vmatprep.mubr.bf16.mxu0 0
  %1252 = vmatmul.mubr.bf16.gmra.mrb[0].mxu0 %v1217
  %v1253 = vpop.f32.mrb[0].mxu0
  %v1254 = vadd.f32 0.0, %v1253
  %v1255 = vpop.f32.mrb[0].mxu0
  %v1256 = vpop.f32.mrb[0].mxu0
  %v1257 = vpop.f32.mrb[0].mxu0
  %1258 = vdwg.mxu0
  %v1259 = vpack.c.bf16 %v690, %v690
  %v1261 = vsel %vm129, %v1259, 0
  %1263 = vmatprep.subr.bf16.mxu0 0
  %1264 = vmatpush1.bf16.msra.mxu0 %v1124
  %1265 = vmatprep.subr.bf16.mxu0 0
  %1266 = vmatpush1.bf16.msra.mxu0 %v1125
  %1267 = vmatprep.subr.bf16.mxu0 0
  %1268 = vmatpush1.bf16.msra.mxu0 0
  %1269 = vmatprep.subr.bf16.mxu0 0
  %1270 = vmatpush1.bf16.msra.mxu0 0
  %1271 = vmatprep.subr.bf16.mxu0 0
  %1272 = vmatpush1.bf16.msra.mxu0 0
  %1273 = vmatprep.subr.bf16.mxu0 0
  %1274 = vmatpush1.bf16.msra.mxu0 0
  %1275 = vmatprep.subr.bf16.mxu0 0
  %1276 = vmatpush1.bf16.msra.mxu0 0
  %1277 = vmatprep.subr.bf16.mxu0 0
  %1278 = vmatpush1.bf16.msra.mxu0 0
  %1279 = vmatprep.subr.bf16.mxu0 0
  %1280 = vmatpush1.bf16.msra.mxu0 0
  %1281 = vmatprep.subr.bf16.mxu0 0
  %1282 = vmatpush1.bf16.msra.mxu0 0
  %1283 = vmatprep.subr.bf16.mxu0 0
  %1284 = vmatpush1.bf16.msra.mxu0 0
  %1285 = vmatprep.subr.bf16.mxu0 0
  %1286 = vmatpush1.bf16.msra.mxu0 0
  %1287 = vmatprep.subr.bf16.mxu0 0
  %1288 = vmatpush1.bf16.msra.mxu0 0
  %1289 = vmatprep.subr.bf16.mxu0 0
  %1290 = vmatpush1.bf16.msra.mxu0 0
  %1291 = vmatprep.subr.bf16.mxu0 0
  %1292 = vmatpush1.bf16.msra.mxu0 0
  %1293 = vmatprep.subr.bf16.mxu0 0
  %1294 = vmatpush1.bf16.msra.mxu0 0
  %1295 = vmatprep.mubr.bf16.mxu0 0
  %1296 = vmatmul.mubr.bf16.gmra.mrb[0].mxu0 %v1261
  %v1297 = vpop.f32.mrb[0].mxu0
  %v1298 = vadd.f32 0.0, %v1297
  %v1299 = vpop.f32.mrb[0].mxu0
  %v1300 = vpop.f32.mrb[0].mxu0
  %v1301 = vpop.f32.mrb[0].mxu0
  %1302 = vdwg.mxu0
  %v1303 = vpack.c.bf16 %v778, %v778
  %v1305 = vsel %vm129, %v1303, 0
  %1307 = vmatprep.subr.bf16.mxu0 0
  %1308 = vmatpush1.bf16.msra.mxu0 %v1124
  %1309 = vmatprep.subr.bf16.mxu0 0
  %1310 = vmatpush1.bf16.msra.mxu0 %v1125
  %1311 = vmatprep.subr.bf16.mxu0 0
  %1312 = vmatpush1.bf16.msra.mxu0 0
  %1313 = vmatprep.subr.bf16.mxu0 0
  %1314 = vmatpush1.bf16.msra.mxu0 0
  %1315 = vmatprep.subr.bf16.mxu0 0
  %1316 = vmatpush1.bf16.msra.mxu0 0
  %1317 = vmatprep.subr.bf16.mxu0 0
  %1318 = vmatpush1.bf16.msra.mxu0 0
  %1319 = vmatprep.subr.bf16.mxu0 0
  %1320 = vmatpush1.bf16.msra.mxu0 0
  %1321 = vmatprep.subr.bf16.mxu0 0
  %1322 = vmatpush1.bf16.msra.mxu0 0
  %1323 = vmatprep.subr.bf16.mxu0 0
  %1324 = vmatpush1.bf16.msra.mxu0 0
  %1325 = vmatprep.subr.bf16.mxu0 0
  %1326 = vmatpush1.bf16.msra.mxu0 0
  %1327 = vmatprep.subr.bf16.mxu0 0
  %1328 = vmatpush1.bf16.msra.mxu0 0
  %1329 = vmatprep.subr.bf16.mxu0 0
  %1330 = vmatpush1.bf16.msra.mxu0 0
  %1331 = vmatprep.subr.bf16.mxu0 0
  %1332 = vmatpush1.bf16.msra.mxu0 0
  %1333 = vmatprep.subr.bf16.mxu0 0
  %1334 = vmatpush1.bf16.msra.mxu0 0
  %1335 = vmatprep.subr.bf16.mxu0 0
  %1336 = vmatpush1.bf16.msra.mxu0 0
  %1337 = vmatprep.subr.bf16.mxu0 0
  %1338 = vmatpush1.bf16.msra.mxu0 0
  %1339 = vmatprep.mubr.bf16.mxu0 0
  %1340 = vmatmul.mubr.bf16.gmra.mrb[0].mxu0 %v1305
  %v1341 = vpop.f32.mrb[0].mxu0
  %v1342 = vadd.f32 0.0, %v1341
  %v1343 = vpop.f32.mrb[0].mxu0
  %v1344 = vpop.f32.mrb[0].mxu0
  %v1345 = vpop.f32.mrb[0].mxu0
  %1346 = vdwg.mxu0
  %v1347 = vpack.c.bf16 %v866, %v866
  %v1349 = vsel %vm129, %v1347, 0
  %1351 = vmatprep.subr.bf16.mxu0 0
  %1352 = vmatpush1.bf16.msra.mxu0 %v1124
  %1353 = vmatprep.subr.bf16.mxu0 0
  %1354 = vmatpush1.bf16.msra.mxu0 %v1125
  %1355 = vmatprep.subr.bf16.mxu0 0
  %1356 = vmatpush1.bf16.msra.mxu0 0
  %1357 = vmatprep.subr.bf16.mxu0 0
  %1358 = vmatpush1.bf16.msra.mxu0 0
  %1359 = vmatprep.subr.bf16.mxu0 0
  %1360 = vmatpush1.bf16.msra.mxu0 0
  %1361 = vmatprep.subr.bf16.mxu0 0
  %1362 = vmatpush1.bf16.msra.mxu0 0
  %1363 = vmatprep.subr.bf16.mxu0 0
  %1364 = vmatpush1.bf16.msra.mxu0 0
  %1365 = vmatprep.subr.bf16.mxu0 0
  %1366 = vmatpush1.bf16.msra.mxu0 0
  %1367 = vmatprep.subr.bf16.mxu0 0
  %1368 = vmatpush1.bf16.msra.mxu0 0
  %1369 = vmatprep.subr.bf16.mxu0 0
  %1370 = vmatpush1.bf16.msra.mxu0 0
  %1371 = vmatprep.subr.bf16.mxu0 0
  %1372 = vmatpush1.bf16.msra.mxu0 0
  %1373 = vmatprep.subr.bf16.mxu0 0
  %1374 = vmatpush1.bf16.msra.mxu0 0
  %1375 = vmatprep.subr.bf16.mxu0 0
  %1376 = vmatpush1.bf16.msra.mxu0 0
  %1377 = vmatprep.subr.bf16.mxu0 0
  %1378 = vmatpush1.bf16.msra.mxu0 0
  %1379 = vmatprep.subr.bf16.mxu0 0
  %1380 = vmatpush1.bf16.msra.mxu0 0
  %1381 = vmatprep.subr.bf16.mxu0 0
  %1382 = vmatpush1.bf16.msra.mxu0 0
  %1383 = vmatprep.mubr.bf16.mxu0 0
  %1384 = vmatmul.mubr.bf16.gmra.mrb[0].mxu0 %v1349
  %v1385 = vpop.f32.mrb[0].mxu0
  %v1386 = vadd.f32 0.0, %v1385
  %v1387 = vpop.f32.mrb[0].mxu0
  %v1388 = vpop.f32.mrb[0].mxu0
  %v1389 = vpop.f32.mrb[0].mxu0
  %1390 = vdwg.mxu0
  %v1391 = vpack.c.bf16 %v954, %v954
  %v1393 = vsel %vm129, %v1391, 0
  %1395 = vmatprep.subr.bf16.mxu0 0
  %1396 = vmatpush1.bf16.msra.mxu0 %v1124
  %1397 = vmatprep.subr.bf16.mxu0 0
  %1398 = vmatpush1.bf16.msra.mxu0 %v1125
  %1399 = vmatprep.subr.bf16.mxu0 0
  %1400 = vmatpush1.bf16.msra.mxu0 0
  %1401 = vmatprep.subr.bf16.mxu0 0
  %1402 = vmatpush1.bf16.msra.mxu0 0
  %1403 = vmatprep.subr.bf16.mxu0 0
  %1404 = vmatpush1.bf16.msra.mxu0 0
  %1405 = vmatprep.subr.bf16.mxu0 0
  %1406 = vmatpush1.bf16.msra.mxu0 0
  %1407 = vmatprep.subr.bf16.mxu0 0
  %1408 = vmatpush1.bf16.msra.mxu0 0
  %1409 = vmatprep.subr.bf16.mxu0 0
  %1410 = vmatpush1.bf16.msra.mxu0 0
  %1411 = vmatprep.subr.bf16.mxu0 0
  %1412 = vmatpush1.bf16.msra.mxu0 0
  %1413 = vmatprep.subr.bf16.mxu0 0
  %1414 = vmatpush1.bf16.msra.mxu0 0
  %1415 = vmatprep.subr.bf16.mxu0 0
  %1416 = vmatpush1.bf16.msra.mxu0 0
  %1417 = vmatprep.subr.bf16.mxu0 0
  %1418 = vmatpush1.bf16.msra.mxu0 0
  %1419 = vmatprep.subr.bf16.mxu0 0
  %1420 = vmatpush1.bf16.msra.mxu0 0
  %1421 = vmatprep.subr.bf16.mxu0 0
  %1422 = vmatpush1.bf16.msra.mxu0 0
  %1423 = vmatprep.subr.bf16.mxu0 0
  %1424 = vmatpush1.bf16.msra.mxu0 0
  %1425 = vmatprep.subr.bf16.mxu0 0
  %1426 = vmatpush1.bf16.msra.mxu0 0
  %1427 = vmatprep.mubr.bf16.mxu0 0
  %1428 = vmatmul.mubr.bf16.gmra.mrb[0].mxu0 %v1393
  %v1429 = vpop.f32.mrb[0].mxu0
  %v1430 = vadd.f32 0.0, %v1429
  %v1431 = vpop.f32.mrb[0].mxu0
  %v1432 = vpop.f32.mrb[0].mxu0
  %v1433 = vpop.f32.mrb[0].mxu0
  %1434 = vdwg.mxu0
  %v1435 = vpack.c.bf16 %v1042, %v1042
  %v1437 = vsel %vm129, %v1435, 0
  %1439 = vmatprep.subr.bf16.mxu0 0
  %1440 = vmatpush1.bf16.msra.mxu0 %v1124
  %1441 = vmatprep.subr.bf16.mxu0 0
  %1442 = vmatpush1.bf16.msra.mxu0 %v1125
  %1443 = vmatprep.subr.bf16.mxu0 0
  %1444 = vmatpush1.bf16.msra.mxu0 0
  %1445 = vmatprep.subr.bf16.mxu0 0
  %1446 = vmatpush1.bf16.msra.mxu0 0
  %1447 = vmatprep.subr.bf16.mxu0 0
  %1448 = vmatpush1.bf16.msra.mxu0 0
  %1449 = vmatprep.subr.bf16.mxu0 0
  %1450 = vmatpush1.bf16.msra.mxu0 0
  %1451 = vmatprep.subr.bf16.mxu0 0
  %1452 = vmatpush1.bf16.msra.mxu0 0
  %1453 = vmatprep.subr.bf16.mxu0 0
  %1454 = vmatpush1.bf16.msra.mxu0 0
  %1455 = vmatprep.subr.bf16.mxu0 0
  %1456 = vmatpush1.bf16.msra.mxu0 0
  %1457 = vmatprep.subr.bf16.mxu0 0
  %1458 = vmatpush1.bf16.msra.mxu0 0
  %1459 = vmatprep.subr.bf16.mxu0 0
  %1460 = vmatpush1.bf16.msra.mxu0 0
  %1461 = vmatprep.subr.bf16.mxu0 0
  %1462 = vmatpush1.bf16.msra.mxu0 0
  %1463 = vmatprep.subr.bf16.mxu0 0
  %1464 = vmatpush1.bf16.msra.mxu0 0
  %1465 = vmatprep.subr.bf16.mxu0 0
  %1466 = vmatpush1.bf16.msra.mxu0 0
  %1467 = vmatprep.subr.bf16.mxu0 0
  %1468 = vmatpush1.bf16.msra.mxu0 0
  %1469 = vmatprep.subr.bf16.mxu0 0
  %1470 = vmatpush1.bf16.msra.mxu0 0
  %1471 = vmatprep.mubr.bf16.mxu0 0
  %1472 = vmatmul.mubr.bf16.gmra.mrb[0].mxu0 %v1437
  %v1473 = vpop.f32.mrb[0].mxu0
  %v1474 = vadd.f32 0.0, %v1473
  %v1475 = vpop.f32.mrb[0].mxu0
  %v1476 = vpop.f32.mrb[0].mxu0
  %v1477 = vpop.f32.mrb[0].mxu0
  %1478 = vdwg.mxu0
  %1480 = vrot.lane.b32.xlu0 %v1210, 32
  %v1481 = vpop.permute.xlu0 %1480
  %1484 = vrot.lane.b32.xlu0 %v1254, 64
  %v1485 = vpop.permute.xlu0 %1484
  %1488 = vrot.lane.b32.xlu0 %v1298, 96
  %v1489 = vpop.permute.xlu0 %1488
  %1492 = vrot.lane.b32.xlu0 %v1386, 32
  %v1493 = vpop.permute.xlu0 %1492
  %1496 = vrot.lane.b32.xlu0 %v1430, 64
  %v1497 = vpop.permute.xlu0 %1496
  %1500 = vrot.lane.b32.xlu0 %v1474, 96
  %v1501 = vpop.permute.xlu0 %1500
  %v1503 = vsel %vm129, %v1166, %v1481
  %vm1504 = vcmask 523264
  %v1505 = vsel %vm1504, %v1503, %v1485
  %vm1506 = vcmask 785408
  %v1507 = vsel %vm1506, %v1505, %v1489
  %v1508 = vsel %vm129, %v1342, %v1493
  %v1509 = vsel %vm1504, %v1508, %v1497
  %v1510 = vsel %vm1506, %v1509, %v1501
  %v1511 = vpack.c.bf16 %v1110, %v1110
  %v1512 = vld [vmem:[%s11] sm:$0xff]
  %v1513 = vld [vmem:[%s11 + $0x8] sm:$0xf]
  %v1514 = vld [vmem:[%s11 + $0xc] sm:$0xff]
  %v1515 = vld [vmem:[%s11 + $0x14] sm:$0xf]
  %v1516 = vld [vmem:[%s11 + $0x18] sm:$0xff]
  %v1517 = vld [vmem:[%s11 + $0x20] sm:$0xf]
  %v1518 = vld [vmem:[%s11 + $0x24] sm:$0xff]
  %v1519 = vld [vmem:[%s11 + $0x2c] sm:$0xf]
  %v1528 = vunpack.c.l.b16 %v1512
  %v1529 = vunpack.c.h.b16 %v1512
  %v1530 = vunpack.c.l.b16 %v1513
  %v1531 = vunpack.c.l.b16 %v1514
  %v1532 = vunpack.c.h.b16 %v1514
  %v1533 = vunpack.c.l.b16 %v1515
  %v1534 = vunpack.c.l.b16 %v1516
  %v1535 = vunpack.c.h.b16 %v1516
  %v1536 = vunpack.c.l.b16 %v1517
  %v1537 = vunpack.c.l.b16 %v1518
  %v1538 = vunpack.c.h.b16 %v1518
  %v1539 = vunpack.c.l.b16 %v1519
  %v1540 = vpack.c.b16 %v1531, %v1528
  %v1541 = vpack.c.b16 %v1532, %v1529
  %v1542 = vpack.c.b16 %v1533, %v1530
  %v1543 = vpack.c.b16 %v1537, %v1534
  %v1544 = vpack.c.b16 %v1538, %v1535
  %v1545 = vpack.c.b16 %v1539, %v1536
  %v1553 = vsel %vm129, %v1511, 0
  %1555 = vmatprep.subr.bf16.mxu0 %v1541
  %1556 = vmatpush1.bf16.msra.mxu0 %v1540
  %1557 = vmatprep.subr.bf16.mxu0 %v1544
  %1558 = vmatpush1.bf16.msra.mxu0 %v1543
  %1559 = vmatprep.subr.bf16.mxu0 0
  %1560 = vmatpush1.bf16.msra.mxu0 0
  %1561 = vmatprep.subr.bf16.mxu0 0
  %1562 = vmatpush1.bf16.msra.mxu0 0
  %1563 = vmatprep.subr.bf16.mxu0 0
  %1564 = vmatpush1.bf16.msra.mxu0 0
  %1565 = vmatprep.subr.bf16.mxu0 0
  %1566 = vmatpush1.bf16.msra.mxu0 0
  %1567 = vmatprep.subr.bf16.mxu0 0
  %1568 = vmatpush1.bf16.msra.mxu0 0
  %1569 = vmatprep.subr.bf16.mxu0 0
  %1570 = vmatpush1.bf16.msra.mxu0 0
  %1571 = vmatprep.subr.bf16.mxu0 0
  %1572 = vmatpush1.bf16.msra.mxu0 0
  %1573 = vmatprep.subr.bf16.mxu0 0
  %1574 = vmatpush1.bf16.msra.mxu0 0
  %1575 = vmatprep.subr.bf16.mxu0 0
  %1576 = vmatpush1.bf16.msra.mxu0 0
  %1577 = vmatprep.subr.bf16.mxu0 0
  %1578 = vmatpush1.bf16.msra.mxu0 0
  %1579 = vmatprep.subr.bf16.mxu0 0
  %1580 = vmatpush1.bf16.msra.mxu0 0
  %1581 = vmatprep.subr.bf16.mxu0 0
  %1582 = vmatpush1.bf16.msra.mxu0 0
  %1583 = vmatprep.subr.bf16.mxu0 0
  %1584 = vmatpush1.bf16.msra.mxu0 0
  %1585 = vmatprep.subr.bf16.mxu0 0
  %1586 = vmatpush1.bf16.msra.mxu0 0
  %1587 = vmatprep.mubr.bf16.mxu0 0
  %1588 = vmatmul.mubr.bf16.gmra.mrb[0].mxu0 %v1553
  %v1589 = vpop.f32.mrb[0].mxu0
  %v1590 = vadd.f32 0.0, %v1589
  %v1591 = vpop.f32.mrb[0].mxu0
  %v1592 = vadd.f32 0.0, %v1591
  %v1593 = vpop.f32.mrb[0].mxu0
  %v1594 = vpop.f32.mrb[0].mxu0
  %1595 = vdwg.mxu0
  %1596 = vmatprep.subr.bf16.mxu0 0
  %1597 = vmatpush1.bf16.msra.mxu0 %v1542
  %1598 = vmatprep.subr.bf16.mxu0 0
  %1599 = vmatpush1.bf16.msra.mxu0 %v1545
  %1600 = vmatprep.subr.bf16.mxu0 0
  %1601 = vmatpush1.bf16.msra.mxu0 0
  %1602 = vmatprep.subr.bf16.mxu0 0
  %1603 = vmatpush1.bf16.msra.mxu0 0
  %1604 = vmatprep.subr.bf16.mxu0 0
  %1605 = vmatpush1.bf16.msra.mxu0 0
  %1606 = vmatprep.subr.bf16.mxu0 0
  %1607 = vmatpush1.bf16.msra.mxu0 0
  %1608 = vmatprep.subr.bf16.mxu0 0
  %1609 = vmatpush1.bf16.msra.mxu0 0
  %1610 = vmatprep.subr.bf16.mxu0 0
  %1611 = vmatpush1.bf16.msra.mxu0 0
  %1612 = vmatprep.subr.bf16.mxu0 0
  %1613 = vmatpush1.bf16.msra.mxu0 0
  %1614 = vmatprep.subr.bf16.mxu0 0
  %1615 = vmatpush1.bf16.msra.mxu0 0
  %1616 = vmatprep.subr.bf16.mxu0 0
  %1617 = vmatpush1.bf16.msra.mxu0 0
  %1618 = vmatprep.subr.bf16.mxu0 0
  %1619 = vmatpush1.bf16.msra.mxu0 0
  %1620 = vmatprep.subr.bf16.mxu0 0
  %1621 = vmatpush1.bf16.msra.mxu0 0
  %1622 = vmatprep.subr.bf16.mxu0 0
  %1623 = vmatpush1.bf16.msra.mxu0 0
  %1624 = vmatprep.subr.bf16.mxu0 0
  %1625 = vmatpush1.bf16.msra.mxu0 0
  %1626 = vmatprep.subr.bf16.mxu0 0
  %1627 = vmatpush1.bf16.msra.mxu0 0
  %1628 = vmatprep.mubr.bf16.mxu0 0
  %1629 = vmatmul.mubr.bf16.gmra.mrb[0].mxu0 %v1553
  %v1630 = vpop.f32.mrb[0].mxu0
  %v1631 = vadd.f32 0.0, %v1630
  %v1632 = vpop.f32.mrb[0].mxu0
  %v1633 = vpop.f32.mrb[0].mxu0
  %v1634 = vpop.f32.mrb[0].mxu0
  %1635 = vdwg.mxu0
  %v1636 = vadd.f32 %v1631, %v75
  %v1637 = vadd.f32 %v1507, %v1590
  %v1638 = vadd.f32 %v1510, %v1592
  %v1639 = vtanh.pop %v1637
  %v1640 = vtanh.pop %v1638
  %v1641 = vpack.c.bf16 %v1639, %v1639
  %v1642 = vpack.c.bf16 %v1640, %v1640
  %v1643 = vld [vmem:[%s13] sm:$0xf]
  %v1644 = vld [vmem:[%s13 + $0x4] sm:$0xf]
  %v1645 = vld [vmem:[%s13 + $0x8] sm:$0xf]
  %v1646 = vld [vmem:[%s13 + $0xc] sm:$0xf]
  %v1647 = vld [vmem:[%s13 + $0x10] sm:$0xf]
  %v1648 = vld [vmem:[%s13 + $0x14] sm:$0xf]
  %v1649 = vld [vmem:[%s13 + $0x18] sm:$0xf]
  %v1650 = vld [vmem:[%s13 + $0x1c] sm:$0xf]
  %v1651 = vld [vmem:[%s13 + $0x20] sm:$0xf]
  %v1652 = vld [vmem:[%s13 + $0x24] sm:$0xf]
  %v1653 = vld [vmem:[%s13 + $0x28] sm:$0xf]
  %v1654 = vld [vmem:[%s13 + $0x2c] sm:$0xf]
  %v1655 = vld [vmem:[%s13 + $0x30] sm:$0xf]
  %v1656 = vld [vmem:[%s13 + $0x34] sm:$0xf]
  %v1657 = vld [vmem:[%s13 + $0x38] sm:$0xf]
  %v1658 = vld [vmem:[%s13 + $0x3c] sm:$0xf]
  %v1659 = vld [vmem:[%s13 + $0x40] sm:$0xf]
  %v1660 = vld [vmem:[%s13 + $0x44] sm:$0xf]
  %v1661 = vld [vmem:[%s13 + $0x48] sm:$0xf]
  %v1662 = vld [vmem:[%s13 + $0x4c] sm:$0xf]
  %v1663 = vld [vmem:[%s13 + $0x50] sm:$0xf]
  %v1664 = vld [vmem:[%s13 + $0x54] sm:$0xf]
  %v1665 = vld [vmem:[%s13 + $0x58] sm:$0xf]
  %v1666 = vld [vmem:[%s13 + $0x5c] sm:$0xf]
  %v1667 = vld [vmem:[%s13 + $0x60] sm:$0xf]
  %v1668 = vld [vmem:[%s13 + $0x64] sm:$0xf]
  %v1669 = vld [vmem:[%s13 + $0x68] sm:$0xf]
  %v1670 = vld [vmem:[%s13 + $0x6c] sm:$0xf]
  %v1671 = vld [vmem:[%s13 + $0x70] sm:$0xf]
  %v1672 = vld [vmem:[%s13 + $0x74] sm:$0xf]
  %v1673 = vld [vmem:[%s13 + $0x78] sm:$0xf]
  %v1674 = vld [vmem:[%s13 + $0x7c] sm:$0xf]
  %v1707 = vunpack.c.l.b16 %v1643
  %v1708 = vunpack.c.l.b16 %v1644
  %v1709 = vunpack.c.l.b16 %v1645
  %v1710 = vunpack.c.l.b16 %v1646
  %v1711 = vunpack.c.l.b16 %v1647
  %v1712 = vunpack.c.l.b16 %v1648
  %v1713 = vunpack.c.l.b16 %v1649
  %v1714 = vunpack.c.l.b16 %v1650
  %v1715 = vunpack.c.l.b16 %v1651
  %v1716 = vunpack.c.l.b16 %v1652
  %v1717 = vunpack.c.l.b16 %v1653
  %v1718 = vunpack.c.l.b16 %v1654
  %v1719 = vunpack.c.l.b16 %v1655
  %v1720 = vunpack.c.l.b16 %v1656
  %v1721 = vunpack.c.l.b16 %v1657
  %v1722 = vunpack.c.l.b16 %v1658
  %v1723 = vunpack.c.l.b16 %v1659
  %v1724 = vunpack.c.l.b16 %v1660
  %v1725 = vunpack.c.l.b16 %v1661
  %v1726 = vunpack.c.l.b16 %v1662
  %v1727 = vunpack.c.l.b16 %v1663
  %v1728 = vunpack.c.l.b16 %v1664
  %v1729 = vunpack.c.l.b16 %v1665
  %v1730 = vunpack.c.l.b16 %v1666
  %v1731 = vunpack.c.l.b16 %v1667
  %v1732 = vunpack.c.l.b16 %v1668
  %v1733 = vunpack.c.l.b16 %v1669
  %v1734 = vunpack.c.l.b16 %v1670
  %v1735 = vunpack.c.l.b16 %v1671
  %v1736 = vunpack.c.l.b16 %v1672
  %v1737 = vunpack.c.l.b16 %v1673
  %v1738 = vunpack.c.l.b16 %v1674
  %v1739 = vpack.c.b16 %v1708, %v1707
  %v1740 = vpack.c.b16 %v1710, %v1709
  %v1741 = vpack.c.b16 %v1712, %v1711
  %v1742 = vpack.c.b16 %v1714, %v1713
  %v1743 = vpack.c.b16 %v1716, %v1715
  %v1744 = vpack.c.b16 %v1718, %v1717
  %v1745 = vpack.c.b16 %v1720, %v1719
  %v1746 = vpack.c.b16 %v1722, %v1721
  %v1747 = vpack.c.b16 %v1724, %v1723
  %v1748 = vpack.c.b16 %v1726, %v1725
  %v1749 = vpack.c.b16 %v1728, %v1727
  %v1750 = vpack.c.b16 %v1730, %v1729
  %v1751 = vpack.c.b16 %v1732, %v1731
  %v1752 = vpack.c.b16 %v1734, %v1733
  %v1753 = vpack.c.b16 %v1736, %v1735
  %v1754 = vpack.c.b16 %v1738, %v1737
  %1771 = vmatprep.subr.bf16.mxu0 0
  %1772 = vmatpush1.bf16.msra.mxu0 %v1739
  %1773 = vmatprep.subr.bf16.mxu0 0
  %1774 = vmatpush1.bf16.msra.mxu0 %v1740
  %1775 = vmatprep.subr.bf16.mxu0 0
  %1776 = vmatpush1.bf16.msra.mxu0 %v1741
  %1777 = vmatprep.subr.bf16.mxu0 0
  %1778 = vmatpush1.bf16.msra.mxu0 %v1742
  %1779 = vmatprep.subr.bf16.mxu0 0
  %1780 = vmatpush1.bf16.msra.mxu0 %v1743
  %1781 = vmatprep.subr.bf16.mxu0 0
  %1782 = vmatpush1.bf16.msra.mxu0 %v1744
  %1783 = vmatprep.subr.bf16.mxu0 0
  %1784 = vmatpush1.bf16.msra.mxu0 %v1745
  %1785 = vmatprep.subr.bf16.mxu0 0
  %1786 = vmatpush1.bf16.msra.mxu0 %v1746
  %1787 = vmatprep.subr.bf16.mxu0 0
  %1788 = vmatpush1.bf16.msra.mxu0 %v1747
  %1789 = vmatprep.subr.bf16.mxu0 0
  %1790 = vmatpush1.bf16.msra.mxu0 %v1748
  %1791 = vmatprep.subr.bf16.mxu0 0
  %1792 = vmatpush1.bf16.msra.mxu0 %v1749
  %1793 = vmatprep.subr.bf16.mxu0 0
  %1794 = vmatpush1.bf16.msra.mxu0 %v1750
  %1795 = vmatprep.subr.bf16.mxu0 0
  %1796 = vmatpush1.bf16.msra.mxu0 %v1751
  %1797 = vmatprep.subr.bf16.mxu0 0
  %1798 = vmatpush1.bf16.msra.mxu0 %v1752
  %1799 = vmatprep.subr.bf16.mxu0 0
  %1800 = vmatpush1.bf16.msra.mxu0 %v1753
  %1801 = vmatprep.subr.bf16.mxu0 0
  %1802 = vmatpush1.bf16.msra.mxu0 %v1754
  %1803 = vmatprep.mubr.bf16.mxu0 %v1642
  %1804 = vmatmul.mubr.bf16.gmra.mrb[0].mxu0 %v1641
  %v1805 = vpop.f32.mrb[0].mxu0
  %v1806 = vadd.f32 0.0, %v1805
  %v1807 = vpop.f32.mrb[0].mxu0
  %v1808 = vpop.f32.mrb[0].mxu0
  %v1809 = vpop.f32.mrb[0].mxu0
  %1810 = vdwg.mxu0
  %v1811 = vmul.f32 %v1806, 1.442695
  %v1812 = vpow.pop %v1811
  %v1813 = vmul.f32 %v1812, %v77
  %1814 = vadd.xlane.f32.xlu0 %v1813
  %v1815 = vpop.xlane.xlu0 %1814
  %v1816 = vmax.f32 %v1815, 1e-30
  %v1817 = vrcp.pop %v1816
  %v1818 = vmul.f32 %v1813, %v1817
  %1820 = vset.pattern.permute.xlu0 64
  %1821 = vperm.xlu0 %1820, %v1818
  %v1822 = vpop.permute.xlu0 %1821
  %v1824 = vmul.f32 %v1822, %v425
  %1825 = vset.pattern.permute.xlu0 65
  %1826 = vperm.xlu0 %1825, %v1818
  %v1827 = vpop.permute.xlu0 %1826
  %v1829 = vmul.f32 %v1827, %v514
  %v1830 = vadd.f32 %v1824, %v1829
  %1831 = vset.pattern.permute.xlu0 66
  %1832 = vperm.xlu0 %1831, %v1818
  %v1833 = vpop.permute.xlu0 %1832
  %v1835 = vmul.f32 %v1833, %v602
  %v1836 = vadd.f32 %v1830, %v1835
  %1837 = vset.pattern.permute.xlu0 67
  %1838 = vperm.xlu0 %1837, %v1818
  %v1839 = vpop.permute.xlu0 %1838
  %v1841 = vmul.f32 %v1839, %v690
  %v1842 = vadd.f32 %v1836, %v1841
  %1843 = vset.pattern.permute.xlu0 68
  %1844 = vperm.xlu0 %1843, %v1818
  %v1845 = vpop.permute.xlu0 %1844
  %v1847 = vmul.f32 %v1845, %v778
  %v1848 = vadd.f32 %v1842, %v1847
  %1849 = vset.pattern.permute.xlu0 69
  %1850 = vperm.xlu0 %1849, %v1818
  %v1851 = vpop.permute.xlu0 %1850
  %v1853 = vmul.f32 %v1851, %v866
  %v1854 = vadd.f32 %v1848, %v1853
  %1855 = vset.pattern.permute.xlu0 70
  %1856 = vperm.xlu0 %1855, %v1818
  %v1857 = vpop.permute.xlu0 %1856
  %v1859 = vmul.f32 %v1857, %v954
  %v1860 = vadd.f32 %v1854, %v1859
  %1861 = vset.pattern.permute.xlu0 71
  %1862 = vperm.xlu0 %1861, %v1818
  %v1863 = vpop.permute.xlu0 %1862
  %v1865 = vmul.f32 %v1863, %v1042
  %v1866 = vadd.f32 %v1860, %v1865
  %v1867 = vpack.c.bf16 %v1866, %v1866
  %v1868 = vld [vmem:[%s16] sm:$0xf]
  %v1869 = vld [vmem:[%s16 + $0x4] sm:$0xf]
  %v1870 = vld [vmem:[%s16 + $0x8] sm:$0xf]
  %v1871 = vld [vmem:[%s16 + $0xc] sm:$0xf]
  %v1876 = vunpack.c.l.b16 %v1868
  %v1877 = vunpack.c.l.b16 %v1869
  %v1878 = vunpack.c.l.b16 %v1870
  %v1879 = vunpack.c.l.b16 %v1871
  %v1880 = vpack.c.b16 %v1877, %v1876
  %v1881 = vpack.c.b16 %v1879, %v1878
  %v1885 = vsel %vm129, %v1867, 0
  %1887 = vmatprep.subr.bf16.mxu0 0
  %1888 = vmatpush1.bf16.msra.mxu0 %v1880
  %1889 = vmatprep.subr.bf16.mxu0 0
  %1890 = vmatpush1.bf16.msra.mxu0 %v1881
  %1891 = vmatprep.subr.bf16.mxu0 0
  %1892 = vmatpush1.bf16.msra.mxu0 0
  %1893 = vmatprep.subr.bf16.mxu0 0
  %1894 = vmatpush1.bf16.msra.mxu0 0
  %1895 = vmatprep.subr.bf16.mxu0 0
  %1896 = vmatpush1.bf16.msra.mxu0 0
  %1897 = vmatprep.subr.bf16.mxu0 0
  %1898 = vmatpush1.bf16.msra.mxu0 0
  %1899 = vmatprep.subr.bf16.mxu0 0
  %1900 = vmatpush1.bf16.msra.mxu0 0
  %1901 = vmatprep.subr.bf16.mxu0 0
  %1902 = vmatpush1.bf16.msra.mxu0 0
  %1903 = vmatprep.subr.bf16.mxu0 0
  %1904 = vmatpush1.bf16.msra.mxu0 0
  %1905 = vmatprep.subr.bf16.mxu0 0
  %1906 = vmatpush1.bf16.msra.mxu0 0
  %1907 = vmatprep.subr.bf16.mxu0 0
  %1908 = vmatpush1.bf16.msra.mxu0 0
  %1909 = vmatprep.subr.bf16.mxu0 0
  %1910 = vmatpush1.bf16.msra.mxu0 0
  %1911 = vmatprep.subr.bf16.mxu0 0
  %1912 = vmatpush1.bf16.msra.mxu0 0
  %1913 = vmatprep.subr.bf16.mxu0 0
  %1914 = vmatpush1.bf16.msra.mxu0 0
  %1915 = vmatprep.subr.bf16.mxu0 0
  %1916 = vmatpush1.bf16.msra.mxu0 0
  %1917 = vmatprep.subr.bf16.mxu0 0
  %1918 = vmatpush1.bf16.msra.mxu0 0
  %1919 = vmatprep.mubr.bf16.mxu0 0
  %1920 = vmatmul.mubr.bf16.gmra.mrb[0].mxu0 %v1885
  %v1921 = vpop.f32.mrb[0].mxu0
  %v1922 = vadd.f32 0.0, %v1921
  %v1923 = vpop.f32.mrb[0].mxu0
  %v1924 = vpop.f32.mrb[0].mxu0
  %v1925 = vpop.f32.mrb[0].mxu0
  %1926 = vdwg.mxu0
  %v1927 = vadd.f32 %v305, %v1922
  %v1928 = vadd.f32 %v1927, %v1636
  %v1929 = vxor.u32 %v1928, 2147483648
  %v1930 = vmul.f32 %v1929, 1.442695
  %v1931 = vpow.pop %v1930
  %v1932 = vadd.f32 %v1931, 1.0
  %v1933 = vrcp.pop %v1932
  %v1934 = vmul.f32 1.0, %v1933
  %1936 = vrot.lane.b32.xlu0 %v1636, 64
  %v1937 = vpop.permute.xlu0 %1936
  %v1939 = vmul.f32 %v1934, %v1937
  %1941 = vrot.lane.b32.xlu0 %v1939, 64
  %v1942 = vpop.permute.xlu0 %1941
  %v1944 = vadd.f32 %v1927, %v1942
  %v1945 = vtanh.pop %v1944
  %v1946 = vsub.f32 1.0, %v1934
  %1948 = vrot.lane.b32.xlu0 %v1945, 96
  %v1949 = vpop.permute.xlu0 %1948
  %v1951 = vmul.f32 %v1946, %v1949
  %1953 = vrot.lane.b32.xlu0 %v1110, 32
  %v1954 = vpop.permute.xlu0 %1953
  %v1956 = vmul.f32 %v1934, %v1954
  %v1957 = vadd.f32 %v1951, %v1956
  %v1958 = vpack.c.bf16 %v1957, %v1957
  %v1959 = vld [vmem:[%s17] sm:$0xf]
  %v1960 = vld [vmem:[%s17 + $0x4] sm:$0xf]
  %v1961 = vld [vmem:[%s17 + $0x8] sm:$0xf]
  %v1962 = vld [vmem:[%s17 + $0xc] sm:$0xf]
  %1964 = vrot.lane.b32.xlu0 %v1958, 96
  %v1965 = vpop.permute.xlu0 %1964
  %v1970 = vunpack.c.l.b16 %v1959
  %v1971 = vunpack.c.l.b16 %v1960
  %v1972 = vunpack.c.l.b16 %v1961
  %v1973 = vunpack.c.l.b16 %v1962
  %v1974 = vpack.c.b16 %v1971, %v1970
  %v1975 = vpack.c.b16 %v1973, %v1972
  %v1979 = vsel %vm129, %v1965, 0
  %1981 = vmatprep.subr.bf16.mxu0 0
  %1982 = vmatpush1.bf16.msra.mxu0 %v1974
  %1983 = vmatprep.subr.bf16.mxu0 0
  %1984 = vmatpush1.bf16.msra.mxu0 %v1975
  %1985 = vmatprep.subr.bf16.mxu0 0
  %1986 = vmatpush1.bf16.msra.mxu0 0
  %1987 = vmatprep.subr.bf16.mxu0 0
  %1988 = vmatpush1.bf16.msra.mxu0 0
  %1989 = vmatprep.subr.bf16.mxu0 0
  %1990 = vmatpush1.bf16.msra.mxu0 0
  %1991 = vmatprep.subr.bf16.mxu0 0
  %1992 = vmatpush1.bf16.msra.mxu0 0
  %1993 = vmatprep.subr.bf16.mxu0 0
  %1994 = vmatpush1.bf16.msra.mxu0 0
  %1995 = vmatprep.subr.bf16.mxu0 0
  %1996 = vmatpush1.bf16.msra.mxu0 0
  %1997 = vmatprep.subr.bf16.mxu0 0
  %1998 = vmatpush1.bf16.msra.mxu0 0
  %1999 = vmatprep.subr.bf16.mxu0 0
  %2000 = vmatpush1.bf16.msra.mxu0 0
  %2001 = vmatprep.subr.bf16.mxu0 0
  %2002 = vmatpush1.bf16.msra.mxu0 0
  %2003 = vmatprep.subr.bf16.mxu0 0
  %2004 = vmatpush1.bf16.msra.mxu0 0
  %2005 = vmatprep.subr.bf16.mxu0 0
  %2006 = vmatpush1.bf16.msra.mxu0 0
  %2007 = vmatprep.subr.bf16.mxu0 0
  %2008 = vmatpush1.bf16.msra.mxu0 0
  %2009 = vmatprep.subr.bf16.mxu0 0
  %2010 = vmatpush1.bf16.msra.mxu0 0
  %2011 = vmatprep.subr.bf16.mxu0 0
  %2012 = vmatpush1.bf16.msra.mxu0 0
  %2013 = vmatprep.mubr.bf16.mxu0 0
  %2014 = vmatmul.mubr.bf16.gmra.mrb[0].mxu0 %v1979
  %v2015 = vpop.f32.mrb[0].mxu0
  %v2016 = vadd.f32 0.0, %v2015
  %v2017 = vpop.f32.mrb[0].mxu0
  %v2018 = vpop.f32.mrb[0].mxu0
  %v2019 = vpop.f32.mrb[0].mxu0
  %2020 = vdwg.mxu0
  %2022 = vrot.lane.b32.xlu0 %v2016, 96
  %v2023 = vpop.permute.xlu0 %2022
  %v2025 = vadd.f32 %v1927, %v2023
  %v2026 = vtanh.pop %v2025
  %v2027 = vpack.c.bf16 %v2026, %v2026
  %v2028 = vld [vmem:[%s18] sm:$0xf]
  %v2029 = vld [vmem:[%s18 + $0x4] sm:$0xf]
  %v2030 = vld [vmem:[%s18 + $0x8] sm:$0xf]
  %v2031 = vld [vmem:[%s18 + $0xc] sm:$0xf]
  %2033 = vrot.lane.b32.xlu0 %v2027, 32
  %v2034 = vpop.permute.xlu0 %2033
  %v2039 = vunpack.c.l.b16 %v2028
  %v2040 = vunpack.c.l.b16 %v2029
  %v2041 = vunpack.c.l.b16 %v2030
  %v2042 = vunpack.c.l.b16 %v2031
  %v2043 = vpack.c.b16 %v2040, %v2039
  %v2044 = vpack.c.b16 %v2042, %v2041
  %v2048 = vsel %vm129, %v2034, 0
  %2050 = vmatprep.subr.bf16.mxu0 0
  %2051 = vmatpush1.bf16.msra.mxu0 %v2043
  %2052 = vmatprep.subr.bf16.mxu0 0
  %2053 = vmatpush1.bf16.msra.mxu0 %v2044
  %2054 = vmatprep.subr.bf16.mxu0 0
  %2055 = vmatpush1.bf16.msra.mxu0 0
  %2056 = vmatprep.subr.bf16.mxu0 0
  %2057 = vmatpush1.bf16.msra.mxu0 0
  %2058 = vmatprep.subr.bf16.mxu0 0
  %2059 = vmatpush1.bf16.msra.mxu0 0
  %2060 = vmatprep.subr.bf16.mxu0 0
  %2061 = vmatpush1.bf16.msra.mxu0 0
  %2062 = vmatprep.subr.bf16.mxu0 0
  %2063 = vmatpush1.bf16.msra.mxu0 0
  %2064 = vmatprep.subr.bf16.mxu0 0
  %2065 = vmatpush1.bf16.msra.mxu0 0
  %2066 = vmatprep.subr.bf16.mxu0 0
  %2067 = vmatpush1.bf16.msra.mxu0 0
  %2068 = vmatprep.subr.bf16.mxu0 0
  %2069 = vmatpush1.bf16.msra.mxu0 0
  %2070 = vmatprep.subr.bf16.mxu0 0
  %2071 = vmatpush1.bf16.msra.mxu0 0
  %2072 = vmatprep.subr.bf16.mxu0 0
  %2073 = vmatpush1.bf16.msra.mxu0 0
  %2074 = vmatprep.subr.bf16.mxu0 0
  %2075 = vmatpush1.bf16.msra.mxu0 0
  %2076 = vmatprep.subr.bf16.mxu0 0
  %2077 = vmatpush1.bf16.msra.mxu0 0
  %2078 = vmatprep.subr.bf16.mxu0 0
  %2079 = vmatpush1.bf16.msra.mxu0 0
  %2080 = vmatprep.subr.bf16.mxu0 0
  %2081 = vmatpush1.bf16.msra.mxu0 0
  %2082 = vmatprep.mubr.bf16.mxu0 0
  %2083 = vmatmul.mubr.bf16.gmra.mrb[0].mxu0 %v2048
  %v2084 = vpop.f32.mrb[0].mxu0
  %v2085 = vadd.f32 %v1818, %v2084
  %v2086 = vpop.f32.mrb[0].mxu0
  %v2087 = vpop.f32.mrb[0].mxu0
  %v2088 = vpop.f32.mrb[0].mxu0
  %2089 = vdwg.mxu0
  %2090 = vst [vmem:[%s19] sm:$0xff] %v2085
  %v2091 = vld [vmem:[%s11] sm:$0xff]
  %v2092 = vld [vmem:[%s11 + $0x8] sm:$0xf]
  %v2093 = vld [vmem:[%s11 + $0xc] sm:$0xff]
  %v2094 = vld [vmem:[%s11 + $0x14] sm:$0xf]
  %v2095 = vld [vmem:[%s11 + $0x18] sm:$0xff]
  %v2096 = vld [vmem:[%s11 + $0x20] sm:$0xf]
  %v2097 = vld [vmem:[%s11 + $0x24] sm:$0xff]
  %v2098 = vld [vmem:[%s11 + $0x2c] sm:$0xf]
  %v2107 = vunpack.c.l.b16 %v2091
  %v2108 = vunpack.c.h.b16 %v2091
  %v2109 = vunpack.c.l.b16 %v2092
  %v2110 = vunpack.c.l.b16 %v2093
  %v2111 = vunpack.c.h.b16 %v2093
  %v2112 = vunpack.c.l.b16 %v2094
  %v2113 = vunpack.c.l.b16 %v2095
  %v2114 = vunpack.c.h.b16 %v2095
  %v2115 = vunpack.c.l.b16 %v2096
  %v2116 = vunpack.c.l.b16 %v2097
  %v2117 = vunpack.c.h.b16 %v2097
  %v2118 = vunpack.c.l.b16 %v2098
  %v2119 = vpack.c.b16 %v2110, %v2107
  %v2120 = vpack.c.b16 %v2111, %v2108
  %v2121 = vpack.c.b16 %v2112, %v2109
  %v2122 = vpack.c.b16 %v2116, %v2113
  %v2123 = vpack.c.b16 %v2117, %v2114
  %v2124 = vpack.c.b16 %v2118, %v2115
  %2131 = vmatprep.subr.bf16.mxu0 %v2120
  %2132 = vmatpush1.bf16.msra.mxu0 %v2119
  %2133 = vmatprep.subr.bf16.mxu0 %v2123
  %2134 = vmatpush1.bf16.msra.mxu0 %v2122
  %2135 = vmatprep.subr.bf16.mxu0 0
  %2136 = vmatpush1.bf16.msra.mxu0 0
  %2137 = vmatprep.subr.bf16.mxu0 0
  %2138 = vmatpush1.bf16.msra.mxu0 0
  %2139 = vmatprep.subr.bf16.mxu0 0
  %2140 = vmatpush1.bf16.msra.mxu0 0
  %2141 = vmatprep.subr.bf16.mxu0 0
  %2142 = vmatpush1.bf16.msra.mxu0 0
  %2143 = vmatprep.subr.bf16.mxu0 0
  %2144 = vmatpush1.bf16.msra.mxu0 0
  %2145 = vmatprep.subr.bf16.mxu0 0
  %2146 = vmatpush1.bf16.msra.mxu0 0
  %2147 = vmatprep.subr.bf16.mxu0 0
  %2148 = vmatpush1.bf16.msra.mxu0 0
  %2149 = vmatprep.subr.bf16.mxu0 0
  %2150 = vmatpush1.bf16.msra.mxu0 0
  %2151 = vmatprep.subr.bf16.mxu0 0
  %2152 = vmatpush1.bf16.msra.mxu0 0
  %2153 = vmatprep.subr.bf16.mxu0 0
  %2154 = vmatpush1.bf16.msra.mxu0 0
  %2155 = vmatprep.subr.bf16.mxu0 0
  %2156 = vmatpush1.bf16.msra.mxu0 0
  %2157 = vmatprep.subr.bf16.mxu0 0
  %2158 = vmatpush1.bf16.msra.mxu0 0
  %2159 = vmatprep.subr.bf16.mxu0 0
  %2160 = vmatpush1.bf16.msra.mxu0 0
  %2161 = vmatprep.subr.bf16.mxu0 0
  %2162 = vmatpush1.bf16.msra.mxu0 0
  %2163 = vmatprep.mubr.bf16.mxu0 0
  %2164 = vmatmul.mubr.bf16.gmra.mrb[0].mxu0 %v1979
  %v2165 = vpop.f32.mrb[0].mxu0
  %v2166 = vadd.f32 0.0, %v2165
  %v2167 = vpop.f32.mrb[0].mxu0
  %v2168 = vadd.f32 0.0, %v2167
  %v2169 = vpop.f32.mrb[0].mxu0
  %v2170 = vpop.f32.mrb[0].mxu0
  %2171 = vdwg.mxu0
  %2172 = vmatprep.subr.bf16.mxu0 0
  %2173 = vmatpush1.bf16.msra.mxu0 %v2121
  %2174 = vmatprep.subr.bf16.mxu0 0
  %2175 = vmatpush1.bf16.msra.mxu0 %v2124
  %2176 = vmatprep.subr.bf16.mxu0 0
  %2177 = vmatpush1.bf16.msra.mxu0 0
  %2178 = vmatprep.subr.bf16.mxu0 0
  %2179 = vmatpush1.bf16.msra.mxu0 0
  %2180 = vmatprep.subr.bf16.mxu0 0
  %2181 = vmatpush1.bf16.msra.mxu0 0
  %2182 = vmatprep.subr.bf16.mxu0 0
  %2183 = vmatpush1.bf16.msra.mxu0 0
  %2184 = vmatprep.subr.bf16.mxu0 0
  %2185 = vmatpush1.bf16.msra.mxu0 0
  %2186 = vmatprep.subr.bf16.mxu0 0
  %2187 = vmatpush1.bf16.msra.mxu0 0
  %2188 = vmatprep.subr.bf16.mxu0 0
  %2189 = vmatpush1.bf16.msra.mxu0 0
  %2190 = vmatprep.subr.bf16.mxu0 0
  %2191 = vmatpush1.bf16.msra.mxu0 0
  %2192 = vmatprep.subr.bf16.mxu0 0
  %2193 = vmatpush1.bf16.msra.mxu0 0
  %2194 = vmatprep.subr.bf16.mxu0 0
  %2195 = vmatpush1.bf16.msra.mxu0 0
  %2196 = vmatprep.subr.bf16.mxu0 0
  %2197 = vmatpush1.bf16.msra.mxu0 0
  %2198 = vmatprep.subr.bf16.mxu0 0
  %2199 = vmatpush1.bf16.msra.mxu0 0
  %2200 = vmatprep.subr.bf16.mxu0 0
  %2201 = vmatpush1.bf16.msra.mxu0 0
  %2202 = vmatprep.subr.bf16.mxu0 0
  %2203 = vmatpush1.bf16.msra.mxu0 0
  %2204 = vmatprep.mubr.bf16.mxu0 0
  %2205 = vmatmul.mubr.bf16.gmra.mrb[0].mxu0 %v1979
  %v2206 = vpop.f32.mrb[0].mxu0
  %v2207 = vadd.f32 0.0, %v2206
  %v2208 = vpop.f32.mrb[0].mxu0
  %v2209 = vpop.f32.mrb[0].mxu0
  %v2210 = vpop.f32.mrb[0].mxu0
  %2211 = vdwg.mxu0
  %v2212 = vadd.f32 %v2207, %v75
  %v2213 = vadd.f32 %v1507, %v2166
  %v2214 = vadd.f32 %v1510, %v2168
  %v2215 = vtanh.pop %v2213
  %v2216 = vtanh.pop %v2214
  %v2217 = vpack.c.bf16 %v2215, %v2215
  %v2218 = vpack.c.bf16 %v2216, %v2216
  %v2219 = vld [vmem:[%s13] sm:$0xf]
  %v2220 = vld [vmem:[%s13 + $0x4] sm:$0xf]
  %v2221 = vld [vmem:[%s13 + $0x8] sm:$0xf]
  %v2222 = vld [vmem:[%s13 + $0xc] sm:$0xf]
  %v2223 = vld [vmem:[%s13 + $0x10] sm:$0xf]
  %v2224 = vld [vmem:[%s13 + $0x14] sm:$0xf]
  %v2225 = vld [vmem:[%s13 + $0x18] sm:$0xf]
  %v2226 = vld [vmem:[%s13 + $0x1c] sm:$0xf]
  %v2227 = vld [vmem:[%s13 + $0x20] sm:$0xf]
  %v2228 = vld [vmem:[%s13 + $0x24] sm:$0xf]
  %v2229 = vld [vmem:[%s13 + $0x28] sm:$0xf]
  %v2230 = vld [vmem:[%s13 + $0x2c] sm:$0xf]
  %v2231 = vld [vmem:[%s13 + $0x30] sm:$0xf]
  %v2232 = vld [vmem:[%s13 + $0x34] sm:$0xf]
  %v2233 = vld [vmem:[%s13 + $0x38] sm:$0xf]
  %v2234 = vld [vmem:[%s13 + $0x3c] sm:$0xf]
  %v2235 = vld [vmem:[%s13 + $0x40] sm:$0xf]
  %v2236 = vld [vmem:[%s13 + $0x44] sm:$0xf]
  %v2237 = vld [vmem:[%s13 + $0x48] sm:$0xf]
  %v2238 = vld [vmem:[%s13 + $0x4c] sm:$0xf]
  %v2239 = vld [vmem:[%s13 + $0x50] sm:$0xf]
  %v2240 = vld [vmem:[%s13 + $0x54] sm:$0xf]
  %v2241 = vld [vmem:[%s13 + $0x58] sm:$0xf]
  %v2242 = vld [vmem:[%s13 + $0x5c] sm:$0xf]
  %v2243 = vld [vmem:[%s13 + $0x60] sm:$0xf]
  %v2244 = vld [vmem:[%s13 + $0x64] sm:$0xf]
  %v2245 = vld [vmem:[%s13 + $0x68] sm:$0xf]
  %v2246 = vld [vmem:[%s13 + $0x6c] sm:$0xf]
  %v2247 = vld [vmem:[%s13 + $0x70] sm:$0xf]
  %v2248 = vld [vmem:[%s13 + $0x74] sm:$0xf]
  %v2249 = vld [vmem:[%s13 + $0x78] sm:$0xf]
  %v2250 = vld [vmem:[%s13 + $0x7c] sm:$0xf]
  %v2283 = vunpack.c.l.b16 %v2219
  %v2284 = vunpack.c.l.b16 %v2220
  %v2285 = vunpack.c.l.b16 %v2221
  %v2286 = vunpack.c.l.b16 %v2222
  %v2287 = vunpack.c.l.b16 %v2223
  %v2288 = vunpack.c.l.b16 %v2224
  %v2289 = vunpack.c.l.b16 %v2225
  %v2290 = vunpack.c.l.b16 %v2226
  %v2291 = vunpack.c.l.b16 %v2227
  %v2292 = vunpack.c.l.b16 %v2228
  %v2293 = vunpack.c.l.b16 %v2229
  %v2294 = vunpack.c.l.b16 %v2230
  %v2295 = vunpack.c.l.b16 %v2231
  %v2296 = vunpack.c.l.b16 %v2232
  %v2297 = vunpack.c.l.b16 %v2233
  %v2298 = vunpack.c.l.b16 %v2234
  %v2299 = vunpack.c.l.b16 %v2235
  %v2300 = vunpack.c.l.b16 %v2236
  %v2301 = vunpack.c.l.b16 %v2237
  %v2302 = vunpack.c.l.b16 %v2238
  %v2303 = vunpack.c.l.b16 %v2239
  %v2304 = vunpack.c.l.b16 %v2240
  %v2305 = vunpack.c.l.b16 %v2241
  %v2306 = vunpack.c.l.b16 %v2242
  %v2307 = vunpack.c.l.b16 %v2243
  %v2308 = vunpack.c.l.b16 %v2244
  %v2309 = vunpack.c.l.b16 %v2245
  %v2310 = vunpack.c.l.b16 %v2246
  %v2311 = vunpack.c.l.b16 %v2247
  %v2312 = vunpack.c.l.b16 %v2248
  %v2313 = vunpack.c.l.b16 %v2249
  %v2314 = vunpack.c.l.b16 %v2250
  %v2315 = vpack.c.b16 %v2284, %v2283
  %v2316 = vpack.c.b16 %v2286, %v2285
  %v2317 = vpack.c.b16 %v2288, %v2287
  %v2318 = vpack.c.b16 %v2290, %v2289
  %v2319 = vpack.c.b16 %v2292, %v2291
  %v2320 = vpack.c.b16 %v2294, %v2293
  %v2321 = vpack.c.b16 %v2296, %v2295
  %v2322 = vpack.c.b16 %v2298, %v2297
  %v2323 = vpack.c.b16 %v2300, %v2299
  %v2324 = vpack.c.b16 %v2302, %v2301
  %v2325 = vpack.c.b16 %v2304, %v2303
  %v2326 = vpack.c.b16 %v2306, %v2305
  %v2327 = vpack.c.b16 %v2308, %v2307
  %v2328 = vpack.c.b16 %v2310, %v2309
  %v2329 = vpack.c.b16 %v2312, %v2311
  %v2330 = vpack.c.b16 %v2314, %v2313
  %2347 = vmatprep.subr.bf16.mxu0 0
  %2348 = vmatpush1.bf16.msra.mxu0 %v2315
  %2349 = vmatprep.subr.bf16.mxu0 0
  %2350 = vmatpush1.bf16.msra.mxu0 %v2316
  %2351 = vmatprep.subr.bf16.mxu0 0
  %2352 = vmatpush1.bf16.msra.mxu0 %v2317
  %2353 = vmatprep.subr.bf16.mxu0 0
  %2354 = vmatpush1.bf16.msra.mxu0 %v2318
  %2355 = vmatprep.subr.bf16.mxu0 0
  %2356 = vmatpush1.bf16.msra.mxu0 %v2319
  %2357 = vmatprep.subr.bf16.mxu0 0
  %2358 = vmatpush1.bf16.msra.mxu0 %v2320
  %2359 = vmatprep.subr.bf16.mxu0 0
  %2360 = vmatpush1.bf16.msra.mxu0 %v2321
  %2361 = vmatprep.subr.bf16.mxu0 0
  %2362 = vmatpush1.bf16.msra.mxu0 %v2322
  %2363 = vmatprep.subr.bf16.mxu0 0
  %2364 = vmatpush1.bf16.msra.mxu0 %v2323
  %2365 = vmatprep.subr.bf16.mxu0 0
  %2366 = vmatpush1.bf16.msra.mxu0 %v2324
  %2367 = vmatprep.subr.bf16.mxu0 0
  %2368 = vmatpush1.bf16.msra.mxu0 %v2325
  %2369 = vmatprep.subr.bf16.mxu0 0
  %2370 = vmatpush1.bf16.msra.mxu0 %v2326
  %2371 = vmatprep.subr.bf16.mxu0 0
  %2372 = vmatpush1.bf16.msra.mxu0 %v2327
  %2373 = vmatprep.subr.bf16.mxu0 0
  %2374 = vmatpush1.bf16.msra.mxu0 %v2328
  %2375 = vmatprep.subr.bf16.mxu0 0
  %2376 = vmatpush1.bf16.msra.mxu0 %v2329
  %2377 = vmatprep.subr.bf16.mxu0 0
  %2378 = vmatpush1.bf16.msra.mxu0 %v2330
  %2379 = vmatprep.mubr.bf16.mxu0 %v2218
  %2380 = vmatmul.mubr.bf16.gmra.mrb[0].mxu0 %v2217
  %v2381 = vpop.f32.mrb[0].mxu0
  %v2382 = vadd.f32 0.0, %v2381
  %v2383 = vpop.f32.mrb[0].mxu0
  %v2384 = vpop.f32.mrb[0].mxu0
  %v2385 = vpop.f32.mrb[0].mxu0
  %2386 = vdwg.mxu0
  %v2387 = vmul.f32 %v2382, 1.442695
  %v2388 = vpow.pop %v2387
  %v2389 = vmul.f32 %v2388, %v77
  %2390 = vadd.xlane.f32.xlu0 %v2389
  %v2391 = vpop.xlane.xlu0 %2390
  %v2392 = vmax.f32 %v2391, 1e-30
  %v2393 = vrcp.pop %v2392
  %v2394 = vmul.f32 %v2389, %v2393
  %2396 = vset.pattern.permute.xlu0 64
  %2397 = vperm.xlu0 %2396, %v2394
  %v2398 = vpop.permute.xlu0 %2397
  %v2400 = vmul.f32 %v2398, %v425
  %2401 = vset.pattern.permute.xlu0 65
  %2402 = vperm.xlu0 %2401, %v2394
  %v2403 = vpop.permute.xlu0 %2402
  %v2405 = vmul.f32 %v2403, %v514
  %v2406 = vadd.f32 %v2400, %v2405
  %2407 = vset.pattern.permute.xlu0 66
  %2408 = vperm.xlu0 %2407, %v2394
  %v2409 = vpop.permute.xlu0 %2408
  %v2411 = vmul.f32 %v2409, %v602
  %v2412 = vadd.f32 %v2406, %v2411
  %2413 = vset.pattern.permute.xlu0 67
  %2414 = vperm.xlu0 %2413, %v2394
  %v2415 = vpop.permute.xlu0 %2414
  %v2417 = vmul.f32 %v2415, %v690
  %v2418 = vadd.f32 %v2412, %v2417
  %2419 = vset.pattern.permute.xlu0 68
  %2420 = vperm.xlu0 %2419, %v2394
  %v2421 = vpop.permute.xlu0 %2420
  %v2423 = vmul.f32 %v2421, %v778
  %v2424 = vadd.f32 %v2418, %v2423
  %2425 = vset.pattern.permute.xlu0 69
  %2426 = vperm.xlu0 %2425, %v2394
  %v2427 = vpop.permute.xlu0 %2426
  %v2429 = vmul.f32 %v2427, %v866
  %v2430 = vadd.f32 %v2424, %v2429
  %2431 = vset.pattern.permute.xlu0 70
  %2432 = vperm.xlu0 %2431, %v2394
  %v2433 = vpop.permute.xlu0 %2432
  %v2435 = vmul.f32 %v2433, %v954
  %v2436 = vadd.f32 %v2430, %v2435
  %2437 = vset.pattern.permute.xlu0 71
  %2438 = vperm.xlu0 %2437, %v2394
  %v2439 = vpop.permute.xlu0 %2438
  %v2441 = vmul.f32 %v2439, %v1042
  %v2442 = vadd.f32 %v2436, %v2441
  %v2443 = vpack.c.bf16 %v2442, %v2442
  %v2444 = vld [vmem:[%s16] sm:$0xf]
  %v2445 = vld [vmem:[%s16 + $0x4] sm:$0xf]
  %v2446 = vld [vmem:[%s16 + $0x8] sm:$0xf]
  %v2447 = vld [vmem:[%s16 + $0xc] sm:$0xf]
  %v2452 = vunpack.c.l.b16 %v2444
  %v2453 = vunpack.c.l.b16 %v2445
  %v2454 = vunpack.c.l.b16 %v2446
  %v2455 = vunpack.c.l.b16 %v2447
  %v2456 = vpack.c.b16 %v2453, %v2452
  %v2457 = vpack.c.b16 %v2455, %v2454
  %v2461 = vsel %vm129, %v2443, 0
  %2463 = vmatprep.subr.bf16.mxu0 0
  %2464 = vmatpush1.bf16.msra.mxu0 %v2456
  %2465 = vmatprep.subr.bf16.mxu0 0
  %2466 = vmatpush1.bf16.msra.mxu0 %v2457
  %2467 = vmatprep.subr.bf16.mxu0 0
  %2468 = vmatpush1.bf16.msra.mxu0 0
  %2469 = vmatprep.subr.bf16.mxu0 0
  %2470 = vmatpush1.bf16.msra.mxu0 0
  %2471 = vmatprep.subr.bf16.mxu0 0
  %2472 = vmatpush1.bf16.msra.mxu0 0
  %2473 = vmatprep.subr.bf16.mxu0 0
  %2474 = vmatpush1.bf16.msra.mxu0 0
  %2475 = vmatprep.subr.bf16.mxu0 0
  %2476 = vmatpush1.bf16.msra.mxu0 0
  %2477 = vmatprep.subr.bf16.mxu0 0
  %2478 = vmatpush1.bf16.msra.mxu0 0
  %2479 = vmatprep.subr.bf16.mxu0 0
  %2480 = vmatpush1.bf16.msra.mxu0 0
  %2481 = vmatprep.subr.bf16.mxu0 0
  %2482 = vmatpush1.bf16.msra.mxu0 0
  %2483 = vmatprep.subr.bf16.mxu0 0
  %2484 = vmatpush1.bf16.msra.mxu0 0
  %2485 = vmatprep.subr.bf16.mxu0 0
  %2486 = vmatpush1.bf16.msra.mxu0 0
  %2487 = vmatprep.subr.bf16.mxu0 0
  %2488 = vmatpush1.bf16.msra.mxu0 0
  %2489 = vmatprep.subr.bf16.mxu0 0
  %2490 = vmatpush1.bf16.msra.mxu0 0
  %2491 = vmatprep.subr.bf16.mxu0 0
  %2492 = vmatpush1.bf16.msra.mxu0 0
  %2493 = vmatprep.subr.bf16.mxu0 0
  %2494 = vmatpush1.bf16.msra.mxu0 0
  %2495 = vmatprep.mubr.bf16.mxu0 0
  %2496 = vmatmul.mubr.bf16.gmra.mrb[0].mxu0 %v2461
  %v2497 = vpop.f32.mrb[0].mxu0
  %v2498 = vadd.f32 0.0, %v2497
  %v2499 = vpop.f32.mrb[0].mxu0
  %v2500 = vpop.f32.mrb[0].mxu0
  %v2501 = vpop.f32.mrb[0].mxu0
  %2502 = vdwg.mxu0
  %v2503 = vadd.f32 %v308, %v2498
  %v2504 = vadd.f32 %v2503, %v2212
  %v2505 = vxor.u32 %v2504, 2147483648
  %v2506 = vmul.f32 %v2505, 1.442695
  %v2507 = vpow.pop %v2506
  %v2508 = vadd.f32 %v2507, 1.0
  %v2509 = vrcp.pop %v2508
  %v2510 = vmul.f32 1.0, %v2509
  %2512 = vrot.lane.b32.xlu0 %v2212, 64
  %v2513 = vpop.permute.xlu0 %2512
  %v2515 = vmul.f32 %v2510, %v2513
  %2517 = vrot.lane.b32.xlu0 %v2515, 64
  %v2518 = vpop.permute.xlu0 %2517
  %v2520 = vadd.f32 %v2503, %v2518
  %v2521 = vtanh.pop %v2520
  %v2522 = vsub.f32 1.0, %v2510
  %2524 = vrot.lane.b32.xlu0 %v2521, 96
  %v2525 = vpop.permute.xlu0 %2524
  %v2527 = vmul.f32 %v2522, %v2525
  %v2528 = vmul.f32 %v2510, %v1957
  %v2529 = vadd.f32 %v2527, %v2528
  %v2530 = vpack.c.bf16 %v2529, %v2529
  %v2531 = vld [vmem:[%s17] sm:$0xf]
  %v2532 = vld [vmem:[%s17 + $0x4] sm:$0xf]
  %v2533 = vld [vmem:[%s17 + $0x8] sm:$0xf]
  %v2534 = vld [vmem:[%s17 + $0xc] sm:$0xf]
  %2536 = vrot.lane.b32.xlu0 %v2530, 96
  %v2537 = vpop.permute.xlu0 %2536
  %v2542 = vunpack.c.l.b16 %v2531
  %v2543 = vunpack.c.l.b16 %v2532
  %v2544 = vunpack.c.l.b16 %v2533
  %v2545 = vunpack.c.l.b16 %v2534
  %v2546 = vpack.c.b16 %v2543, %v2542
  %v2547 = vpack.c.b16 %v2545, %v2544
  %v2551 = vsel %vm129, %v2537, 0
  %2553 = vmatprep.subr.bf16.mxu0 0
  %2554 = vmatpush1.bf16.msra.mxu0 %v2546
  %2555 = vmatprep.subr.bf16.mxu0 0
  %2556 = vmatpush1.bf16.msra.mxu0 %v2547
  %2557 = vmatprep.subr.bf16.mxu0 0
  %2558 = vmatpush1.bf16.msra.mxu0 0
  %2559 = vmatprep.subr.bf16.mxu0 0
  %2560 = vmatpush1.bf16.msra.mxu0 0
  %2561 = vmatprep.subr.bf16.mxu0 0
  %2562 = vmatpush1.bf16.msra.mxu0 0
  %2563 = vmatprep.subr.bf16.mxu0 0
  %2564 = vmatpush1.bf16.msra.mxu0 0
  %2565 = vmatprep.subr.bf16.mxu0 0
  %2566 = vmatpush1.bf16.msra.mxu0 0
  %2567 = vmatprep.subr.bf16.mxu0 0
  %2568 = vmatpush1.bf16.msra.mxu0 0
  %2569 = vmatprep.subr.bf16.mxu0 0
  %2570 = vmatpush1.bf16.msra.mxu0 0
  %2571 = vmatprep.subr.bf16.mxu0 0
  %2572 = vmatpush1.bf16.msra.mxu0 0
  %2573 = vmatprep.subr.bf16.mxu0 0
  %2574 = vmatpush1.bf16.msra.mxu0 0
  %2575 = vmatprep.subr.bf16.mxu0 0
  %2576 = vmatpush1.bf16.msra.mxu0 0
  %2577 = vmatprep.subr.bf16.mxu0 0
  %2578 = vmatpush1.bf16.msra.mxu0 0
  %2579 = vmatprep.subr.bf16.mxu0 0
  %2580 = vmatpush1.bf16.msra.mxu0 0
  %2581 = vmatprep.subr.bf16.mxu0 0
  %2582 = vmatpush1.bf16.msra.mxu0 0
  %2583 = vmatprep.subr.bf16.mxu0 0
  %2584 = vmatpush1.bf16.msra.mxu0 0
  %2585 = vmatprep.mubr.bf16.mxu0 0
  %2586 = vmatmul.mubr.bf16.gmra.mrb[0].mxu0 %v2551
  %v2587 = vpop.f32.mrb[0].mxu0
  %v2588 = vadd.f32 0.0, %v2587
  %v2589 = vpop.f32.mrb[0].mxu0
  %v2590 = vpop.f32.mrb[0].mxu0
  %v2591 = vpop.f32.mrb[0].mxu0
  %2592 = vdwg.mxu0
  %2594 = vrot.lane.b32.xlu0 %v2588, 96
  %v2595 = vpop.permute.xlu0 %2594
  %v2597 = vadd.f32 %v2503, %v2595
  %v2598 = vtanh.pop %v2597
  %v2599 = vpack.c.bf16 %v2598, %v2598
  %v2600 = vld [vmem:[%s18] sm:$0xf]
  %v2601 = vld [vmem:[%s18 + $0x4] sm:$0xf]
  %v2602 = vld [vmem:[%s18 + $0x8] sm:$0xf]
  %v2603 = vld [vmem:[%s18 + $0xc] sm:$0xf]
  %2605 = vrot.lane.b32.xlu0 %v2599, 32
  %v2606 = vpop.permute.xlu0 %2605
  %v2611 = vunpack.c.l.b16 %v2600
  %v2612 = vunpack.c.l.b16 %v2601
  %v2613 = vunpack.c.l.b16 %v2602
  %v2614 = vunpack.c.l.b16 %v2603
  %v2615 = vpack.c.b16 %v2612, %v2611
  %v2616 = vpack.c.b16 %v2614, %v2613
  %v2620 = vsel %vm129, %v2606, 0
  %2622 = vmatprep.subr.bf16.mxu0 0
  %2623 = vmatpush1.bf16.msra.mxu0 %v2615
  %2624 = vmatprep.subr.bf16.mxu0 0
  %2625 = vmatpush1.bf16.msra.mxu0 %v2616
  %2626 = vmatprep.subr.bf16.mxu0 0
  %2627 = vmatpush1.bf16.msra.mxu0 0
  %2628 = vmatprep.subr.bf16.mxu0 0
  %2629 = vmatpush1.bf16.msra.mxu0 0
  %2630 = vmatprep.subr.bf16.mxu0 0
  %2631 = vmatpush1.bf16.msra.mxu0 0
  %2632 = vmatprep.subr.bf16.mxu0 0
  %2633 = vmatpush1.bf16.msra.mxu0 0
  %2634 = vmatprep.subr.bf16.mxu0 0
  %2635 = vmatpush1.bf16.msra.mxu0 0
  %2636 = vmatprep.subr.bf16.mxu0 0
  %2637 = vmatpush1.bf16.msra.mxu0 0
  %2638 = vmatprep.subr.bf16.mxu0 0
  %2639 = vmatpush1.bf16.msra.mxu0 0
  %2640 = vmatprep.subr.bf16.mxu0 0
  %2641 = vmatpush1.bf16.msra.mxu0 0
  %2642 = vmatprep.subr.bf16.mxu0 0
  %2643 = vmatpush1.bf16.msra.mxu0 0
  %2644 = vmatprep.subr.bf16.mxu0 0
  %2645 = vmatpush1.bf16.msra.mxu0 0
  %2646 = vmatprep.subr.bf16.mxu0 0
  %2647 = vmatpush1.bf16.msra.mxu0 0
  %2648 = vmatprep.subr.bf16.mxu0 0
  %2649 = vmatpush1.bf16.msra.mxu0 0
  %2650 = vmatprep.subr.bf16.mxu0 0
  %2651 = vmatpush1.bf16.msra.mxu0 0
  %2652 = vmatprep.subr.bf16.mxu0 0
  %2653 = vmatpush1.bf16.msra.mxu0 0
  %2654 = vmatprep.mubr.bf16.mxu0 0
  %2655 = vmatmul.mubr.bf16.gmra.mrb[0].mxu0 %v2620
  %v2656 = vpop.f32.mrb[0].mxu0
  %v2657 = vadd.f32 %v2394, %v2656
  %v2658 = vpop.f32.mrb[0].mxu0
  %v2659 = vpop.f32.mrb[0].mxu0
  %v2660 = vpop.f32.mrb[0].mxu0
  %2661 = vdwg.mxu0
  %s2662 = scalar_lea.vmem %s19, 8
  %2663 = vst [vmem:[%s2662] sm:$0xff] %v2657
  %v2664 = vld [vmem:[%s11] sm:$0xff]
  %v2665 = vld [vmem:[%s11 + $0x8] sm:$0xf]
  %v2666 = vld [vmem:[%s11 + $0xc] sm:$0xff]
  %v2667 = vld [vmem:[%s11 + $0x14] sm:$0xf]
  %v2668 = vld [vmem:[%s11 + $0x18] sm:$0xff]
  %v2669 = vld [vmem:[%s11 + $0x20] sm:$0xf]
  %v2670 = vld [vmem:[%s11 + $0x24] sm:$0xff]
  %v2671 = vld [vmem:[%s11 + $0x2c] sm:$0xf]
  %v2680 = vunpack.c.l.b16 %v2664
  %v2681 = vunpack.c.h.b16 %v2664
  %v2682 = vunpack.c.l.b16 %v2665
  %v2683 = vunpack.c.l.b16 %v2666
  %v2684 = vunpack.c.h.b16 %v2666
  %v2685 = vunpack.c.l.b16 %v2667
  %v2686 = vunpack.c.l.b16 %v2668
  %v2687 = vunpack.c.h.b16 %v2668
  %v2688 = vunpack.c.l.b16 %v2669
  %v2689 = vunpack.c.l.b16 %v2670
  %v2690 = vunpack.c.h.b16 %v2670
  %v2691 = vunpack.c.l.b16 %v2671
  %v2692 = vpack.c.b16 %v2683, %v2680
  %v2693 = vpack.c.b16 %v2684, %v2681
  %v2694 = vpack.c.b16 %v2685, %v2682
  %v2695 = vpack.c.b16 %v2689, %v2686
  %v2696 = vpack.c.b16 %v2690, %v2687
  %v2697 = vpack.c.b16 %v2691, %v2688
  %2704 = vmatprep.subr.bf16.mxu0 %v2693
  %2705 = vmatpush1.bf16.msra.mxu0 %v2692
  %2706 = vmatprep.subr.bf16.mxu0 %v2696
  %2707 = vmatpush1.bf16.msra.mxu0 %v2695
  %2708 = vmatprep.subr.bf16.mxu0 0
  %2709 = vmatpush1.bf16.msra.mxu0 0
  %2710 = vmatprep.subr.bf16.mxu0 0
  %2711 = vmatpush1.bf16.msra.mxu0 0
  %2712 = vmatprep.subr.bf16.mxu0 0
  %2713 = vmatpush1.bf16.msra.mxu0 0
  %2714 = vmatprep.subr.bf16.mxu0 0
  %2715 = vmatpush1.bf16.msra.mxu0 0
  %2716 = vmatprep.subr.bf16.mxu0 0
  %2717 = vmatpush1.bf16.msra.mxu0 0
  %2718 = vmatprep.subr.bf16.mxu0 0
  %2719 = vmatpush1.bf16.msra.mxu0 0
  %2720 = vmatprep.subr.bf16.mxu0 0
  %2721 = vmatpush1.bf16.msra.mxu0 0
  %2722 = vmatprep.subr.bf16.mxu0 0
  %2723 = vmatpush1.bf16.msra.mxu0 0
  %2724 = vmatprep.subr.bf16.mxu0 0
  %2725 = vmatpush1.bf16.msra.mxu0 0
  %2726 = vmatprep.subr.bf16.mxu0 0
  %2727 = vmatpush1.bf16.msra.mxu0 0
  %2728 = vmatprep.subr.bf16.mxu0 0
  %2729 = vmatpush1.bf16.msra.mxu0 0
  %2730 = vmatprep.subr.bf16.mxu0 0
  %2731 = vmatpush1.bf16.msra.mxu0 0
  %2732 = vmatprep.subr.bf16.mxu0 0
  %2733 = vmatpush1.bf16.msra.mxu0 0
  %2734 = vmatprep.subr.bf16.mxu0 0
  %2735 = vmatpush1.bf16.msra.mxu0 0
  %2736 = vmatprep.mubr.bf16.mxu0 0
  %2737 = vmatmul.mubr.bf16.gmra.mrb[0].mxu0 %v2551
  %v2738 = vpop.f32.mrb[0].mxu0
  %v2739 = vadd.f32 0.0, %v2738
  %v2740 = vpop.f32.mrb[0].mxu0
  %v2741 = vadd.f32 0.0, %v2740
  %v2742 = vpop.f32.mrb[0].mxu0
  %v2743 = vpop.f32.mrb[0].mxu0
  %2744 = vdwg.mxu0
  %2745 = vmatprep.subr.bf16.mxu0 0
  %2746 = vmatpush1.bf16.msra.mxu0 %v2694
  %2747 = vmatprep.subr.bf16.mxu0 0
  %2748 = vmatpush1.bf16.msra.mxu0 %v2697
  %2749 = vmatprep.subr.bf16.mxu0 0
  %2750 = vmatpush1.bf16.msra.mxu0 0
  %2751 = vmatprep.subr.bf16.mxu0 0
  %2752 = vmatpush1.bf16.msra.mxu0 0
  %2753 = vmatprep.subr.bf16.mxu0 0
  %2754 = vmatpush1.bf16.msra.mxu0 0
  %2755 = vmatprep.subr.bf16.mxu0 0
  %2756 = vmatpush1.bf16.msra.mxu0 0
  %2757 = vmatprep.subr.bf16.mxu0 0
  %2758 = vmatpush1.bf16.msra.mxu0 0
  %2759 = vmatprep.subr.bf16.mxu0 0
  %2760 = vmatpush1.bf16.msra.mxu0 0
  %2761 = vmatprep.subr.bf16.mxu0 0
  %2762 = vmatpush1.bf16.msra.mxu0 0
  %2763 = vmatprep.subr.bf16.mxu0 0
  %2764 = vmatpush1.bf16.msra.mxu0 0
  %2765 = vmatprep.subr.bf16.mxu0 0
  %2766 = vmatpush1.bf16.msra.mxu0 0
  %2767 = vmatprep.subr.bf16.mxu0 0
  %2768 = vmatpush1.bf16.msra.mxu0 0
  %2769 = vmatprep.subr.bf16.mxu0 0
  %2770 = vmatpush1.bf16.msra.mxu0 0
  %2771 = vmatprep.subr.bf16.mxu0 0
  %2772 = vmatpush1.bf16.msra.mxu0 0
  %2773 = vmatprep.subr.bf16.mxu0 0
  %2774 = vmatpush1.bf16.msra.mxu0 0
  %2775 = vmatprep.subr.bf16.mxu0 0
  %2776 = vmatpush1.bf16.msra.mxu0 0
  %2777 = vmatprep.mubr.bf16.mxu0 0
  %2778 = vmatmul.mubr.bf16.gmra.mrb[0].mxu0 %v2551
  %v2779 = vpop.f32.mrb[0].mxu0
  %v2780 = vadd.f32 0.0, %v2779
  %v2781 = vpop.f32.mrb[0].mxu0
  %v2782 = vpop.f32.mrb[0].mxu0
  %v2783 = vpop.f32.mrb[0].mxu0
  %2784 = vdwg.mxu0
  %v2785 = vadd.f32 %v2780, %v75
  %v2786 = vadd.f32 %v1507, %v2739
  %v2787 = vadd.f32 %v1510, %v2741
  %v2788 = vtanh.pop %v2786
  %v2789 = vtanh.pop %v2787
  %v2790 = vpack.c.bf16 %v2788, %v2788
  %v2791 = vpack.c.bf16 %v2789, %v2789
  %v2792 = vld [vmem:[%s13] sm:$0xf]
  %v2793 = vld [vmem:[%s13 + $0x4] sm:$0xf]
  %v2794 = vld [vmem:[%s13 + $0x8] sm:$0xf]
  %v2795 = vld [vmem:[%s13 + $0xc] sm:$0xf]
  %v2796 = vld [vmem:[%s13 + $0x10] sm:$0xf]
  %v2797 = vld [vmem:[%s13 + $0x14] sm:$0xf]
  %v2798 = vld [vmem:[%s13 + $0x18] sm:$0xf]
  %v2799 = vld [vmem:[%s13 + $0x1c] sm:$0xf]
  %v2800 = vld [vmem:[%s13 + $0x20] sm:$0xf]
  %v2801 = vld [vmem:[%s13 + $0x24] sm:$0xf]
  %v2802 = vld [vmem:[%s13 + $0x28] sm:$0xf]
  %v2803 = vld [vmem:[%s13 + $0x2c] sm:$0xf]
  %v2804 = vld [vmem:[%s13 + $0x30] sm:$0xf]
  %v2805 = vld [vmem:[%s13 + $0x34] sm:$0xf]
  %v2806 = vld [vmem:[%s13 + $0x38] sm:$0xf]
  %v2807 = vld [vmem:[%s13 + $0x3c] sm:$0xf]
  %v2808 = vld [vmem:[%s13 + $0x40] sm:$0xf]
  %v2809 = vld [vmem:[%s13 + $0x44] sm:$0xf]
  %v2810 = vld [vmem:[%s13 + $0x48] sm:$0xf]
  %v2811 = vld [vmem:[%s13 + $0x4c] sm:$0xf]
  %v2812 = vld [vmem:[%s13 + $0x50] sm:$0xf]
  %v2813 = vld [vmem:[%s13 + $0x54] sm:$0xf]
  %v2814 = vld [vmem:[%s13 + $0x58] sm:$0xf]
  %v2815 = vld [vmem:[%s13 + $0x5c] sm:$0xf]
  %v2816 = vld [vmem:[%s13 + $0x60] sm:$0xf]
  %v2817 = vld [vmem:[%s13 + $0x64] sm:$0xf]
  %v2818 = vld [vmem:[%s13 + $0x68] sm:$0xf]
  %v2819 = vld [vmem:[%s13 + $0x6c] sm:$0xf]
  %v2820 = vld [vmem:[%s13 + $0x70] sm:$0xf]
  %v2821 = vld [vmem:[%s13 + $0x74] sm:$0xf]
  %v2822 = vld [vmem:[%s13 + $0x78] sm:$0xf]
  %v2823 = vld [vmem:[%s13 + $0x7c] sm:$0xf]
  %v2856 = vunpack.c.l.b16 %v2792
  %v2857 = vunpack.c.l.b16 %v2793
  %v2858 = vunpack.c.l.b16 %v2794
  %v2859 = vunpack.c.l.b16 %v2795
  %v2860 = vunpack.c.l.b16 %v2796
  %v2861 = vunpack.c.l.b16 %v2797
  %v2862 = vunpack.c.l.b16 %v2798
  %v2863 = vunpack.c.l.b16 %v2799
  %v2864 = vunpack.c.l.b16 %v2800
  %v2865 = vunpack.c.l.b16 %v2801
  %v2866 = vunpack.c.l.b16 %v2802
  %v2867 = vunpack.c.l.b16 %v2803
  %v2868 = vunpack.c.l.b16 %v2804
  %v2869 = vunpack.c.l.b16 %v2805
  %v2870 = vunpack.c.l.b16 %v2806
  %v2871 = vunpack.c.l.b16 %v2807
  %v2872 = vunpack.c.l.b16 %v2808
  %v2873 = vunpack.c.l.b16 %v2809
  %v2874 = vunpack.c.l.b16 %v2810
  %v2875 = vunpack.c.l.b16 %v2811
  %v2876 = vunpack.c.l.b16 %v2812
  %v2877 = vunpack.c.l.b16 %v2813
  %v2878 = vunpack.c.l.b16 %v2814
  %v2879 = vunpack.c.l.b16 %v2815
  %v2880 = vunpack.c.l.b16 %v2816
  %v2881 = vunpack.c.l.b16 %v2817
  %v2882 = vunpack.c.l.b16 %v2818
  %v2883 = vunpack.c.l.b16 %v2819
  %v2884 = vunpack.c.l.b16 %v2820
  %v2885 = vunpack.c.l.b16 %v2821
  %v2886 = vunpack.c.l.b16 %v2822
  %v2887 = vunpack.c.l.b16 %v2823
  %v2888 = vpack.c.b16 %v2857, %v2856
  %v2889 = vpack.c.b16 %v2859, %v2858
  %v2890 = vpack.c.b16 %v2861, %v2860
  %v2891 = vpack.c.b16 %v2863, %v2862
  %v2892 = vpack.c.b16 %v2865, %v2864
  %v2893 = vpack.c.b16 %v2867, %v2866
  %v2894 = vpack.c.b16 %v2869, %v2868
  %v2895 = vpack.c.b16 %v2871, %v2870
  %v2896 = vpack.c.b16 %v2873, %v2872
  %v2897 = vpack.c.b16 %v2875, %v2874
  %v2898 = vpack.c.b16 %v2877, %v2876
  %v2899 = vpack.c.b16 %v2879, %v2878
  %v2900 = vpack.c.b16 %v2881, %v2880
  %v2901 = vpack.c.b16 %v2883, %v2882
  %v2902 = vpack.c.b16 %v2885, %v2884
  %v2903 = vpack.c.b16 %v2887, %v2886
  %2920 = vmatprep.subr.bf16.mxu0 0
  %2921 = vmatpush1.bf16.msra.mxu0 %v2888
  %2922 = vmatprep.subr.bf16.mxu0 0
  %2923 = vmatpush1.bf16.msra.mxu0 %v2889
  %2924 = vmatprep.subr.bf16.mxu0 0
  %2925 = vmatpush1.bf16.msra.mxu0 %v2890
  %2926 = vmatprep.subr.bf16.mxu0 0
  %2927 = vmatpush1.bf16.msra.mxu0 %v2891
  %2928 = vmatprep.subr.bf16.mxu0 0
  %2929 = vmatpush1.bf16.msra.mxu0 %v2892
  %2930 = vmatprep.subr.bf16.mxu0 0
  %2931 = vmatpush1.bf16.msra.mxu0 %v2893
  %2932 = vmatprep.subr.bf16.mxu0 0
  %2933 = vmatpush1.bf16.msra.mxu0 %v2894
  %2934 = vmatprep.subr.bf16.mxu0 0
  %2935 = vmatpush1.bf16.msra.mxu0 %v2895
  %2936 = vmatprep.subr.bf16.mxu0 0
  %2937 = vmatpush1.bf16.msra.mxu0 %v2896
  %2938 = vmatprep.subr.bf16.mxu0 0
  %2939 = vmatpush1.bf16.msra.mxu0 %v2897
  %2940 = vmatprep.subr.bf16.mxu0 0
  %2941 = vmatpush1.bf16.msra.mxu0 %v2898
  %2942 = vmatprep.subr.bf16.mxu0 0
  %2943 = vmatpush1.bf16.msra.mxu0 %v2899
  %2944 = vmatprep.subr.bf16.mxu0 0
  %2945 = vmatpush1.bf16.msra.mxu0 %v2900
  %2946 = vmatprep.subr.bf16.mxu0 0
  %2947 = vmatpush1.bf16.msra.mxu0 %v2901
  %2948 = vmatprep.subr.bf16.mxu0 0
  %2949 = vmatpush1.bf16.msra.mxu0 %v2902
  %2950 = vmatprep.subr.bf16.mxu0 0
  %2951 = vmatpush1.bf16.msra.mxu0 %v2903
  %2952 = vmatprep.mubr.bf16.mxu0 %v2791
  %2953 = vmatmul.mubr.bf16.gmra.mrb[0].mxu0 %v2790
  %v2954 = vpop.f32.mrb[0].mxu0
  %v2955 = vadd.f32 0.0, %v2954
  %v2956 = vpop.f32.mrb[0].mxu0
  %v2957 = vpop.f32.mrb[0].mxu0
  %v2958 = vpop.f32.mrb[0].mxu0
  %2959 = vdwg.mxu0
  %v2960 = vmul.f32 %v2955, 1.442695
  %v2961 = vpow.pop %v2960
  %v2962 = vmul.f32 %v2961, %v77
  %2963 = vadd.xlane.f32.xlu0 %v2962
  %v2964 = vpop.xlane.xlu0 %2963
  %v2965 = vmax.f32 %v2964, 1e-30
  %v2966 = vrcp.pop %v2965
  %v2967 = vmul.f32 %v2962, %v2966
  %2969 = vset.pattern.permute.xlu0 64
  %2970 = vperm.xlu0 %2969, %v2967
  %v2971 = vpop.permute.xlu0 %2970
  %v2973 = vmul.f32 %v2971, %v425
  %2974 = vset.pattern.permute.xlu0 65
  %2975 = vperm.xlu0 %2974, %v2967
  %v2976 = vpop.permute.xlu0 %2975
  %v2978 = vmul.f32 %v2976, %v514
  %v2979 = vadd.f32 %v2973, %v2978
  %2980 = vset.pattern.permute.xlu0 66
  %2981 = vperm.xlu0 %2980, %v2967
  %v2982 = vpop.permute.xlu0 %2981
  %v2984 = vmul.f32 %v2982, %v602
  %v2985 = vadd.f32 %v2979, %v2984
  %2986 = vset.pattern.permute.xlu0 67
  %2987 = vperm.xlu0 %2986, %v2967
  %v2988 = vpop.permute.xlu0 %2987
  %v2990 = vmul.f32 %v2988, %v690
  %v2991 = vadd.f32 %v2985, %v2990
  %2992 = vset.pattern.permute.xlu0 68
  %2993 = vperm.xlu0 %2992, %v2967
  %v2994 = vpop.permute.xlu0 %2993
  %v2996 = vmul.f32 %v2994, %v778
  %v2997 = vadd.f32 %v2991, %v2996
  %2998 = vset.pattern.permute.xlu0 69
  %2999 = vperm.xlu0 %2998, %v2967
  %v3000 = vpop.permute.xlu0 %2999
  %v3002 = vmul.f32 %v3000, %v866
  %v3003 = vadd.f32 %v2997, %v3002
  %3004 = vset.pattern.permute.xlu0 70
  %3005 = vperm.xlu0 %3004, %v2967
  %v3006 = vpop.permute.xlu0 %3005
  %v3008 = vmul.f32 %v3006, %v954
  %v3009 = vadd.f32 %v3003, %v3008
  %3010 = vset.pattern.permute.xlu0 71
  %3011 = vperm.xlu0 %3010, %v2967
  %v3012 = vpop.permute.xlu0 %3011
  %v3014 = vmul.f32 %v3012, %v1042
  %v3015 = vadd.f32 %v3009, %v3014
  %v3016 = vpack.c.bf16 %v3015, %v3015
  %v3017 = vld [vmem:[%s16] sm:$0xf]
  %v3018 = vld [vmem:[%s16 + $0x4] sm:$0xf]
  %v3019 = vld [vmem:[%s16 + $0x8] sm:$0xf]
  %v3020 = vld [vmem:[%s16 + $0xc] sm:$0xf]
  %v3025 = vunpack.c.l.b16 %v3017
  %v3026 = vunpack.c.l.b16 %v3018
  %v3027 = vunpack.c.l.b16 %v3019
  %v3028 = vunpack.c.l.b16 %v3020
  %v3029 = vpack.c.b16 %v3026, %v3025
  %v3030 = vpack.c.b16 %v3028, %v3027
  %v3034 = vsel %vm129, %v3016, 0
  %3036 = vmatprep.subr.bf16.mxu0 0
  %3037 = vmatpush1.bf16.msra.mxu0 %v3029
  %3038 = vmatprep.subr.bf16.mxu0 0
  %3039 = vmatpush1.bf16.msra.mxu0 %v3030
  %3040 = vmatprep.subr.bf16.mxu0 0
  %3041 = vmatpush1.bf16.msra.mxu0 0
  %3042 = vmatprep.subr.bf16.mxu0 0
  %3043 = vmatpush1.bf16.msra.mxu0 0
  %3044 = vmatprep.subr.bf16.mxu0 0
  %3045 = vmatpush1.bf16.msra.mxu0 0
  %3046 = vmatprep.subr.bf16.mxu0 0
  %3047 = vmatpush1.bf16.msra.mxu0 0
  %3048 = vmatprep.subr.bf16.mxu0 0
  %3049 = vmatpush1.bf16.msra.mxu0 0
  %3050 = vmatprep.subr.bf16.mxu0 0
  %3051 = vmatpush1.bf16.msra.mxu0 0
  %3052 = vmatprep.subr.bf16.mxu0 0
  %3053 = vmatpush1.bf16.msra.mxu0 0
  %3054 = vmatprep.subr.bf16.mxu0 0
  %3055 = vmatpush1.bf16.msra.mxu0 0
  %3056 = vmatprep.subr.bf16.mxu0 0
  %3057 = vmatpush1.bf16.msra.mxu0 0
  %3058 = vmatprep.subr.bf16.mxu0 0
  %3059 = vmatpush1.bf16.msra.mxu0 0
  %3060 = vmatprep.subr.bf16.mxu0 0
  %3061 = vmatpush1.bf16.msra.mxu0 0
  %3062 = vmatprep.subr.bf16.mxu0 0
  %3063 = vmatpush1.bf16.msra.mxu0 0
  %3064 = vmatprep.subr.bf16.mxu0 0
  %3065 = vmatpush1.bf16.msra.mxu0 0
  %3066 = vmatprep.subr.bf16.mxu0 0
  %3067 = vmatpush1.bf16.msra.mxu0 0
  %3068 = vmatprep.mubr.bf16.mxu0 0
  %3069 = vmatmul.mubr.bf16.gmra.mrb[0].mxu0 %v3034
  %v3070 = vpop.f32.mrb[0].mxu0
  %v3071 = vadd.f32 0.0, %v3070
  %v3072 = vpop.f32.mrb[0].mxu0
  %v3073 = vpop.f32.mrb[0].mxu0
  %v3074 = vpop.f32.mrb[0].mxu0
  %3075 = vdwg.mxu0
  %v3076 = vadd.f32 %v313, %v3071
  %v3077 = vadd.f32 %v3076, %v2785
  %v3078 = vxor.u32 %v3077, 2147483648
  %v3079 = vmul.f32 %v3078, 1.442695
  %v3080 = vpow.pop %v3079
  %v3081 = vadd.f32 %v3080, 1.0
  %v3082 = vrcp.pop %v3081
  %v3083 = vmul.f32 1.0, %v3082
  %3085 = vrot.lane.b32.xlu0 %v2785, 64
  %v3086 = vpop.permute.xlu0 %3085
  %v3088 = vmul.f32 %v3083, %v3086
  %3090 = vrot.lane.b32.xlu0 %v3088, 64
  %v3091 = vpop.permute.xlu0 %3090
  %v3093 = vadd.f32 %v3076, %v3091
  %v3094 = vtanh.pop %v3093
  %v3095 = vsub.f32 1.0, %v3083
  %3097 = vrot.lane.b32.xlu0 %v3094, 96
  %v3098 = vpop.permute.xlu0 %3097
  %v3100 = vmul.f32 %v3095, %v3098
  %v3101 = vmul.f32 %v3083, %v2529
  %v3102 = vadd.f32 %v3100, %v3101
  %v3103 = vpack.c.bf16 %v3102, %v3102
  %v3104 = vld [vmem:[%s17] sm:$0xf]
  %v3105 = vld [vmem:[%s17 + $0x4] sm:$0xf]
  %v3106 = vld [vmem:[%s17 + $0x8] sm:$0xf]
  %v3107 = vld [vmem:[%s17 + $0xc] sm:$0xf]
  %3109 = vrot.lane.b32.xlu0 %v3103, 96
  %v3110 = vpop.permute.xlu0 %3109
  %v3115 = vunpack.c.l.b16 %v3104
  %v3116 = vunpack.c.l.b16 %v3105
  %v3117 = vunpack.c.l.b16 %v3106
  %v3118 = vunpack.c.l.b16 %v3107
  %v3119 = vpack.c.b16 %v3116, %v3115
  %v3120 = vpack.c.b16 %v3118, %v3117
  %v3124 = vsel %vm129, %v3110, 0
  %3126 = vmatprep.subr.bf16.mxu0 0
  %3127 = vmatpush1.bf16.msra.mxu0 %v3119
  %3128 = vmatprep.subr.bf16.mxu0 0
  %3129 = vmatpush1.bf16.msra.mxu0 %v3120
  %3130 = vmatprep.subr.bf16.mxu0 0
  %3131 = vmatpush1.bf16.msra.mxu0 0
  %3132 = vmatprep.subr.bf16.mxu0 0
  %3133 = vmatpush1.bf16.msra.mxu0 0
  %3134 = vmatprep.subr.bf16.mxu0 0
  %3135 = vmatpush1.bf16.msra.mxu0 0
  %3136 = vmatprep.subr.bf16.mxu0 0
  %3137 = vmatpush1.bf16.msra.mxu0 0
  %3138 = vmatprep.subr.bf16.mxu0 0
  %3139 = vmatpush1.bf16.msra.mxu0 0
  %3140 = vmatprep.subr.bf16.mxu0 0
  %3141 = vmatpush1.bf16.msra.mxu0 0
  %3142 = vmatprep.subr.bf16.mxu0 0
  %3143 = vmatpush1.bf16.msra.mxu0 0
  %3144 = vmatprep.subr.bf16.mxu0 0
  %3145 = vmatpush1.bf16.msra.mxu0 0
  %3146 = vmatprep.subr.bf16.mxu0 0
  %3147 = vmatpush1.bf16.msra.mxu0 0
  %3148 = vmatprep.subr.bf16.mxu0 0
  %3149 = vmatpush1.bf16.msra.mxu0 0
  %3150 = vmatprep.subr.bf16.mxu0 0
  %3151 = vmatpush1.bf16.msra.mxu0 0
  %3152 = vmatprep.subr.bf16.mxu0 0
  %3153 = vmatpush1.bf16.msra.mxu0 0
  %3154 = vmatprep.subr.bf16.mxu0 0
  %3155 = vmatpush1.bf16.msra.mxu0 0
  %3156 = vmatprep.subr.bf16.mxu0 0
  %3157 = vmatpush1.bf16.msra.mxu0 0
  %3158 = vmatprep.mubr.bf16.mxu0 0
  %3159 = vmatmul.mubr.bf16.gmra.mrb[0].mxu0 %v3124
  %v3160 = vpop.f32.mrb[0].mxu0
  %v3161 = vadd.f32 0.0, %v3160
  %v3162 = vpop.f32.mrb[0].mxu0
  %v3163 = vpop.f32.mrb[0].mxu0
  %v3164 = vpop.f32.mrb[0].mxu0
  %3165 = vdwg.mxu0
  %3167 = vrot.lane.b32.xlu0 %v3161, 96
  %v3168 = vpop.permute.xlu0 %3167
  %v3170 = vadd.f32 %v3076, %v3168
  %v3171 = vtanh.pop %v3170
  %v3172 = vpack.c.bf16 %v3171, %v3171
  %v3173 = vld [vmem:[%s18] sm:$0xf]
  %v3174 = vld [vmem:[%s18 + $0x4] sm:$0xf]
  %v3175 = vld [vmem:[%s18 + $0x8] sm:$0xf]
  %v3176 = vld [vmem:[%s18 + $0xc] sm:$0xf]
  %3178 = vrot.lane.b32.xlu0 %v3172, 32
  %v3179 = vpop.permute.xlu0 %3178
  %v3184 = vunpack.c.l.b16 %v3173
  %v3185 = vunpack.c.l.b16 %v3174
  %v3186 = vunpack.c.l.b16 %v3175
  %v3187 = vunpack.c.l.b16 %v3176
  %v3188 = vpack.c.b16 %v3185, %v3184
  %v3189 = vpack.c.b16 %v3187, %v3186
  %v3193 = vsel %vm129, %v3179, 0
  %3195 = vmatprep.subr.bf16.mxu0 0
  %3196 = vmatpush1.bf16.msra.mxu0 %v3188
  %3197 = vmatprep.subr.bf16.mxu0 0
  %3198 = vmatpush1.bf16.msra.mxu0 %v3189
  %3199 = vmatprep.subr.bf16.mxu0 0
  %3200 = vmatpush1.bf16.msra.mxu0 0
  %3201 = vmatprep.subr.bf16.mxu0 0
  %3202 = vmatpush1.bf16.msra.mxu0 0
  %3203 = vmatprep.subr.bf16.mxu0 0
  %3204 = vmatpush1.bf16.msra.mxu0 0
  %3205 = vmatprep.subr.bf16.mxu0 0
  %3206 = vmatpush1.bf16.msra.mxu0 0
  %3207 = vmatprep.subr.bf16.mxu0 0
  %3208 = vmatpush1.bf16.msra.mxu0 0
  %3209 = vmatprep.subr.bf16.mxu0 0
  %3210 = vmatpush1.bf16.msra.mxu0 0
  %3211 = vmatprep.subr.bf16.mxu0 0
  %3212 = vmatpush1.bf16.msra.mxu0 0
  %3213 = vmatprep.subr.bf16.mxu0 0
  %3214 = vmatpush1.bf16.msra.mxu0 0
  %3215 = vmatprep.subr.bf16.mxu0 0
  %3216 = vmatpush1.bf16.msra.mxu0 0
  %3217 = vmatprep.subr.bf16.mxu0 0
  %3218 = vmatpush1.bf16.msra.mxu0 0
  %3219 = vmatprep.subr.bf16.mxu0 0
  %3220 = vmatpush1.bf16.msra.mxu0 0
  %3221 = vmatprep.subr.bf16.mxu0 0
  %3222 = vmatpush1.bf16.msra.mxu0 0
  %3223 = vmatprep.subr.bf16.mxu0 0
  %3224 = vmatpush1.bf16.msra.mxu0 0
  %3225 = vmatprep.subr.bf16.mxu0 0
  %3226 = vmatpush1.bf16.msra.mxu0 0
  %3227 = vmatprep.mubr.bf16.mxu0 0
  %3228 = vmatmul.mubr.bf16.gmra.mrb[0].mxu0 %v3193
  %v3229 = vpop.f32.mrb[0].mxu0
  %v3230 = vadd.f32 %v2967, %v3229
  %v3231 = vpop.f32.mrb[0].mxu0
  %v3232 = vpop.f32.mrb[0].mxu0
  %v3233 = vpop.f32.mrb[0].mxu0
  %3234 = vdwg.mxu0
  %s3235 = scalar_lea.vmem %s19, 16
  %3236 = vst [vmem:[%s3235] sm:$0xff] %v3230
  %v3237 = vld [vmem:[%s11] sm:$0xff]
  %v3238 = vld [vmem:[%s11 + $0x8] sm:$0xf]
  %v3239 = vld [vmem:[%s11 + $0xc] sm:$0xff]
  %v3240 = vld [vmem:[%s11 + $0x14] sm:$0xf]
  %v3241 = vld [vmem:[%s11 + $0x18] sm:$0xff]
  %v3242 = vld [vmem:[%s11 + $0x20] sm:$0xf]
  %v3243 = vld [vmem:[%s11 + $0x24] sm:$0xff]
  %v3244 = vld [vmem:[%s11 + $0x2c] sm:$0xf]
  %v3253 = vunpack.c.l.b16 %v3237
  %v3254 = vunpack.c.h.b16 %v3237
  %v3255 = vunpack.c.l.b16 %v3238
  %v3256 = vunpack.c.l.b16 %v3239
  %v3257 = vunpack.c.h.b16 %v3239
  %v3258 = vunpack.c.l.b16 %v3240
  %v3259 = vunpack.c.l.b16 %v3241
  %v3260 = vunpack.c.h.b16 %v3241
  %v3261 = vunpack.c.l.b16 %v3242
  %v3262 = vunpack.c.l.b16 %v3243
  %v3263 = vunpack.c.h.b16 %v3243
  %v3264 = vunpack.c.l.b16 %v3244
  %v3265 = vpack.c.b16 %v3256, %v3253
  %v3266 = vpack.c.b16 %v3257, %v3254
  %v3267 = vpack.c.b16 %v3258, %v3255
  %v3268 = vpack.c.b16 %v3262, %v3259
  %v3269 = vpack.c.b16 %v3263, %v3260
  %v3270 = vpack.c.b16 %v3264, %v3261
  %3277 = vmatprep.subr.bf16.mxu0 %v3266
  %3278 = vmatpush1.bf16.msra.mxu0 %v3265
  %3279 = vmatprep.subr.bf16.mxu0 %v3269
  %3280 = vmatpush1.bf16.msra.mxu0 %v3268
  %3281 = vmatprep.subr.bf16.mxu0 0
  %3282 = vmatpush1.bf16.msra.mxu0 0
  %3283 = vmatprep.subr.bf16.mxu0 0
  %3284 = vmatpush1.bf16.msra.mxu0 0
  %3285 = vmatprep.subr.bf16.mxu0 0
  %3286 = vmatpush1.bf16.msra.mxu0 0
  %3287 = vmatprep.subr.bf16.mxu0 0
  %3288 = vmatpush1.bf16.msra.mxu0 0
  %3289 = vmatprep.subr.bf16.mxu0 0
  %3290 = vmatpush1.bf16.msra.mxu0 0
  %3291 = vmatprep.subr.bf16.mxu0 0
  %3292 = vmatpush1.bf16.msra.mxu0 0
  %3293 = vmatprep.subr.bf16.mxu0 0
  %3294 = vmatpush1.bf16.msra.mxu0 0
  %3295 = vmatprep.subr.bf16.mxu0 0
  %3296 = vmatpush1.bf16.msra.mxu0 0
  %3297 = vmatprep.subr.bf16.mxu0 0
  %3298 = vmatpush1.bf16.msra.mxu0 0
  %3299 = vmatprep.subr.bf16.mxu0 0
  %3300 = vmatpush1.bf16.msra.mxu0 0
  %3301 = vmatprep.subr.bf16.mxu0 0
  %3302 = vmatpush1.bf16.msra.mxu0 0
  %3303 = vmatprep.subr.bf16.mxu0 0
  %3304 = vmatpush1.bf16.msra.mxu0 0
  %3305 = vmatprep.subr.bf16.mxu0 0
  %3306 = vmatpush1.bf16.msra.mxu0 0
  %3307 = vmatprep.subr.bf16.mxu0 0
  %3308 = vmatpush1.bf16.msra.mxu0 0
  %3309 = vmatprep.mubr.bf16.mxu0 0
  %3310 = vmatmul.mubr.bf16.gmra.mrb[0].mxu0 %v3124
  %v3311 = vpop.f32.mrb[0].mxu0
  %v3312 = vadd.f32 0.0, %v3311
  %v3313 = vpop.f32.mrb[0].mxu0
  %v3314 = vadd.f32 0.0, %v3313
  %v3315 = vpop.f32.mrb[0].mxu0
  %v3316 = vpop.f32.mrb[0].mxu0
  %3317 = vdwg.mxu0
  %3318 = vmatprep.subr.bf16.mxu0 0
  %3319 = vmatpush1.bf16.msra.mxu0 %v3267
  %3320 = vmatprep.subr.bf16.mxu0 0
  %3321 = vmatpush1.bf16.msra.mxu0 %v3270
  %3322 = vmatprep.subr.bf16.mxu0 0
  %3323 = vmatpush1.bf16.msra.mxu0 0
  %3324 = vmatprep.subr.bf16.mxu0 0
  %3325 = vmatpush1.bf16.msra.mxu0 0
  %3326 = vmatprep.subr.bf16.mxu0 0
  %3327 = vmatpush1.bf16.msra.mxu0 0
  %3328 = vmatprep.subr.bf16.mxu0 0
  %3329 = vmatpush1.bf16.msra.mxu0 0
  %3330 = vmatprep.subr.bf16.mxu0 0
  %3331 = vmatpush1.bf16.msra.mxu0 0
  %3332 = vmatprep.subr.bf16.mxu0 0
  %3333 = vmatpush1.bf16.msra.mxu0 0
  %3334 = vmatprep.subr.bf16.mxu0 0
  %3335 = vmatpush1.bf16.msra.mxu0 0
  %3336 = vmatprep.subr.bf16.mxu0 0
  %3337 = vmatpush1.bf16.msra.mxu0 0
  %3338 = vmatprep.subr.bf16.mxu0 0
  %3339 = vmatpush1.bf16.msra.mxu0 0
  %3340 = vmatprep.subr.bf16.mxu0 0
  %3341 = vmatpush1.bf16.msra.mxu0 0
  %3342 = vmatprep.subr.bf16.mxu0 0
  %3343 = vmatpush1.bf16.msra.mxu0 0
  %3344 = vmatprep.subr.bf16.mxu0 0
  %3345 = vmatpush1.bf16.msra.mxu0 0
  %3346 = vmatprep.subr.bf16.mxu0 0
  %3347 = vmatpush1.bf16.msra.mxu0 0
  %3348 = vmatprep.subr.bf16.mxu0 0
  %3349 = vmatpush1.bf16.msra.mxu0 0
  %3350 = vmatprep.mubr.bf16.mxu0 0
  %3351 = vmatmul.mubr.bf16.gmra.mrb[0].mxu0 %v3124
  %v3352 = vpop.f32.mrb[0].mxu0
  %v3353 = vadd.f32 0.0, %v3352
  %v3354 = vpop.f32.mrb[0].mxu0
  %v3355 = vpop.f32.mrb[0].mxu0
  %v3356 = vpop.f32.mrb[0].mxu0
  %3357 = vdwg.mxu0
  %v3358 = vadd.f32 %v3353, %v75
  %v3359 = vadd.f32 %v1507, %v3312
  %v3360 = vadd.f32 %v1510, %v3314
  %v3361 = vtanh.pop %v3359
  %v3362 = vtanh.pop %v3360
  %v3363 = vpack.c.bf16 %v3361, %v3361
  %v3364 = vpack.c.bf16 %v3362, %v3362
  %v3365 = vld [vmem:[%s13] sm:$0xf]
  %v3366 = vld [vmem:[%s13 + $0x4] sm:$0xf]
  %v3367 = vld [vmem:[%s13 + $0x8] sm:$0xf]
  %v3368 = vld [vmem:[%s13 + $0xc] sm:$0xf]
  %v3369 = vld [vmem:[%s13 + $0x10] sm:$0xf]
  %v3370 = vld [vmem:[%s13 + $0x14] sm:$0xf]
  %v3371 = vld [vmem:[%s13 + $0x18] sm:$0xf]
  %v3372 = vld [vmem:[%s13 + $0x1c] sm:$0xf]
  %v3373 = vld [vmem:[%s13 + $0x20] sm:$0xf]
  %v3374 = vld [vmem:[%s13 + $0x24] sm:$0xf]
  %v3375 = vld [vmem:[%s13 + $0x28] sm:$0xf]
  %v3376 = vld [vmem:[%s13 + $0x2c] sm:$0xf]
  %v3377 = vld [vmem:[%s13 + $0x30] sm:$0xf]
  %v3378 = vld [vmem:[%s13 + $0x34] sm:$0xf]
  %v3379 = vld [vmem:[%s13 + $0x38] sm:$0xf]
  %v3380 = vld [vmem:[%s13 + $0x3c] sm:$0xf]
  %v3381 = vld [vmem:[%s13 + $0x40] sm:$0xf]
  %v3382 = vld [vmem:[%s13 + $0x44] sm:$0xf]
  %v3383 = vld [vmem:[%s13 + $0x48] sm:$0xf]
  %v3384 = vld [vmem:[%s13 + $0x4c] sm:$0xf]
  %v3385 = vld [vmem:[%s13 + $0x50] sm:$0xf]
  %v3386 = vld [vmem:[%s13 + $0x54] sm:$0xf]
  %v3387 = vld [vmem:[%s13 + $0x58] sm:$0xf]
  %v3388 = vld [vmem:[%s13 + $0x5c] sm:$0xf]
  %v3389 = vld [vmem:[%s13 + $0x60] sm:$0xf]
  %v3390 = vld [vmem:[%s13 + $0x64] sm:$0xf]
  %v3391 = vld [vmem:[%s13 + $0x68] sm:$0xf]
  %v3392 = vld [vmem:[%s13 + $0x6c] sm:$0xf]
  %v3393 = vld [vmem:[%s13 + $0x70] sm:$0xf]
  %v3394 = vld [vmem:[%s13 + $0x74] sm:$0xf]
  %v3395 = vld [vmem:[%s13 + $0x78] sm:$0xf]
  %v3396 = vld [vmem:[%s13 + $0x7c] sm:$0xf]
  %v3429 = vunpack.c.l.b16 %v3365
  %v3430 = vunpack.c.l.b16 %v3366
  %v3431 = vunpack.c.l.b16 %v3367
  %v3432 = vunpack.c.l.b16 %v3368
  %v3433 = vunpack.c.l.b16 %v3369
  %v3434 = vunpack.c.l.b16 %v3370
  %v3435 = vunpack.c.l.b16 %v3371
  %v3436 = vunpack.c.l.b16 %v3372
  %v3437 = vunpack.c.l.b16 %v3373
  %v3438 = vunpack.c.l.b16 %v3374
  %v3439 = vunpack.c.l.b16 %v3375
  %v3440 = vunpack.c.l.b16 %v3376
  %v3441 = vunpack.c.l.b16 %v3377
  %v3442 = vunpack.c.l.b16 %v3378
  %v3443 = vunpack.c.l.b16 %v3379
  %v3444 = vunpack.c.l.b16 %v3380
  %v3445 = vunpack.c.l.b16 %v3381
  %v3446 = vunpack.c.l.b16 %v3382
  %v3447 = vunpack.c.l.b16 %v3383
  %v3448 = vunpack.c.l.b16 %v3384
  %v3449 = vunpack.c.l.b16 %v3385
  %v3450 = vunpack.c.l.b16 %v3386
  %v3451 = vunpack.c.l.b16 %v3387
  %v3452 = vunpack.c.l.b16 %v3388
  %v3453 = vunpack.c.l.b16 %v3389
  %v3454 = vunpack.c.l.b16 %v3390
  %v3455 = vunpack.c.l.b16 %v3391
  %v3456 = vunpack.c.l.b16 %v3392
  %v3457 = vunpack.c.l.b16 %v3393
  %v3458 = vunpack.c.l.b16 %v3394
  %v3459 = vunpack.c.l.b16 %v3395
  %v3460 = vunpack.c.l.b16 %v3396
  %v3461 = vpack.c.b16 %v3430, %v3429
  %v3462 = vpack.c.b16 %v3432, %v3431
  %v3463 = vpack.c.b16 %v3434, %v3433
  %v3464 = vpack.c.b16 %v3436, %v3435
  %v3465 = vpack.c.b16 %v3438, %v3437
  %v3466 = vpack.c.b16 %v3440, %v3439
  %v3467 = vpack.c.b16 %v3442, %v3441
  %v3468 = vpack.c.b16 %v3444, %v3443
  %v3469 = vpack.c.b16 %v3446, %v3445
  %v3470 = vpack.c.b16 %v3448, %v3447
  %v3471 = vpack.c.b16 %v3450, %v3449
  %v3472 = vpack.c.b16 %v3452, %v3451
  %v3473 = vpack.c.b16 %v3454, %v3453
  %v3474 = vpack.c.b16 %v3456, %v3455
  %v3475 = vpack.c.b16 %v3458, %v3457
  %v3476 = vpack.c.b16 %v3460, %v3459
  %3493 = vmatprep.subr.bf16.mxu0 0
  %3494 = vmatpush1.bf16.msra.mxu0 %v3461
  %3495 = vmatprep.subr.bf16.mxu0 0
  %3496 = vmatpush1.bf16.msra.mxu0 %v3462
  %3497 = vmatprep.subr.bf16.mxu0 0
  %3498 = vmatpush1.bf16.msra.mxu0 %v3463
  %3499 = vmatprep.subr.bf16.mxu0 0
  %3500 = vmatpush1.bf16.msra.mxu0 %v3464
  %3501 = vmatprep.subr.bf16.mxu0 0
  %3502 = vmatpush1.bf16.msra.mxu0 %v3465
  %3503 = vmatprep.subr.bf16.mxu0 0
  %3504 = vmatpush1.bf16.msra.mxu0 %v3466
  %3505 = vmatprep.subr.bf16.mxu0 0
  %3506 = vmatpush1.bf16.msra.mxu0 %v3467
  %3507 = vmatprep.subr.bf16.mxu0 0
  %3508 = vmatpush1.bf16.msra.mxu0 %v3468
  %3509 = vmatprep.subr.bf16.mxu0 0
  %3510 = vmatpush1.bf16.msra.mxu0 %v3469
  %3511 = vmatprep.subr.bf16.mxu0 0
  %3512 = vmatpush1.bf16.msra.mxu0 %v3470
  %3513 = vmatprep.subr.bf16.mxu0 0
  %3514 = vmatpush1.bf16.msra.mxu0 %v3471
  %3515 = vmatprep.subr.bf16.mxu0 0
  %3516 = vmatpush1.bf16.msra.mxu0 %v3472
  %3517 = vmatprep.subr.bf16.mxu0 0
  %3518 = vmatpush1.bf16.msra.mxu0 %v3473
  %3519 = vmatprep.subr.bf16.mxu0 0
  %3520 = vmatpush1.bf16.msra.mxu0 %v3474
  %3521 = vmatprep.subr.bf16.mxu0 0
  %3522 = vmatpush1.bf16.msra.mxu0 %v3475
  %3523 = vmatprep.subr.bf16.mxu0 0
  %3524 = vmatpush1.bf16.msra.mxu0 %v3476
  %3525 = vmatprep.mubr.bf16.mxu0 %v3364
  %3526 = vmatmul.mubr.bf16.gmra.mrb[0].mxu0 %v3363
  %v3527 = vpop.f32.mrb[0].mxu0
  %v3528 = vadd.f32 0.0, %v3527
  %v3529 = vpop.f32.mrb[0].mxu0
  %v3530 = vpop.f32.mrb[0].mxu0
  %v3531 = vpop.f32.mrb[0].mxu0
  %3532 = vdwg.mxu0
  %v3533 = vmul.f32 %v3528, 1.442695
  %v3534 = vpow.pop %v3533
  %v3535 = vmul.f32 %v3534, %v77
  %3536 = vadd.xlane.f32.xlu0 %v3535
  %v3537 = vpop.xlane.xlu0 %3536
  %v3538 = vmax.f32 %v3537, 1e-30
  %v3539 = vrcp.pop %v3538
  %v3540 = vmul.f32 %v3535, %v3539
  %3542 = vset.pattern.permute.xlu0 64
  %3543 = vperm.xlu0 %3542, %v3540
  %v3544 = vpop.permute.xlu0 %3543
  %v3546 = vmul.f32 %v3544, %v425
  %3547 = vset.pattern.permute.xlu0 65
  %3548 = vperm.xlu0 %3547, %v3540
  %v3549 = vpop.permute.xlu0 %3548
  %v3551 = vmul.f32 %v3549, %v514
  %v3552 = vadd.f32 %v3546, %v3551
  %3553 = vset.pattern.permute.xlu0 66
  %3554 = vperm.xlu0 %3553, %v3540
  %v3555 = vpop.permute.xlu0 %3554
  %v3557 = vmul.f32 %v3555, %v602
  %v3558 = vadd.f32 %v3552, %v3557
  %3559 = vset.pattern.permute.xlu0 67
  %3560 = vperm.xlu0 %3559, %v3540
  %v3561 = vpop.permute.xlu0 %3560
  %v3563 = vmul.f32 %v3561, %v690
  %v3564 = vadd.f32 %v3558, %v3563
  %3565 = vset.pattern.permute.xlu0 68
  %3566 = vperm.xlu0 %3565, %v3540
  %v3567 = vpop.permute.xlu0 %3566
  %v3569 = vmul.f32 %v3567, %v778
  %v3570 = vadd.f32 %v3564, %v3569
  %3571 = vset.pattern.permute.xlu0 69
  %3572 = vperm.xlu0 %3571, %v3540
  %v3573 = vpop.permute.xlu0 %3572
  %v3575 = vmul.f32 %v3573, %v866
  %v3576 = vadd.f32 %v3570, %v3575
  %3577 = vset.pattern.permute.xlu0 70
  %3578 = vperm.xlu0 %3577, %v3540
  %v3579 = vpop.permute.xlu0 %3578
  %v3581 = vmul.f32 %v3579, %v954
  %v3582 = vadd.f32 %v3576, %v3581
  %3583 = vset.pattern.permute.xlu0 71
  %3584 = vperm.xlu0 %3583, %v3540
  %v3585 = vpop.permute.xlu0 %3584
  %v3587 = vmul.f32 %v3585, %v1042
  %v3588 = vadd.f32 %v3582, %v3587
  %v3589 = vpack.c.bf16 %v3588, %v3588
  %v3590 = vld [vmem:[%s16] sm:$0xf]
  %v3591 = vld [vmem:[%s16 + $0x4] sm:$0xf]
  %v3592 = vld [vmem:[%s16 + $0x8] sm:$0xf]
  %v3593 = vld [vmem:[%s16 + $0xc] sm:$0xf]
  %v3598 = vunpack.c.l.b16 %v3590
  %v3599 = vunpack.c.l.b16 %v3591
  %v3600 = vunpack.c.l.b16 %v3592
  %v3601 = vunpack.c.l.b16 %v3593
  %v3602 = vpack.c.b16 %v3599, %v3598
  %v3603 = vpack.c.b16 %v3601, %v3600
  %v3607 = vsel %vm129, %v3589, 0
  %3609 = vmatprep.subr.bf16.mxu0 0
  %3610 = vmatpush1.bf16.msra.mxu0 %v3602
  %3611 = vmatprep.subr.bf16.mxu0 0
  %3612 = vmatpush1.bf16.msra.mxu0 %v3603
  %3613 = vmatprep.subr.bf16.mxu0 0
  %3614 = vmatpush1.bf16.msra.mxu0 0
  %3615 = vmatprep.subr.bf16.mxu0 0
  %3616 = vmatpush1.bf16.msra.mxu0 0
  %3617 = vmatprep.subr.bf16.mxu0 0
  %3618 = vmatpush1.bf16.msra.mxu0 0
  %3619 = vmatprep.subr.bf16.mxu0 0
  %3620 = vmatpush1.bf16.msra.mxu0 0
  %3621 = vmatprep.subr.bf16.mxu0 0
  %3622 = vmatpush1.bf16.msra.mxu0 0
  %3623 = vmatprep.subr.bf16.mxu0 0
  %3624 = vmatpush1.bf16.msra.mxu0 0
  %3625 = vmatprep.subr.bf16.mxu0 0
  %3626 = vmatpush1.bf16.msra.mxu0 0
  %3627 = vmatprep.subr.bf16.mxu0 0
  %3628 = vmatpush1.bf16.msra.mxu0 0
  %3629 = vmatprep.subr.bf16.mxu0 0
  %3630 = vmatpush1.bf16.msra.mxu0 0
  %3631 = vmatprep.subr.bf16.mxu0 0
  %3632 = vmatpush1.bf16.msra.mxu0 0
  %3633 = vmatprep.subr.bf16.mxu0 0
  %3634 = vmatpush1.bf16.msra.mxu0 0
  %3635 = vmatprep.subr.bf16.mxu0 0
  %3636 = vmatpush1.bf16.msra.mxu0 0
  %3637 = vmatprep.subr.bf16.mxu0 0
  %3638 = vmatpush1.bf16.msra.mxu0 0
  %3639 = vmatprep.subr.bf16.mxu0 0
  %3640 = vmatpush1.bf16.msra.mxu0 0
  %3641 = vmatprep.mubr.bf16.mxu0 0
  %3642 = vmatmul.mubr.bf16.gmra.mrb[0].mxu0 %v3607
  %v3643 = vpop.f32.mrb[0].mxu0
  %v3644 = vadd.f32 0.0, %v3643
  %v3645 = vpop.f32.mrb[0].mxu0
  %v3646 = vpop.f32.mrb[0].mxu0
  %v3647 = vpop.f32.mrb[0].mxu0
  %3648 = vdwg.mxu0
  %v3649 = vadd.f32 %v316, %v3644
  %v3650 = vadd.f32 %v3649, %v3358
  %v3651 = vxor.u32 %v3650, 2147483648
  %v3652 = vmul.f32 %v3651, 1.442695
  %v3653 = vpow.pop %v3652
  %v3654 = vadd.f32 %v3653, 1.0
  %v3655 = vrcp.pop %v3654
  %v3656 = vmul.f32 1.0, %v3655
  %3658 = vrot.lane.b32.xlu0 %v3358, 64
  %v3659 = vpop.permute.xlu0 %3658
  %v3661 = vmul.f32 %v3656, %v3659
  %3663 = vrot.lane.b32.xlu0 %v3661, 64
  %v3664 = vpop.permute.xlu0 %3663
  %v3666 = vadd.f32 %v3649, %v3664
  %v3667 = vtanh.pop %v3666
  %v3668 = vsub.f32 1.0, %v3656
  %3670 = vrot.lane.b32.xlu0 %v3667, 96
  %v3671 = vpop.permute.xlu0 %3670
  %v3673 = vmul.f32 %v3668, %v3671
  %v3674 = vmul.f32 %v3656, %v3102
  %v3675 = vadd.f32 %v3673, %v3674
  %v3676 = vpack.c.bf16 %v3675, %v3675
  %v3677 = vld [vmem:[%s17] sm:$0xf]
  %v3678 = vld [vmem:[%s17 + $0x4] sm:$0xf]
  %v3679 = vld [vmem:[%s17 + $0x8] sm:$0xf]
  %v3680 = vld [vmem:[%s17 + $0xc] sm:$0xf]
  %3682 = vrot.lane.b32.xlu0 %v3676, 96
  %v3683 = vpop.permute.xlu0 %3682
  %v3688 = vunpack.c.l.b16 %v3677
  %v3689 = vunpack.c.l.b16 %v3678
  %v3690 = vunpack.c.l.b16 %v3679
  %v3691 = vunpack.c.l.b16 %v3680
  %v3692 = vpack.c.b16 %v3689, %v3688
  %v3693 = vpack.c.b16 %v3691, %v3690
  %v3697 = vsel %vm129, %v3683, 0
  %3699 = vmatprep.subr.bf16.mxu0 0
  %3700 = vmatpush1.bf16.msra.mxu0 %v3692
  %3701 = vmatprep.subr.bf16.mxu0 0
  %3702 = vmatpush1.bf16.msra.mxu0 %v3693
  %3703 = vmatprep.subr.bf16.mxu0 0
  %3704 = vmatpush1.bf16.msra.mxu0 0
  %3705 = vmatprep.subr.bf16.mxu0 0
  %3706 = vmatpush1.bf16.msra.mxu0 0
  %3707 = vmatprep.subr.bf16.mxu0 0
  %3708 = vmatpush1.bf16.msra.mxu0 0
  %3709 = vmatprep.subr.bf16.mxu0 0
  %3710 = vmatpush1.bf16.msra.mxu0 0
  %3711 = vmatprep.subr.bf16.mxu0 0
  %3712 = vmatpush1.bf16.msra.mxu0 0
  %3713 = vmatprep.subr.bf16.mxu0 0
  %3714 = vmatpush1.bf16.msra.mxu0 0
  %3715 = vmatprep.subr.bf16.mxu0 0
  %3716 = vmatpush1.bf16.msra.mxu0 0
  %3717 = vmatprep.subr.bf16.mxu0 0
  %3718 = vmatpush1.bf16.msra.mxu0 0
  %3719 = vmatprep.subr.bf16.mxu0 0
  %3720 = vmatpush1.bf16.msra.mxu0 0
  %3721 = vmatprep.subr.bf16.mxu0 0
  %3722 = vmatpush1.bf16.msra.mxu0 0
  %3723 = vmatprep.subr.bf16.mxu0 0
  %3724 = vmatpush1.bf16.msra.mxu0 0
  %3725 = vmatprep.subr.bf16.mxu0 0
  %3726 = vmatpush1.bf16.msra.mxu0 0
  %3727 = vmatprep.subr.bf16.mxu0 0
  %3728 = vmatpush1.bf16.msra.mxu0 0
  %3729 = vmatprep.subr.bf16.mxu0 0
  %3730 = vmatpush1.bf16.msra.mxu0 0
  %3731 = vmatprep.mubr.bf16.mxu0 0
  %3732 = vmatmul.mubr.bf16.gmra.mrb[0].mxu0 %v3697
  %v3733 = vpop.f32.mrb[0].mxu0
  %v3734 = vadd.f32 0.0, %v3733
  %v3735 = vpop.f32.mrb[0].mxu0
  %v3736 = vpop.f32.mrb[0].mxu0
  %v3737 = vpop.f32.mrb[0].mxu0
  %3738 = vdwg.mxu0
  %3740 = vrot.lane.b32.xlu0 %v3734, 96
  %v3741 = vpop.permute.xlu0 %3740
  %v3743 = vadd.f32 %v3649, %v3741
  %v3744 = vtanh.pop %v3743
  %v3745 = vpack.c.bf16 %v3744, %v3744
  %v3746 = vld [vmem:[%s18] sm:$0xf]
  %v3747 = vld [vmem:[%s18 + $0x4] sm:$0xf]
  %v3748 = vld [vmem:[%s18 + $0x8] sm:$0xf]
  %v3749 = vld [vmem:[%s18 + $0xc] sm:$0xf]
  %3751 = vrot.lane.b32.xlu0 %v3745, 32
  %v3752 = vpop.permute.xlu0 %3751
  %v3757 = vunpack.c.l.b16 %v3746
  %v3758 = vunpack.c.l.b16 %v3747
  %v3759 = vunpack.c.l.b16 %v3748
  %v3760 = vunpack.c.l.b16 %v3749
  %v3761 = vpack.c.b16 %v3758, %v3757
  %v3762 = vpack.c.b16 %v3760, %v3759
  %v3766 = vsel %vm129, %v3752, 0
  %3768 = vmatprep.subr.bf16.mxu0 0
  %3769 = vmatpush1.bf16.msra.mxu0 %v3761
  %3770 = vmatprep.subr.bf16.mxu0 0
  %3771 = vmatpush1.bf16.msra.mxu0 %v3762
  %3772 = vmatprep.subr.bf16.mxu0 0
  %3773 = vmatpush1.bf16.msra.mxu0 0
  %3774 = vmatprep.subr.bf16.mxu0 0
  %3775 = vmatpush1.bf16.msra.mxu0 0
  %3776 = vmatprep.subr.bf16.mxu0 0
  %3777 = vmatpush1.bf16.msra.mxu0 0
  %3778 = vmatprep.subr.bf16.mxu0 0
  %3779 = vmatpush1.bf16.msra.mxu0 0
  %3780 = vmatprep.subr.bf16.mxu0 0
  %3781 = vmatpush1.bf16.msra.mxu0 0
  %3782 = vmatprep.subr.bf16.mxu0 0
  %3783 = vmatpush1.bf16.msra.mxu0 0
  %3784 = vmatprep.subr.bf16.mxu0 0
  %3785 = vmatpush1.bf16.msra.mxu0 0
  %3786 = vmatprep.subr.bf16.mxu0 0
  %3787 = vmatpush1.bf16.msra.mxu0 0
  %3788 = vmatprep.subr.bf16.mxu0 0
  %3789 = vmatpush1.bf16.msra.mxu0 0
  %3790 = vmatprep.subr.bf16.mxu0 0
  %3791 = vmatpush1.bf16.msra.mxu0 0
  %3792 = vmatprep.subr.bf16.mxu0 0
  %3793 = vmatpush1.bf16.msra.mxu0 0
  %3794 = vmatprep.subr.bf16.mxu0 0
  %3795 = vmatpush1.bf16.msra.mxu0 0
  %3796 = vmatprep.subr.bf16.mxu0 0
  %3797 = vmatpush1.bf16.msra.mxu0 0
  %3798 = vmatprep.subr.bf16.mxu0 0
  %3799 = vmatpush1.bf16.msra.mxu0 0
  %3800 = vmatprep.mubr.bf16.mxu0 0
  %3801 = vmatmul.mubr.bf16.gmra.mrb[0].mxu0 %v3766
  %v3802 = vpop.f32.mrb[0].mxu0
  %v3803 = vadd.f32 %v3540, %v3802
  %v3804 = vpop.f32.mrb[0].mxu0
  %v3805 = vpop.f32.mrb[0].mxu0
  %v3806 = vpop.f32.mrb[0].mxu0
  %3807 = vdwg.mxu0
  %s3808 = scalar_lea.vmem %s19, 24
  %3809 = vst [vmem:[%s3808] sm:$0xff] %v3803
  %v3810 = vld [vmem:[%s11] sm:$0xff]
  %v3811 = vld [vmem:[%s11 + $0x8] sm:$0xf]
  %v3812 = vld [vmem:[%s11 + $0xc] sm:$0xff]
  %v3813 = vld [vmem:[%s11 + $0x14] sm:$0xf]
  %v3814 = vld [vmem:[%s11 + $0x18] sm:$0xff]
  %v3815 = vld [vmem:[%s11 + $0x20] sm:$0xf]
  %v3816 = vld [vmem:[%s11 + $0x24] sm:$0xff]
  %v3817 = vld [vmem:[%s11 + $0x2c] sm:$0xf]
  %v3826 = vunpack.c.l.b16 %v3810
  %v3827 = vunpack.c.h.b16 %v3810
  %v3828 = vunpack.c.l.b16 %v3811
  %v3829 = vunpack.c.l.b16 %v3812
  %v3830 = vunpack.c.h.b16 %v3812
  %v3831 = vunpack.c.l.b16 %v3813
  %v3832 = vunpack.c.l.b16 %v3814
  %v3833 = vunpack.c.h.b16 %v3814
  %v3834 = vunpack.c.l.b16 %v3815
  %v3835 = vunpack.c.l.b16 %v3816
  %v3836 = vunpack.c.h.b16 %v3816
  %v3837 = vunpack.c.l.b16 %v3817
  %v3838 = vpack.c.b16 %v3829, %v3826
  %v3839 = vpack.c.b16 %v3830, %v3827
  %v3840 = vpack.c.b16 %v3831, %v3828
  %v3841 = vpack.c.b16 %v3835, %v3832
  %v3842 = vpack.c.b16 %v3836, %v3833
  %v3843 = vpack.c.b16 %v3837, %v3834
  %3850 = vmatprep.subr.bf16.mxu0 %v3839
  %3851 = vmatpush1.bf16.msra.mxu0 %v3838
  %3852 = vmatprep.subr.bf16.mxu0 %v3842
  %3853 = vmatpush1.bf16.msra.mxu0 %v3841
  %3854 = vmatprep.subr.bf16.mxu0 0
  %3855 = vmatpush1.bf16.msra.mxu0 0
  %3856 = vmatprep.subr.bf16.mxu0 0
  %3857 = vmatpush1.bf16.msra.mxu0 0
  %3858 = vmatprep.subr.bf16.mxu0 0
  %3859 = vmatpush1.bf16.msra.mxu0 0
  %3860 = vmatprep.subr.bf16.mxu0 0
  %3861 = vmatpush1.bf16.msra.mxu0 0
  %3862 = vmatprep.subr.bf16.mxu0 0
  %3863 = vmatpush1.bf16.msra.mxu0 0
  %3864 = vmatprep.subr.bf16.mxu0 0
  %3865 = vmatpush1.bf16.msra.mxu0 0
  %3866 = vmatprep.subr.bf16.mxu0 0
  %3867 = vmatpush1.bf16.msra.mxu0 0
  %3868 = vmatprep.subr.bf16.mxu0 0
  %3869 = vmatpush1.bf16.msra.mxu0 0
  %3870 = vmatprep.subr.bf16.mxu0 0
  %3871 = vmatpush1.bf16.msra.mxu0 0
  %3872 = vmatprep.subr.bf16.mxu0 0
  %3873 = vmatpush1.bf16.msra.mxu0 0
  %3874 = vmatprep.subr.bf16.mxu0 0
  %3875 = vmatpush1.bf16.msra.mxu0 0
  %3876 = vmatprep.subr.bf16.mxu0 0
  %3877 = vmatpush1.bf16.msra.mxu0 0
  %3878 = vmatprep.subr.bf16.mxu0 0
  %3879 = vmatpush1.bf16.msra.mxu0 0
  %3880 = vmatprep.subr.bf16.mxu0 0
  %3881 = vmatpush1.bf16.msra.mxu0 0
  %3882 = vmatprep.mubr.bf16.mxu0 0
  %3883 = vmatmul.mubr.bf16.gmra.mrb[0].mxu0 %v3697
  %v3884 = vpop.f32.mrb[0].mxu0
  %v3885 = vadd.f32 0.0, %v3884
  %v3886 = vpop.f32.mrb[0].mxu0
  %v3887 = vadd.f32 0.0, %v3886
  %v3888 = vpop.f32.mrb[0].mxu0
  %v3889 = vpop.f32.mrb[0].mxu0
  %3890 = vdwg.mxu0
  %3891 = vmatprep.subr.bf16.mxu0 0
  %3892 = vmatpush1.bf16.msra.mxu0 %v3840
  %3893 = vmatprep.subr.bf16.mxu0 0
  %3894 = vmatpush1.bf16.msra.mxu0 %v3843
  %3895 = vmatprep.subr.bf16.mxu0 0
  %3896 = vmatpush1.bf16.msra.mxu0 0
  %3897 = vmatprep.subr.bf16.mxu0 0
  %3898 = vmatpush1.bf16.msra.mxu0 0
  %3899 = vmatprep.subr.bf16.mxu0 0
  %3900 = vmatpush1.bf16.msra.mxu0 0
  %3901 = vmatprep.subr.bf16.mxu0 0
  %3902 = vmatpush1.bf16.msra.mxu0 0
  %3903 = vmatprep.subr.bf16.mxu0 0
  %3904 = vmatpush1.bf16.msra.mxu0 0
  %3905 = vmatprep.subr.bf16.mxu0 0
  %3906 = vmatpush1.bf16.msra.mxu0 0
  %3907 = vmatprep.subr.bf16.mxu0 0
  %3908 = vmatpush1.bf16.msra.mxu0 0
  %3909 = vmatprep.subr.bf16.mxu0 0
  %3910 = vmatpush1.bf16.msra.mxu0 0
  %3911 = vmatprep.subr.bf16.mxu0 0
  %3912 = vmatpush1.bf16.msra.mxu0 0
  %3913 = vmatprep.subr.bf16.mxu0 0
  %3914 = vmatpush1.bf16.msra.mxu0 0
  %3915 = vmatprep.subr.bf16.mxu0 0
  %3916 = vmatpush1.bf16.msra.mxu0 0
  %3917 = vmatprep.subr.bf16.mxu0 0
  %3918 = vmatpush1.bf16.msra.mxu0 0
  %3919 = vmatprep.subr.bf16.mxu0 0
  %3920 = vmatpush1.bf16.msra.mxu0 0
  %3921 = vmatprep.subr.bf16.mxu0 0
  %3922 = vmatpush1.bf16.msra.mxu0 0
  %3923 = vmatprep.mubr.bf16.mxu0 0
  %3924 = vmatmul.mubr.bf16.gmra.mrb[0].mxu0 %v3697
  %v3925 = vpop.f32.mrb[0].mxu0
  %v3926 = vadd.f32 0.0, %v3925
  %v3927 = vpop.f32.mrb[0].mxu0
  %v3928 = vpop.f32.mrb[0].mxu0
  %v3929 = vpop.f32.mrb[0].mxu0
  %3930 = vdwg.mxu0
  %v3931 = vadd.f32 %v3926, %v75
  %v3932 = vadd.f32 %v1507, %v3885
  %v3933 = vadd.f32 %v1510, %v3887
  %v3934 = vtanh.pop %v3932
  %v3935 = vtanh.pop %v3933
  %v3936 = vpack.c.bf16 %v3934, %v3934
  %v3937 = vpack.c.bf16 %v3935, %v3935
  %v3938 = vld [vmem:[%s13] sm:$0xf]
  %v3939 = vld [vmem:[%s13 + $0x4] sm:$0xf]
  %v3940 = vld [vmem:[%s13 + $0x8] sm:$0xf]
  %v3941 = vld [vmem:[%s13 + $0xc] sm:$0xf]
  %v3942 = vld [vmem:[%s13 + $0x10] sm:$0xf]
  %v3943 = vld [vmem:[%s13 + $0x14] sm:$0xf]
  %v3944 = vld [vmem:[%s13 + $0x18] sm:$0xf]
  %v3945 = vld [vmem:[%s13 + $0x1c] sm:$0xf]
  %v3946 = vld [vmem:[%s13 + $0x20] sm:$0xf]
  %v3947 = vld [vmem:[%s13 + $0x24] sm:$0xf]
  %v3948 = vld [vmem:[%s13 + $0x28] sm:$0xf]
  %v3949 = vld [vmem:[%s13 + $0x2c] sm:$0xf]
  %v3950 = vld [vmem:[%s13 + $0x30] sm:$0xf]
  %v3951 = vld [vmem:[%s13 + $0x34] sm:$0xf]
  %v3952 = vld [vmem:[%s13 + $0x38] sm:$0xf]
  %v3953 = vld [vmem:[%s13 + $0x3c] sm:$0xf]
  %v3954 = vld [vmem:[%s13 + $0x40] sm:$0xf]
  %v3955 = vld [vmem:[%s13 + $0x44] sm:$0xf]
  %v3956 = vld [vmem:[%s13 + $0x48] sm:$0xf]
  %v3957 = vld [vmem:[%s13 + $0x4c] sm:$0xf]
  %v3958 = vld [vmem:[%s13 + $0x50] sm:$0xf]
  %v3959 = vld [vmem:[%s13 + $0x54] sm:$0xf]
  %v3960 = vld [vmem:[%s13 + $0x58] sm:$0xf]
  %v3961 = vld [vmem:[%s13 + $0x5c] sm:$0xf]
  %v3962 = vld [vmem:[%s13 + $0x60] sm:$0xf]
  %v3963 = vld [vmem:[%s13 + $0x64] sm:$0xf]
  %v3964 = vld [vmem:[%s13 + $0x68] sm:$0xf]
  %v3965 = vld [vmem:[%s13 + $0x6c] sm:$0xf]
  %v3966 = vld [vmem:[%s13 + $0x70] sm:$0xf]
  %v3967 = vld [vmem:[%s13 + $0x74] sm:$0xf]
  %v3968 = vld [vmem:[%s13 + $0x78] sm:$0xf]
  %v3969 = vld [vmem:[%s13 + $0x7c] sm:$0xf]
  %v4002 = vunpack.c.l.b16 %v3938
  %v4003 = vunpack.c.l.b16 %v3939
  %v4004 = vunpack.c.l.b16 %v3940
  %v4005 = vunpack.c.l.b16 %v3941
  %v4006 = vunpack.c.l.b16 %v3942
  %v4007 = vunpack.c.l.b16 %v3943
  %v4008 = vunpack.c.l.b16 %v3944
  %v4009 = vunpack.c.l.b16 %v3945
  %v4010 = vunpack.c.l.b16 %v3946
  %v4011 = vunpack.c.l.b16 %v3947
  %v4012 = vunpack.c.l.b16 %v3948
  %v4013 = vunpack.c.l.b16 %v3949
  %v4014 = vunpack.c.l.b16 %v3950
  %v4015 = vunpack.c.l.b16 %v3951
  %v4016 = vunpack.c.l.b16 %v3952
  %v4017 = vunpack.c.l.b16 %v3953
  %v4018 = vunpack.c.l.b16 %v3954
  %v4019 = vunpack.c.l.b16 %v3955
  %v4020 = vunpack.c.l.b16 %v3956
  %v4021 = vunpack.c.l.b16 %v3957
  %v4022 = vunpack.c.l.b16 %v3958
  %v4023 = vunpack.c.l.b16 %v3959
  %v4024 = vunpack.c.l.b16 %v3960
  %v4025 = vunpack.c.l.b16 %v3961
  %v4026 = vunpack.c.l.b16 %v3962
  %v4027 = vunpack.c.l.b16 %v3963
  %v4028 = vunpack.c.l.b16 %v3964
  %v4029 = vunpack.c.l.b16 %v3965
  %v4030 = vunpack.c.l.b16 %v3966
  %v4031 = vunpack.c.l.b16 %v3967
  %v4032 = vunpack.c.l.b16 %v3968
  %v4033 = vunpack.c.l.b16 %v3969
  %v4034 = vpack.c.b16 %v4003, %v4002
  %v4035 = vpack.c.b16 %v4005, %v4004
  %v4036 = vpack.c.b16 %v4007, %v4006
  %v4037 = vpack.c.b16 %v4009, %v4008
  %v4038 = vpack.c.b16 %v4011, %v4010
  %v4039 = vpack.c.b16 %v4013, %v4012
  %v4040 = vpack.c.b16 %v4015, %v4014
  %v4041 = vpack.c.b16 %v4017, %v4016
  %v4042 = vpack.c.b16 %v4019, %v4018
  %v4043 = vpack.c.b16 %v4021, %v4020
  %v4044 = vpack.c.b16 %v4023, %v4022
  %v4045 = vpack.c.b16 %v4025, %v4024
  %v4046 = vpack.c.b16 %v4027, %v4026
  %v4047 = vpack.c.b16 %v4029, %v4028
  %v4048 = vpack.c.b16 %v4031, %v4030
  %v4049 = vpack.c.b16 %v4033, %v4032
  %4066 = vmatprep.subr.bf16.mxu0 0
  %4067 = vmatpush1.bf16.msra.mxu0 %v4034
  %4068 = vmatprep.subr.bf16.mxu0 0
  %4069 = vmatpush1.bf16.msra.mxu0 %v4035
  %4070 = vmatprep.subr.bf16.mxu0 0
  %4071 = vmatpush1.bf16.msra.mxu0 %v4036
  %4072 = vmatprep.subr.bf16.mxu0 0
  %4073 = vmatpush1.bf16.msra.mxu0 %v4037
  %4074 = vmatprep.subr.bf16.mxu0 0
  %4075 = vmatpush1.bf16.msra.mxu0 %v4038
  %4076 = vmatprep.subr.bf16.mxu0 0
  %4077 = vmatpush1.bf16.msra.mxu0 %v4039
  %4078 = vmatprep.subr.bf16.mxu0 0
  %4079 = vmatpush1.bf16.msra.mxu0 %v4040
  %4080 = vmatprep.subr.bf16.mxu0 0
  %4081 = vmatpush1.bf16.msra.mxu0 %v4041
  %4082 = vmatprep.subr.bf16.mxu0 0
  %4083 = vmatpush1.bf16.msra.mxu0 %v4042
  %4084 = vmatprep.subr.bf16.mxu0 0
  %4085 = vmatpush1.bf16.msra.mxu0 %v4043
  %4086 = vmatprep.subr.bf16.mxu0 0
  %4087 = vmatpush1.bf16.msra.mxu0 %v4044
  %4088 = vmatprep.subr.bf16.mxu0 0
  %4089 = vmatpush1.bf16.msra.mxu0 %v4045
  %4090 = vmatprep.subr.bf16.mxu0 0
  %4091 = vmatpush1.bf16.msra.mxu0 %v4046
  %4092 = vmatprep.subr.bf16.mxu0 0
  %4093 = vmatpush1.bf16.msra.mxu0 %v4047
  %4094 = vmatprep.subr.bf16.mxu0 0
  %4095 = vmatpush1.bf16.msra.mxu0 %v4048
  %4096 = vmatprep.subr.bf16.mxu0 0
  %4097 = vmatpush1.bf16.msra.mxu0 %v4049
  %4098 = vmatprep.mubr.bf16.mxu0 %v3937
  %4099 = vmatmul.mubr.bf16.gmra.mrb[0].mxu0 %v3936
  %v4100 = vpop.f32.mrb[0].mxu0
  %v4101 = vadd.f32 0.0, %v4100
  %v4102 = vpop.f32.mrb[0].mxu0
  %v4103 = vpop.f32.mrb[0].mxu0
  %v4104 = vpop.f32.mrb[0].mxu0
  %4105 = vdwg.mxu0
  %v4106 = vmul.f32 %v4101, 1.442695
  %v4107 = vpow.pop %v4106
  %v4108 = vmul.f32 %v4107, %v77
  %4109 = vadd.xlane.f32.xlu0 %v4108
  %v4110 = vpop.xlane.xlu0 %4109
  %v4111 = vmax.f32 %v4110, 1e-30
  %v4112 = vrcp.pop %v4111
  %v4113 = vmul.f32 %v4108, %v4112
  %4115 = vset.pattern.permute.xlu0 64
  %4116 = vperm.xlu0 %4115, %v4113
  %v4117 = vpop.permute.xlu0 %4116
  %v4119 = vmul.f32 %v4117, %v425
  %4120 = vset.pattern.permute.xlu0 65
  %4121 = vperm.xlu0 %4120, %v4113
  %v4122 = vpop.permute.xlu0 %4121
  %v4124 = vmul.f32 %v4122, %v514
  %v4125 = vadd.f32 %v4119, %v4124
  %4126 = vset.pattern.permute.xlu0 66
  %4127 = vperm.xlu0 %4126, %v4113
  %v4128 = vpop.permute.xlu0 %4127
  %v4130 = vmul.f32 %v4128, %v602
  %v4131 = vadd.f32 %v4125, %v4130
  %4132 = vset.pattern.permute.xlu0 67
  %4133 = vperm.xlu0 %4132, %v4113
  %v4134 = vpop.permute.xlu0 %4133
  %v4136 = vmul.f32 %v4134, %v690
  %v4137 = vadd.f32 %v4131, %v4136
  %4138 = vset.pattern.permute.xlu0 68
  %4139 = vperm.xlu0 %4138, %v4113
  %v4140 = vpop.permute.xlu0 %4139
  %v4142 = vmul.f32 %v4140, %v778
  %v4143 = vadd.f32 %v4137, %v4142
  %4144 = vset.pattern.permute.xlu0 69
  %4145 = vperm.xlu0 %4144, %v4113
  %v4146 = vpop.permute.xlu0 %4145
  %v4148 = vmul.f32 %v4146, %v866
  %v4149 = vadd.f32 %v4143, %v4148
  %4150 = vset.pattern.permute.xlu0 70
  %4151 = vperm.xlu0 %4150, %v4113
  %v4152 = vpop.permute.xlu0 %4151
  %v4154 = vmul.f32 %v4152, %v954
  %v4155 = vadd.f32 %v4149, %v4154
  %4156 = vset.pattern.permute.xlu0 71
  %4157 = vperm.xlu0 %4156, %v4113
  %v4158 = vpop.permute.xlu0 %4157
  %v4160 = vmul.f32 %v4158, %v1042
  %v4161 = vadd.f32 %v4155, %v4160
  %v4162 = vpack.c.bf16 %v4161, %v4161
  %v4163 = vld [vmem:[%s16] sm:$0xf]
  %v4164 = vld [vmem:[%s16 + $0x4] sm:$0xf]
  %v4165 = vld [vmem:[%s16 + $0x8] sm:$0xf]
  %v4166 = vld [vmem:[%s16 + $0xc] sm:$0xf]
  %v4171 = vunpack.c.l.b16 %v4163
  %v4172 = vunpack.c.l.b16 %v4164
  %v4173 = vunpack.c.l.b16 %v4165
  %v4174 = vunpack.c.l.b16 %v4166
  %v4175 = vpack.c.b16 %v4172, %v4171
  %v4176 = vpack.c.b16 %v4174, %v4173
  %v4180 = vsel %vm129, %v4162, 0
  %4182 = vmatprep.subr.bf16.mxu0 0
  %4183 = vmatpush1.bf16.msra.mxu0 %v4175
  %4184 = vmatprep.subr.bf16.mxu0 0
  %4185 = vmatpush1.bf16.msra.mxu0 %v4176
  %4186 = vmatprep.subr.bf16.mxu0 0
  %4187 = vmatpush1.bf16.msra.mxu0 0
  %4188 = vmatprep.subr.bf16.mxu0 0
  %4189 = vmatpush1.bf16.msra.mxu0 0
  %4190 = vmatprep.subr.bf16.mxu0 0
  %4191 = vmatpush1.bf16.msra.mxu0 0
  %4192 = vmatprep.subr.bf16.mxu0 0
  %4193 = vmatpush1.bf16.msra.mxu0 0
  %4194 = vmatprep.subr.bf16.mxu0 0
  %4195 = vmatpush1.bf16.msra.mxu0 0
  %4196 = vmatprep.subr.bf16.mxu0 0
  %4197 = vmatpush1.bf16.msra.mxu0 0
  %4198 = vmatprep.subr.bf16.mxu0 0
  %4199 = vmatpush1.bf16.msra.mxu0 0
  %4200 = vmatprep.subr.bf16.mxu0 0
  %4201 = vmatpush1.bf16.msra.mxu0 0
  %4202 = vmatprep.subr.bf16.mxu0 0
  %4203 = vmatpush1.bf16.msra.mxu0 0
  %4204 = vmatprep.subr.bf16.mxu0 0
  %4205 = vmatpush1.bf16.msra.mxu0 0
  %4206 = vmatprep.subr.bf16.mxu0 0
  %4207 = vmatpush1.bf16.msra.mxu0 0
  %4208 = vmatprep.subr.bf16.mxu0 0
  %4209 = vmatpush1.bf16.msra.mxu0 0
  %4210 = vmatprep.subr.bf16.mxu0 0
  %4211 = vmatpush1.bf16.msra.mxu0 0
  %4212 = vmatprep.subr.bf16.mxu0 0
  %4213 = vmatpush1.bf16.msra.mxu0 0
  %4214 = vmatprep.mubr.bf16.mxu0 0
  %4215 = vmatmul.mubr.bf16.gmra.mrb[0].mxu0 %v4180
  %v4216 = vpop.f32.mrb[0].mxu0
  %v4217 = vadd.f32 0.0, %v4216
  %v4218 = vpop.f32.mrb[0].mxu0
  %v4219 = vpop.f32.mrb[0].mxu0
  %v4220 = vpop.f32.mrb[0].mxu0
  %4221 = vdwg.mxu0
  %v4222 = vadd.f32 %v321, %v4217
  %v4223 = vadd.f32 %v4222, %v3931
  %v4224 = vxor.u32 %v4223, 2147483648
  %v4225 = vmul.f32 %v4224, 1.442695
  %v4226 = vpow.pop %v4225
  %v4227 = vadd.f32 %v4226, 1.0
  %v4228 = vrcp.pop %v4227
  %v4229 = vmul.f32 1.0, %v4228
  %4231 = vrot.lane.b32.xlu0 %v3931, 64
  %v4232 = vpop.permute.xlu0 %4231
  %v4234 = vmul.f32 %v4229, %v4232
  %4236 = vrot.lane.b32.xlu0 %v4234, 64
  %v4237 = vpop.permute.xlu0 %4236
  %v4239 = vadd.f32 %v4222, %v4237
  %v4240 = vtanh.pop %v4239
  %v4241 = vsub.f32 1.0, %v4229
  %4243 = vrot.lane.b32.xlu0 %v4240, 96
  %v4244 = vpop.permute.xlu0 %4243
  %v4246 = vmul.f32 %v4241, %v4244
  %v4247 = vmul.f32 %v4229, %v3675
  %v4248 = vadd.f32 %v4246, %v4247
  %v4249 = vpack.c.bf16 %v4248, %v4248
  %v4250 = vld [vmem:[%s17] sm:$0xf]
  %v4251 = vld [vmem:[%s17 + $0x4] sm:$0xf]
  %v4252 = vld [vmem:[%s17 + $0x8] sm:$0xf]
  %v4253 = vld [vmem:[%s17 + $0xc] sm:$0xf]
  %4255 = vrot.lane.b32.xlu0 %v4249, 96
  %v4256 = vpop.permute.xlu0 %4255
  %v4261 = vunpack.c.l.b16 %v4250
  %v4262 = vunpack.c.l.b16 %v4251
  %v4263 = vunpack.c.l.b16 %v4252
  %v4264 = vunpack.c.l.b16 %v4253
  %v4265 = vpack.c.b16 %v4262, %v4261
  %v4266 = vpack.c.b16 %v4264, %v4263
  %v4270 = vsel %vm129, %v4256, 0
  %4272 = vmatprep.subr.bf16.mxu0 0
  %4273 = vmatpush1.bf16.msra.mxu0 %v4265
  %4274 = vmatprep.subr.bf16.mxu0 0
  %4275 = vmatpush1.bf16.msra.mxu0 %v4266
  %4276 = vmatprep.subr.bf16.mxu0 0
  %4277 = vmatpush1.bf16.msra.mxu0 0
  %4278 = vmatprep.subr.bf16.mxu0 0
  %4279 = vmatpush1.bf16.msra.mxu0 0
  %4280 = vmatprep.subr.bf16.mxu0 0
  %4281 = vmatpush1.bf16.msra.mxu0 0
  %4282 = vmatprep.subr.bf16.mxu0 0
  %4283 = vmatpush1.bf16.msra.mxu0 0
  %4284 = vmatprep.subr.bf16.mxu0 0
  %4285 = vmatpush1.bf16.msra.mxu0 0
  %4286 = vmatprep.subr.bf16.mxu0 0
  %4287 = vmatpush1.bf16.msra.mxu0 0
  %4288 = vmatprep.subr.bf16.mxu0 0
  %4289 = vmatpush1.bf16.msra.mxu0 0
  %4290 = vmatprep.subr.bf16.mxu0 0
  %4291 = vmatpush1.bf16.msra.mxu0 0
  %4292 = vmatprep.subr.bf16.mxu0 0
  %4293 = vmatpush1.bf16.msra.mxu0 0
  %4294 = vmatprep.subr.bf16.mxu0 0
  %4295 = vmatpush1.bf16.msra.mxu0 0
  %4296 = vmatprep.subr.bf16.mxu0 0
  %4297 = vmatpush1.bf16.msra.mxu0 0
  %4298 = vmatprep.subr.bf16.mxu0 0
  %4299 = vmatpush1.bf16.msra.mxu0 0
  %4300 = vmatprep.subr.bf16.mxu0 0
  %4301 = vmatpush1.bf16.msra.mxu0 0
  %4302 = vmatprep.subr.bf16.mxu0 0
  %4303 = vmatpush1.bf16.msra.mxu0 0
  %4304 = vmatprep.mubr.bf16.mxu0 0
  %4305 = vmatmul.mubr.bf16.gmra.mrb[0].mxu0 %v4270
  %v4306 = vpop.f32.mrb[0].mxu0
  %v4307 = vadd.f32 0.0, %v4306
  %v4308 = vpop.f32.mrb[0].mxu0
  %v4309 = vpop.f32.mrb[0].mxu0
  %v4310 = vpop.f32.mrb[0].mxu0
  %4311 = vdwg.mxu0
  %4313 = vrot.lane.b32.xlu0 %v4307, 96
  %v4314 = vpop.permute.xlu0 %4313
  %v4316 = vadd.f32 %v4222, %v4314
  %v4317 = vtanh.pop %v4316
  %v4318 = vpack.c.bf16 %v4317, %v4317
  %v4319 = vld [vmem:[%s18] sm:$0xf]
  %v4320 = vld [vmem:[%s18 + $0x4] sm:$0xf]
  %v4321 = vld [vmem:[%s18 + $0x8] sm:$0xf]
  %v4322 = vld [vmem:[%s18 + $0xc] sm:$0xf]
  %4324 = vrot.lane.b32.xlu0 %v4318, 32
  %v4325 = vpop.permute.xlu0 %4324
  %v4330 = vunpack.c.l.b16 %v4319
  %v4331 = vunpack.c.l.b16 %v4320
  %v4332 = vunpack.c.l.b16 %v4321
  %v4333 = vunpack.c.l.b16 %v4322
  %v4334 = vpack.c.b16 %v4331, %v4330
  %v4335 = vpack.c.b16 %v4333, %v4332
  %v4339 = vsel %vm129, %v4325, 0
  %4341 = vmatprep.subr.bf16.mxu0 0
  %4342 = vmatpush1.bf16.msra.mxu0 %v4334
  %4343 = vmatprep.subr.bf16.mxu0 0
  %4344 = vmatpush1.bf16.msra.mxu0 %v4335
  %4345 = vmatprep.subr.bf16.mxu0 0
  %4346 = vmatpush1.bf16.msra.mxu0 0
  %4347 = vmatprep.subr.bf16.mxu0 0
  %4348 = vmatpush1.bf16.msra.mxu0 0
  %4349 = vmatprep.subr.bf16.mxu0 0
  %4350 = vmatpush1.bf16.msra.mxu0 0
  %4351 = vmatprep.subr.bf16.mxu0 0
  %4352 = vmatpush1.bf16.msra.mxu0 0
  %4353 = vmatprep.subr.bf16.mxu0 0
  %4354 = vmatpush1.bf16.msra.mxu0 0
  %4355 = vmatprep.subr.bf16.mxu0 0
  %4356 = vmatpush1.bf16.msra.mxu0 0
  %4357 = vmatprep.subr.bf16.mxu0 0
  %4358 = vmatpush1.bf16.msra.mxu0 0
  %4359 = vmatprep.subr.bf16.mxu0 0
  %4360 = vmatpush1.bf16.msra.mxu0 0
  %4361 = vmatprep.subr.bf16.mxu0 0
  %4362 = vmatpush1.bf16.msra.mxu0 0
  %4363 = vmatprep.subr.bf16.mxu0 0
  %4364 = vmatpush1.bf16.msra.mxu0 0
  %4365 = vmatprep.subr.bf16.mxu0 0
  %4366 = vmatpush1.bf16.msra.mxu0 0
  %4367 = vmatprep.subr.bf16.mxu0 0
  %4368 = vmatpush1.bf16.msra.mxu0 0
  %4369 = vmatprep.subr.bf16.mxu0 0
  %4370 = vmatpush1.bf16.msra.mxu0 0
  %4371 = vmatprep.subr.bf16.mxu0 0
  %4372 = vmatpush1.bf16.msra.mxu0 0
  %4373 = vmatprep.mubr.bf16.mxu0 0
  %4374 = vmatmul.mubr.bf16.gmra.mrb[0].mxu0 %v4339
  %v4375 = vpop.f32.mrb[0].mxu0
  %v4376 = vadd.f32 %v4113, %v4375
  %v4377 = vpop.f32.mrb[0].mxu0
  %v4378 = vpop.f32.mrb[0].mxu0
  %v4379 = vpop.f32.mrb[0].mxu0
  %4380 = vdwg.mxu0
  %s4381 = scalar_lea.vmem %s19, 32
  %4382 = vst [vmem:[%s4381] sm:$0xff] %v4376
  %v4383 = vld [vmem:[%s11] sm:$0xff]
  %v4384 = vld [vmem:[%s11 + $0x8] sm:$0xf]
  %v4385 = vld [vmem:[%s11 + $0xc] sm:$0xff]
  %v4386 = vld [vmem:[%s11 + $0x14] sm:$0xf]
  %v4387 = vld [vmem:[%s11 + $0x18] sm:$0xff]
  %v4388 = vld [vmem:[%s11 + $0x20] sm:$0xf]
  %v4389 = vld [vmem:[%s11 + $0x24] sm:$0xff]
  %v4390 = vld [vmem:[%s11 + $0x2c] sm:$0xf]
  %v4399 = vunpack.c.l.b16 %v4383
  %v4400 = vunpack.c.h.b16 %v4383
  %v4401 = vunpack.c.l.b16 %v4384
  %v4402 = vunpack.c.l.b16 %v4385
  %v4403 = vunpack.c.h.b16 %v4385
  %v4404 = vunpack.c.l.b16 %v4386
  %v4405 = vunpack.c.l.b16 %v4387
  %v4406 = vunpack.c.h.b16 %v4387
  %v4407 = vunpack.c.l.b16 %v4388
  %v4408 = vunpack.c.l.b16 %v4389
  %v4409 = vunpack.c.h.b16 %v4389
  %v4410 = vunpack.c.l.b16 %v4390
  %v4411 = vpack.c.b16 %v4402, %v4399
  %v4412 = vpack.c.b16 %v4403, %v4400
  %v4413 = vpack.c.b16 %v4404, %v4401
  %v4414 = vpack.c.b16 %v4408, %v4405
  %v4415 = vpack.c.b16 %v4409, %v4406
  %v4416 = vpack.c.b16 %v4410, %v4407
  %4423 = vmatprep.subr.bf16.mxu0 %v4412
  %4424 = vmatpush1.bf16.msra.mxu0 %v4411
  %4425 = vmatprep.subr.bf16.mxu0 %v4415
  %4426 = vmatpush1.bf16.msra.mxu0 %v4414
  %4427 = vmatprep.subr.bf16.mxu0 0
  %4428 = vmatpush1.bf16.msra.mxu0 0
  %4429 = vmatprep.subr.bf16.mxu0 0
  %4430 = vmatpush1.bf16.msra.mxu0 0
  %4431 = vmatprep.subr.bf16.mxu0 0
  %4432 = vmatpush1.bf16.msra.mxu0 0
  %4433 = vmatprep.subr.bf16.mxu0 0
  %4434 = vmatpush1.bf16.msra.mxu0 0
  %4435 = vmatprep.subr.bf16.mxu0 0
  %4436 = vmatpush1.bf16.msra.mxu0 0
  %4437 = vmatprep.subr.bf16.mxu0 0
  %4438 = vmatpush1.bf16.msra.mxu0 0
  %4439 = vmatprep.subr.bf16.mxu0 0
  %4440 = vmatpush1.bf16.msra.mxu0 0
  %4441 = vmatprep.subr.bf16.mxu0 0
  %4442 = vmatpush1.bf16.msra.mxu0 0
  %4443 = vmatprep.subr.bf16.mxu0 0
  %4444 = vmatpush1.bf16.msra.mxu0 0
  %4445 = vmatprep.subr.bf16.mxu0 0
  %4446 = vmatpush1.bf16.msra.mxu0 0
  %4447 = vmatprep.subr.bf16.mxu0 0
  %4448 = vmatpush1.bf16.msra.mxu0 0
  %4449 = vmatprep.subr.bf16.mxu0 0
  %4450 = vmatpush1.bf16.msra.mxu0 0
  %4451 = vmatprep.subr.bf16.mxu0 0
  %4452 = vmatpush1.bf16.msra.mxu0 0
  %4453 = vmatprep.subr.bf16.mxu0 0
  %4454 = vmatpush1.bf16.msra.mxu0 0
  %4455 = vmatprep.mubr.bf16.mxu0 0
  %4456 = vmatmul.mubr.bf16.gmra.mrb[0].mxu0 %v4270
  %v4457 = vpop.f32.mrb[0].mxu0
  %v4458 = vadd.f32 0.0, %v4457
  %v4459 = vpop.f32.mrb[0].mxu0
  %v4460 = vadd.f32 0.0, %v4459
  %v4461 = vpop.f32.mrb[0].mxu0
  %v4462 = vpop.f32.mrb[0].mxu0
  %4463 = vdwg.mxu0
  %4464 = vmatprep.subr.bf16.mxu0 0
  %4465 = vmatpush1.bf16.msra.mxu0 %v4413
  %4466 = vmatprep.subr.bf16.mxu0 0
  %4467 = vmatpush1.bf16.msra.mxu0 %v4416
  %4468 = vmatprep.subr.bf16.mxu0 0
  %4469 = vmatpush1.bf16.msra.mxu0 0
  %4470 = vmatprep.subr.bf16.mxu0 0
  %4471 = vmatpush1.bf16.msra.mxu0 0
  %4472 = vmatprep.subr.bf16.mxu0 0
  %4473 = vmatpush1.bf16.msra.mxu0 0
  %4474 = vmatprep.subr.bf16.mxu0 0
  %4475 = vmatpush1.bf16.msra.mxu0 0
  %4476 = vmatprep.subr.bf16.mxu0 0
  %4477 = vmatpush1.bf16.msra.mxu0 0
  %4478 = vmatprep.subr.bf16.mxu0 0
  %4479 = vmatpush1.bf16.msra.mxu0 0
  %4480 = vmatprep.subr.bf16.mxu0 0
  %4481 = vmatpush1.bf16.msra.mxu0 0
  %4482 = vmatprep.subr.bf16.mxu0 0
  %4483 = vmatpush1.bf16.msra.mxu0 0
  %4484 = vmatprep.subr.bf16.mxu0 0
  %4485 = vmatpush1.bf16.msra.mxu0 0
  %4486 = vmatprep.subr.bf16.mxu0 0
  %4487 = vmatpush1.bf16.msra.mxu0 0
  %4488 = vmatprep.subr.bf16.mxu0 0
  %4489 = vmatpush1.bf16.msra.mxu0 0
  %4490 = vmatprep.subr.bf16.mxu0 0
  %4491 = vmatpush1.bf16.msra.mxu0 0
  %4492 = vmatprep.subr.bf16.mxu0 0
  %4493 = vmatpush1.bf16.msra.mxu0 0
  %4494 = vmatprep.subr.bf16.mxu0 0
  %4495 = vmatpush1.bf16.msra.mxu0 0
  %4496 = vmatprep.mubr.bf16.mxu0 0
  %4497 = vmatmul.mubr.bf16.gmra.mrb[0].mxu0 %v4270
  %v4498 = vpop.f32.mrb[0].mxu0
  %v4499 = vadd.f32 0.0, %v4498
  %v4500 = vpop.f32.mrb[0].mxu0
  %v4501 = vpop.f32.mrb[0].mxu0
  %v4502 = vpop.f32.mrb[0].mxu0
  %4503 = vdwg.mxu0
  %v4504 = vadd.f32 %v4499, %v75
  %v4505 = vadd.f32 %v1507, %v4458
  %v4506 = vadd.f32 %v1510, %v4460
  %v4507 = vtanh.pop %v4505
  %v4508 = vtanh.pop %v4506
  %v4509 = vpack.c.bf16 %v4507, %v4507
  %v4510 = vpack.c.bf16 %v4508, %v4508
  %v4511 = vld [vmem:[%s13] sm:$0xf]
  %v4512 = vld [vmem:[%s13 + $0x4] sm:$0xf]
  %v4513 = vld [vmem:[%s13 + $0x8] sm:$0xf]
  %v4514 = vld [vmem:[%s13 + $0xc] sm:$0xf]
  %v4515 = vld [vmem:[%s13 + $0x10] sm:$0xf]
  %v4516 = vld [vmem:[%s13 + $0x14] sm:$0xf]
  %v4517 = vld [vmem:[%s13 + $0x18] sm:$0xf]
  %v4518 = vld [vmem:[%s13 + $0x1c] sm:$0xf]
  %v4519 = vld [vmem:[%s13 + $0x20] sm:$0xf]
  %v4520 = vld [vmem:[%s13 + $0x24] sm:$0xf]
  %v4521 = vld [vmem:[%s13 + $0x28] sm:$0xf]
  %v4522 = vld [vmem:[%s13 + $0x2c] sm:$0xf]
  %v4523 = vld [vmem:[%s13 + $0x30] sm:$0xf]
  %v4524 = vld [vmem:[%s13 + $0x34] sm:$0xf]
  %v4525 = vld [vmem:[%s13 + $0x38] sm:$0xf]
  %v4526 = vld [vmem:[%s13 + $0x3c] sm:$0xf]
  %v4527 = vld [vmem:[%s13 + $0x40] sm:$0xf]
  %v4528 = vld [vmem:[%s13 + $0x44] sm:$0xf]
  %v4529 = vld [vmem:[%s13 + $0x48] sm:$0xf]
  %v4530 = vld [vmem:[%s13 + $0x4c] sm:$0xf]
  %v4531 = vld [vmem:[%s13 + $0x50] sm:$0xf]
  %v4532 = vld [vmem:[%s13 + $0x54] sm:$0xf]
  %v4533 = vld [vmem:[%s13 + $0x58] sm:$0xf]
  %v4534 = vld [vmem:[%s13 + $0x5c] sm:$0xf]
  %v4535 = vld [vmem:[%s13 + $0x60] sm:$0xf]
  %v4536 = vld [vmem:[%s13 + $0x64] sm:$0xf]
  %v4537 = vld [vmem:[%s13 + $0x68] sm:$0xf]
  %v4538 = vld [vmem:[%s13 + $0x6c] sm:$0xf]
  %v4539 = vld [vmem:[%s13 + $0x70] sm:$0xf]
  %v4540 = vld [vmem:[%s13 + $0x74] sm:$0xf]
  %v4541 = vld [vmem:[%s13 + $0x78] sm:$0xf]
  %v4542 = vld [vmem:[%s13 + $0x7c] sm:$0xf]
  %v4575 = vunpack.c.l.b16 %v4511
  %v4576 = vunpack.c.l.b16 %v4512
  %v4577 = vunpack.c.l.b16 %v4513
  %v4578 = vunpack.c.l.b16 %v4514
  %v4579 = vunpack.c.l.b16 %v4515
  %v4580 = vunpack.c.l.b16 %v4516
  %v4581 = vunpack.c.l.b16 %v4517
  %v4582 = vunpack.c.l.b16 %v4518
  %v4583 = vunpack.c.l.b16 %v4519
  %v4584 = vunpack.c.l.b16 %v4520
  %v4585 = vunpack.c.l.b16 %v4521
  %v4586 = vunpack.c.l.b16 %v4522
  %v4587 = vunpack.c.l.b16 %v4523
  %v4588 = vunpack.c.l.b16 %v4524
  %v4589 = vunpack.c.l.b16 %v4525
  %v4590 = vunpack.c.l.b16 %v4526
  %v4591 = vunpack.c.l.b16 %v4527
  %v4592 = vunpack.c.l.b16 %v4528
  %v4593 = vunpack.c.l.b16 %v4529
  %v4594 = vunpack.c.l.b16 %v4530
  %v4595 = vunpack.c.l.b16 %v4531
  %v4596 = vunpack.c.l.b16 %v4532
  %v4597 = vunpack.c.l.b16 %v4533
  %v4598 = vunpack.c.l.b16 %v4534
  %v4599 = vunpack.c.l.b16 %v4535
  %v4600 = vunpack.c.l.b16 %v4536
  %v4601 = vunpack.c.l.b16 %v4537
  %v4602 = vunpack.c.l.b16 %v4538
  %v4603 = vunpack.c.l.b16 %v4539
  %v4604 = vunpack.c.l.b16 %v4540
  %v4605 = vunpack.c.l.b16 %v4541
  %v4606 = vunpack.c.l.b16 %v4542
  %v4607 = vpack.c.b16 %v4576, %v4575
  %v4608 = vpack.c.b16 %v4578, %v4577
  %v4609 = vpack.c.b16 %v4580, %v4579
  %v4610 = vpack.c.b16 %v4582, %v4581
  %v4611 = vpack.c.b16 %v4584, %v4583
  %v4612 = vpack.c.b16 %v4586, %v4585
  %v4613 = vpack.c.b16 %v4588, %v4587
  %v4614 = vpack.c.b16 %v4590, %v4589
  %v4615 = vpack.c.b16 %v4592, %v4591
  %v4616 = vpack.c.b16 %v4594, %v4593
  %v4617 = vpack.c.b16 %v4596, %v4595
  %v4618 = vpack.c.b16 %v4598, %v4597
  %v4619 = vpack.c.b16 %v4600, %v4599
  %v4620 = vpack.c.b16 %v4602, %v4601
  %v4621 = vpack.c.b16 %v4604, %v4603
  %v4622 = vpack.c.b16 %v4606, %v4605
  %4639 = vmatprep.subr.bf16.mxu0 0
  %4640 = vmatpush1.bf16.msra.mxu0 %v4607
  %4641 = vmatprep.subr.bf16.mxu0 0
  %4642 = vmatpush1.bf16.msra.mxu0 %v4608
  %4643 = vmatprep.subr.bf16.mxu0 0
  %4644 = vmatpush1.bf16.msra.mxu0 %v4609
  %4645 = vmatprep.subr.bf16.mxu0 0
  %4646 = vmatpush1.bf16.msra.mxu0 %v4610
  %4647 = vmatprep.subr.bf16.mxu0 0
  %4648 = vmatpush1.bf16.msra.mxu0 %v4611
  %4649 = vmatprep.subr.bf16.mxu0 0
  %4650 = vmatpush1.bf16.msra.mxu0 %v4612
  %4651 = vmatprep.subr.bf16.mxu0 0
  %4652 = vmatpush1.bf16.msra.mxu0 %v4613
  %4653 = vmatprep.subr.bf16.mxu0 0
  %4654 = vmatpush1.bf16.msra.mxu0 %v4614
  %4655 = vmatprep.subr.bf16.mxu0 0
  %4656 = vmatpush1.bf16.msra.mxu0 %v4615
  %4657 = vmatprep.subr.bf16.mxu0 0
  %4658 = vmatpush1.bf16.msra.mxu0 %v4616
  %4659 = vmatprep.subr.bf16.mxu0 0
  %4660 = vmatpush1.bf16.msra.mxu0 %v4617
  %4661 = vmatprep.subr.bf16.mxu0 0
  %4662 = vmatpush1.bf16.msra.mxu0 %v4618
  %4663 = vmatprep.subr.bf16.mxu0 0
  %4664 = vmatpush1.bf16.msra.mxu0 %v4619
  %4665 = vmatprep.subr.bf16.mxu0 0
  %4666 = vmatpush1.bf16.msra.mxu0 %v4620
  %4667 = vmatprep.subr.bf16.mxu0 0
  %4668 = vmatpush1.bf16.msra.mxu0 %v4621
  %4669 = vmatprep.subr.bf16.mxu0 0
  %4670 = vmatpush1.bf16.msra.mxu0 %v4622
  %4671 = vmatprep.mubr.bf16.mxu0 %v4510
  %4672 = vmatmul.mubr.bf16.gmra.mrb[0].mxu0 %v4509
  %v4673 = vpop.f32.mrb[0].mxu0
  %v4674 = vadd.f32 0.0, %v4673
  %v4675 = vpop.f32.mrb[0].mxu0
  %v4676 = vpop.f32.mrb[0].mxu0
  %v4677 = vpop.f32.mrb[0].mxu0
  %4678 = vdwg.mxu0
  %v4679 = vmul.f32 %v4674, 1.442695
  %v4680 = vpow.pop %v4679
  %v4681 = vmul.f32 %v4680, %v77
  %4682 = vadd.xlane.f32.xlu0 %v4681
  %v4683 = vpop.xlane.xlu0 %4682
  %v4684 = vmax.f32 %v4683, 1e-30
  %v4685 = vrcp.pop %v4684
  %v4686 = vmul.f32 %v4681, %v4685
  %4688 = vset.pattern.permute.xlu0 64
  %4689 = vperm.xlu0 %4688, %v4686
  %v4690 = vpop.permute.xlu0 %4689
  %v4692 = vmul.f32 %v4690, %v425
  %4693 = vset.pattern.permute.xlu0 65
  %4694 = vperm.xlu0 %4693, %v4686
  %v4695 = vpop.permute.xlu0 %4694
  %v4697 = vmul.f32 %v4695, %v514
  %v4698 = vadd.f32 %v4692, %v4697
  %4699 = vset.pattern.permute.xlu0 66
  %4700 = vperm.xlu0 %4699, %v4686
  %v4701 = vpop.permute.xlu0 %4700
  %v4703 = vmul.f32 %v4701, %v602
  %v4704 = vadd.f32 %v4698, %v4703
  %4705 = vset.pattern.permute.xlu0 67
  %4706 = vperm.xlu0 %4705, %v4686
  %v4707 = vpop.permute.xlu0 %4706
  %v4709 = vmul.f32 %v4707, %v690
  %v4710 = vadd.f32 %v4704, %v4709
  %4711 = vset.pattern.permute.xlu0 68
  %4712 = vperm.xlu0 %4711, %v4686
  %v4713 = vpop.permute.xlu0 %4712
  %v4715 = vmul.f32 %v4713, %v778
  %v4716 = vadd.f32 %v4710, %v4715
  %4717 = vset.pattern.permute.xlu0 69
  %4718 = vperm.xlu0 %4717, %v4686
  %v4719 = vpop.permute.xlu0 %4718
  %v4721 = vmul.f32 %v4719, %v866
  %v4722 = vadd.f32 %v4716, %v4721
  %4723 = vset.pattern.permute.xlu0 70
  %4724 = vperm.xlu0 %4723, %v4686
  %v4725 = vpop.permute.xlu0 %4724
  %v4727 = vmul.f32 %v4725, %v954
  %v4728 = vadd.f32 %v4722, %v4727
  %4729 = vset.pattern.permute.xlu0 71
  %4730 = vperm.xlu0 %4729, %v4686
  %v4731 = vpop.permute.xlu0 %4730
  %v4733 = vmul.f32 %v4731, %v1042
  %v4734 = vadd.f32 %v4728, %v4733
  %v4735 = vpack.c.bf16 %v4734, %v4734
  %v4736 = vld [vmem:[%s16] sm:$0xf]
  %v4737 = vld [vmem:[%s16 + $0x4] sm:$0xf]
  %v4738 = vld [vmem:[%s16 + $0x8] sm:$0xf]
  %v4739 = vld [vmem:[%s16 + $0xc] sm:$0xf]
  %v4744 = vunpack.c.l.b16 %v4736
  %v4745 = vunpack.c.l.b16 %v4737
  %v4746 = vunpack.c.l.b16 %v4738
  %v4747 = vunpack.c.l.b16 %v4739
  %v4748 = vpack.c.b16 %v4745, %v4744
  %v4749 = vpack.c.b16 %v4747, %v4746
  %v4753 = vsel %vm129, %v4735, 0
  %4755 = vmatprep.subr.bf16.mxu0 0
  %4756 = vmatpush1.bf16.msra.mxu0 %v4748
  %4757 = vmatprep.subr.bf16.mxu0 0
  %4758 = vmatpush1.bf16.msra.mxu0 %v4749
  %4759 = vmatprep.subr.bf16.mxu0 0
  %4760 = vmatpush1.bf16.msra.mxu0 0
  %4761 = vmatprep.subr.bf16.mxu0 0
  %4762 = vmatpush1.bf16.msra.mxu0 0
  %4763 = vmatprep.subr.bf16.mxu0 0
  %4764 = vmatpush1.bf16.msra.mxu0 0
  %4765 = vmatprep.subr.bf16.mxu0 0
  %4766 = vmatpush1.bf16.msra.mxu0 0
  %4767 = vmatprep.subr.bf16.mxu0 0
  %4768 = vmatpush1.bf16.msra.mxu0 0
  %4769 = vmatprep.subr.bf16.mxu0 0
  %4770 = vmatpush1.bf16.msra.mxu0 0
  %4771 = vmatprep.subr.bf16.mxu0 0
  %4772 = vmatpush1.bf16.msra.mxu0 0
  %4773 = vmatprep.subr.bf16.mxu0 0
  %4774 = vmatpush1.bf16.msra.mxu0 0
  %4775 = vmatprep.subr.bf16.mxu0 0
  %4776 = vmatpush1.bf16.msra.mxu0 0
  %4777 = vmatprep.subr.bf16.mxu0 0
  %4778 = vmatpush1.bf16.msra.mxu0 0
  %4779 = vmatprep.subr.bf16.mxu0 0
  %4780 = vmatpush1.bf16.msra.mxu0 0
  %4781 = vmatprep.subr.bf16.mxu0 0
  %4782 = vmatpush1.bf16.msra.mxu0 0
  %4783 = vmatprep.subr.bf16.mxu0 0
  %4784 = vmatpush1.bf16.msra.mxu0 0
  %4785 = vmatprep.subr.bf16.mxu0 0
  %4786 = vmatpush1.bf16.msra.mxu0 0
  %4787 = vmatprep.mubr.bf16.mxu0 0
  %4788 = vmatmul.mubr.bf16.gmra.mrb[0].mxu0 %v4753
  %v4789 = vpop.f32.mrb[0].mxu0
  %v4790 = vadd.f32 0.0, %v4789
  %v4791 = vpop.f32.mrb[0].mxu0
  %v4792 = vpop.f32.mrb[0].mxu0
  %v4793 = vpop.f32.mrb[0].mxu0
  %4794 = vdwg.mxu0
  %v4795 = vadd.f32 %v324, %v4790
  %v4796 = vadd.f32 %v4795, %v4504
  %v4797 = vxor.u32 %v4796, 2147483648
  %v4798 = vmul.f32 %v4797, 1.442695
  %v4799 = vpow.pop %v4798
  %v4800 = vadd.f32 %v4799, 1.0
  %v4801 = vrcp.pop %v4800
  %v4802 = vmul.f32 1.0, %v4801
  %4804 = vrot.lane.b32.xlu0 %v4504, 64
  %v4805 = vpop.permute.xlu0 %4804
  %v4807 = vmul.f32 %v4802, %v4805
  %4809 = vrot.lane.b32.xlu0 %v4807, 64
  %v4810 = vpop.permute.xlu0 %4809
  %v4812 = vadd.f32 %v4795, %v4810
  %v4813 = vtanh.pop %v4812
  %v4814 = vsub.f32 1.0, %v4802
  %4816 = vrot.lane.b32.xlu0 %v4813, 96
  %v4817 = vpop.permute.xlu0 %4816
  %v4819 = vmul.f32 %v4814, %v4817
  %v4820 = vmul.f32 %v4802, %v4248
  %v4821 = vadd.f32 %v4819, %v4820
  %v4822 = vpack.c.bf16 %v4821, %v4821
  %v4823 = vld [vmem:[%s17] sm:$0xf]
  %v4824 = vld [vmem:[%s17 + $0x4] sm:$0xf]
  %v4825 = vld [vmem:[%s17 + $0x8] sm:$0xf]
  %v4826 = vld [vmem:[%s17 + $0xc] sm:$0xf]
  %4828 = vrot.lane.b32.xlu0 %v4822, 96
  %v4829 = vpop.permute.xlu0 %4828
  %v4834 = vunpack.c.l.b16 %v4823
  %v4835 = vunpack.c.l.b16 %v4824
  %v4836 = vunpack.c.l.b16 %v4825
  %v4837 = vunpack.c.l.b16 %v4826
  %v4838 = vpack.c.b16 %v4835, %v4834
  %v4839 = vpack.c.b16 %v4837, %v4836
  %v4843 = vsel %vm129, %v4829, 0
  %4845 = vmatprep.subr.bf16.mxu0 0
  %4846 = vmatpush1.bf16.msra.mxu0 %v4838
  %4847 = vmatprep.subr.bf16.mxu0 0
  %4848 = vmatpush1.bf16.msra.mxu0 %v4839
  %4849 = vmatprep.subr.bf16.mxu0 0
  %4850 = vmatpush1.bf16.msra.mxu0 0
  %4851 = vmatprep.subr.bf16.mxu0 0
  %4852 = vmatpush1.bf16.msra.mxu0 0
  %4853 = vmatprep.subr.bf16.mxu0 0
  %4854 = vmatpush1.bf16.msra.mxu0 0
  %4855 = vmatprep.subr.bf16.mxu0 0
  %4856 = vmatpush1.bf16.msra.mxu0 0
  %4857 = vmatprep.subr.bf16.mxu0 0
  %4858 = vmatpush1.bf16.msra.mxu0 0
  %4859 = vmatprep.subr.bf16.mxu0 0
  %4860 = vmatpush1.bf16.msra.mxu0 0
  %4861 = vmatprep.subr.bf16.mxu0 0
  %4862 = vmatpush1.bf16.msra.mxu0 0
  %4863 = vmatprep.subr.bf16.mxu0 0
  %4864 = vmatpush1.bf16.msra.mxu0 0
  %4865 = vmatprep.subr.bf16.mxu0 0
  %4866 = vmatpush1.bf16.msra.mxu0 0
  %4867 = vmatprep.subr.bf16.mxu0 0
  %4868 = vmatpush1.bf16.msra.mxu0 0
  %4869 = vmatprep.subr.bf16.mxu0 0
  %4870 = vmatpush1.bf16.msra.mxu0 0
  %4871 = vmatprep.subr.bf16.mxu0 0
  %4872 = vmatpush1.bf16.msra.mxu0 0
  %4873 = vmatprep.subr.bf16.mxu0 0
  %4874 = vmatpush1.bf16.msra.mxu0 0
  %4875 = vmatprep.subr.bf16.mxu0 0
  %4876 = vmatpush1.bf16.msra.mxu0 0
  %4877 = vmatprep.mubr.bf16.mxu0 0
  %4878 = vmatmul.mubr.bf16.gmra.mrb[0].mxu0 %v4843
  %v4879 = vpop.f32.mrb[0].mxu0
  %v4880 = vadd.f32 0.0, %v4879
  %v4881 = vpop.f32.mrb[0].mxu0
  %v4882 = vpop.f32.mrb[0].mxu0
  %v4883 = vpop.f32.mrb[0].mxu0
  %4884 = vdwg.mxu0
  %4886 = vrot.lane.b32.xlu0 %v4880, 96
  %v4887 = vpop.permute.xlu0 %4886
  %v4889 = vadd.f32 %v4795, %v4887
  %v4890 = vtanh.pop %v4889
  %v4891 = vpack.c.bf16 %v4890, %v4890
  %v4892 = vld [vmem:[%s18] sm:$0xf]
  %v4893 = vld [vmem:[%s18 + $0x4] sm:$0xf]
  %v4894 = vld [vmem:[%s18 + $0x8] sm:$0xf]
  %v4895 = vld [vmem:[%s18 + $0xc] sm:$0xf]
  %4897 = vrot.lane.b32.xlu0 %v4891, 32
  %v4898 = vpop.permute.xlu0 %4897
  %v4903 = vunpack.c.l.b16 %v4892
  %v4904 = vunpack.c.l.b16 %v4893
  %v4905 = vunpack.c.l.b16 %v4894
  %v4906 = vunpack.c.l.b16 %v4895
  %v4907 = vpack.c.b16 %v4904, %v4903
  %v4908 = vpack.c.b16 %v4906, %v4905
  %v4912 = vsel %vm129, %v4898, 0
  %4914 = vmatprep.subr.bf16.mxu0 0
  %4915 = vmatpush1.bf16.msra.mxu0 %v4907
  %4916 = vmatprep.subr.bf16.mxu0 0
  %4917 = vmatpush1.bf16.msra.mxu0 %v4908
  %4918 = vmatprep.subr.bf16.mxu0 0
  %4919 = vmatpush1.bf16.msra.mxu0 0
  %4920 = vmatprep.subr.bf16.mxu0 0
  %4921 = vmatpush1.bf16.msra.mxu0 0
  %4922 = vmatprep.subr.bf16.mxu0 0
  %4923 = vmatpush1.bf16.msra.mxu0 0
  %4924 = vmatprep.subr.bf16.mxu0 0
  %4925 = vmatpush1.bf16.msra.mxu0 0
  %4926 = vmatprep.subr.bf16.mxu0 0
  %4927 = vmatpush1.bf16.msra.mxu0 0
  %4928 = vmatprep.subr.bf16.mxu0 0
  %4929 = vmatpush1.bf16.msra.mxu0 0
  %4930 = vmatprep.subr.bf16.mxu0 0
  %4931 = vmatpush1.bf16.msra.mxu0 0
  %4932 = vmatprep.subr.bf16.mxu0 0
  %4933 = vmatpush1.bf16.msra.mxu0 0
  %4934 = vmatprep.subr.bf16.mxu0 0
  %4935 = vmatpush1.bf16.msra.mxu0 0
  %4936 = vmatprep.subr.bf16.mxu0 0
  %4937 = vmatpush1.bf16.msra.mxu0 0
  %4938 = vmatprep.subr.bf16.mxu0 0
  %4939 = vmatpush1.bf16.msra.mxu0 0
  %4940 = vmatprep.subr.bf16.mxu0 0
  %4941 = vmatpush1.bf16.msra.mxu0 0
  %4942 = vmatprep.subr.bf16.mxu0 0
  %4943 = vmatpush1.bf16.msra.mxu0 0
  %4944 = vmatprep.subr.bf16.mxu0 0
  %4945 = vmatpush1.bf16.msra.mxu0 0
  %4946 = vmatprep.mubr.bf16.mxu0 0
  %4947 = vmatmul.mubr.bf16.gmra.mrb[0].mxu0 %v4912
  %v4948 = vpop.f32.mrb[0].mxu0
  %v4949 = vadd.f32 %v4686, %v4948
  %v4950 = vpop.f32.mrb[0].mxu0
  %v4951 = vpop.f32.mrb[0].mxu0
  %v4952 = vpop.f32.mrb[0].mxu0
  %4953 = vdwg.mxu0
  %s4954 = scalar_lea.vmem %s19, 40
  %4955 = vst [vmem:[%s4954] sm:$0xff] %v4949
  %v4956 = vld [vmem:[%s11] sm:$0xff]
  %v4957 = vld [vmem:[%s11 + $0x8] sm:$0xf]
  %v4958 = vld [vmem:[%s11 + $0xc] sm:$0xff]
  %v4959 = vld [vmem:[%s11 + $0x14] sm:$0xf]
  %v4960 = vld [vmem:[%s11 + $0x18] sm:$0xff]
  %v4961 = vld [vmem:[%s11 + $0x20] sm:$0xf]
  %v4962 = vld [vmem:[%s11 + $0x24] sm:$0xff]
  %v4963 = vld [vmem:[%s11 + $0x2c] sm:$0xf]
  %v4972 = vunpack.c.l.b16 %v4956
  %v4973 = vunpack.c.h.b16 %v4956
  %v4974 = vunpack.c.l.b16 %v4957
  %v4975 = vunpack.c.l.b16 %v4958
  %v4976 = vunpack.c.h.b16 %v4958
  %v4977 = vunpack.c.l.b16 %v4959
  %v4978 = vunpack.c.l.b16 %v4960
  %v4979 = vunpack.c.h.b16 %v4960
  %v4980 = vunpack.c.l.b16 %v4961
  %v4981 = vunpack.c.l.b16 %v4962
  %v4982 = vunpack.c.h.b16 %v4962
  %v4983 = vunpack.c.l.b16 %v4963
  %v4984 = vpack.c.b16 %v4975, %v4972
  %v4985 = vpack.c.b16 %v4976, %v4973
  %v4986 = vpack.c.b16 %v4977, %v4974
  %v4987 = vpack.c.b16 %v4981, %v4978
  %v4988 = vpack.c.b16 %v4982, %v4979
  %v4989 = vpack.c.b16 %v4983, %v4980
  %4996 = vmatprep.subr.bf16.mxu0 %v4985
  %4997 = vmatpush1.bf16.msra.mxu0 %v4984
  %4998 = vmatprep.subr.bf16.mxu0 %v4988
  %4999 = vmatpush1.bf16.msra.mxu0 %v4987
  %5000 = vmatprep.subr.bf16.mxu0 0
  %5001 = vmatpush1.bf16.msra.mxu0 0
  %5002 = vmatprep.subr.bf16.mxu0 0
  %5003 = vmatpush1.bf16.msra.mxu0 0
  %5004 = vmatprep.subr.bf16.mxu0 0
  %5005 = vmatpush1.bf16.msra.mxu0 0
  %5006 = vmatprep.subr.bf16.mxu0 0
  %5007 = vmatpush1.bf16.msra.mxu0 0
  %5008 = vmatprep.subr.bf16.mxu0 0
  %5009 = vmatpush1.bf16.msra.mxu0 0
  %5010 = vmatprep.subr.bf16.mxu0 0
  %5011 = vmatpush1.bf16.msra.mxu0 0
  %5012 = vmatprep.subr.bf16.mxu0 0
  %5013 = vmatpush1.bf16.msra.mxu0 0
  %5014 = vmatprep.subr.bf16.mxu0 0
  %5015 = vmatpush1.bf16.msra.mxu0 0
  %5016 = vmatprep.subr.bf16.mxu0 0
  %5017 = vmatpush1.bf16.msra.mxu0 0
  %5018 = vmatprep.subr.bf16.mxu0 0
  %5019 = vmatpush1.bf16.msra.mxu0 0
  %5020 = vmatprep.subr.bf16.mxu0 0
  %5021 = vmatpush1.bf16.msra.mxu0 0
  %5022 = vmatprep.subr.bf16.mxu0 0
  %5023 = vmatpush1.bf16.msra.mxu0 0
  %5024 = vmatprep.subr.bf16.mxu0 0
  %5025 = vmatpush1.bf16.msra.mxu0 0
  %5026 = vmatprep.subr.bf16.mxu0 0
  %5027 = vmatpush1.bf16.msra.mxu0 0
  %5028 = vmatprep.mubr.bf16.mxu0 0
  %5029 = vmatmul.mubr.bf16.gmra.mrb[0].mxu0 %v4843
  %v5030 = vpop.f32.mrb[0].mxu0
  %v5031 = vadd.f32 0.0, %v5030
  %v5032 = vpop.f32.mrb[0].mxu0
  %v5033 = vadd.f32 0.0, %v5032
  %v5034 = vpop.f32.mrb[0].mxu0
  %v5035 = vpop.f32.mrb[0].mxu0
  %5036 = vdwg.mxu0
  %5037 = vmatprep.subr.bf16.mxu0 0
  %5038 = vmatpush1.bf16.msra.mxu0 %v4986
  %5039 = vmatprep.subr.bf16.mxu0 0
  %5040 = vmatpush1.bf16.msra.mxu0 %v4989
  %5041 = vmatprep.subr.bf16.mxu0 0
  %5042 = vmatpush1.bf16.msra.mxu0 0
  %5043 = vmatprep.subr.bf16.mxu0 0
  %5044 = vmatpush1.bf16.msra.mxu0 0
  %5045 = vmatprep.subr.bf16.mxu0 0
  %5046 = vmatpush1.bf16.msra.mxu0 0
  %5047 = vmatprep.subr.bf16.mxu0 0
  %5048 = vmatpush1.bf16.msra.mxu0 0
  %5049 = vmatprep.subr.bf16.mxu0 0
  %5050 = vmatpush1.bf16.msra.mxu0 0
  %5051 = vmatprep.subr.bf16.mxu0 0
  %5052 = vmatpush1.bf16.msra.mxu0 0
  %5053 = vmatprep.subr.bf16.mxu0 0
  %5054 = vmatpush1.bf16.msra.mxu0 0
  %5055 = vmatprep.subr.bf16.mxu0 0
  %5056 = vmatpush1.bf16.msra.mxu0 0
  %5057 = vmatprep.subr.bf16.mxu0 0
  %5058 = vmatpush1.bf16.msra.mxu0 0
  %5059 = vmatprep.subr.bf16.mxu0 0
  %5060 = vmatpush1.bf16.msra.mxu0 0
  %5061 = vmatprep.subr.bf16.mxu0 0
  %5062 = vmatpush1.bf16.msra.mxu0 0
  %5063 = vmatprep.subr.bf16.mxu0 0
  %5064 = vmatpush1.bf16.msra.mxu0 0
  %5065 = vmatprep.subr.bf16.mxu0 0
  %5066 = vmatpush1.bf16.msra.mxu0 0
  %5067 = vmatprep.subr.bf16.mxu0 0
  %5068 = vmatpush1.bf16.msra.mxu0 0
  %5069 = vmatprep.mubr.bf16.mxu0 0
  %5070 = vmatmul.mubr.bf16.gmra.mrb[0].mxu0 %v4843
  %v5071 = vpop.f32.mrb[0].mxu0
  %v5072 = vadd.f32 0.0, %v5071
  %v5073 = vpop.f32.mrb[0].mxu0
  %v5074 = vpop.f32.mrb[0].mxu0
  %v5075 = vpop.f32.mrb[0].mxu0
  %5076 = vdwg.mxu0
  %v5077 = vadd.f32 %v5072, %v75
  %v5078 = vadd.f32 %v1507, %v5031
  %v5079 = vadd.f32 %v1510, %v5033
  %v5080 = vtanh.pop %v5078
  %v5081 = vtanh.pop %v5079
  %v5082 = vpack.c.bf16 %v5080, %v5080
  %v5083 = vpack.c.bf16 %v5081, %v5081
  %v5084 = vld [vmem:[%s13] sm:$0xf]
  %v5085 = vld [vmem:[%s13 + $0x4] sm:$0xf]
  %v5086 = vld [vmem:[%s13 + $0x8] sm:$0xf]
  %v5087 = vld [vmem:[%s13 + $0xc] sm:$0xf]
  %v5088 = vld [vmem:[%s13 + $0x10] sm:$0xf]
  %v5089 = vld [vmem:[%s13 + $0x14] sm:$0xf]
  %v5090 = vld [vmem:[%s13 + $0x18] sm:$0xf]
  %v5091 = vld [vmem:[%s13 + $0x1c] sm:$0xf]
  %v5092 = vld [vmem:[%s13 + $0x20] sm:$0xf]
  %v5093 = vld [vmem:[%s13 + $0x24] sm:$0xf]
  %v5094 = vld [vmem:[%s13 + $0x28] sm:$0xf]
  %v5095 = vld [vmem:[%s13 + $0x2c] sm:$0xf]
  %v5096 = vld [vmem:[%s13 + $0x30] sm:$0xf]
  %v5097 = vld [vmem:[%s13 + $0x34] sm:$0xf]
  %v5098 = vld [vmem:[%s13 + $0x38] sm:$0xf]
  %v5099 = vld [vmem:[%s13 + $0x3c] sm:$0xf]
  %v5100 = vld [vmem:[%s13 + $0x40] sm:$0xf]
  %v5101 = vld [vmem:[%s13 + $0x44] sm:$0xf]
  %v5102 = vld [vmem:[%s13 + $0x48] sm:$0xf]
  %v5103 = vld [vmem:[%s13 + $0x4c] sm:$0xf]
  %v5104 = vld [vmem:[%s13 + $0x50] sm:$0xf]
  %v5105 = vld [vmem:[%s13 + $0x54] sm:$0xf]
  %v5106 = vld [vmem:[%s13 + $0x58] sm:$0xf]
  %v5107 = vld [vmem:[%s13 + $0x5c] sm:$0xf]
  %v5108 = vld [vmem:[%s13 + $0x60] sm:$0xf]
  %v5109 = vld [vmem:[%s13 + $0x64] sm:$0xf]
  %v5110 = vld [vmem:[%s13 + $0x68] sm:$0xf]
  %v5111 = vld [vmem:[%s13 + $0x6c] sm:$0xf]
  %v5112 = vld [vmem:[%s13 + $0x70] sm:$0xf]
  %v5113 = vld [vmem:[%s13 + $0x74] sm:$0xf]
  %v5114 = vld [vmem:[%s13 + $0x78] sm:$0xf]
  %v5115 = vld [vmem:[%s13 + $0x7c] sm:$0xf]
  %v5148 = vunpack.c.l.b16 %v5084
  %v5149 = vunpack.c.l.b16 %v5085
  %v5150 = vunpack.c.l.b16 %v5086
  %v5151 = vunpack.c.l.b16 %v5087
  %v5152 = vunpack.c.l.b16 %v5088
  %v5153 = vunpack.c.l.b16 %v5089
  %v5154 = vunpack.c.l.b16 %v5090
  %v5155 = vunpack.c.l.b16 %v5091
  %v5156 = vunpack.c.l.b16 %v5092
  %v5157 = vunpack.c.l.b16 %v5093
  %v5158 = vunpack.c.l.b16 %v5094
  %v5159 = vunpack.c.l.b16 %v5095
  %v5160 = vunpack.c.l.b16 %v5096
  %v5161 = vunpack.c.l.b16 %v5097
  %v5162 = vunpack.c.l.b16 %v5098
  %v5163 = vunpack.c.l.b16 %v5099
  %v5164 = vunpack.c.l.b16 %v5100
  %v5165 = vunpack.c.l.b16 %v5101
  %v5166 = vunpack.c.l.b16 %v5102
  %v5167 = vunpack.c.l.b16 %v5103
  %v5168 = vunpack.c.l.b16 %v5104
  %v5169 = vunpack.c.l.b16 %v5105
  %v5170 = vunpack.c.l.b16 %v5106
  %v5171 = vunpack.c.l.b16 %v5107
  %v5172 = vunpack.c.l.b16 %v5108
  %v5173 = vunpack.c.l.b16 %v5109
  %v5174 = vunpack.c.l.b16 %v5110
  %v5175 = vunpack.c.l.b16 %v5111
  %v5176 = vunpack.c.l.b16 %v5112
  %v5177 = vunpack.c.l.b16 %v5113
  %v5178 = vunpack.c.l.b16 %v5114
  %v5179 = vunpack.c.l.b16 %v5115
  %v5180 = vpack.c.b16 %v5149, %v5148
  %v5181 = vpack.c.b16 %v5151, %v5150
  %v5182 = vpack.c.b16 %v5153, %v5152
  %v5183 = vpack.c.b16 %v5155, %v5154
  %v5184 = vpack.c.b16 %v5157, %v5156
  %v5185 = vpack.c.b16 %v5159, %v5158
  %v5186 = vpack.c.b16 %v5161, %v5160
  %v5187 = vpack.c.b16 %v5163, %v5162
  %v5188 = vpack.c.b16 %v5165, %v5164
  %v5189 = vpack.c.b16 %v5167, %v5166
  %v5190 = vpack.c.b16 %v5169, %v5168
  %v5191 = vpack.c.b16 %v5171, %v5170
  %v5192 = vpack.c.b16 %v5173, %v5172
  %v5193 = vpack.c.b16 %v5175, %v5174
  %v5194 = vpack.c.b16 %v5177, %v5176
  %v5195 = vpack.c.b16 %v5179, %v5178
  %5212 = vmatprep.subr.bf16.mxu0 0
  %5213 = vmatpush1.bf16.msra.mxu0 %v5180
  %5214 = vmatprep.subr.bf16.mxu0 0
  %5215 = vmatpush1.bf16.msra.mxu0 %v5181
  %5216 = vmatprep.subr.bf16.mxu0 0
  %5217 = vmatpush1.bf16.msra.mxu0 %v5182
  %5218 = vmatprep.subr.bf16.mxu0 0
  %5219 = vmatpush1.bf16.msra.mxu0 %v5183
  %5220 = vmatprep.subr.bf16.mxu0 0
  %5221 = vmatpush1.bf16.msra.mxu0 %v5184
  %5222 = vmatprep.subr.bf16.mxu0 0
  %5223 = vmatpush1.bf16.msra.mxu0 %v5185
  %5224 = vmatprep.subr.bf16.mxu0 0
  %5225 = vmatpush1.bf16.msra.mxu0 %v5186
  %5226 = vmatprep.subr.bf16.mxu0 0
  %5227 = vmatpush1.bf16.msra.mxu0 %v5187
  %5228 = vmatprep.subr.bf16.mxu0 0
  %5229 = vmatpush1.bf16.msra.mxu0 %v5188
  %5230 = vmatprep.subr.bf16.mxu0 0
  %5231 = vmatpush1.bf16.msra.mxu0 %v5189
  %5232 = vmatprep.subr.bf16.mxu0 0
  %5233 = vmatpush1.bf16.msra.mxu0 %v5190
  %5234 = vmatprep.subr.bf16.mxu0 0
  %5235 = vmatpush1.bf16.msra.mxu0 %v5191
  %5236 = vmatprep.subr.bf16.mxu0 0
  %5237 = vmatpush1.bf16.msra.mxu0 %v5192
  %5238 = vmatprep.subr.bf16.mxu0 0
  %5239 = vmatpush1.bf16.msra.mxu0 %v5193
  %5240 = vmatprep.subr.bf16.mxu0 0
  %5241 = vmatpush1.bf16.msra.mxu0 %v5194
  %5242 = vmatprep.subr.bf16.mxu0 0
  %5243 = vmatpush1.bf16.msra.mxu0 %v5195
  %5244 = vmatprep.mubr.bf16.mxu0 %v5083
  %5245 = vmatmul.mubr.bf16.gmra.mrb[0].mxu0 %v5082
  %v5246 = vpop.f32.mrb[0].mxu0
  %v5247 = vadd.f32 0.0, %v5246
  %v5248 = vpop.f32.mrb[0].mxu0
  %v5249 = vpop.f32.mrb[0].mxu0
  %v5250 = vpop.f32.mrb[0].mxu0
  %5251 = vdwg.mxu0
  %v5252 = vmul.f32 %v5247, 1.442695
  %v5253 = vpow.pop %v5252
  %v5254 = vmul.f32 %v5253, %v77
  %5255 = vadd.xlane.f32.xlu0 %v5254
  %v5256 = vpop.xlane.xlu0 %5255
  %v5257 = vmax.f32 %v5256, 1e-30
  %v5258 = vrcp.pop %v5257
  %v5259 = vmul.f32 %v5254, %v5258
  %5261 = vset.pattern.permute.xlu0 64
  %5262 = vperm.xlu0 %5261, %v5259
  %v5263 = vpop.permute.xlu0 %5262
  %v5265 = vmul.f32 %v5263, %v425
  %5266 = vset.pattern.permute.xlu0 65
  %5267 = vperm.xlu0 %5266, %v5259
  %v5268 = vpop.permute.xlu0 %5267
  %v5270 = vmul.f32 %v5268, %v514
  %v5271 = vadd.f32 %v5265, %v5270
  %5272 = vset.pattern.permute.xlu0 66
  %5273 = vperm.xlu0 %5272, %v5259
  %v5274 = vpop.permute.xlu0 %5273
  %v5276 = vmul.f32 %v5274, %v602
  %v5277 = vadd.f32 %v5271, %v5276
  %5278 = vset.pattern.permute.xlu0 67
  %5279 = vperm.xlu0 %5278, %v5259
  %v5280 = vpop.permute.xlu0 %5279
  %v5282 = vmul.f32 %v5280, %v690
  %v5283 = vadd.f32 %v5277, %v5282
  %5284 = vset.pattern.permute.xlu0 68
  %5285 = vperm.xlu0 %5284, %v5259
  %v5286 = vpop.permute.xlu0 %5285
  %v5288 = vmul.f32 %v5286, %v778
  %v5289 = vadd.f32 %v5283, %v5288
  %5290 = vset.pattern.permute.xlu0 69
  %5291 = vperm.xlu0 %5290, %v5259
  %v5292 = vpop.permute.xlu0 %5291
  %v5294 = vmul.f32 %v5292, %v866
  %v5295 = vadd.f32 %v5289, %v5294
  %5296 = vset.pattern.permute.xlu0 70
  %5297 = vperm.xlu0 %5296, %v5259
  %v5298 = vpop.permute.xlu0 %5297
  %v5300 = vmul.f32 %v5298, %v954
  %v5301 = vadd.f32 %v5295, %v5300
  %5302 = vset.pattern.permute.xlu0 71
  %5303 = vperm.xlu0 %5302, %v5259
  %v5304 = vpop.permute.xlu0 %5303
  %v5306 = vmul.f32 %v5304, %v1042
  %v5307 = vadd.f32 %v5301, %v5306
  %v5308 = vpack.c.bf16 %v5307, %v5307
  %v5309 = vld [vmem:[%s16] sm:$0xf]
  %v5310 = vld [vmem:[%s16 + $0x4] sm:$0xf]
  %v5311 = vld [vmem:[%s16 + $0x8] sm:$0xf]
  %v5312 = vld [vmem:[%s16 + $0xc] sm:$0xf]
  %v5317 = vunpack.c.l.b16 %v5309
  %v5318 = vunpack.c.l.b16 %v5310
  %v5319 = vunpack.c.l.b16 %v5311
  %v5320 = vunpack.c.l.b16 %v5312
  %v5321 = vpack.c.b16 %v5318, %v5317
  %v5322 = vpack.c.b16 %v5320, %v5319
  %v5326 = vsel %vm129, %v5308, 0
  %5328 = vmatprep.subr.bf16.mxu0 0
  %5329 = vmatpush1.bf16.msra.mxu0 %v5321
  %5330 = vmatprep.subr.bf16.mxu0 0
  %5331 = vmatpush1.bf16.msra.mxu0 %v5322
  %5332 = vmatprep.subr.bf16.mxu0 0
  %5333 = vmatpush1.bf16.msra.mxu0 0
  %5334 = vmatprep.subr.bf16.mxu0 0
  %5335 = vmatpush1.bf16.msra.mxu0 0
  %5336 = vmatprep.subr.bf16.mxu0 0
  %5337 = vmatpush1.bf16.msra.mxu0 0
  %5338 = vmatprep.subr.bf16.mxu0 0
  %5339 = vmatpush1.bf16.msra.mxu0 0
  %5340 = vmatprep.subr.bf16.mxu0 0
  %5341 = vmatpush1.bf16.msra.mxu0 0
  %5342 = vmatprep.subr.bf16.mxu0 0
  %5343 = vmatpush1.bf16.msra.mxu0 0
  %5344 = vmatprep.subr.bf16.mxu0 0
  %5345 = vmatpush1.bf16.msra.mxu0 0
  %5346 = vmatprep.subr.bf16.mxu0 0
  %5347 = vmatpush1.bf16.msra.mxu0 0
  %5348 = vmatprep.subr.bf16.mxu0 0
  %5349 = vmatpush1.bf16.msra.mxu0 0
  %5350 = vmatprep.subr.bf16.mxu0 0
  %5351 = vmatpush1.bf16.msra.mxu0 0
  %5352 = vmatprep.subr.bf16.mxu0 0
  %5353 = vmatpush1.bf16.msra.mxu0 0
  %5354 = vmatprep.subr.bf16.mxu0 0
  %5355 = vmatpush1.bf16.msra.mxu0 0
  %5356 = vmatprep.subr.bf16.mxu0 0
  %5357 = vmatpush1.bf16.msra.mxu0 0
  %5358 = vmatprep.subr.bf16.mxu0 0
  %5359 = vmatpush1.bf16.msra.mxu0 0
  %5360 = vmatprep.mubr.bf16.mxu0 0
  %5361 = vmatmul.mubr.bf16.gmra.mrb[0].mxu0 %v5326
  %v5362 = vpop.f32.mrb[0].mxu0
  %v5363 = vadd.f32 0.0, %v5362
  %v5364 = vpop.f32.mrb[0].mxu0
  %v5365 = vpop.f32.mrb[0].mxu0
  %v5366 = vpop.f32.mrb[0].mxu0
  %5367 = vdwg.mxu0
  %v5368 = vadd.f32 %v329, %v5363
  %v5369 = vadd.f32 %v5368, %v5077
  %v5370 = vxor.u32 %v5369, 2147483648
  %v5371 = vmul.f32 %v5370, 1.442695
  %v5372 = vpow.pop %v5371
  %v5373 = vadd.f32 %v5372, 1.0
  %v5374 = vrcp.pop %v5373
  %v5375 = vmul.f32 1.0, %v5374
  %5377 = vrot.lane.b32.xlu0 %v5077, 64
  %v5378 = vpop.permute.xlu0 %5377
  %v5380 = vmul.f32 %v5375, %v5378
  %5382 = vrot.lane.b32.xlu0 %v5380, 64
  %v5383 = vpop.permute.xlu0 %5382
  %v5385 = vadd.f32 %v5368, %v5383
  %v5386 = vtanh.pop %v5385
  %v5387 = vsub.f32 1.0, %v5375
  %5389 = vrot.lane.b32.xlu0 %v5386, 96
  %v5390 = vpop.permute.xlu0 %5389
  %v5392 = vmul.f32 %v5387, %v5390
  %v5393 = vmul.f32 %v5375, %v4821
  %v5394 = vadd.f32 %v5392, %v5393
  %v5395 = vpack.c.bf16 %v5394, %v5394
  %v5396 = vld [vmem:[%s17] sm:$0xf]
  %v5397 = vld [vmem:[%s17 + $0x4] sm:$0xf]
  %v5398 = vld [vmem:[%s17 + $0x8] sm:$0xf]
  %v5399 = vld [vmem:[%s17 + $0xc] sm:$0xf]
  %5401 = vrot.lane.b32.xlu0 %v5395, 96
  %v5402 = vpop.permute.xlu0 %5401
  %v5407 = vunpack.c.l.b16 %v5396
  %v5408 = vunpack.c.l.b16 %v5397
  %v5409 = vunpack.c.l.b16 %v5398
  %v5410 = vunpack.c.l.b16 %v5399
  %v5411 = vpack.c.b16 %v5408, %v5407
  %v5412 = vpack.c.b16 %v5410, %v5409
  %v5416 = vsel %vm129, %v5402, 0
  %5418 = vmatprep.subr.bf16.mxu0 0
  %5419 = vmatpush1.bf16.msra.mxu0 %v5411
  %5420 = vmatprep.subr.bf16.mxu0 0
  %5421 = vmatpush1.bf16.msra.mxu0 %v5412
  %5422 = vmatprep.subr.bf16.mxu0 0
  %5423 = vmatpush1.bf16.msra.mxu0 0
  %5424 = vmatprep.subr.bf16.mxu0 0
  %5425 = vmatpush1.bf16.msra.mxu0 0
  %5426 = vmatprep.subr.bf16.mxu0 0
  %5427 = vmatpush1.bf16.msra.mxu0 0
  %5428 = vmatprep.subr.bf16.mxu0 0
  %5429 = vmatpush1.bf16.msra.mxu0 0
  %5430 = vmatprep.subr.bf16.mxu0 0
  %5431 = vmatpush1.bf16.msra.mxu0 0
  %5432 = vmatprep.subr.bf16.mxu0 0
  %5433 = vmatpush1.bf16.msra.mxu0 0
  %5434 = vmatprep.subr.bf16.mxu0 0
  %5435 = vmatpush1.bf16.msra.mxu0 0
  %5436 = vmatprep.subr.bf16.mxu0 0
  %5437 = vmatpush1.bf16.msra.mxu0 0
  %5438 = vmatprep.subr.bf16.mxu0 0
  %5439 = vmatpush1.bf16.msra.mxu0 0
  %5440 = vmatprep.subr.bf16.mxu0 0
  %5441 = vmatpush1.bf16.msra.mxu0 0
  %5442 = vmatprep.subr.bf16.mxu0 0
  %5443 = vmatpush1.bf16.msra.mxu0 0
  %5444 = vmatprep.subr.bf16.mxu0 0
  %5445 = vmatpush1.bf16.msra.mxu0 0
  %5446 = vmatprep.subr.bf16.mxu0 0
  %5447 = vmatpush1.bf16.msra.mxu0 0
  %5448 = vmatprep.subr.bf16.mxu0 0
  %5449 = vmatpush1.bf16.msra.mxu0 0
  %5450 = vmatprep.mubr.bf16.mxu0 0
  %5451 = vmatmul.mubr.bf16.gmra.mrb[0].mxu0 %v5416
  %v5452 = vpop.f32.mrb[0].mxu0
  %v5453 = vadd.f32 0.0, %v5452
  %v5454 = vpop.f32.mrb[0].mxu0
  %v5455 = vpop.f32.mrb[0].mxu0
  %v5456 = vpop.f32.mrb[0].mxu0
  %5457 = vdwg.mxu0
  %5459 = vrot.lane.b32.xlu0 %v5453, 96
  %v5460 = vpop.permute.xlu0 %5459
  %v5462 = vadd.f32 %v5368, %v5460
  %v5463 = vtanh.pop %v5462
  %v5464 = vpack.c.bf16 %v5463, %v5463
  %v5465 = vld [vmem:[%s18] sm:$0xf]
  %v5466 = vld [vmem:[%s18 + $0x4] sm:$0xf]
  %v5467 = vld [vmem:[%s18 + $0x8] sm:$0xf]
  %v5468 = vld [vmem:[%s18 + $0xc] sm:$0xf]
  %5470 = vrot.lane.b32.xlu0 %v5464, 32
  %v5471 = vpop.permute.xlu0 %5470
  %v5476 = vunpack.c.l.b16 %v5465
  %v5477 = vunpack.c.l.b16 %v5466
  %v5478 = vunpack.c.l.b16 %v5467
  %v5479 = vunpack.c.l.b16 %v5468
  %v5480 = vpack.c.b16 %v5477, %v5476
  %v5481 = vpack.c.b16 %v5479, %v5478
  %v5485 = vsel %vm129, %v5471, 0
  %5487 = vmatprep.subr.bf16.mxu0 0
  %5488 = vmatpush1.bf16.msra.mxu0 %v5480
  %5489 = vmatprep.subr.bf16.mxu0 0
  %5490 = vmatpush1.bf16.msra.mxu0 %v5481
  %5491 = vmatprep.subr.bf16.mxu0 0
  %5492 = vmatpush1.bf16.msra.mxu0 0
  %5493 = vmatprep.subr.bf16.mxu0 0
  %5494 = vmatpush1.bf16.msra.mxu0 0
  %5495 = vmatprep.subr.bf16.mxu0 0
  %5496 = vmatpush1.bf16.msra.mxu0 0
  %5497 = vmatprep.subr.bf16.mxu0 0
  %5498 = vmatpush1.bf16.msra.mxu0 0
  %5499 = vmatprep.subr.bf16.mxu0 0
  %5500 = vmatpush1.bf16.msra.mxu0 0
  %5501 = vmatprep.subr.bf16.mxu0 0
  %5502 = vmatpush1.bf16.msra.mxu0 0
  %5503 = vmatprep.subr.bf16.mxu0 0
  %5504 = vmatpush1.bf16.msra.mxu0 0
  %5505 = vmatprep.subr.bf16.mxu0 0
  %5506 = vmatpush1.bf16.msra.mxu0 0
  %5507 = vmatprep.subr.bf16.mxu0 0
  %5508 = vmatpush1.bf16.msra.mxu0 0
  %5509 = vmatprep.subr.bf16.mxu0 0
  %5510 = vmatpush1.bf16.msra.mxu0 0
  %5511 = vmatprep.subr.bf16.mxu0 0
  %5512 = vmatpush1.bf16.msra.mxu0 0
  %5513 = vmatprep.subr.bf16.mxu0 0
  %5514 = vmatpush1.bf16.msra.mxu0 0
  %5515 = vmatprep.subr.bf16.mxu0 0
  %5516 = vmatpush1.bf16.msra.mxu0 0
  %5517 = vmatprep.subr.bf16.mxu0 0
  %5518 = vmatpush1.bf16.msra.mxu0 0
  %5519 = vmatprep.mubr.bf16.mxu0 0
  %5520 = vmatmul.mubr.bf16.gmra.mrb[0].mxu0 %v5485
  %v5521 = vpop.f32.mrb[0].mxu0
  %v5522 = vadd.f32 %v5259, %v5521
  %v5523 = vpop.f32.mrb[0].mxu0
  %v5524 = vpop.f32.mrb[0].mxu0
  %v5525 = vpop.f32.mrb[0].mxu0
  %5526 = vdwg.mxu0
  %s5527 = scalar_lea.vmem %s19, 48
  %5528 = vst [vmem:[%s5527] sm:$0xff] %v5522
  %v5529 = vld [vmem:[%s11] sm:$0xff]
  %v5530 = vld [vmem:[%s11 + $0x8] sm:$0xf]
  %v5531 = vld [vmem:[%s11 + $0xc] sm:$0xff]
  %v5532 = vld [vmem:[%s11 + $0x14] sm:$0xf]
  %v5533 = vld [vmem:[%s11 + $0x18] sm:$0xff]
  %v5534 = vld [vmem:[%s11 + $0x20] sm:$0xf]
  %v5535 = vld [vmem:[%s11 + $0x24] sm:$0xff]
  %v5536 = vld [vmem:[%s11 + $0x2c] sm:$0xf]
  %v5545 = vunpack.c.l.b16 %v5529
  %v5546 = vunpack.c.h.b16 %v5529
  %v5547 = vunpack.c.l.b16 %v5530
  %v5548 = vunpack.c.l.b16 %v5531
  %v5549 = vunpack.c.h.b16 %v5531
  %v5550 = vunpack.c.l.b16 %v5532
  %v5551 = vunpack.c.l.b16 %v5533
  %v5552 = vunpack.c.h.b16 %v5533
  %v5553 = vunpack.c.l.b16 %v5534
  %v5554 = vunpack.c.l.b16 %v5535
  %v5555 = vunpack.c.h.b16 %v5535
  %v5556 = vunpack.c.l.b16 %v5536
  %v5557 = vpack.c.b16 %v5548, %v5545
  %v5558 = vpack.c.b16 %v5549, %v5546
  %v5559 = vpack.c.b16 %v5550, %v5547
  %v5560 = vpack.c.b16 %v5554, %v5551
  %v5561 = vpack.c.b16 %v5555, %v5552
  %v5562 = vpack.c.b16 %v5556, %v5553
  %5569 = vmatprep.subr.bf16.mxu0 %v5558
  %5570 = vmatpush1.bf16.msra.mxu0 %v5557
  %5571 = vmatprep.subr.bf16.mxu0 %v5561
  %5572 = vmatpush1.bf16.msra.mxu0 %v5560
  %5573 = vmatprep.subr.bf16.mxu0 0
  %5574 = vmatpush1.bf16.msra.mxu0 0
  %5575 = vmatprep.subr.bf16.mxu0 0
  %5576 = vmatpush1.bf16.msra.mxu0 0
  %5577 = vmatprep.subr.bf16.mxu0 0
  %5578 = vmatpush1.bf16.msra.mxu0 0
  %5579 = vmatprep.subr.bf16.mxu0 0
  %5580 = vmatpush1.bf16.msra.mxu0 0
  %5581 = vmatprep.subr.bf16.mxu0 0
  %5582 = vmatpush1.bf16.msra.mxu0 0
  %5583 = vmatprep.subr.bf16.mxu0 0
  %5584 = vmatpush1.bf16.msra.mxu0 0
  %5585 = vmatprep.subr.bf16.mxu0 0
  %5586 = vmatpush1.bf16.msra.mxu0 0
  %5587 = vmatprep.subr.bf16.mxu0 0
  %5588 = vmatpush1.bf16.msra.mxu0 0
  %5589 = vmatprep.subr.bf16.mxu0 0
  %5590 = vmatpush1.bf16.msra.mxu0 0
  %5591 = vmatprep.subr.bf16.mxu0 0
  %5592 = vmatpush1.bf16.msra.mxu0 0
  %5593 = vmatprep.subr.bf16.mxu0 0
  %5594 = vmatpush1.bf16.msra.mxu0 0
  %5595 = vmatprep.subr.bf16.mxu0 0
  %5596 = vmatpush1.bf16.msra.mxu0 0
  %5597 = vmatprep.subr.bf16.mxu0 0
  %5598 = vmatpush1.bf16.msra.mxu0 0
  %5599 = vmatprep.subr.bf16.mxu0 0
  %5600 = vmatpush1.bf16.msra.mxu0 0
  %5601 = vmatprep.mubr.bf16.mxu0 0
  %5602 = vmatmul.mubr.bf16.gmra.mrb[0].mxu0 %v5416
  %v5603 = vpop.f32.mrb[0].mxu0
  %v5604 = vadd.f32 0.0, %v5603
  %v5605 = vpop.f32.mrb[0].mxu0
  %v5606 = vadd.f32 0.0, %v5605
  %v5607 = vpop.f32.mrb[0].mxu0
  %v5608 = vpop.f32.mrb[0].mxu0
  %5609 = vdwg.mxu0
  %5610 = vmatprep.subr.bf16.mxu0 0
  %5611 = vmatpush1.bf16.msra.mxu0 %v5559
  %5612 = vmatprep.subr.bf16.mxu0 0
  %5613 = vmatpush1.bf16.msra.mxu0 %v5562
  %5614 = vmatprep.subr.bf16.mxu0 0
  %5615 = vmatpush1.bf16.msra.mxu0 0
  %5616 = vmatprep.subr.bf16.mxu0 0
  %5617 = vmatpush1.bf16.msra.mxu0 0
  %5618 = vmatprep.subr.bf16.mxu0 0
  %5619 = vmatpush1.bf16.msra.mxu0 0
  %5620 = vmatprep.subr.bf16.mxu0 0
  %5621 = vmatpush1.bf16.msra.mxu0 0
  %5622 = vmatprep.subr.bf16.mxu0 0
  %5623 = vmatpush1.bf16.msra.mxu0 0
  %5624 = vmatprep.subr.bf16.mxu0 0
  %5625 = vmatpush1.bf16.msra.mxu0 0
  %5626 = vmatprep.subr.bf16.mxu0 0
  %5627 = vmatpush1.bf16.msra.mxu0 0
  %5628 = vmatprep.subr.bf16.mxu0 0
  %5629 = vmatpush1.bf16.msra.mxu0 0
  %5630 = vmatprep.subr.bf16.mxu0 0
  %5631 = vmatpush1.bf16.msra.mxu0 0
  %5632 = vmatprep.subr.bf16.mxu0 0
  %5633 = vmatpush1.bf16.msra.mxu0 0
  %5634 = vmatprep.subr.bf16.mxu0 0
  %5635 = vmatpush1.bf16.msra.mxu0 0
  %5636 = vmatprep.subr.bf16.mxu0 0
  %5637 = vmatpush1.bf16.msra.mxu0 0
  %5638 = vmatprep.subr.bf16.mxu0 0
  %5639 = vmatpush1.bf16.msra.mxu0 0
  %5640 = vmatprep.subr.bf16.mxu0 0
  %5641 = vmatpush1.bf16.msra.mxu0 0
  %5642 = vmatprep.mubr.bf16.mxu0 0
  %5643 = vmatmul.mubr.bf16.gmra.mrb[0].mxu0 %v5416
  %v5644 = vpop.f32.mrb[0].mxu0
  %v5645 = vadd.f32 0.0, %v5644
  %v5646 = vpop.f32.mrb[0].mxu0
  %v5647 = vpop.f32.mrb[0].mxu0
  %v5648 = vpop.f32.mrb[0].mxu0
  %5649 = vdwg.mxu0
  %v5650 = vadd.f32 %v5645, %v75
  %v5651 = vadd.f32 %v1507, %v5604
  %v5652 = vadd.f32 %v1510, %v5606
  %v5653 = vtanh.pop %v5651
  %v5654 = vtanh.pop %v5652
  %v5655 = vpack.c.bf16 %v5653, %v5653
  %v5656 = vpack.c.bf16 %v5654, %v5654
  %v5657 = vld [vmem:[%s13] sm:$0xf]
  %v5658 = vld [vmem:[%s13 + $0x4] sm:$0xf]
  %v5659 = vld [vmem:[%s13 + $0x8] sm:$0xf]
  %v5660 = vld [vmem:[%s13 + $0xc] sm:$0xf]
  %v5661 = vld [vmem:[%s13 + $0x10] sm:$0xf]
  %v5662 = vld [vmem:[%s13 + $0x14] sm:$0xf]
  %v5663 = vld [vmem:[%s13 + $0x18] sm:$0xf]
  %v5664 = vld [vmem:[%s13 + $0x1c] sm:$0xf]
  %v5665 = vld [vmem:[%s13 + $0x20] sm:$0xf]
  %v5666 = vld [vmem:[%s13 + $0x24] sm:$0xf]
  %v5667 = vld [vmem:[%s13 + $0x28] sm:$0xf]
  %v5668 = vld [vmem:[%s13 + $0x2c] sm:$0xf]
  %v5669 = vld [vmem:[%s13 + $0x30] sm:$0xf]
  %v5670 = vld [vmem:[%s13 + $0x34] sm:$0xf]
  %v5671 = vld [vmem:[%s13 + $0x38] sm:$0xf]
  %v5672 = vld [vmem:[%s13 + $0x3c] sm:$0xf]
  %v5673 = vld [vmem:[%s13 + $0x40] sm:$0xf]
  %v5674 = vld [vmem:[%s13 + $0x44] sm:$0xf]
  %v5675 = vld [vmem:[%s13 + $0x48] sm:$0xf]
  %v5676 = vld [vmem:[%s13 + $0x4c] sm:$0xf]
  %v5677 = vld [vmem:[%s13 + $0x50] sm:$0xf]
  %v5678 = vld [vmem:[%s13 + $0x54] sm:$0xf]
  %v5679 = vld [vmem:[%s13 + $0x58] sm:$0xf]
  %v5680 = vld [vmem:[%s13 + $0x5c] sm:$0xf]
  %v5681 = vld [vmem:[%s13 + $0x60] sm:$0xf]
  %v5682 = vld [vmem:[%s13 + $0x64] sm:$0xf]
  %v5683 = vld [vmem:[%s13 + $0x68] sm:$0xf]
  %v5684 = vld [vmem:[%s13 + $0x6c] sm:$0xf]
  %v5685 = vld [vmem:[%s13 + $0x70] sm:$0xf]
  %v5686 = vld [vmem:[%s13 + $0x74] sm:$0xf]
  %v5687 = vld [vmem:[%s13 + $0x78] sm:$0xf]
  %v5688 = vld [vmem:[%s13 + $0x7c] sm:$0xf]
  %v5721 = vunpack.c.l.b16 %v5657
  %v5722 = vunpack.c.l.b16 %v5658
  %v5723 = vunpack.c.l.b16 %v5659
  %v5724 = vunpack.c.l.b16 %v5660
  %v5725 = vunpack.c.l.b16 %v5661
  %v5726 = vunpack.c.l.b16 %v5662
  %v5727 = vunpack.c.l.b16 %v5663
  %v5728 = vunpack.c.l.b16 %v5664
  %v5729 = vunpack.c.l.b16 %v5665
  %v5730 = vunpack.c.l.b16 %v5666
  %v5731 = vunpack.c.l.b16 %v5667
  %v5732 = vunpack.c.l.b16 %v5668
  %v5733 = vunpack.c.l.b16 %v5669
  %v5734 = vunpack.c.l.b16 %v5670
  %v5735 = vunpack.c.l.b16 %v5671
  %v5736 = vunpack.c.l.b16 %v5672
  %v5737 = vunpack.c.l.b16 %v5673
  %v5738 = vunpack.c.l.b16 %v5674
  %v5739 = vunpack.c.l.b16 %v5675
  %v5740 = vunpack.c.l.b16 %v5676
  %v5741 = vunpack.c.l.b16 %v5677
  %v5742 = vunpack.c.l.b16 %v5678
  %v5743 = vunpack.c.l.b16 %v5679
  %v5744 = vunpack.c.l.b16 %v5680
  %v5745 = vunpack.c.l.b16 %v5681
  %v5746 = vunpack.c.l.b16 %v5682
  %v5747 = vunpack.c.l.b16 %v5683
  %v5748 = vunpack.c.l.b16 %v5684
  %v5749 = vunpack.c.l.b16 %v5685
  %v5750 = vunpack.c.l.b16 %v5686
  %v5751 = vunpack.c.l.b16 %v5687
  %v5752 = vunpack.c.l.b16 %v5688
  %v5753 = vpack.c.b16 %v5722, %v5721
  %v5754 = vpack.c.b16 %v5724, %v5723
  %v5755 = vpack.c.b16 %v5726, %v5725
  %v5756 = vpack.c.b16 %v5728, %v5727
  %v5757 = vpack.c.b16 %v5730, %v5729
  %v5758 = vpack.c.b16 %v5732, %v5731
  %v5759 = vpack.c.b16 %v5734, %v5733
  %v5760 = vpack.c.b16 %v5736, %v5735
  %v5761 = vpack.c.b16 %v5738, %v5737
  %v5762 = vpack.c.b16 %v5740, %v5739
  %v5763 = vpack.c.b16 %v5742, %v5741
  %v5764 = vpack.c.b16 %v5744, %v5743
  %v5765 = vpack.c.b16 %v5746, %v5745
  %v5766 = vpack.c.b16 %v5748, %v5747
  %v5767 = vpack.c.b16 %v5750, %v5749
  %v5768 = vpack.c.b16 %v5752, %v5751
  %5785 = vmatprep.subr.bf16.mxu0 0
  %5786 = vmatpush1.bf16.msra.mxu0 %v5753
  %5787 = vmatprep.subr.bf16.mxu0 0
  %5788 = vmatpush1.bf16.msra.mxu0 %v5754
  %5789 = vmatprep.subr.bf16.mxu0 0
  %5790 = vmatpush1.bf16.msra.mxu0 %v5755
  %5791 = vmatprep.subr.bf16.mxu0 0
  %5792 = vmatpush1.bf16.msra.mxu0 %v5756
  %5793 = vmatprep.subr.bf16.mxu0 0
  %5794 = vmatpush1.bf16.msra.mxu0 %v5757
  %5795 = vmatprep.subr.bf16.mxu0 0
  %5796 = vmatpush1.bf16.msra.mxu0 %v5758
  %5797 = vmatprep.subr.bf16.mxu0 0
  %5798 = vmatpush1.bf16.msra.mxu0 %v5759
  %5799 = vmatprep.subr.bf16.mxu0 0
  %5800 = vmatpush1.bf16.msra.mxu0 %v5760
  %5801 = vmatprep.subr.bf16.mxu0 0
  %5802 = vmatpush1.bf16.msra.mxu0 %v5761
  %5803 = vmatprep.subr.bf16.mxu0 0
  %5804 = vmatpush1.bf16.msra.mxu0 %v5762
  %5805 = vmatprep.subr.bf16.mxu0 0
  %5806 = vmatpush1.bf16.msra.mxu0 %v5763
  %5807 = vmatprep.subr.bf16.mxu0 0
  %5808 = vmatpush1.bf16.msra.mxu0 %v5764
  %5809 = vmatprep.subr.bf16.mxu0 0
  %5810 = vmatpush1.bf16.msra.mxu0 %v5765
  %5811 = vmatprep.subr.bf16.mxu0 0
  %5812 = vmatpush1.bf16.msra.mxu0 %v5766
  %5813 = vmatprep.subr.bf16.mxu0 0
  %5814 = vmatpush1.bf16.msra.mxu0 %v5767
  %5815 = vmatprep.subr.bf16.mxu0 0
  %5816 = vmatpush1.bf16.msra.mxu0 %v5768
  %5817 = vmatprep.mubr.bf16.mxu0 %v5656
  %5818 = vmatmul.mubr.bf16.gmra.mrb[0].mxu0 %v5655
  %v5819 = vpop.f32.mrb[0].mxu0
  %v5820 = vadd.f32 0.0, %v5819
  %v5821 = vpop.f32.mrb[0].mxu0
  %v5822 = vpop.f32.mrb[0].mxu0
  %v5823 = vpop.f32.mrb[0].mxu0
  %5824 = vdwg.mxu0
  %v5825 = vmul.f32 %v5820, 1.442695
  %v5826 = vpow.pop %v5825
  %v5827 = vmul.f32 %v5826, %v77
  %5828 = vadd.xlane.f32.xlu0 %v5827
  %v5829 = vpop.xlane.xlu0 %5828
  %v5830 = vmax.f32 %v5829, 1e-30
  %v5831 = vrcp.pop %v5830
  %v5832 = vmul.f32 %v5827, %v5831
  %5834 = vset.pattern.permute.xlu0 64
  %5835 = vperm.xlu0 %5834, %v5832
  %v5836 = vpop.permute.xlu0 %5835
  %v5838 = vmul.f32 %v5836, %v425
  %5839 = vset.pattern.permute.xlu0 65
  %5840 = vperm.xlu0 %5839, %v5832
  %v5841 = vpop.permute.xlu0 %5840
  %v5843 = vmul.f32 %v5841, %v514
  %v5844 = vadd.f32 %v5838, %v5843
  %5845 = vset.pattern.permute.xlu0 66
  %5846 = vperm.xlu0 %5845, %v5832
  %v5847 = vpop.permute.xlu0 %5846
  %v5849 = vmul.f32 %v5847, %v602
  %v5850 = vadd.f32 %v5844, %v5849
  %5851 = vset.pattern.permute.xlu0 67
  %5852 = vperm.xlu0 %5851, %v5832
  %v5853 = vpop.permute.xlu0 %5852
  %v5855 = vmul.f32 %v5853, %v690
  %v5856 = vadd.f32 %v5850, %v5855
  %5857 = vset.pattern.permute.xlu0 68
  %5858 = vperm.xlu0 %5857, %v5832
  %v5859 = vpop.permute.xlu0 %5858
  %v5861 = vmul.f32 %v5859, %v778
  %v5862 = vadd.f32 %v5856, %v5861
  %5863 = vset.pattern.permute.xlu0 69
  %5864 = vperm.xlu0 %5863, %v5832
  %v5865 = vpop.permute.xlu0 %5864
  %v5867 = vmul.f32 %v5865, %v866
  %v5868 = vadd.f32 %v5862, %v5867
  %5869 = vset.pattern.permute.xlu0 70
  %5870 = vperm.xlu0 %5869, %v5832
  %v5871 = vpop.permute.xlu0 %5870
  %v5873 = vmul.f32 %v5871, %v954
  %v5874 = vadd.f32 %v5868, %v5873
  %5875 = vset.pattern.permute.xlu0 71
  %5876 = vperm.xlu0 %5875, %v5832
  %v5877 = vpop.permute.xlu0 %5876
  %v5879 = vmul.f32 %v5877, %v1042
  %v5880 = vadd.f32 %v5874, %v5879
  %v5881 = vpack.c.bf16 %v5880, %v5880
  %v5882 = vld [vmem:[%s16] sm:$0xf]
  %v5883 = vld [vmem:[%s16 + $0x4] sm:$0xf]
  %v5884 = vld [vmem:[%s16 + $0x8] sm:$0xf]
  %v5885 = vld [vmem:[%s16 + $0xc] sm:$0xf]
  %v5890 = vunpack.c.l.b16 %v5882
  %v5891 = vunpack.c.l.b16 %v5883
  %v5892 = vunpack.c.l.b16 %v5884
  %v5893 = vunpack.c.l.b16 %v5885
  %v5894 = vpack.c.b16 %v5891, %v5890
  %v5895 = vpack.c.b16 %v5893, %v5892
  %v5899 = vsel %vm129, %v5881, 0
  %5901 = vmatprep.subr.bf16.mxu0 0
  %5902 = vmatpush1.bf16.msra.mxu0 %v5894
  %5903 = vmatprep.subr.bf16.mxu0 0
  %5904 = vmatpush1.bf16.msra.mxu0 %v5895
  %5905 = vmatprep.subr.bf16.mxu0 0
  %5906 = vmatpush1.bf16.msra.mxu0 0
  %5907 = vmatprep.subr.bf16.mxu0 0
  %5908 = vmatpush1.bf16.msra.mxu0 0
  %5909 = vmatprep.subr.bf16.mxu0 0
  %5910 = vmatpush1.bf16.msra.mxu0 0
  %5911 = vmatprep.subr.bf16.mxu0 0
  %5912 = vmatpush1.bf16.msra.mxu0 0
  %5913 = vmatprep.subr.bf16.mxu0 0
  %5914 = vmatpush1.bf16.msra.mxu0 0
  %5915 = vmatprep.subr.bf16.mxu0 0
  %5916 = vmatpush1.bf16.msra.mxu0 0
  %5917 = vmatprep.subr.bf16.mxu0 0
  %5918 = vmatpush1.bf16.msra.mxu0 0
  %5919 = vmatprep.subr.bf16.mxu0 0
  %5920 = vmatpush1.bf16.msra.mxu0 0
  %5921 = vmatprep.subr.bf16.mxu0 0
  %5922 = vmatpush1.bf16.msra.mxu0 0
  %5923 = vmatprep.subr.bf16.mxu0 0
  %5924 = vmatpush1.bf16.msra.mxu0 0
  %5925 = vmatprep.subr.bf16.mxu0 0
  %5926 = vmatpush1.bf16.msra.mxu0 0
  %5927 = vmatprep.subr.bf16.mxu0 0
  %5928 = vmatpush1.bf16.msra.mxu0 0
  %5929 = vmatprep.subr.bf16.mxu0 0
  %5930 = vmatpush1.bf16.msra.mxu0 0
  %5931 = vmatprep.subr.bf16.mxu0 0
  %5932 = vmatpush1.bf16.msra.mxu0 0
  %5933 = vmatprep.mubr.bf16.mxu0 0
  %5934 = vmatmul.mubr.bf16.gmra.mrb[0].mxu0 %v5899
  %v5935 = vpop.f32.mrb[0].mxu0
  %v5936 = vadd.f32 0.0, %v5935
  %v5937 = vpop.f32.mrb[0].mxu0
  %v5938 = vpop.f32.mrb[0].mxu0
  %v5939 = vpop.f32.mrb[0].mxu0
  %5940 = vdwg.mxu0
  %v5941 = vadd.f32 %v332, %v5936
  %v5942 = vadd.f32 %v5941, %v5650
  %v5943 = vxor.u32 %v5942, 2147483648
  %v5944 = vmul.f32 %v5943, 1.442695
  %v5945 = vpow.pop %v5944
  %v5946 = vadd.f32 %v5945, 1.0
  %v5947 = vrcp.pop %v5946
  %v5948 = vmul.f32 1.0, %v5947
  %5950 = vrot.lane.b32.xlu0 %v5650, 64
  %v5951 = vpop.permute.xlu0 %5950
  %v5953 = vmul.f32 %v5948, %v5951
  %5955 = vrot.lane.b32.xlu0 %v5953, 64
  %v5956 = vpop.permute.xlu0 %5955
  %v5958 = vadd.f32 %v5941, %v5956
  %v5959 = vtanh.pop %v5958
  %v5960 = vsub.f32 1.0, %v5948
  %5962 = vrot.lane.b32.xlu0 %v5959, 96
  %v5963 = vpop.permute.xlu0 %5962
  %v5965 = vmul.f32 %v5960, %v5963
  %v5966 = vmul.f32 %v5948, %v5394
  %v5967 = vadd.f32 %v5965, %v5966
  %v5968 = vpack.c.bf16 %v5967, %v5967
  %v5969 = vld [vmem:[%s17] sm:$0xf]
  %v5970 = vld [vmem:[%s17 + $0x4] sm:$0xf]
  %v5971 = vld [vmem:[%s17 + $0x8] sm:$0xf]
  %v5972 = vld [vmem:[%s17 + $0xc] sm:$0xf]
  %5974 = vrot.lane.b32.xlu0 %v5968, 96
  %v5975 = vpop.permute.xlu0 %5974
  %v5980 = vunpack.c.l.b16 %v5969
  %v5981 = vunpack.c.l.b16 %v5970
  %v5982 = vunpack.c.l.b16 %v5971
  %v5983 = vunpack.c.l.b16 %v5972
  %v5984 = vpack.c.b16 %v5981, %v5980
  %v5985 = vpack.c.b16 %v5983, %v5982
  %v5989 = vsel %vm129, %v5975, 0
  %5991 = vmatprep.subr.bf16.mxu0 0
  %5992 = vmatpush1.bf16.msra.mxu0 %v5984
  %5993 = vmatprep.subr.bf16.mxu0 0
  %5994 = vmatpush1.bf16.msra.mxu0 %v5985
  %5995 = vmatprep.subr.bf16.mxu0 0
  %5996 = vmatpush1.bf16.msra.mxu0 0
  %5997 = vmatprep.subr.bf16.mxu0 0
  %5998 = vmatpush1.bf16.msra.mxu0 0
  %5999 = vmatprep.subr.bf16.mxu0 0
  %6000 = vmatpush1.bf16.msra.mxu0 0
  %6001 = vmatprep.subr.bf16.mxu0 0
  %6002 = vmatpush1.bf16.msra.mxu0 0
  %6003 = vmatprep.subr.bf16.mxu0 0
  %6004 = vmatpush1.bf16.msra.mxu0 0
  %6005 = vmatprep.subr.bf16.mxu0 0
  %6006 = vmatpush1.bf16.msra.mxu0 0
  %6007 = vmatprep.subr.bf16.mxu0 0
  %6008 = vmatpush1.bf16.msra.mxu0 0
  %6009 = vmatprep.subr.bf16.mxu0 0
  %6010 = vmatpush1.bf16.msra.mxu0 0
  %6011 = vmatprep.subr.bf16.mxu0 0
  %6012 = vmatpush1.bf16.msra.mxu0 0
  %6013 = vmatprep.subr.bf16.mxu0 0
  %6014 = vmatpush1.bf16.msra.mxu0 0
  %6015 = vmatprep.subr.bf16.mxu0 0
  %6016 = vmatpush1.bf16.msra.mxu0 0
  %6017 = vmatprep.subr.bf16.mxu0 0
  %6018 = vmatpush1.bf16.msra.mxu0 0
  %6019 = vmatprep.subr.bf16.mxu0 0
  %6020 = vmatpush1.bf16.msra.mxu0 0
  %6021 = vmatprep.subr.bf16.mxu0 0
  %6022 = vmatpush1.bf16.msra.mxu0 0
  %6023 = vmatprep.mubr.bf16.mxu0 0
  %6024 = vmatmul.mubr.bf16.gmra.mrb[0].mxu0 %v5989
  %v6025 = vpop.f32.mrb[0].mxu0
  %v6026 = vadd.f32 0.0, %v6025
  %v6027 = vpop.f32.mrb[0].mxu0
  %v6028 = vpop.f32.mrb[0].mxu0
  %v6029 = vpop.f32.mrb[0].mxu0
  %6030 = vdwg.mxu0
  %6032 = vrot.lane.b32.xlu0 %v6026, 96
  %v6033 = vpop.permute.xlu0 %6032
  %v6035 = vadd.f32 %v5941, %v6033
  %v6036 = vtanh.pop %v6035
  %v6037 = vpack.c.bf16 %v6036, %v6036
  %v6038 = vld [vmem:[%s18] sm:$0xf]
  %v6039 = vld [vmem:[%s18 + $0x4] sm:$0xf]
  %v6040 = vld [vmem:[%s18 + $0x8] sm:$0xf]
  %v6041 = vld [vmem:[%s18 + $0xc] sm:$0xf]
  %6043 = vrot.lane.b32.xlu0 %v6037, 32
  %v6044 = vpop.permute.xlu0 %6043
  %v6049 = vunpack.c.l.b16 %v6038
  %v6050 = vunpack.c.l.b16 %v6039
  %v6051 = vunpack.c.l.b16 %v6040
  %v6052 = vunpack.c.l.b16 %v6041
  %v6053 = vpack.c.b16 %v6050, %v6049
  %v6054 = vpack.c.b16 %v6052, %v6051
  %v6058 = vsel %vm129, %v6044, 0
  %6060 = vmatprep.subr.bf16.mxu0 0
  %6061 = vmatpush1.bf16.msra.mxu0 %v6053
  %6062 = vmatprep.subr.bf16.mxu0 0
  %6063 = vmatpush1.bf16.msra.mxu0 %v6054
  %6064 = vmatprep.subr.bf16.mxu0 0
  %6065 = vmatpush1.bf16.msra.mxu0 0
  %6066 = vmatprep.subr.bf16.mxu0 0
  %6067 = vmatpush1.bf16.msra.mxu0 0
  %6068 = vmatprep.subr.bf16.mxu0 0
  %6069 = vmatpush1.bf16.msra.mxu0 0
  %6070 = vmatprep.subr.bf16.mxu0 0
  %6071 = vmatpush1.bf16.msra.mxu0 0
  %6072 = vmatprep.subr.bf16.mxu0 0
  %6073 = vmatpush1.bf16.msra.mxu0 0
  %6074 = vmatprep.subr.bf16.mxu0 0
  %6075 = vmatpush1.bf16.msra.mxu0 0
  %6076 = vmatprep.subr.bf16.mxu0 0
  %6077 = vmatpush1.bf16.msra.mxu0 0
  %6078 = vmatprep.subr.bf16.mxu0 0
  %6079 = vmatpush1.bf16.msra.mxu0 0
  %6080 = vmatprep.subr.bf16.mxu0 0
  %6081 = vmatpush1.bf16.msra.mxu0 0
  %6082 = vmatprep.subr.bf16.mxu0 0
  %6083 = vmatpush1.bf16.msra.mxu0 0
  %6084 = vmatprep.subr.bf16.mxu0 0
  %6085 = vmatpush1.bf16.msra.mxu0 0
  %6086 = vmatprep.subr.bf16.mxu0 0
  %6087 = vmatpush1.bf16.msra.mxu0 0
  %6088 = vmatprep.subr.bf16.mxu0 0
  %6089 = vmatpush1.bf16.msra.mxu0 0
  %6090 = vmatprep.subr.bf16.mxu0 0
  %6091 = vmatpush1.bf16.msra.mxu0 0
  %6092 = vmatprep.mubr.bf16.mxu0 0
  %6093 = vmatmul.mubr.bf16.gmra.mrb[0].mxu0 %v6058
  %v6094 = vpop.f32.mrb[0].mxu0
  %v6095 = vadd.f32 %v5832, %v6094
  %v6096 = vpop.f32.mrb[0].mxu0
  %v6097 = vpop.f32.mrb[0].mxu0
  %v6098 = vpop.f32.mrb[0].mxu0
  %6099 = vdwg.mxu0
  %s6100 = scalar_lea.vmem %s19, 56
  %6101 = vst [vmem:[%s6100] sm:$0xff] %v6095
  // Predicated region
  $region78: #{pallas_forward.1} parent=0 // pred_check
    _
  $region79: #{pallas_forward.1} parent=0 // pred_check_branch
    %6103 = sbr.rel (0) target = $region81
  $region80: #{pallas_forward.1} parent=0 // pred_region
    _
  $region81: #{pallas_forward.1} parent=0 // pred_fallthru
    _
  // Predicated region
  $region82: #{pallas_forward.1} parent=0 // pred_check
    _
  $region83: #{pallas_forward.1} parent=0 // pred_check_branch
    %6105 = sbr.rel (0) target = $region85
  $region84: #{pallas_forward.1} parent=0 // pred_region
    _
  $region85: #{pallas_forward.1} parent=0 // pred_fallthru
    _

</llo_original>
